<compile_context>
chip_gen: v7x
topology: tpu7x:2x2x1
jax: 0.10.0
libtpu: 0.0.40
codegen_flags: <defaults>
</compile_context>

<pallas_src>
import numpy as np

import jax
import jax.numpy as jnp
from jax.experimental import pallas as pl
from jax.experimental.pallas import tpu as pltpu

B_TILE = 8                   # samples per grid step (one output (8,128) tile)
LANES = 128                  # padded lane width for activations
HALF = 128                   # width of each (even-w / odd-w) accumulator half
R1 = B_TILE * 32 - 4         # conv1 slab output rows (252)
R2 = B_TILE * 14 - 4         # conv2 slab output rows (108)


# ----------------------------------------------------------------------------
# Fused kernel: one grid step == B_TILE samples' full forward pass
# ----------------------------------------------------------------------------
def _convnet_kernel(x_ref, m1_ref, c1b_ref, sel1_ref, m2_ref, c2b_ref, sel2_ref,
                    w1_ref, b1_ref, w2_ref, b2_ref, w3_ref, b3_ref, w4_ref,
                    b4_ref, o_ref, acc1_ref, acc2_ref):
    f32 = jnp.float32
    bf16 = jnp.bfloat16

    # Input slab: rows = (sample, h), lanes = (c_in, w), already bf16.
    x = x_ref[...]                                             # (B*32, 128) bf16

    # ---- conv1 (5x5, 3->6): 5 banded row-tap matmuls on the whole slab.
    #      Output cols = (parity(ow), c_out, ow//2), so the w-pool is just a
    #      max of the two 128-lane halves.  Seam rows (h=28..31 per sample)
    #      are garbage and never selected downstream.
    acc1_ref[...] = jnp.broadcast_to(c1b_ref[...], (R1, 2 * HALF))
    for di in range(5):
        acc1_ref[...] += jnp.dot(x[di:di + R1, :], m1_ref[di],
                                 preferred_element_type=f32)
    # NOTE: no ReLU after conv — the reference forward is pool(conv(x)).

    # ---- maxpool1 (2x2): w-pairs via the column halves, h-pairs via two
    #      bf16 row-selection matmuls (MXU) + elementwise max (VPU, f32).
    wmax = jnp.maximum(acc1_ref[:, 0:HALF],
                       acc1_ref[:, HALF:2 * HALF]).astype(bf16)  # (R1, 128)
    p1 = jnp.maximum(
        jnp.dot(sel1_ref[0], wmax, preferred_element_type=f32),
        jnp.dot(sel1_ref[1], wmax, preferred_element_type=f32)).astype(bf16)
    # p1: (B*14, 128) bf16, rows = (sample, h), lanes = (c, w) — conv2 layout.

    # ---- conv2 (5x5, 6->16), same scheme on the pooled slab.
    acc2_ref[...] = jnp.broadcast_to(c2b_ref[...], (R2, 2 * HALF))
    for di in range(5):
        acc2_ref[...] += jnp.dot(p1[di:di + R2, :], m2_ref[di],
                                 preferred_element_type=f32)

    # ---- maxpool2 (2x2): selection matrices also permute rows to
    #      (spatial_row, sample) so the fc1 flatten is contiguous slices.
    wmax2 = jnp.maximum(acc2_ref[:, 0:HALF],
                        acc2_ref[:, HALF:2 * HALF]).astype(bf16)  # (R2, 128)
    p2 = jnp.maximum(
        jnp.dot(sel2_ref[0], wmax2, preferred_element_type=f32),
        jnp.dot(sel2_ref[1], wmax2, preferred_element_type=f32)).astype(bf16)
    # p2: (5*B, 128) bf16, rows = (spatial h, sample), lanes = (c, w).

    # ---- fc1 (400->300, padded to 384): the NCHW flatten (c*25 + h*5 + w) is
    #      folded into 5 per-spatial-row weight slices.
    h = jnp.broadcast_to(b1_ref[...], (B_TILE, 384))
    for r in range(5):
        h = h + jnp.dot(p2[r * B_TILE:(r + 1) * B_TILE, :], w1_ref[r],
                        preferred_element_type=f32)
    h = jnp.maximum(h, 0.0)
    # TODO(synk): nn.Dropout(0.2) is identity in eval/inference mode;
    # training-mode random masking is not implemented here.
    h = jnp.maximum(jnp.dot(h.astype(bf16), w2_ref[...],
                            preferred_element_type=f32) + b2_ref[...], 0.0)
    h = jnp.maximum(jnp.dot(h.astype(bf16), w3_ref[...],
                            preferred_element_type=f32) + b3_ref[...], 0.0)
    logits = jnp.dot(h.astype(bf16), w4_ref[...],
                     preferred_element_type=f32) + b4_ref[...]    # (B, 128)

    # One logits row per sample; full unmasked (8, 128) tile store.
    o_ref[...] = logits


# ----------------------------------------------------------------------------
# Host-side, one-time weight/layout preparation
# ----------------------------------------------------------------------------
def _conv_to_banded(w, b, w_in, lanes_in, half):
    """Fold a KHxKW conv into KH banded matmul matrices + a bias row.

    Input lane layout:  lane = c_in * w_in + x
    Output col layout:  col  = (ow % 2) * half + c_out * (OW//2) + ow // 2
    so a 2x2 w-pool is max(acc[:, :half], acc[:, half:]).
    """
    w = np.asarray(w, np.float32)
    b = np.asarray(b, np.float32)
    cout, cin, kh, kw = w.shape
    ow_n = w_in - kw + 1
    ow_half = ow_n // 2
    mats = np.zeros((kh, lanes_in, 2 * half), np.float32)
    bias = np.zeros((1, 2 * half), np.float32)
    for di in range(kh):
        for dj in range(kw):
            for ow in range(ow_n):
                rows = np.arange(cin) * w_in + ow + dj
                cols = (ow % 2) * half + np.arange(cout) * ow_half + ow // 2
                mats[di][np.ix_(rows, cols)] = w[:, :, di, dj].T
    for ow in range(ow_n):
        bias[0, (ow % 2) * half + np.arange(cout) * ow_half + ow // 2] = b
    return mats, bias


def _pool1_select(b_tile):
    """(2, B*14, B*32-4) 0/1 matrices: out row b*14+ph <- in row b*32+2*ph+k."""
    sel = np.zeros((2, b_tile * 14, b_tile * 32 - 4), np.float32)
    for k in range(2):
        for b in range(b_tile):
            for ph in range(14):
                sel[k, b * 14 + ph, b * 32 + 2 * ph + k] = 1.0
    return sel


def _pool2_select(b_tile):
    """(2, 5*B, B*14-4) 0/1 matrices: out row ph*B+b <- in row b*14+2*ph+k."""
    sel = np.zeros((2, 5 * b_tile, b_tile * 14 - 4), np.float32)
    for k in range(2):
        for b in range(b_tile):
            for ph in range(5):
                sel[k, ph * b_tile + b, b * 14 + 2 * ph + k] = 1.0
    return sel


def _pad2d(a, rows, cols):
    a = np.asarray(a, np.float32)
    out = np.zeros((rows, cols), np.float32)
    out[:a.shape[0], :a.shape[1]] = a
    return out


def _pad_bias(a, cols):
    a = np.asarray(a, np.float32).reshape(1, -1)
    out = np.zeros((1, cols), np.float32)
    out[:, :a.shape[1]] = a
    return out


def prepare_params(params):
    """Fold torch-shaped params into kernel-ready, lane-padded arrays."""
    m1, c1b = _conv_to_banded(params["conv1_w"], params["conv1_b"],
                              w_in=32, lanes_in=LANES, half=HALF)
    m2, c2b = _conv_to_banded(params["conv2_w"], params["conv2_b"],
                              w_in=14, lanes_in=LANES, half=HALF)
    sel1 = _pool1_select(B_TILE)
    sel2 = _pool2_select(B_TILE)

    # fc1: fold the NCHW flatten (index = c*25 + h*5 + w) into 5 per-row slices
    # whose rows follow the kernel's (c, w) lane layout.
    w1 = np.asarray(params["fc1_w"], np.float32)                 # (400, 300)
    w1 = w1.reshape(16, 5, 5, 300).transpose(1, 0, 2, 3).reshape(5, 80, 300)
    w1h = np.zeros((5, LANES, 384), np.float32)
    w1h[:, :80, :300] = w1

    bf = jnp.bfloat16
    return {
        "m1": jnp.asarray(m1, bf), "c1b": jnp.asarray(c1b),
        "sel1": jnp.asarray(sel1, bf),
        "m2": jnp.asarray(m2, bf), "c2b": jnp.asarray(c2b),
        "sel2": jnp.asarray(sel2, bf),
        "w1h": jnp.asarray(w1h, bf),
        "b1": jnp.asarray(_pad_bias(params["fc1_b"], 384)),
        "w2": jnp.asarray(_pad2d(params["fc2_w"], 384, 128), bf),
        "b2": jnp.asarray(_pad_bias(params["fc2_b"], 128)),
        "w3": jnp.asarray(_pad2d(params["fc3_w"], 128, 128), bf),
        "b3": jnp.asarray(_pad_bias(params["fc3_b"], 128)),
        "w4": jnp.asarray(_pad2d(params["fc4_w"], 128, 128), bf),
        "b4": jnp.asarray(_pad_bias(params["fc4_b"], 128)),
    }


# ----------------------------------------------------------------------------
# Forward pass (one pallas_call; only boundary layout glue outside the kernel)
# ----------------------------------------------------------------------------
def convnet_forward(prep, x_nchw):
    n, c, hh, ww = x_nchw.shape                     # (N, 3, 32, 32)
    n_pad = pl.cdiv(n, B_TILE) * B_TILE
    # rows = (n, h), lanes = (c, w), padded to 128 lanes, bf16 (MXU input dtype).
    x2d = jnp.transpose(x_nchw, (0, 2, 1, 3)).reshape(n * hh, c * ww)
    x2d = jnp.pad(x2d, ((0, (n_pad - n) * hh), (0, LANES - c * ww)))
    x2d = x2d.astype(jnp.bfloat16)

    out = pl.pallas_call(
        _convnet_kernel,
        out_shape=jax.ShapeDtypeStruct((n_pad, 128), jnp.float32),
        grid=(n_pad // B_TILE,),
        in_specs=[
            pl.BlockSpec((B_TILE * 32, 128), lambda i: (i, 0)),    # x slab
            pl.BlockSpec((5, 128, 256), lambda i: (0, 0, 0)),      # conv1 banded
            pl.BlockSpec((1, 256), lambda i: (0, 0)),              # conv1 bias
            pl.BlockSpec((2, B_TILE * 14, R1), lambda i: (0, 0, 0)),  # pool1 sel
            pl.BlockSpec((5, 128, 256), lambda i: (0, 0, 0)),      # conv2 banded
            pl.BlockSpec((1, 256), lambda i: (0, 0)),              # conv2 bias
            pl.BlockSpec((2, 5 * B_TILE, R2), lambda i: (0, 0, 0)),   # pool2 sel
            pl.BlockSpec((5, 128, 384), lambda i: (0, 0, 0)),      # fc1 slices
            pl.BlockSpec((1, 384), lambda i: (0, 0)),              # fc1 bias
            pl.BlockSpec((384, 128), lambda i: (0, 0)),            # fc2 w
            pl.BlockSpec((1, 128), lambda i: (0, 0)),              # fc2 b
            pl.BlockSpec((128, 128), lambda i: (0, 0)),            # fc3 w
            pl.BlockSpec((1, 128), lambda i: (0, 0)),              # fc3 b
            pl.BlockSpec((128, 128), lambda i: (0, 0)),            # fc4 w
            pl.BlockSpec((1, 128), lambda i: (0, 0)),              # fc4 b
        ],
        out_specs=pl.BlockSpec((B_TILE, 128), lambda i: (i, 0)),
        scratch_shapes=[pltpu.VMEM((R1, 2 * HALF), jnp.float32),   # conv1 acc
                        pltpu.VMEM((R2, 2 * HALF), jnp.float32)],  # conv2 acc
        compiler_params=pltpu.CompilerParams(
            # batch axis is embarrassingly parallel -> both TCs on v7x
            dimension_semantics=("parallel",),
        ),
    )(x2d, prep["m1"], prep["c1b"], prep["sel1"], prep["m2"], prep["c2b"],
      prep["sel2"], prep["w1h"], prep["b1"], prep["w2"], prep["b2"],
      prep["w3"], prep["b3"], prep["w4"], prep["b4"])

    # one row per sample; first 10 lanes are the logits
    return out[:n, :10]


# ----------------------------------------------------------------------------
# Pure-JAX reference (f32, highest precision) for a tolerance check
# ----------------------------------------------------------------------------
def reference_forward(params, x):
    hi = jax.lax.Precision.HIGHEST

    def conv(x, w, b):
        y = jax.lax.conv_general_dilated(
            x, w, window_strides=(1, 1), padding="VALID",
            dimension_numbers=("NCHW", "OIHW", "NCHW"), precision=hi)
        return y + jnp.asarray(b).reshape(1, -1, 1, 1)

    def pool(x):
        n, c, h, w = x.shape
        return x.reshape(n, c, h // 2, 2, w // 2, 2).max(axis=(3, 5))

    x = pool(conv(x, params["conv1_w"], params["conv1_b"]))
    x = pool(conv(x, params["conv2_w"], params["conv2_b"]))
    x = x.reshape(x.shape[0], -1)                                   # NCHW flatten
    x = jnp.maximum(jnp.dot(x, params["fc1_w"], precision=hi) + params["fc1_b"], 0.0)
    x = jnp.maximum(jnp.dot(x, params["fc2_w"], precision=hi) + params["fc2_b"], 0.0)
    x = jnp.maximum(jnp.dot(x, params["fc3_w"], precision=hi) + params["fc3_b"], 0.0)
    return jnp.dot(x, params["fc4_w"], precision=hi) + params["fc4_b"]


# ----------------------------------------------------------------------------
# Parameters (deterministic synthetic init, matching the nn.Module shapes)
# ----------------------------------------------------------------------------
def init_params(key):
    ks = jax.random.split(key, 12)

    def w(k, shape, fan_in):
        return jax.random.normal(k, shape, jnp.float32) / jnp.sqrt(float(fan_in))

    def b(k, shape):
        return 0.01 * jax.random.normal(k, shape, jnp.float32)

    return {
        "conv1_w": w(ks[0], (6, 3, 5, 5), 3 * 5 * 5), "conv1_b": b(ks[1], (6,)),
        "conv2_w": w(ks[2], (16, 6, 5, 5), 6 * 5 * 5), "conv2_b": b(ks[3], (16,)),
        "fc1_w": w(ks[4], (400, 300), 400), "fc1_b": b(ks[5], (300,)),
        "fc2_w": w(ks[6], (300, 120), 300), "fc2_b": b(ks[7], (120,)),
        "fc3_w": w(ks[8], (120, 84), 120), "fc3_b": b(ks[9], (84,)),
        "fc4_w": w(ks[10], (84, 10), 84), "fc4_b": b(ks[11], (10,)),
    }


if __name__ == "__main__":
    key = jax.random.PRNGKey(0)
    pkey, xkey = jax.random.split(key)
    params = init_params(pkey)
    prep = prepare_params(params)          # one-time weight folding (host side)

    # batch=16 -> 2 grid steps of 8 samples; spatial must be 32x32 so the
    # flatten yields 16*5*5 = 400 features (as the module implies).
    x = jax.random.normal(xkey, (16, 3, 32, 32), jnp.float32)

    fwd = jax.jit(convnet_forward)
    out = jax.block_until_ready(fwd(prep, x))
    assert out.shape == (16, 10) and out.dtype == jnp.float32

    # tolerance-asserted pure-JAX reference check (bf16 MXU inputs, f32 accum)
    ref = jax.block_until_ready(reference_forward(params, x))
    np.testing.assert_allclose(np.asarray(out), np.asarray(ref),
                               rtol=1e-1, atol=1e-1)

    print("KERNEL_OK")
</pallas_src>

<mosaic_0001>
module attributes {stable_mosaic.version = 11 : i64} {
  func.func @_convnet_kernel(%arg0: i32, %arg1: memref<256x128xbf16, #tpu.memory_space<vmem>>, %arg2: memref<5x128x256xbf16, #tpu.memory_space<vmem>>, %arg3: memref<1x256xf32, #tpu.memory_space<vmem>>, %arg4: memref<2x112x252xbf16, #tpu.memory_space<vmem>>, %arg5: memref<5x128x256xbf16, #tpu.memory_space<vmem>>, %arg6: memref<1x256xf32, #tpu.memory_space<vmem>>, %arg7: memref<2x40x108xbf16, #tpu.memory_space<vmem>>, %arg8: memref<5x128x384xbf16, #tpu.memory_space<vmem>>, %arg9: memref<1x384xf32, #tpu.memory_space<vmem>>, %arg10: memref<384x128xbf16, #tpu.memory_space<vmem>>, %arg11: memref<1x128xf32, #tpu.memory_space<vmem>>, %arg12: memref<128x128xbf16, #tpu.memory_space<vmem>>, %arg13: memref<1x128xf32, #tpu.memory_space<vmem>>, %arg14: memref<128x128xbf16, #tpu.memory_space<vmem>>, %arg15: memref<1x128xf32, #tpu.memory_space<vmem>>, %arg16: memref<8x128xf32, #tpu.memory_space<vmem>>, %arg17: memref<252x256xf32, #tpu.memory_space<vmem>>, %arg18: memref<108x256xf32, #tpu.memory_space<vmem>>) attributes {dimension_semantics = [#tpu.dimension_semantics<parallel>], iteration_bounds = array<i64: 2>, scalar_prefetch = 0 : i64, scratch_operands = 2 : i64, tpu.core_type = #tpu.core_type<tc>, window_params = [{transform_indices = @transform_0, window_bounds = array<i64: 256, 128>}, {pipeline_mode = #tpu.pipeline_mode<synchronous>, transform_indices = @transform_1, window_bounds = array<i64: 5, 128, 256>}, {pipeline_mode = #tpu.pipeline_mode<synchronous>, transform_indices = @transform_2, window_bounds = array<i64: 1, 256>}, {pipeline_mode = #tpu.pipeline_mode<synchronous>, transform_indices = @transform_3, window_bounds = array<i64: 2, 112, 252>}, {pipeline_mode = #tpu.pipeline_mode<synchronous>, transform_indices = @transform_4, window_bounds = array<i64: 5, 128, 256>}, {pipeline_mode = #tpu.pipeline_mode<synchronous>, transform_indices = @transform_5, window_bounds = array<i64: 1, 256>}, {pipeline_mode = #tpu.pipeline_mode<synchronous>, transform_indices = @transform_6, window_bounds = array<i64: 2, 40, 108>}, {pipeline_mode = #tpu.pipeline_mode<synchronous>, transform_indices = @transform_7, window_bounds = array<i64: 5, 128, 384>}, {pipeline_mode = #tpu.pipeline_mode<synchronous>, transform_indices = @transform_8, window_bounds = array<i64: 1, 384>}, {pipeline_mode = #tpu.pipeline_mode<synchronous>, transform_indices = @transform_9, window_bounds = array<i64: 384, 128>}, {pipeline_mode = #tpu.pipeline_mode<synchronous>, transform_indices = @transform_10, window_bounds = array<i64: 1, 128>}, {pipeline_mode = #tpu.pipeline_mode<synchronous>, transform_indices = @transform_11, window_bounds = array<i64: 128, 128>}, {pipeline_mode = #tpu.pipeline_mode<synchronous>, transform_indices = @transform_12, window_bounds = array<i64: 1, 128>}, {pipeline_mode = #tpu.pipeline_mode<synchronous>, transform_indices = @transform_13, window_bounds = array<i64: 128, 128>}, {pipeline_mode = #tpu.pipeline_mode<synchronous>, transform_indices = @transform_14, window_bounds = array<i64: 1, 128>}, {transform_indices = @transform_15, window_bounds = array<i64: 8, 128>}]} {
    %c0 = arith.constant 0 : index
    %c0_0 = arith.constant 0 : index
    %0 = vector.load %arg1[%c0, %c0_0] : memref<256x128xbf16, #tpu.memory_space<vmem>>, vector<256x128xbf16>
    %c0_1 = arith.constant 0 : index
    %c0_2 = arith.constant 0 : index
    %1 = vector.load %arg3[%c0_1, %c0_2] : memref<1x256xf32, #tpu.memory_space<vmem>>, vector<1x256xf32>
    %2 = vector.shape_cast %1 : vector<1x256xf32> to vector<1x256xf32>
    %3 = vector.broadcast %2 : vector<1x256xf32> to vector<252x256xf32>
    %c0_3 = arith.constant 0 : index
    %c0_4 = arith.constant 0 : index
    %4 = vector.load %arg17[%c0_3, %c0_4] : memref<252x256xf32, #tpu.memory_space<vmem>>, vector<252x256xf32>
    tpu.vector_store %arg17[%c0_3, %c0_4], %3 {strides = array<i32>} : memref<252x256xf32, #tpu.memory_space<vmem>>, vector<252x256xf32>,
    %c0_5 = arith.constant 0 : index
    %c0_6 = arith.constant 0 : index
    %5 = vector.load %arg17[%c0_5, %c0_6] : memref<252x256xf32, #tpu.memory_space<vmem>>, vector<252x256xf32>
    %6 = vector.extract_strided_slice %0 {offsets = [0, 0], sizes = [252, 128], strides = [1, 1]} : vector<256x128xbf16> to vector<252x128xbf16>
    %c0_7 = arith.constant 0 : index
    %c0_8 = arith.constant 0 : index
    %c0_9 = arith.constant 0 : index
    %7 = vector.load %arg2[%c0_7, %c0_8, %c0_9] : memref<5x128x256xbf16, #tpu.memory_space<vmem>>, vector<1x128x256xbf16>
    %8 = vector.shape_cast %7 : vector<1x128x256xbf16> to vector<128x256xbf16>
    %cst = arith.constant dense<0.000000e+00> : vector<252x256xf32>
    %9 = tpu.matmul %6, %8, %cst {dimension_numbers = #tpu.dot_dimension_numbers<[1], [0], [0], [1], [0, 0, 1, 1], [], []>} : vector<252x128xbf16>, vector<128x256xbf16>, vector<252x256xf32> -> vector<252x256xf32>
    %10 = arith.addf %5, %9 : vector<252x256xf32>
    %c0_10 = arith.constant 0 : index
    %c0_11 = arith.constant 0 : index
    %11 = vector.load %arg17[%c0_10, %c0_11] : memref<252x256xf32, #tpu.memory_space<vmem>>, vector<252x256xf32>
    tpu.vector_store %arg17[%c0_10, %c0_11], %10 {strides = array<i32>} : memref<252x256xf32, #tpu.memory_space<vmem>>, vector<252x256xf32>,
    %c0_12 = arith.constant 0 : index
    %c0_13 = arith.constant 0 : index
    %12 = vector.load %arg17[%c0_12, %c0_13] : memref<252x256xf32, #tpu.memory_space<vmem>>, vector<252x256xf32>
    %13 = vector.extract_strided_slice %0 {offsets = [1, 0], sizes = [252, 128], strides = [1, 1]} : vector<256x128xbf16> to vector<252x128xbf16>
    %c1 = arith.constant 1 : index
    %c0_14 = arith.constant 0 : index
    %c0_15 = arith.constant 0 : index
    %14 = vector.load %arg2[%c1, %c0_14, %c0_15] : memref<5x128x256xbf16, #tpu.memory_space<vmem>>, vector<1x128x256xbf16>
    %15 = vector.shape_cast %14 : vector<1x128x256xbf16> to vector<128x256xbf16>
    %cst_16 = arith.constant dense<0.000000e+00> : vector<252x256xf32>
    %16 = tpu.matmul %13, %15, %cst_16 {dimension_numbers = #tpu.dot_dimension_numbers<[1], [0], [0], [1], [0, 0, 1, 1], [], []>} : vector<252x128xbf16>, vector<128x256xbf16>, vector<252x256xf32> -> vector<252x256xf32>
    %17 = arith.addf %12, %16 : vector<252x256xf32>
    %c0_17 = arith.constant 0 : index
    %c0_18 = arith.constant 0 : index
    %18 = vector.load %arg17[%c0_17, %c0_18] : memref<252x256xf32, #tpu.memory_space<vmem>>, vector<252x256xf32>
    tpu.vector_store %arg17[%c0_17, %c0_18], %17 {strides = array<i32>} : memref<252x256xf32, #tpu.memory_space<vmem>>, vector<252x256xf32>,
    %c0_19 = arith.constant 0 : index
    %c0_20 = arith.constant 0 : index
    %19 = vector.load %arg17[%c0_19, %c0_20] : memref<252x256xf32, #tpu.memory_space<vmem>>, vector<252x256xf32>
    %20 = vector.extract_strided_slice %0 {offsets = [2, 0], sizes = [252, 128], strides = [1, 1]} : vector<256x128xbf16> to vector<252x128xbf16>
    %c2 = arith.constant 2 : index
    %c0_21 = arith.constant 0 : index
    %c0_22 = arith.constant 0 : index
    %21 = vector.load %arg2[%c2, %c0_21, %c0_22] : memref<5x128x256xbf16, #tpu.memory_space<vmem>>, vector<1x128x256xbf16>
    %22 = vector.shape_cast %21 : vector<1x128x256xbf16> to vector<128x256xbf16>
    %cst_23 = arith.constant dense<0.000000e+00> : vector<252x256xf32>
    %23 = tpu.matmul %20, %22, %cst_23 {dimension_numbers = #tpu.dot_dimension_numbers<[1], [0], [0], [1], [0, 0, 1, 1], [], []>} : vector<252x128xbf16>, vector<128x256xbf16>, vector<252x256xf32> -> vector<252x256xf32>
    %24 = arith.addf %19, %23 : vector<252x256xf32>
    %c0_24 = arith.constant 0 : index
    %c0_25 = arith.constant 0 : index
    %25 = vector.load %arg17[%c0_24, %c0_25] : memref<252x256xf32, #tpu.memory_space<vmem>>, vector<252x256xf32>
    tpu.vector_store %arg17[%c0_24, %c0_25], %24 {strides = array<i32>} : memref<252x256xf32, #tpu.memory_space<vmem>>, vector<252x256xf32>,
    %c0_26 = arith.constant 0 : index
    %c0_27 = arith.constant 0 : index
    %26 = vector.load %arg17[%c0_26, %c0_27] : memref<252x256xf32, #tpu.memory_space<vmem>>, vector<252x256xf32>
    %27 = vector.extract_strided_slice %0 {offsets = [3, 0], sizes = [252, 128], strides = [1, 1]} : vector<256x128xbf16> to vector<252x128xbf16>
    %c3 = arith.constant 3 : index
    %c0_28 = arith.constant 0 : index
    %c0_29 = arith.constant 0 : index
    %28 = vector.load %arg2[%c3, %c0_28, %c0_29] : memref<5x128x256xbf16, #tpu.memory_space<vmem>>, vector<1x128x256xbf16>
    %29 = vector.shape_cast %28 : vector<1x128x256xbf16> to vector<128x256xbf16>
    %cst_30 = arith.constant dense<0.000000e+00> : vector<252x256xf32>
    %30 = tpu.matmul %27, %29, %cst_30 {dimension_numbers = #tpu.dot_dimension_numbers<[1], [0], [0], [1], [0, 0, 1, 1], [], []>} : vector<252x128xbf16>, vector<128x256xbf16>, vector<252x256xf32> -> vector<252x256xf32>
    %31 = arith.addf %26, %30 : vector<252x256xf32>
    %c0_31 = arith.constant 0 : index
    %c0_32 = arith.constant 0 : index
    %32 = vector.load %arg17[%c0_31, %c0_32] : memref<252x256xf32, #tpu.memory_space<vmem>>, vector<252x256xf32>
    tpu.vector_store %arg17[%c0_31, %c0_32], %31 {strides = array<i32>} : memref<252x256xf32, #tpu.memory_space<vmem>>, vector<252x256xf32>,
    %c0_33 = arith.constant 0 : index
    %c0_34 = arith.constant 0 : index
    %33 = vector.load %arg17[%c0_33, %c0_34] : memref<252x256xf32, #tpu.memory_space<vmem>>, vector<252x256xf32>
    %34 = vector.extract_strided_slice %0 {offsets = [4, 0], sizes = [252, 128], strides = [1, 1]} : vector<256x128xbf16> to vector<252x128xbf16>
    %c4 = arith.constant 4 : index
    %c0_35 = arith.constant 0 : index
    %c0_36 = arith.constant 0 : index
    %35 = vector.load %arg2[%c4, %c0_35, %c0_36] : memref<5x128x256xbf16, #tpu.memory_space<vmem>>, vector<1x128x256xbf16>
    %36 = vector.shape_cast %35 : vector<1x128x256xbf16> to vector<128x256xbf16>
    %cst_37 = arith.constant dense<0.000000e+00> : vector<252x256xf32>
    %37 = tpu.matmul %34, %36, %cst_37 {dimension_numbers = #tpu.dot_dimension_numbers<[1], [0], [0], [1], [0, 0, 1, 1], [], []>} : vector<252x128xbf16>, vector<128x256xbf16>, vector<252x256xf32> -> vector<252x256xf32>
    %38 = arith.addf %33, %37 : vector<252x256xf32>
    %c0_38 = arith.constant 0 : index
    %c0_39 = arith.constant 0 : index
    %39 = vector.load %arg17[%c0_38, %c0_39] : memref<252x256xf32, #tpu.memory_space<vmem>>, vector<252x256xf32>
    tpu.vector_store %arg17[%c0_38, %c0_39], %38 {strides = array<i32>} : memref<252x256xf32, #tpu.memory_space<vmem>>, vector<252x256xf32>,
    %c0_40 = arith.constant 0 : index
    %c0_41 = arith.constant 0 : index
    %40 = vector.load %arg17[%c0_40, %c0_41] : memref<252x256xf32, #tpu.memory_space<vmem>>, vector<252x128xf32>
    %c0_42 = arith.constant 0 : index
    %c128 = arith.constant 128 : index
    %41 = vector.load %arg17[%c0_42, %c128] : memref<252x256xf32, #tpu.memory_space<vmem>>, vector<252x128xf32>
    %42 = arith.maximumf %40, %41 : vector<252x128xf32>
    %43 = arith.truncf %42 : vector<252x128xf32> to vector<252x128xbf16>
    %c0_43 = arith.constant 0 : index
    %c0_44 = arith.constant 0 : index
    %c0_45 = arith.constant 0 : index
    %44 = vector.load %arg4[%c0_43, %c0_44, %c0_45] : memref<2x112x252xbf16, #tpu.memory_space<vmem>>, vector<1x112x252xbf16>
    %45 = vector.shape_cast %44 : vector<1x112x252xbf16> to vector<112x252xbf16>
    %cst_46 = arith.constant dense<0.000000e+00> : vector<112x128xf32>
    %46 = tpu.matmul %45, %43, %cst_46 {dimension_numbers = #tpu.dot_dimension_numbers<[1], [0], [0], [1], [0, 0, 1, 1], [], []>} : vector<112x252xbf16>, vector<252x128xbf16>, vector<112x128xf32> -> vector<112x128xf32>
    %c1_47 = arith.constant 1 : index
    %c0_48 = arith.constant 0 : index
    %c0_49 = arith.constant 0 : index
    %47 = vector.load %arg4[%c1_47, %c0_48, %c0_49] : memref<2x112x252xbf16, #tpu.memory_space<vmem>>, vector<1x112x252xbf16>
    %48 = vector.shape_cast %47 : vector<1x112x252xbf16> to vector<112x252xbf16>
    %cst_50 = arith.constant dense<0.000000e+00> : vector<112x128xf32>
    %49 = tpu.matmul %48, %43, %cst_50 {dimension_numbers = #tpu.dot_dimension_numbers<[1], [0], [0], [1], [0, 0, 1, 1], [], []>} : vector<112x252xbf16>, vector<252x128xbf16>, vector<112x128xf32> -> vector<112x128xf32>
    %50 = arith.maximumf %46, %49 : vector<112x128xf32>
    %51 = arith.truncf %50 : vector<112x128xf32> to vector<112x128xbf16>
    %c0_51 = arith.constant 0 : index
    %c0_52 = arith.constant 0 : index
    %52 = vector.load %arg6[%c0_51, %c0_52] : memref<1x256xf32, #tpu.memory_space<vmem>>, vector<1x256xf32>
    %53 = vector.shape_cast %52 : vector<1x256xf32> to vector<1x256xf32>
    %54 = vector.broadcast %53 : vector<1x256xf32> to vector<108x256xf32>
    %c0_53 = arith.constant 0 : index
    %c0_54 = arith.constant 0 : index
    %55 = vector.load %arg18[%c0_53, %c0_54] : memref<108x256xf32, #tpu.memory_space<vmem>>, vector<108x256xf32>
    tpu.vector_store %arg18[%c0_53, %c0_54], %54 {strides = array<i32>} : memref<108x256xf32, #tpu.memory_space<vmem>>, vector<108x256xf32>,
    %c0_55 = arith.constant 0 : index
    %c0_56 = arith.constant 0 : index
    %56 = vector.load %arg18[%c0_55, %c0_56] : memref<108x256xf32, #tpu.memory_space<vmem>>, vector<108x256xf32>
    %57 = vector.extract_strided_slice %51 {offsets = [0, 0], sizes = [108, 128], strides = [1, 1]} : vector<112x128xbf16> to vector<108x128xbf16>
    %c0_57 = arith.constant 0 : index
    %c0_58 = arith.constant 0 : index
    %c0_59 = arith.constant 0 : index
    %58 = vector.load %arg5[%c0_57, %c0_58, %c0_59] : memref<5x128x256xbf16, #tpu.memory_space<vmem>>, vector<1x128x256xbf16>
    %59 = vector.shape_cast %58 : vector<1x128x256xbf16> to vector<128x256xbf16>
    %cst_60 = arith.constant dense<0.000000e+00> : vector<108x256xf32>
    %60 = tpu.matmul %57, %59, %cst_60 {dimension_numbers = #tpu.dot_dimension_numbers<[1], [0], [0], [1], [0, 0, 1, 1], [], []>} : vector<108x128xbf16>, vector<128x256xbf16>, vector<108x256xf32> -> vector<108x256xf32>
    %61 = arith.addf %56, %60 : vector<108x256xf32>
    %c0_61 = arith.constant 0 : index
    %c0_62 = arith.constant 0 : index
    %62 = vector.load %arg18[%c0_61, %c0_62] : memref<108x256xf32, #tpu.memory_space<vmem>>, vector<108x256xf32>
    tpu.vector_store %arg18[%c0_61, %c0_62], %61 {strides = array<i32>} : memref<108x256xf32, #tpu.memory_space<vmem>>, vector<108x256xf32>,
    %c0_63 = arith.constant 0 : index
    %c0_64 = arith.constant 0 : index
    %63 = vector.load %arg18[%c0_63, %c0_64] : memref<108x256xf32, #tpu.memory_space<vmem>>, vector<108x256xf32>
    %64 = vector.extract_strided_slice %51 {offsets = [1, 0], sizes = [108, 128], strides = [1, 1]} : vector<112x128xbf16> to vector<108x128xbf16>
    %c1_65 = arith.constant 1 : index
    %c0_66 = arith.constant 0 : index
    %c0_67 = arith.constant 0 : index
    %65 = vector.load %arg5[%c1_65, %c0_66, %c0_67] : memref<5x128x256xbf16, #tpu.memory_space<vmem>>, vector<1x128x256xbf16>
    %66 = vector.shape_cast %65 : vector<1x128x256xbf16> to vector<128x256xbf16>
    %cst_68 = arith.constant dense<0.000000e+00> : vector<108x256xf32>
    %67 = tpu.matmul %64, %66, %cst_68 {dimension_numbers = #tpu.dot_dimension_numbers<[1], [0], [0], [1], [0, 0, 1, 1], [], []>} : vector<108x128xbf16>, vector<128x256xbf16>, vector<108x256xf32> -> vector<108x256xf32>
    %68 = arith.addf %63, %67 : vector<108x256xf32>
    %c0_69 = arith.constant 0 : index
    %c0_70 = arith.constant 0 : index
    %69 = vector.load %arg18[%c0_69, %c0_70] : memref<108x256xf32, #tpu.memory_space<vmem>>, vector<108x256xf32>
    tpu.vector_store %arg18[%c0_69, %c0_70], %68 {strides = array<i32>} : memref<108x256xf32, #tpu.memory_space<vmem>>, vector<108x256xf32>,
    %c0_71 = arith.constant 0 : index
    %c0_72 = arith.constant 0 : index
    %70 = vector.load %arg18[%c0_71, %c0_72] : memref<108x256xf32, #tpu.memory_space<vmem>>, vector<108x256xf32>
    %71 = vector.extract_strided_slice %51 {offsets = [2, 0], sizes = [108, 128], strides = [1, 1]} : vector<112x128xbf16> to vector<108x128xbf16>
    %c2_73 = arith.constant 2 : index
    %c0_74 = arith.constant 0 : index
    %c0_75 = arith.constant 0 : index
    %72 = vector.load %arg5[%c2_73, %c0_74, %c0_75] : memref<5x128x256xbf16, #tpu.memory_space<vmem>>, vector<1x128x256xbf16>
    %73 = vector.shape_cast %72 : vector<1x128x256xbf16> to vector<128x256xbf16>
    %cst_76 = arith.constant dense<0.000000e+00> : vector<108x256xf32>
    %74 = tpu.matmul %71, %73, %cst_76 {dimension_numbers = #tpu.dot_dimension_numbers<[1], [0], [0], [1], [0, 0, 1, 1], [], []>} : vector<108x128xbf16>, vector<128x256xbf16>, vector<108x256xf32> -> vector<108x256xf32>
    %75 = arith.addf %70, %74 : vector<108x256xf32>
    %c0_77 = arith.constant 0 : index
    %c0_78 = arith.constant 0 : index
    %76 = vector.load %arg18[%c0_77, %c0_78] : memref<108x256xf32, #tpu.memory_space<vmem>>, vector<108x256xf32>
    tpu.vector_store %arg18[%c0_77, %c0_78], %75 {strides = array<i32>} : memref<108x256xf32, #tpu.memory_space<vmem>>, vector<108x256xf32>,
    %c0_79 = arith.constant 0 : index
    %c0_80 = arith.constant 0 : index
    %77 = vector.load %arg18[%c0_79, %c0_80] : memref<108x256xf32, #tpu.memory_space<vmem>>, vector<108x256xf32>
    %78 = vector.extract_strided_slice %51 {offsets = [3, 0], sizes = [108, 128], strides = [1, 1]} : vector<112x128xbf16> to vector<108x128xbf16>
    %c3_81 = arith.constant 3 : index
    %c0_82 = arith.constant 0 : index
    %c0_83 = arith.constant 0 : index
    %79 = vector.load %arg5[%c3_81, %c0_82, %c0_83] : memref<5x128x256xbf16, #tpu.memory_space<vmem>>, vector<1x128x256xbf16>
    %80 = vector.shape_cast %79 : vector<1x128x256xbf16> to vector<128x256xbf16>
    %cst_84 = arith.constant dense<0.000000e+00> : vector<108x256xf32>
    %81 = tpu.matmul %78, %80, %cst_84 {dimension_numbers = #tpu.dot_dimension_numbers<[1], [0], [0], [1], [0, 0, 1, 1], [], []>} : vector<108x128xbf16>, vector<128x256xbf16>, vector<108x256xf32> -> vector<108x256xf32>
    %82 = arith.addf %77, %81 : vector<108x256xf32>
    %c0_85 = arith.constant 0 : index
    %c0_86 = arith.constant 0 : index
    %83 = vector.load %arg18[%c0_85, %c0_86] : memref<108x256xf32, #tpu.memory_space<vmem>>, vector<108x256xf32>
    tpu.vector_store %arg18[%c0_85, %c0_86], %82 {strides = array<i32>} : memref<108x256xf32, #tpu.memory_space<vmem>>, vector<108x256xf32>,
    %c0_87 = arith.constant 0 : index
    %c0_88 = arith.constant 0 : index
    %84 = vector.load %arg18[%c0_87, %c0_88] : memref<108x256xf32, #tpu.memory_space<vmem>>, vector<108x256xf32>
    %85 = vector.extract_strided_slice %51 {offsets = [4, 0], sizes = [108, 128], strides = [1, 1]} : vector<112x128xbf16> to vector<108x128xbf16>
    %c4_89 = arith.constant 4 : index
    %c0_90 = arith.constant 0 : index
    %c0_91 = arith.constant 0 : index
    %86 = vector.load %arg5[%c4_89, %c0_90, %c0_91] : memref<5x128x256xbf16, #tpu.memory_space<vmem>>, vector<1x128x256xbf16>
    %87 = vector.shape_cast %86 : vector<1x128x256xbf16> to vector<128x256xbf16>
    %cst_92 = arith.constant dense<0.000000e+00> : vector<108x256xf32>
    %88 = tpu.matmul %85, %87, %cst_92 {dimension_numbers = #tpu.dot_dimension_numbers<[1], [0], [0], [1], [0, 0, 1, 1], [], []>} : vector<108x128xbf16>, vector<128x256xbf16>, vector<108x256xf32> -> vector<108x256xf32>
    %89 = arith.addf %84, %88 : vector<108x256xf32>
    %c0_93 = arith.constant 0 : index
    %c0_94 = arith.constant 0 : index
    %90 = vector.load %arg18[%c0_93, %c0_94] : memref<108x256xf32, #tpu.memory_space<vmem>>, vector<108x256xf32>
    tpu.vector_store %arg18[%c0_93, %c0_94], %89 {strides = array<i32>} : memref<108x256xf32, #tpu.memory_space<vmem>>, vector<108x256xf32>,
    %c0_95 = arith.constant 0 : index
    %c0_96 = arith.constant 0 : index
    %91 = vector.load %arg18[%c0_95, %c0_96] : memref<108x256xf32, #tpu.memory_space<vmem>>, vector<108x128xf32>
    %c0_97 = arith.constant 0 : index
    %c128_98 = arith.constant 128 : index
    %92 = vector.load %arg18[%c0_97, %c128_98] : memref<108x256xf32, #tpu.memory_space<vmem>>, vector<108x128xf32>
    %93 = arith.maximumf %91, %92 : vector<108x128xf32>
    %94 = arith.truncf %93 : vector<108x128xf32> to vector<108x128xbf16>
    %c0_99 = arith.constant 0 : index
    %c0_100 = arith.constant 0 : index
    %c0_101 = arith.constant 0 : index
    %95 = vector.load %arg7[%c0_99, %c0_100, %c0_101] : memref<2x40x108xbf16, #tpu.memory_space<vmem>>, vector<1x40x108xbf16>
    %96 = vector.shape_cast %95 : vector<1x40x108xbf16> to vector<40x108xbf16>
    %cst_102 = arith.constant dense<0.000000e+00> : vector<40x128xf32>
    %97 = tpu.matmul %96, %94, %cst_102 {dimension_numbers = #tpu.dot_dimension_numbers<[1], [0], [0], [1], [0, 0, 1, 1], [], []>} : vector<40x108xbf16>, vector<108x128xbf16>, vector<40x128xf32> -> vector<40x128xf32>
    %c1_103 = arith.constant 1 : index
    %c0_104 = arith.constant 0 : index
    %c0_105 = arith.constant 0 : index
    %98 = vector.load %arg7[%c1_103, %c0_104, %c0_105] : memref<2x40x108xbf16, #tpu.memory_space<vmem>>, vector<1x40x108xbf16>
    %99 = vector.shape_cast %98 : vector<1x40x108xbf16> to vector<40x108xbf16>
    %cst_106 = arith.constant dense<0.000000e+00> : vector<40x128xf32>
    %100 = tpu.matmul %99, %94, %cst_106 {dimension_numbers = #tpu.dot_dimension_numbers<[1], [0], [0], [1], [0, 0, 1, 1], [], []>} : vector<40x108xbf16>, vector<108x128xbf16>, vector<40x128xf32> -> vector<40x128xf32>
    %101 = arith.maximumf %97, %100 : vector<40x128xf32>
    %102 = arith.truncf %101 : vector<40x128xf32> to vector<40x128xbf16>
    %c0_107 = arith.constant 0 : index
    %c0_108 = arith.constant 0 : index
    %103 = vector.load %arg9[%c0_107, %c0_108] : memref<1x384xf32, #tpu.memory_space<vmem>>, vector<1x384xf32>
    %104 = vector.shape_cast %103 : vector<1x384xf32> to vector<1x384xf32>
    %105 = vector.broadcast %104 : vector<1x384xf32> to vector<8x384xf32>
    %106 = vector.extract_strided_slice %102 {offsets = [0, 0], sizes = [8, 128], strides = [1, 1]} : vector<40x128xbf16> to vector<8x128xbf16>
    %c0_109 = arith.constant 0 : index
    %c0_110 = arith.constant 0 : index
    %c0_111 = arith.constant 0 : index
    %107 = vector.load %arg8[%c0_109, %c0_110, %c0_111] : memref<5x128x384xbf16, #tpu.memory_space<vmem>>, vector<1x128x384xbf16>
    %108 = vector.shape_cast %107 : vector<1x128x384xbf16> to vector<128x384xbf16>
    %cst_112 = arith.constant dense<0.000000e+00> : vector<8x384xf32>
    %109 = tpu.matmul %106, %108, %cst_112 {dimension_numbers = #tpu.dot_dimension_numbers<[1], [0], [0], [1], [0, 0, 1, 1], [], []>} : vector<8x128xbf16>, vector<128x384xbf16>, vector<8x384xf32> -> vector<8x384xf32>
    %110 = arith.addf %105, %109 : vector<8x384xf32>
    %111 = vector.extract_strided_slice %102 {offsets = [8, 0], sizes = [8, 128], strides = [1, 1]} : vector<40x128xbf16> to vector<8x128xbf16>
    %c1_113 = arith.constant 1 : index
    %c0_114 = arith.constant 0 : index
    %c0_115 = arith.constant 0 : index
    %112 = vector.load %arg8[%c1_113, %c0_114, %c0_115] : memref<5x128x384xbf16, #tpu.memory_space<vmem>>, vector<1x128x384xbf16>
    %113 = vector.shape_cast %112 : vector<1x128x384xbf16> to vector<128x384xbf16>
    %cst_116 = arith.constant dense<0.000000e+00> : vector<8x384xf32>
    %114 = tpu.matmul %111, %113, %cst_116 {dimension_numbers = #tpu.dot_dimension_numbers<[1], [0], [0], [1], [0, 0, 1, 1], [], []>} : vector<8x128xbf16>, vector<128x384xbf16>, vector<8x384xf32> -> vector<8x384xf32>
    %115 = arith.addf %110, %114 : vector<8x384xf32>
    %116 = vector.extract_strided_slice %102 {offsets = [16, 0], sizes = [8, 128], strides = [1, 1]} : vector<40x128xbf16> to vector<8x128xbf16>
    %c2_117 = arith.constant 2 : index
    %c0_118 = arith.constant 0 : index
    %c0_119 = arith.constant 0 : index
    %117 = vector.load %arg8[%c2_117, %c0_118, %c0_119] : memref<5x128x384xbf16, #tpu.memory_space<vmem>>, vector<1x128x384xbf16>
    %118 = vector.shape_cast %117 : vector<1x128x384xbf16> to vector<128x384xbf16>
    %cst_120 = arith.constant dense<0.000000e+00> : vector<8x384xf32>
    %119 = tpu.matmul %116, %118, %cst_120 {dimension_numbers = #tpu.dot_dimension_numbers<[1], [0], [0], [1], [0, 0, 1, 1], [], []>} : vector<8x128xbf16>, vector<128x384xbf16>, vector<8x384xf32> -> vector<8x384xf32>
    %120 = arith.addf %115, %119 : vector<8x384xf32>
    %121 = vector.extract_strided_slice %102 {offsets = [24, 0], sizes = [8, 128], strides = [1, 1]} : vector<40x128xbf16> to vector<8x128xbf16>
    %c3_121 = arith.constant 3 : index
    %c0_122 = arith.constant 0 : index
    %c0_123 = arith.constant 0 : index
    %122 = vector.load %arg8[%c3_121, %c0_122, %c0_123] : memref<5x128x384xbf16, #tpu.memory_space<vmem>>, vector<1x128x384xbf16>
    %123 = vector.shape_cast %122 : vector<1x128x384xbf16> to vector<128x384xbf16>
    %cst_124 = arith.constant dense<0.000000e+00> : vector<8x384xf32>
    %124 = tpu.matmul %121, %123, %cst_124 {dimension_numbers = #tpu.dot_dimension_numbers<[1], [0], [0], [1], [0, 0, 1, 1], [], []>} : vector<8x128xbf16>, vector<128x384xbf16>, vector<8x384xf32> -> vector<8x384xf32>
    %125 = arith.addf %120, %124 : vector<8x384xf32>
    %126 = vector.extract_strided_slice %102 {offsets = [32, 0], sizes = [8, 128], strides = [1, 1]} : vector<40x128xbf16> to vector<8x128xbf16>
    %c4_125 = arith.constant 4 : index
    %c0_126 = arith.constant 0 : index
    %c0_127 = arith.constant 0 : index
    %127 = vector.load %arg8[%c4_125, %c0_126, %c0_127] : memref<5x128x384xbf16, #tpu.memory_space<vmem>>, vector<1x128x384xbf16>
    %128 = vector.shape_cast %127 : vector<1x128x384xbf16> to vector<128x384xbf16>
    %cst_128 = arith.constant dense<0.000000e+00> : vector<8x384xf32>
    %129 = tpu.matmul %126, %128, %cst_128 {dimension_numbers = #tpu.dot_dimension_numbers<[1], [0], [0], [1], [0, 0, 1, 1], [], []>} : vector<8x128xbf16>, vector<128x384xbf16>, vector<8x384xf32> -> vector<8x384xf32>
    %130 = arith.addf %125, %129 : vector<8x384xf32>
    %cst_129 = arith.constant 0.000000e+00 : f32
    %131 = vector.broadcast %cst_129 : f32 to vector<8x384xf32>
    %132 = arith.maximumf %130, %131 : vector<8x384xf32>
    %133 = arith.truncf %132 : vector<8x384xf32> to vector<8x384xbf16>
    %c0_130 = arith.constant 0 : index
    %c0_131 = arith.constant 0 : index
    %134 = vector.load %arg10[%c0_130, %c0_131] : memref<384x128xbf16, #tpu.memory_space<vmem>>, vector<384x128xbf16>
    %cst_132 = arith.constant dense<0.000000e+00> : vector<8x128xf32>
    %135 = tpu.matmul %133, %134, %cst_132 {dimension_numbers = #tpu.dot_dimension_numbers<[1], [0], [0], [1], [0, 0, 1, 1], [], []>} : vector<8x384xbf16>, vector<384x128xbf16>, vector<8x128xf32> -> vector<8x128xf32>
    %c0_133 = arith.constant 0 : index
    %c0_134 = arith.constant 0 : index
    %136 = vector.load %arg11[%c0_133, %c0_134] : memref<1x128xf32, #tpu.memory_space<vmem>>, vector<1x128xf32>
    %137 = vector.broadcast %136 : vector<1x128xf32> to vector<8x128xf32>
    %138 = arith.addf %135, %137 : vector<8x128xf32>
    %cst_135 = arith.constant 0.000000e+00 : f32
    %139 = vector.broadcast %cst_135 : f32 to vector<8x128xf32>
    %140 = arith.maximumf %138, %139 : vector<8x128xf32>
    %141 = arith.truncf %140 : vector<8x128xf32> to vector<8x128xbf16>
    %c0_136 = arith.constant 0 : index
    %c0_137 = arith.constant 0 : index
    %142 = vector.load %arg12[%c0_136, %c0_137] : memref<128x128xbf16, #tpu.memory_space<vmem>>, vector<128x128xbf16>
    %cst_138 = arith.constant dense<0.000000e+00> : vector<8x128xf32>
    %143 = tpu.matmul %141, %142, %cst_138 {dimension_numbers = #tpu.dot_dimension_numbers<[1], [0], [0], [1], [0, 0, 1, 1], [], []>} : vector<8x128xbf16>, vector<128x128xbf16>, vector<8x128xf32> -> vector<8x128xf32>
    %c0_139 = arith.constant 0 : index
    %c0_140 = arith.constant 0 : index
    %144 = vector.load %arg13[%c0_139, %c0_140] : memref<1x128xf32, #tpu.memory_space<vmem>>, vector<1x128xf32>
    %145 = vector.broadcast %144 : vector<1x128xf32> to vector<8x128xf32>
    %146 = arith.addf %143, %145 : vector<8x128xf32>
    %cst_141 = arith.constant 0.000000e+00 : f32
    %147 = vector.broadcast %cst_141 : f32 to vector<8x128xf32>
    %148 = arith.maximumf %146, %147 : vector<8x128xf32>
    %149 = arith.truncf %148 : vector<8x128xf32> to vector<8x128xbf16>
    %c0_142 = arith.constant 0 : index
    %c0_143 = arith.constant 0 : index
    %150 = vector.load %arg14[%c0_142, %c0_143] : memref<128x128xbf16, #tpu.memory_space<vmem>>, vector<128x128xbf16>
    %cst_144 = arith.constant dense<0.000000e+00> : vector<8x128xf32>
    %151 = tpu.matmul %149, %150, %cst_144 {dimension_numbers = #tpu.dot_dimension_numbers<[1], [0], [0], [1], [0, 0, 1, 1], [], []>} : vector<8x128xbf16>, vector<128x128xbf16>, vector<8x128xf32> -> vector<8x128xf32>
    %c0_145 = arith.constant 0 : index
    %c0_146 = arith.constant 0 : index
    %152 = vector.load %arg15[%c0_145, %c0_146] : memref<1x128xf32, #tpu.memory_space<vmem>>, vector<1x128xf32>
    %153 = vector.broadcast %152 : vector<1x128xf32> to vector<8x128xf32>
    %154 = arith.addf %151, %153 : vector<8x128xf32>
    %c0_147 = arith.constant 0 : index
    %c0_148 = arith.constant 0 : index
    %155 = vector.load %arg16[%c0_147, %c0_148] : memref<8x128xf32, #tpu.memory_space<vmem>>, vector<8x128xf32>
    tpu.vector_store %arg16[%c0_147, %c0_148], %154 {strides = array<i32>} : memref<8x128xf32, #tpu.memory_space<vmem>>, vector<8x128xf32>,
    return
  }
  func.func @transform_0(%arg0: i32) -> (i32, i32) {
    %c0_i32 = arith.constant 0 : i32
    %c0_i32_0 = arith.constant 0 : i32
    return %arg0, %c0_i32 : i32, i32
  }
  func.func @transform_1(%arg0: i32) -> (i32, i32, i32) {
    %c0_i32 = arith.constant 0 : i32
    %c0_i32_0 = arith.constant 0 : i32
    %c0_i32_1 = arith.constant 0 : i32
    %c0_i32_2 = arith.constant 0 : i32
    return %c0_i32, %c0_i32_0, %c0_i32_1 : i32, i32, i32
  }
  func.func @transform_2(%arg0: i32) -> (i32, i32) {
    %c0_i32 = arith.constant 0 : i32
    %c0_i32_0 = arith.constant 0 : i32
    %c0_i32_1 = arith.constant 0 : i32
    return %c0_i32, %c0_i32_0 : i32, i32
  }
  func.func @transform_3(%arg0: i32) -> (i32, i32, i32) {
    %c0_i32 = arith.constant 0 : i32
    %c0_i32_0 = arith.constant 0 : i32
    %c0_i32_1 = arith.constant 0 : i32
    %c0_i32_2 = arith.constant 0 : i32
    return %c0_i32, %c0_i32_0, %c0_i32_1 : i32, i32, i32
  }
  func.func @transform_4(%arg0: i32) -> (i32, i32, i32) {
    %c0_i32 = arith.constant 0 : i32
    %c0_i32_0 = arith.constant 0 : i32
    %c0_i32_1 = arith.constant 0 : i32
    %c0_i32_2 = arith.constant 0 : i32
    return %c0_i32, %c0_i32_0, %c0_i32_1 : i32, i32, i32
  }
  func.func @transform_5(%arg0: i32) -> (i32, i32) {
    %c0_i32 = arith.constant 0 : i32
    %c0_i32_0 = arith.constant 0 : i32
    %c0_i32_1 = arith.constant 0 : i32
    return %c0_i32, %c0_i32_0 : i32, i32
  }
  func.func @transform_6(%arg0: i32) -> (i32, i32, i32) {
    %c0_i32 = arith.constant 0 : i32
    %c0_i32_0 = arith.constant 0 : i32
    %c0_i32_1 = arith.constant 0 : i32
    %c0_i32_2 = arith.constant 0 : i32
    return %c0_i32, %c0_i32_0, %c0_i32_1 : i32, i32, i32
  }
  func.func @transform_7(%arg0: i32) -> (i32, i32, i32) {
    %c0_i32 = arith.constant 0 : i32
    %c0_i32_0 = arith.constant 0 : i32
    %c0_i32_1 = arith.constant 0 : i32
    %c0_i32_2 = arith.constant 0 : i32
    return %c0_i32, %c0_i32_0, %c0_i32_1 : i32, i32, i32
  }
  func.func @transform_8(%arg0: i32) -> (i32, i32) {
    %c0_i32 = arith.constant 0 : i32
    %c0_i32_0 = arith.constant 0 : i32
    %c0_i32_1 = arith.constant 0 : i32
    return %c0_i32, %c0_i32_0 : i32, i32
  }
  func.func @transform_9(%arg0: i32) -> (i32, i32) {
    %c0_i32 = arith.constant 0 : i32
    %c0_i32_0 = arith.constant 0 : i32
    %c0_i32_1 = arith.constant 0 : i32
    return %c0_i32, %c0_i32_0 : i32, i32
  }
  func.func @transform_10(%arg0: i32) -> (i32, i32) {
    %c0_i32 = arith.constant 0 : i32
    %c0_i32_0 = arith.constant 0 : i32
    %c0_i32_1 = arith.constant 0 : i32
    return %c0_i32, %c0_i32_0 : i32, i32
  }
  func.func @transform_11(%arg0: i32) -> (i32, i32) {
    %c0_i32 = arith.constant 0 : i32
    %c0_i32_0 = arith.constant 0 : i32
    %c0_i32_1 = arith.constant 0 : i32
    return %c0_i32, %c0_i32_0 : i32, i32
  }
  func.func @transform_12(%arg0: i32) -> (i32, i32) {
    %c0_i32 = arith.constant 0 : i32
    %c0_i32_0 = arith.constant 0 : i32
    %c0_i32_1 = arith.constant 0 : i32
    return %c0_i32, %c0_i32_0 : i32, i32
  }
  func.func @transform_13(%arg0: i32) -> (i32, i32) {
    %c0_i32 = arith.constant 0 : i32
    %c0_i32_0 = arith.constant 0 : i32
    %c0_i32_1 = arith.constant 0 : i32
    return %c0_i32, %c0_i32_0 : i32, i32
  }
  func.func @transform_14(%arg0: i32) -> (i32, i32) {
    %c0_i32 = arith.constant 0 : i32
    %c0_i32_0 = arith.constant 0 : i32
    %c0_i32_1 = arith.constant 0 : i32
    return %c0_i32, %c0_i32_0 : i32, i32
  }
  func.func @transform_15(%arg0: i32) -> (i32, i32) {
    %c0_i32 = arith.constant 0 : i32
    %c0_i32_0 = arith.constant 0 : i32
    return %arg0, %c0_i32 : i32, i32
  }
}

</mosaic_0001>

<llo_original>
// kernel: convnet_forward.1
$region0: #{convnet_forward.1}
  #allocation0 [shape = 'u32[]', space=smem, size = 0x4, offset = 0x4, fixed_abs, tag = 'smem constant byte address 0x4 - core index']
  #allocation1 [shape = 'u32[144,128]{1,0:T(1,128)}', space=vmem, size = 0x12000, scoped, tag = 'internal scratch']
  #allocation2 [shape = 'f32[252,256]{1,0:T(8,128)}', space=vmem, size = 0x40000, scoped, tag = 'scratch operand']
  #allocation3 [shape = 'f32[108,256]{1,0:T(8,128)}', space=vmem, size = 0x1c000, scoped, tag = 'scratch operand']
  %s0 = inlined_call_operand.vmem [shape: bf16[512,128], index: 0, kind: input, shape index: {}]
  %s1 = inlined_call_operand.vmem [shape: bf16[5,128,256], index: 1, kind: input, shape index: {}]
  %s2 = inlined_call_operand.vmem [shape: f32[1,256], index: 2, kind: input, shape index: {}]
  %s3 = inlined_call_operand.vmem [shape: bf16[2,112,252], index: 3, kind: input, shape index: {}]
  %s4 = inlined_call_operand.vmem [shape: bf16[5,128,256], index: 4, kind: input, shape index: {}]
  %s5 = inlined_call_operand.vmem [shape: f32[1,256], index: 5, kind: input, shape index: {}]
  %s6 = inlined_call_operand.vmem [shape: bf16[2,40,108], index: 6, kind: input, shape index: {}]
  %s7 = inlined_call_operand.vmem [shape: bf16[5,128,384], index: 7, kind: input, shape index: {}]
  %s8 = inlined_call_operand.vmem [shape: f32[1,384], index: 8, kind: input, shape index: {}]
  %s9 = inlined_call_operand.vmem [shape: bf16[384,128], index: 9, kind: input, shape index: {}]
  %s10 = inlined_call_operand.vmem [shape: f32[1,128], index: 10, kind: input, shape index: {}]
  %s11 = inlined_call_operand.vmem [shape: bf16[128,128], index: 11, kind: input, shape index: {}]
  %s12 = inlined_call_operand.vmem [shape: f32[1,128], index: 12, kind: input, shape index: {}]
  %s13 = inlined_call_operand.vmem [shape: bf16[128,128], index: 13, kind: input, shape index: {}]
  %s14 = inlined_call_operand.vmem [shape: f32[1,128], index: 14, kind: input, shape index: {}]
  %s15 = inlined_call_operand.hbm [shape: f32[16,128], index: 15, kind: output, shape index: {}]
  %s16 = sld [smem:[#allocation0]]
  $region93: #{convnet_forward.1} parent=0
    _
  %s18 = ssub.s32 1, %s16
  %s19 = scalar_select 0, %s18, %s16
  $region1: #{convnet_forward.1} parent=0
    #allocation4 [shape = 'u8[8192]{0}', space=vmem, size = 0x2000, scoped, tag = 'output window, operand 0']
    #allocation5 [shape = 's32[2]{0}', space=sflag, size = 0x8, scoped, tag = 'scoped memory for convnet_forward.1']
    %20 = vsyncpa [#allocation5], 0
    %s21 = scalar_lea.sflag [#allocation5], 1
    %22 = vsyncpa %s21, 0
    loop: start=0, step=1, limit=4
    $region2: #{convnet_forward.1} parent=1 // loop_pre_header
      _
    $region3: #{convnet_forward.1} parent=1 // loop_header
      %s24 = sphi 0, %s28
      %p25 = scmp.ge.s32.totalorder %s24, 4
      %s34 = sphi 0, %s36
      %s37 = sphi 0, %s34
      %s38 = sphi 0, %s37
      %s54 = sphi 0, %s38
      %s58 = sphi 0, %s58
      %s60 = sphi 0, %s58
      %s61 = sphi 0, %s60
      %s75 = sphi 0, %s61
      %s79 = sphi 0, %s79
      %s81 = sphi 0, %s79
      %s82 = sphi 0, %s81
      %s96 = sphi 0, %s82
      %s100 = sphi 0, %s100
      %s102 = sphi 0, %s100
      %s103 = sphi 0, %s102
      %s117 = sphi 0, %s103
      %s121 = sphi 0, %s121
      %s123 = sphi 0, %s121
      %s124 = sphi 0, %s123
      %s138 = sphi 0, %s124
      %s142 = sphi 0, %s142
      %s144 = sphi 0, %s142
      %s145 = sphi 0, %s144
      %s159 = sphi 0, %s145
      %s163 = sphi 0, %s163
      %s165 = sphi 0, %s163
      %s166 = sphi 0, %s165
      %s180 = sphi 0, %s166
      %s184 = sphi 0, %s184
      %s186 = sphi 0, %s184
      %s187 = sphi 0, %s186
      %s201 = sphi 0, %s187
      %s205 = sphi 0, %s205
      %s207 = sphi 0, %s205
      %s208 = sphi 0, %s207
      %s222 = sphi 0, %s208
      %s226 = sphi 0, %s226
      %s228 = sphi 0, %s226
      %s229 = sphi 0, %s228
      %s243 = sphi 0, %s229
      %s247 = sphi 0, %s247
      %s249 = sphi 0, %s247
      %s250 = sphi 0, %s249
      %s264 = sphi 0, %s250
      %s268 = sphi 0, %s268
      %s270 = sphi 0, %s268
      %s271 = sphi 0, %s270
      %s285 = sphi 0, %s271
      %s289 = sphi 0, %s289
      %s291 = sphi 0, %s289
      %s292 = sphi 0, %s291
      %s306 = sphi 0, %s292
      %s310 = sphi 0, %s310
      %s312 = sphi 0, %s310
      %s313 = sphi 0, %s312
      %s327 = sphi 0, %s313
      %s331 = sphi 0, %s331
      %s333 = sphi 0, %s331
      %s334 = sphi 0, %s333
      %s348 = sphi 0, %s334
      %s354 = sphi 0, %s356
      %s357 = sphi 0, %s354
      %s358 = sphi 0, %s357
      %s374 = sphi 0, %s358
    $region4: #{convnet_forward.1} parent=1 // loop_header_branch
      %27 = sbr.rel (%p25) target = $region8
    $region5: #{convnet_forward.1} parent=1 // loop_body
      %s29 = ssub.s32 %s24, 1
      %s30 = ssub.s32 %s24, 2
      %s31 = sadd.s32 %s24, 1
      %s32 = ssub.s32 %s24, %s31
      %p33 = scmp.eq.s32.totalorder %s32, 0
      %s35 = sadd.s32 %s34, 1
      %s36 = scalar_select %p33, %s34, %s35
      %p39 = pneg %p33
      %p40 = scmp.eq.s32.totalorder %s24, 1
      %p41 = por %p39, %p40
      %p42 = scmp.ne.s32.totalorder %s34, %s37
      %p43 = scmp.eq.s32.totalorder %s24, 0
      %p44 = por %p42, %p43
      %p45 = scmp.ne.s32.totalorder %s34, %s37
      %p46 = scmp.eq.s32.totalorder %s29, 1
      %p47 = por %p45, %p46
      %p48 = scmp.ne.s32.totalorder %s37, %s38
      %p49 = scmp.eq.s32.totalorder %s29, 0
      %p50 = por %p48, %p49
      %p51 = scmp.ne.s32.totalorder %s37, %s38
      %p52 = scmp.eq.s32.totalorder %s30, 1
      %p53 = por %p51, %p52
      %p55 = scmp.ne.s32.totalorder %s38, %s54
      %p56 = scmp.eq.s32.totalorder %s30, 0
      %p57 = por %p55, %p56
      %s59 = sadd.s32 %s58, 1
      %p62 = scmp.eq.s32.totalorder %s24, 1
      %p63 = scmp.ne.s32.totalorder %s58, %s60
      %p64 = scmp.eq.s32.totalorder %s24, 0
      %p65 = por %p63, %p64
      %p66 = scmp.ne.s32.totalorder %s58, %s60
      %p67 = scmp.eq.s32.totalorder %s29, 1
      %p68 = por %p66, %p67
      %p69 = scmp.ne.s32.totalorder %s60, %s61
      %p70 = scmp.eq.s32.totalorder %s29, 0
      %p71 = por %p69, %p70
      %p72 = scmp.ne.s32.totalorder %s60, %s61
      %p73 = scmp.eq.s32.totalorder %s30, 1
      %p74 = por %p72, %p73
      %p76 = scmp.ne.s32.totalorder %s61, %s75
      %p77 = scmp.eq.s32.totalorder %s30, 0
      %p78 = por %p76, %p77
      %s80 = sadd.s32 %s79, 1
      %p83 = scmp.eq.s32.totalorder %s24, 1
      %p84 = scmp.ne.s32.totalorder %s79, %s81
      %p85 = scmp.eq.s32.totalorder %s24, 0
      %p86 = por %p84, %p85
      %p87 = scmp.ne.s32.totalorder %s79, %s81
      %p88 = scmp.eq.s32.totalorder %s29, 1
      %p89 = por %p87, %p88
      %p90 = scmp.ne.s32.totalorder %s81, %s82
      %p91 = scmp.eq.s32.totalorder %s29, 0
      %p92 = por %p90, %p91
      %p93 = scmp.ne.s32.totalorder %s81, %s82
      %p94 = scmp.eq.s32.totalorder %s30, 1
      %p95 = por %p93, %p94
      %p97 = scmp.ne.s32.totalorder %s82, %s96
      %p98 = scmp.eq.s32.totalorder %s30, 0
      %p99 = por %p97, %p98
      %s101 = sadd.s32 %s100, 1
      %p104 = scmp.eq.s32.totalorder %s24, 1
      %p105 = scmp.ne.s32.totalorder %s100, %s102
      %p106 = scmp.eq.s32.totalorder %s24, 0
      %p107 = por %p105, %p106
      %p108 = scmp.ne.s32.totalorder %s100, %s102
      %p109 = scmp.eq.s32.totalorder %s29, 1
      %p110 = por %p108, %p109
      %p111 = scmp.ne.s32.totalorder %s102, %s103
      %p112 = scmp.eq.s32.totalorder %s29, 0
      %p113 = por %p111, %p112
      %p114 = scmp.ne.s32.totalorder %s102, %s103
      %p115 = scmp.eq.s32.totalorder %s30, 1
      %p116 = por %p114, %p115
      %p118 = scmp.ne.s32.totalorder %s103, %s117
      %p119 = scmp.eq.s32.totalorder %s30, 0
      %p120 = por %p118, %p119
      %s122 = sadd.s32 %s121, 1
      %p125 = scmp.eq.s32.totalorder %s24, 1
      %p126 = scmp.ne.s32.totalorder %s121, %s123
      %p127 = scmp.eq.s32.totalorder %s24, 0
      %p128 = por %p126, %p127
      %p129 = scmp.ne.s32.totalorder %s121, %s123
      %p130 = scmp.eq.s32.totalorder %s29, 1
      %p131 = por %p129, %p130
      %p132 = scmp.ne.s32.totalorder %s123, %s124
      %p133 = scmp.eq.s32.totalorder %s29, 0
      %p134 = por %p132, %p133
      %p135 = scmp.ne.s32.totalorder %s123, %s124
      %p136 = scmp.eq.s32.totalorder %s30, 1
      %p137 = por %p135, %p136
      %p139 = scmp.ne.s32.totalorder %s124, %s138
      %p140 = scmp.eq.s32.totalorder %s30, 0
      %p141 = por %p139, %p140
      %s143 = sadd.s32 %s142, 1
      %p146 = scmp.eq.s32.totalorder %s24, 1
      %p147 = scmp.ne.s32.totalorder %s142, %s144
      %p148 = scmp.eq.s32.totalorder %s24, 0
      %p149 = por %p147, %p148
      %p150 = scmp.ne.s32.totalorder %s142, %s144
      %p151 = scmp.eq.s32.totalorder %s29, 1
      %p152 = por %p150, %p151
      %p153 = scmp.ne.s32.totalorder %s144, %s145
      %p154 = scmp.eq.s32.totalorder %s29, 0
      %p155 = por %p153, %p154
      %p156 = scmp.ne.s32.totalorder %s144, %s145
      %p157 = scmp.eq.s32.totalorder %s30, 1
      %p158 = por %p156, %p157
      %p160 = scmp.ne.s32.totalorder %s145, %s159
      %p161 = scmp.eq.s32.totalorder %s30, 0
      %p162 = por %p160, %p161
      %s164 = sadd.s32 %s163, 1
      %p167 = scmp.eq.s32.totalorder %s24, 1
      %p168 = scmp.ne.s32.totalorder %s163, %s165
      %p169 = scmp.eq.s32.totalorder %s24, 0
      %p170 = por %p168, %p169
      %p171 = scmp.ne.s32.totalorder %s163, %s165
      %p172 = scmp.eq.s32.totalorder %s29, 1
      %p173 = por %p171, %p172
      %p174 = scmp.ne.s32.totalorder %s165, %s166
      %p175 = scmp.eq.s32.totalorder %s29, 0
      %p176 = por %p174, %p175
      %p177 = scmp.ne.s32.totalorder %s165, %s166
      %p178 = scmp.eq.s32.totalorder %s30, 1
      %p179 = por %p177, %p178
      %p181 = scmp.ne.s32.totalorder %s166, %s180
      %p182 = scmp.eq.s32.totalorder %s30, 0
      %p183 = por %p181, %p182
      %s185 = sadd.s32 %s184, 1
      %p188 = scmp.eq.s32.totalorder %s24, 1
      %p189 = scmp.ne.s32.totalorder %s184, %s186
      %p190 = scmp.eq.s32.totalorder %s24, 0
      %p191 = por %p189, %p190
      %p192 = scmp.ne.s32.totalorder %s184, %s186
      %p193 = scmp.eq.s32.totalorder %s29, 1
      %p194 = por %p192, %p193
      %p195 = scmp.ne.s32.totalorder %s186, %s187
      %p196 = scmp.eq.s32.totalorder %s29, 0
      %p197 = por %p195, %p196
      %p198 = scmp.ne.s32.totalorder %s186, %s187
      %p199 = scmp.eq.s32.totalorder %s30, 1
      %p200 = por %p198, %p199
      %p202 = scmp.ne.s32.totalorder %s187, %s201
      %p203 = scmp.eq.s32.totalorder %s30, 0
      %p204 = por %p202, %p203
      %s206 = sadd.s32 %s205, 1
      %p209 = scmp.eq.s32.totalorder %s24, 1
      %p210 = scmp.ne.s32.totalorder %s205, %s207
      %p211 = scmp.eq.s32.totalorder %s24, 0
      %p212 = por %p210, %p211
      %p213 = scmp.ne.s32.totalorder %s205, %s207
      %p214 = scmp.eq.s32.totalorder %s29, 1
      %p215 = por %p213, %p214
      %p216 = scmp.ne.s32.totalorder %s207, %s208
      %p217 = scmp.eq.s32.totalorder %s29, 0
      %p218 = por %p216, %p217
      %p219 = scmp.ne.s32.totalorder %s207, %s208
      %p220 = scmp.eq.s32.totalorder %s30, 1
      %p221 = por %p219, %p220
      %p223 = scmp.ne.s32.totalorder %s208, %s222
      %p224 = scmp.eq.s32.totalorder %s30, 0
      %p225 = por %p223, %p224
      %s227 = sadd.s32 %s226, 1
      %p230 = scmp.eq.s32.totalorder %s24, 1
      %p231 = scmp.ne.s32.totalorder %s226, %s228
      %p232 = scmp.eq.s32.totalorder %s24, 0
      %p233 = por %p231, %p232
      %p234 = scmp.ne.s32.totalorder %s226, %s228
      %p235 = scmp.eq.s32.totalorder %s29, 1
      %p236 = por %p234, %p235
      %p237 = scmp.ne.s32.totalorder %s228, %s229
      %p238 = scmp.eq.s32.totalorder %s29, 0
      %p239 = por %p237, %p238
      %p240 = scmp.ne.s32.totalorder %s228, %s229
      %p241 = scmp.eq.s32.totalorder %s30, 1
      %p242 = por %p240, %p241
      %p244 = scmp.ne.s32.totalorder %s229, %s243
      %p245 = scmp.eq.s32.totalorder %s30, 0
      %p246 = por %p244, %p245
      %s248 = sadd.s32 %s247, 1
      %p251 = scmp.eq.s32.totalorder %s24, 1
      %p252 = scmp.ne.s32.totalorder %s247, %s249
      %p253 = scmp.eq.s32.totalorder %s24, 0
      %p254 = por %p252, %p253
      %p255 = scmp.ne.s32.totalorder %s247, %s249
      %p256 = scmp.eq.s32.totalorder %s29, 1
      %p257 = por %p255, %p256
      %p258 = scmp.ne.s32.totalorder %s249, %s250
      %p259 = scmp.eq.s32.totalorder %s29, 0
      %p260 = por %p258, %p259
      %p261 = scmp.ne.s32.totalorder %s249, %s250
      %p262 = scmp.eq.s32.totalorder %s30, 1
      %p263 = por %p261, %p262
      %p265 = scmp.ne.s32.totalorder %s250, %s264
      %p266 = scmp.eq.s32.totalorder %s30, 0
      %p267 = por %p265, %p266
      %s269 = sadd.s32 %s268, 1
      %p272 = scmp.eq.s32.totalorder %s24, 1
      %p273 = scmp.ne.s32.totalorder %s268, %s270
      %p274 = scmp.eq.s32.totalorder %s24, 0
      %p275 = por %p273, %p274
      %p276 = scmp.ne.s32.totalorder %s268, %s270
      %p277 = scmp.eq.s32.totalorder %s29, 1
      %p278 = por %p276, %p277
      %p279 = scmp.ne.s32.totalorder %s270, %s271
      %p280 = scmp.eq.s32.totalorder %s29, 0
      %p281 = por %p279, %p280
      %p282 = scmp.ne.s32.totalorder %s270, %s271
      %p283 = scmp.eq.s32.totalorder %s30, 1
      %p284 = por %p282, %p283
      %p286 = scmp.ne.s32.totalorder %s271, %s285
      %p287 = scmp.eq.s32.totalorder %s30, 0
      %p288 = por %p286, %p287
      %s290 = sadd.s32 %s289, 1
      %p293 = scmp.eq.s32.totalorder %s24, 1
      %p294 = scmp.ne.s32.totalorder %s289, %s291
      %p295 = scmp.eq.s32.totalorder %s24, 0
      %p296 = por %p294, %p295
      %p297 = scmp.ne.s32.totalorder %s289, %s291
      %p298 = scmp.eq.s32.totalorder %s29, 1
      %p299 = por %p297, %p298
      %p300 = scmp.ne.s32.totalorder %s291, %s292
      %p301 = scmp.eq.s32.totalorder %s29, 0
      %p302 = por %p300, %p301
      %p303 = scmp.ne.s32.totalorder %s291, %s292
      %p304 = scmp.eq.s32.totalorder %s30, 1
      %p305 = por %p303, %p304
      %p307 = scmp.ne.s32.totalorder %s292, %s306
      %p308 = scmp.eq.s32.totalorder %s30, 0
      %p309 = por %p307, %p308
      %s311 = sadd.s32 %s310, 1
      %p314 = scmp.eq.s32.totalorder %s24, 1
      %p315 = scmp.ne.s32.totalorder %s310, %s312
      %p316 = scmp.eq.s32.totalorder %s24, 0
      %p317 = por %p315, %p316
      %p318 = scmp.ne.s32.totalorder %s310, %s312
      %p319 = scmp.eq.s32.totalorder %s29, 1
      %p320 = por %p318, %p319
      %p321 = scmp.ne.s32.totalorder %s312, %s313
      %p322 = scmp.eq.s32.totalorder %s29, 0
      %p323 = por %p321, %p322
      %p324 = scmp.ne.s32.totalorder %s312, %s313
      %p325 = scmp.eq.s32.totalorder %s30, 1
      %p326 = por %p324, %p325
      %p328 = scmp.ne.s32.totalorder %s313, %s327
      %p329 = scmp.eq.s32.totalorder %s30, 0
      %p330 = por %p328, %p329
      %s332 = sadd.s32 %s331, 1
      %p335 = scmp.eq.s32.totalorder %s24, 1
      %p336 = scmp.ne.s32.totalorder %s331, %s333
      %p337 = scmp.eq.s32.totalorder %s24, 0
      %p338 = por %p336, %p337
      %p339 = scmp.ne.s32.totalorder %s331, %s333
      %p340 = scmp.eq.s32.totalorder %s29, 1
      %p341 = por %p339, %p340
      %p342 = scmp.ne.s32.totalorder %s333, %s334
      %p343 = scmp.eq.s32.totalorder %s29, 0
      %p344 = por %p342, %p343
      %p345 = scmp.ne.s32.totalorder %s333, %s334
      %p346 = scmp.eq.s32.totalorder %s30, 1
      %p347 = por %p345, %p346
      %p349 = scmp.ne.s32.totalorder %s334, %s348
      %p350 = scmp.eq.s32.totalorder %s30, 0
      %p351 = por %p349, %p350
      %s352 = ssub.s32 %s24, %s31
      %p353 = scmp.eq.s32.totalorder %s352, 0
      %s355 = sadd.s32 %s354, 1
      %s356 = scalar_select %p353, %s354, %s355
      %p359 = pneg %p353
      %p360 = scmp.eq.s32.totalorder %s24, 1
      %p361 = por %p359, %p360
      %p362 = scmp.ne.s32.totalorder %s354, %s357
      %p363 = scmp.eq.s32.totalorder %s24, 0
      %p364 = por %p362, %p363
      %p365 = scmp.ne.s32.totalorder %s354, %s357
      %p366 = scmp.eq.s32.totalorder %s29, 1
      %p367 = por %p365, %p366
      %p368 = scmp.ne.s32.totalorder %s357, %s358
      %p369 = scmp.eq.s32.totalorder %s29, 0
      %p370 = por %p368, %p369
      %p371 = scmp.ne.s32.totalorder %s357, %s358
      %p372 = scmp.eq.s32.totalorder %s30, 1
      %p373 = por %p371, %p372
      %p375 = scmp.ne.s32.totalorder %s358, %s374
      %p376 = scmp.eq.s32.totalorder %s30, 0
      %p377 = por %p375, %p376
      %p378 = scmp.le.s32.totalorder 1, %s24
      %p379 = scmp.lt.s32.totalorder %s24, 3
      %p380 = pnand %p378, %p379
      %p381 = pneg %p380
      // Predicated region
      $region9: #{convnet_forward.1} parent=5 // pred_check
        _
      $region10: #{convnet_forward.1} parent=5 // pred_check_branch
        %383 = sbr.rel (%p380) target = $region12
      $region11: #{convnet_forward.1} parent=5 // pred_region
        %s384 = ssub.s32 %s24, 1
        // Predicated region
        $region13: #{convnet_forward.1} parent=11 // pred_check
          %p385 = pneg %p71
        $region14: #{convnet_forward.1} parent=11 // pred_check_branch
          %387 = sbr.rel (%p385) target = $region16
        $region15: #{convnet_forward.1} parent=11 // pred_region
          _
        $region16: #{convnet_forward.1} parent=11 // pred_fallthru
          _
        // Predicated region
        $region17: #{convnet_forward.1} parent=11 // pred_check
          %p388 = pneg %p92
        $region18: #{convnet_forward.1} parent=11 // pred_check_branch
          %390 = sbr.rel (%p388) target = $region20
        $region19: #{convnet_forward.1} parent=11 // pred_region
          _
        $region20: #{convnet_forward.1} parent=11 // pred_fallthru
          _
        // Predicated region
        $region21: #{convnet_forward.1} parent=11 // pred_check
          %p391 = pneg %p113
        $region22: #{convnet_forward.1} parent=11 // pred_check_branch
          %393 = sbr.rel (%p391) target = $region24
        $region23: #{convnet_forward.1} parent=11 // pred_region
          _
        $region24: #{convnet_forward.1} parent=11 // pred_fallthru
          _
        // Predicated region
        $region25: #{convnet_forward.1} parent=11 // pred_check
          %p394 = pneg %p134
        $region26: #{convnet_forward.1} parent=11 // pred_check_branch
          %396 = sbr.rel (%p394) target = $region28
        $region27: #{convnet_forward.1} parent=11 // pred_region
          _
        $region28: #{convnet_forward.1} parent=11 // pred_fallthru
          _
        // Predicated region
        $region29: #{convnet_forward.1} parent=11 // pred_check
          %p397 = pneg %p155
        $region30: #{convnet_forward.1} parent=11 // pred_check_branch
          %399 = sbr.rel (%p397) target = $region32
        $region31: #{convnet_forward.1} parent=11 // pred_region
          _
        $region32: #{convnet_forward.1} parent=11 // pred_fallthru
          _
        // Predicated region
        $region33: #{convnet_forward.1} parent=11 // pred_check
          %p400 = pneg %p176
        $region34: #{convnet_forward.1} parent=11 // pred_check_branch
          %402 = sbr.rel (%p400) target = $region36
        $region35: #{convnet_forward.1} parent=11 // pred_region
          _
        $region36: #{convnet_forward.1} parent=11 // pred_fallthru
          _
        // Predicated region
        $region37: #{convnet_forward.1} parent=11 // pred_check
          %p403 = pneg %p197
        $region38: #{convnet_forward.1} parent=11 // pred_check_branch
          %405 = sbr.rel (%p403) target = $region40
        $region39: #{convnet_forward.1} parent=11 // pred_region
          _
        $region40: #{convnet_forward.1} parent=11 // pred_fallthru
          _
        // Predicated region
        $region41: #{convnet_forward.1} parent=11 // pred_check
          %p406 = pneg %p218
        $region42: #{convnet_forward.1} parent=11 // pred_check_branch
          %408 = sbr.rel (%p406) target = $region44
        $region43: #{convnet_forward.1} parent=11 // pred_region
          _
        $region44: #{convnet_forward.1} parent=11 // pred_fallthru
          _
        // Predicated region
        $region45: #{convnet_forward.1} parent=11 // pred_check
          %p409 = pneg %p239
        $region46: #{convnet_forward.1} parent=11 // pred_check_branch
          %411 = sbr.rel (%p409) target = $region48
        $region47: #{convnet_forward.1} parent=11 // pred_region
          _
        $region48: #{convnet_forward.1} parent=11 // pred_fallthru
          _
        // Predicated region
        $region49: #{convnet_forward.1} parent=11 // pred_check
          %p412 = pneg %p260
        $region50: #{convnet_forward.1} parent=11 // pred_check_branch
          %414 = sbr.rel (%p412) target = $region52
        $region51: #{convnet_forward.1} parent=11 // pred_region
          _
        $region52: #{convnet_forward.1} parent=11 // pred_fallthru
          _
        // Predicated region
        $region53: #{convnet_forward.1} parent=11 // pred_check
          %p415 = pneg %p281
        $region54: #{convnet_forward.1} parent=11 // pred_check_branch
          %417 = sbr.rel (%p415) target = $region56
        $region55: #{convnet_forward.1} parent=11 // pred_region
          _
        $region56: #{convnet_forward.1} parent=11 // pred_fallthru
          _
        // Predicated region
        $region57: #{convnet_forward.1} parent=11 // pred_check
          %p418 = pneg %p302
        $region58: #{convnet_forward.1} parent=11 // pred_check_branch
          %420 = sbr.rel (%p418) target = $region60
        $region59: #{convnet_forward.1} parent=11 // pred_region
          _
        $region60: #{convnet_forward.1} parent=11 // pred_fallthru
          _
        // Predicated region
        $region61: #{convnet_forward.1} parent=11 // pred_check
          %p421 = pneg %p323
        $region62: #{convnet_forward.1} parent=11 // pred_check_branch
          %423 = sbr.rel (%p421) target = $region64
        $region63: #{convnet_forward.1} parent=11 // pred_region
          _
        $region64: #{convnet_forward.1} parent=11 // pred_fallthru
          _
        // Predicated region
        $region65: #{convnet_forward.1} parent=11 // pred_check
          %p424 = pneg %p344
        $region66: #{convnet_forward.1} parent=11 // pred_check_branch
          %426 = sbr.rel (%p424) target = $region68
        $region67: #{convnet_forward.1} parent=11 // pred_region
          _
        $region68: #{convnet_forward.1} parent=11 // pred_fallthru
          _
      $region12: #{convnet_forward.1} parent=5 // pred_fallthru
        _
      %p427 = scmp.lt.s32.totalorder %s24, 2
      // Predicated region
      $region69: #{convnet_forward.1} parent=5 // pred_check
        %p428 = pneg %p427
      $region70: #{convnet_forward.1} parent=5 // pred_check_branch
        %430 = sbr.rel (%p428) target = $region72
      $region71: #{convnet_forward.1} parent=5 // pred_region
        // Predicated region
        $region73: #{convnet_forward.1} parent=71 // pred_check
          %p431 = pneg %p44
        $region74: #{convnet_forward.1} parent=71 // pred_check_branch
          %433 = sbr.rel (%p431) target = $region76
        $region75: #{convnet_forward.1} parent=71 // pred_region
          %s434 = smul.u32 32, %s24
          %p435 = scmp.lt.s32.totalorder %s434, 63
          %s436 = scalar_select %p435, %s434, 63
          %s437 = smul.addr %s436, 4
          %s438 = scalar_lea.vmem %s0, %s437
          %s439 = smul.u32 32, %s24
        $region76: #{convnet_forward.1} parent=71 // pred_fallthru
          _
      $region72: #{convnet_forward.1} parent=5 // pred_fallthru
        _
      %p440 = scmp.le.s32.totalorder 1, %s24
      %p441 = scmp.lt.s32.totalorder %s24, 3
      %p442 = pnand %p440, %p441
      %p443 = pneg %p442
      // Predicated region
      $region77: #{convnet_forward.1} parent=5 // pred_check
        _
      $region78: #{convnet_forward.1} parent=5 // pred_check_branch
        %445 = sbr.rel (%p442) target = $region80
      $region79: #{convnet_forward.1} parent=5 // pred_region
        %s446 = ssub.s32 %s24, 1
        %s447 = smul.u32 32, %s29
        %p448 = scmp.lt.s32.totalorder %s447, 63
        %s449 = scalar_select %p448, %s447, 63
        %s450 = smul.addr %s449, 4
        %s451 = scalar_lea.vmem %s0, %s450
        %p452 = pneg %p50
        %p453 = pneg %p47
        %p454 = pneg %p71
        %p455 = pneg %p68
        %p456 = pneg %p92
        %p457 = pneg %p89
        %p458 = pneg %p113
        %p459 = pneg %p110
        %p460 = pneg %p134
        %p461 = pneg %p131
        %p462 = pneg %p155
        %p463 = pneg %p152
        %p464 = pneg %p176
        %p465 = pneg %p173
        %p466 = pneg %p197
        %p467 = pneg %p194
        %p468 = pneg %p218
        %p469 = pneg %p215
        %p470 = pneg %p239
        %p471 = pneg %p236
        %p472 = pneg %p260
        %p473 = pneg %p257
        %p474 = pneg %p281
        %p475 = pneg %p278
        %p476 = pneg %p302
        %p477 = pneg %p299
        %p478 = pneg %p323
        %p479 = pneg %p320
        %p480 = pneg %p344
        %p481 = pneg %p341
        %p482 = pneg %p370
        %p483 = pneg %p367
        %s484 = sand.u32 %s357, 1
        %s485 = scalar_lea.sflag [#allocation5], %s484
        %s486 = sand.u32 %s357, 1
        %s487 = smul.addr %s486, 8
        %s488 = scalar_lea.vmem [#allocation4], %s487
        %s489 = smul.u32 32, %s29
        %p490 = scmp.lt.s32.totalorder %s489, 63
        %s491 = scalar_select %p490, %s489, 63
        %s492 = smul.addr %s491, 4
        %s493 = scalar_lea.vmem %s0, %s492
        %s494 = smul.u32 32, %s29
        %v496 = vld [vmem:[%s493] sm:$0xf]
        %v497 = vld [vmem:[%s493 + $0x4] sm:$0xf]
        %v498 = vld [vmem:[%s493 + $0x8] sm:$0xf]
        %v499 = vld [vmem:[%s493 + $0xc] sm:$0xf]
        %v500 = vld [vmem:[%s493 + $0x10] sm:$0xf]
        %v501 = vld [vmem:[%s493 + $0x14] sm:$0xf]
        %v502 = vld [vmem:[%s493 + $0x18] sm:$0xf]
        %v503 = vld [vmem:[%s493 + $0x1c] sm:$0xf]
        %v504 = vld [vmem:[%s493 + $0x20] sm:$0xf]
        %v505 = vld [vmem:[%s493 + $0x24] sm:$0xf]
        %v506 = vld [vmem:[%s493 + $0x28] sm:$0xf]
        %v507 = vld [vmem:[%s493 + $0x2c] sm:$0xf]
        %v508 = vld [vmem:[%s493 + $0x30] sm:$0xf]
        %v509 = vld [vmem:[%s493 + $0x34] sm:$0xf]
        %v510 = vld [vmem:[%s493 + $0x38] sm:$0xf]
        %v511 = vld [vmem:[%s493 + $0x3c] sm:$0xf]
        %v512 = vld [vmem:[%s493 + $0x40] sm:$0xf]
        %v513 = vld [vmem:[%s493 + $0x44] sm:$0xf]
        %v514 = vld [vmem:[%s493 + $0x48] sm:$0xf]
        %v515 = vld [vmem:[%s493 + $0x4c] sm:$0xf]
        %v516 = vld [vmem:[%s493 + $0x50] sm:$0xf]
        %v517 = vld [vmem:[%s493 + $0x54] sm:$0xf]
        %v518 = vld [vmem:[%s493 + $0x58] sm:$0xf]
        %v519 = vld [vmem:[%s493 + $0x5c] sm:$0xf]
        %v520 = vld [vmem:[%s493 + $0x60] sm:$0xf]
        %v521 = vld [vmem:[%s493 + $0x64] sm:$0xf]
        %v522 = vld [vmem:[%s493 + $0x68] sm:$0xf]
        %v523 = vld [vmem:[%s493 + $0x6c] sm:$0xf]
        %v524 = vld [vmem:[%s493 + $0x70] sm:$0xf]
        %v525 = vld [vmem:[%s493 + $0x74] sm:$0xf]
        %v526 = vld [vmem:[%s493 + $0x78] sm:$0xf]
        %v527 = vld [vmem:[%s493 + $0x7c] sm:$0xf]
        %v528 = vld [vmem:[%s2] sm:$0x3]
        %v530 = vlaneseq
        %v531 = vshrl.u32 %v530, 7
        %v532 = vsub.s32 0, %v531
        %v533 = vrot.slane %v528, %v532
        %v534 = vlaneseq
        %v535 = vshrl.u32 %v534, 7
        %v536 = vsub.s32 1, %v535
        %v537 = vrot.slane %v528, %v536
        %540 = vst [vmem:[#allocation2] sm:$0xff] %v533
        %541 = vst [vmem:[#allocation2 + $0x8] sm:$0xff] %v537
        %542 = vst [vmem:[#allocation2 + $0x10] sm:$0xff] %v533
        %543 = vst [vmem:[#allocation2 + $0x18] sm:$0xff] %v537
        %544 = vst [vmem:[#allocation2 + $0x20] sm:$0xff] %v533
        %545 = vst [vmem:[#allocation2 + $0x28] sm:$0xff] %v537
        %546 = vst [vmem:[#allocation2 + $0x30] sm:$0xff] %v533
        %547 = vst [vmem:[#allocation2 + $0x38] sm:$0xff] %v537
        %548 = vst [vmem:[#allocation2 + $0x40] sm:$0xff] %v533
        %549 = vst [vmem:[#allocation2 + $0x48] sm:$0xff] %v537
        %550 = vst [vmem:[#allocation2 + $0x50] sm:$0xff] %v533
        %551 = vst [vmem:[#allocation2 + $0x58] sm:$0xff] %v537
        %552 = vst [vmem:[#allocation2 + $0x60] sm:$0xff] %v533
        %553 = vst [vmem:[#allocation2 + $0x68] sm:$0xff] %v537
        %554 = vst [vmem:[#allocation2 + $0x70] sm:$0xff] %v533
        %555 = vst [vmem:[#allocation2 + $0x78] sm:$0xff] %v537
        %556 = vst [vmem:[#allocation2 + $0x80] sm:$0xff] %v533
        %557 = vst [vmem:[#allocation2 + $0x88] sm:$0xff] %v537
        %558 = vst [vmem:[#allocation2 + $0x90] sm:$0xff] %v533
        %559 = vst [vmem:[#allocation2 + $0x98] sm:$0xff] %v537
        %560 = vst [vmem:[#allocation2 + $0xa0] sm:$0xff] %v533
        %561 = vst [vmem:[#allocation2 + $0xa8] sm:$0xff] %v537
        %562 = vst [vmem:[#allocation2 + $0xb0] sm:$0xff] %v533
        %563 = vst [vmem:[#allocation2 + $0xb8] sm:$0xff] %v537
        %564 = vst [vmem:[#allocation2 + $0xc0] sm:$0xff] %v533
        %565 = vst [vmem:[#allocation2 + $0xc8] sm:$0xff] %v537
        %566 = vst [vmem:[#allocation2 + $0xd0] sm:$0xff] %v533
        %567 = vst [vmem:[#allocation2 + $0xd8] sm:$0xff] %v537
        %568 = vst [vmem:[#allocation2 + $0xe0] sm:$0xff] %v533
        %569 = vst [vmem:[#allocation2 + $0xe8] sm:$0xff] %v537
        %570 = vst [vmem:[#allocation2 + $0xf0] sm:$0xff] %v533
        %571 = vst [vmem:[#allocation2 + $0xf8] sm:$0xff] %v537
        %572 = vst [vmem:[#allocation2 + $0x100] sm:$0xff] %v533
        %573 = vst [vmem:[#allocation2 + $0x108] sm:$0xff] %v537
        %574 = vst [vmem:[#allocation2 + $0x110] sm:$0xff] %v533
        %575 = vst [vmem:[#allocation2 + $0x118] sm:$0xff] %v537
        %576 = vst [vmem:[#allocation2 + $0x120] sm:$0xff] %v533
        %577 = vst [vmem:[#allocation2 + $0x128] sm:$0xff] %v537
        %578 = vst [vmem:[#allocation2 + $0x130] sm:$0xff] %v533
        %579 = vst [vmem:[#allocation2 + $0x138] sm:$0xff] %v537
        %580 = vst [vmem:[#allocation2 + $0x140] sm:$0xff] %v533
        %581 = vst [vmem:[#allocation2 + $0x148] sm:$0xff] %v537
        %582 = vst [vmem:[#allocation2 + $0x150] sm:$0xff] %v533
        %583 = vst [vmem:[#allocation2 + $0x158] sm:$0xff] %v537
        %584 = vst [vmem:[#allocation2 + $0x160] sm:$0xff] %v533
        %585 = vst [vmem:[#allocation2 + $0x168] sm:$0xff] %v537
        %586 = vst [vmem:[#allocation2 + $0x170] sm:$0xff] %v533
        %587 = vst [vmem:[#allocation2 + $0x178] sm:$0xff] %v537
        %588 = vst [vmem:[#allocation2 + $0x180] sm:$0xff] %v533
        %589 = vst [vmem:[#allocation2 + $0x188] sm:$0xff] %v537
        %590 = vst [vmem:[#allocation2 + $0x190] sm:$0xff] %v533
        %591 = vst [vmem:[#allocation2 + $0x198] sm:$0xff] %v537
        %592 = vst [vmem:[#allocation2 + $0x1a0] sm:$0xff] %v533
        %593 = vst [vmem:[#allocation2 + $0x1a8] sm:$0xff] %v537
        %594 = vst [vmem:[#allocation2 + $0x1b0] sm:$0xff] %v533
        %595 = vst [vmem:[#allocation2 + $0x1b8] sm:$0xff] %v537
        %596 = vst [vmem:[#allocation2 + $0x1c0] sm:$0xff] %v533
        %597 = vst [vmem:[#allocation2 + $0x1c8] sm:$0xff] %v537
        %598 = vst [vmem:[#allocation2 + $0x1d0] sm:$0xff] %v533
        %599 = vst [vmem:[#allocation2 + $0x1d8] sm:$0xff] %v537
        %600 = vst [vmem:[#allocation2 + $0x1e0] sm:$0xff] %v533
        %601 = vst [vmem:[#allocation2 + $0x1e8] sm:$0xff] %v537
        %602 = vst [vmem:[#allocation2 + $0x1f0] sm:$0xf] %v533
        %603 = vst [vmem:[#allocation2 + $0x1f8] sm:$0xf] %v537
        %v604 = vld [vmem:[#allocation2] sm:$0xff]
        %v605 = vld [vmem:[#allocation2 + $0x8] sm:$0xff]
        %v606 = vld [vmem:[#allocation2 + $0x10] sm:$0xff]
        %v607 = vld [vmem:[#allocation2 + $0x18] sm:$0xff]
        %v608 = vld [vmem:[#allocation2 + $0x20] sm:$0xff]
        %v609 = vld [vmem:[#allocation2 + $0x28] sm:$0xff]
        %v610 = vld [vmem:[#allocation2 + $0x30] sm:$0xff]
        %v611 = vld [vmem:[#allocation2 + $0x38] sm:$0xff]
        %v612 = vld [vmem:[#allocation2 + $0x40] sm:$0xff]
        %v613 = vld [vmem:[#allocation2 + $0x48] sm:$0xff]
        %v614 = vld [vmem:[#allocation2 + $0x50] sm:$0xff]
        %v615 = vld [vmem:[#allocation2 + $0x58] sm:$0xff]
        %v616 = vld [vmem:[#allocation2 + $0x60] sm:$0xff]
        %v617 = vld [vmem:[#allocation2 + $0x68] sm:$0xff]
        %v618 = vld [vmem:[#allocation2 + $0x70] sm:$0xff]
        %v619 = vld [vmem:[#allocation2 + $0x78] sm:$0xff]
        %v620 = vld [vmem:[#allocation2 + $0x80] sm:$0xff]
        %v621 = vld [vmem:[#allocation2 + $0x88] sm:$0xff]
        %v622 = vld [vmem:[#allocation2 + $0x90] sm:$0xff]
        %v623 = vld [vmem:[#allocation2 + $0x98] sm:$0xff]
        %v624 = vld [vmem:[#allocation2 + $0xa0] sm:$0xff]
        %v625 = vld [vmem:[#allocation2 + $0xa8] sm:$0xff]
        %v626 = vld [vmem:[#allocation2 + $0xb0] sm:$0xff]
        %v627 = vld [vmem:[#allocation2 + $0xb8] sm:$0xff]
        %v628 = vld [vmem:[#allocation2 + $0xc0] sm:$0xff]
        %v629 = vld [vmem:[#allocation2 + $0xc8] sm:$0xff]
        %v630 = vld [vmem:[#allocation2 + $0xd0] sm:$0xff]
        %v631 = vld [vmem:[#allocation2 + $0xd8] sm:$0xff]
        %v632 = vld [vmem:[#allocation2 + $0xe0] sm:$0xff]
        %v633 = vld [vmem:[#allocation2 + $0xe8] sm:$0xff]
        %v634 = vld [vmem:[#allocation2 + $0xf0] sm:$0xff]
        %v635 = vld [vmem:[#allocation2 + $0xf8] sm:$0xff]
        %v636 = vld [vmem:[#allocation2 + $0x100] sm:$0xff]
        %v637 = vld [vmem:[#allocation2 + $0x108] sm:$0xff]
        %v638 = vld [vmem:[#allocation2 + $0x110] sm:$0xff]
        %v639 = vld [vmem:[#allocation2 + $0x118] sm:$0xff]
        %v640 = vld [vmem:[#allocation2 + $0x120] sm:$0xff]
        %v641 = vld [vmem:[#allocation2 + $0x128] sm:$0xff]
        %v642 = vld [vmem:[#allocation2 + $0x130] sm:$0xff]
        %v643 = vld [vmem:[#allocation2 + $0x138] sm:$0xff]
        %v644 = vld [vmem:[#allocation2 + $0x140] sm:$0xff]
        %v645 = vld [vmem:[#allocation2 + $0x148] sm:$0xff]
        %v646 = vld [vmem:[#allocation2 + $0x150] sm:$0xff]
        %v647 = vld [vmem:[#allocation2 + $0x158] sm:$0xff]
        %v648 = vld [vmem:[#allocation2 + $0x160] sm:$0xff]
        %v649 = vld [vmem:[#allocation2 + $0x168] sm:$0xff]
        %v650 = vld [vmem:[#allocation2 + $0x170] sm:$0xff]
        %v651 = vld [vmem:[#allocation2 + $0x178] sm:$0xff]
        %v652 = vld [vmem:[#allocation2 + $0x180] sm:$0xff]
        %v653 = vld [vmem:[#allocation2 + $0x188] sm:$0xff]
        %v654 = vld [vmem:[#allocation2 + $0x190] sm:$0xff]
        %v655 = vld [vmem:[#allocation2 + $0x198] sm:$0xff]
        %v656 = vld [vmem:[#allocation2 + $0x1a0] sm:$0xff]
        %v657 = vld [vmem:[#allocation2 + $0x1a8] sm:$0xff]
        %v658 = vld [vmem:[#allocation2 + $0x1b0] sm:$0xff]
        %v659 = vld [vmem:[#allocation2 + $0x1b8] sm:$0xff]
        %v660 = vld [vmem:[#allocation2 + $0x1c0] sm:$0xff]
        %v661 = vld [vmem:[#allocation2 + $0x1c8] sm:$0xff]
        %v662 = vld [vmem:[#allocation2 + $0x1d0] sm:$0xff]
        %v663 = vld [vmem:[#allocation2 + $0x1d8] sm:$0xff]
        %v664 = vld [vmem:[#allocation2 + $0x1e0] sm:$0xff]
        %v665 = vld [vmem:[#allocation2 + $0x1e8] sm:$0xff]
        %v666 = vld [vmem:[#allocation2 + $0x1f0] sm:$0xf]
        %v667 = vld [vmem:[#allocation2 + $0x1f8] sm:$0xf]
        %v668 = vld [vmem:[%s1] sm:$0xff]
        %v669 = vld [vmem:[%s1 + $0x8] sm:$0xff]
        %v670 = vld [vmem:[%s1 + $0x10] sm:$0xff]
        %v671 = vld [vmem:[%s1 + $0x18] sm:$0xff]
        %v672 = vld [vmem:[%s1 + $0x20] sm:$0xff]
        %v673 = vld [vmem:[%s1 + $0x28] sm:$0xff]
        %v674 = vld [vmem:[%s1 + $0x30] sm:$0xff]
        %v675 = vld [vmem:[%s1 + $0x38] sm:$0xff]
        %v676 = vld [vmem:[%s1 + $0x40] sm:$0xff]
        %v677 = vld [vmem:[%s1 + $0x48] sm:$0xff]
        %v678 = vld [vmem:[%s1 + $0x50] sm:$0xff]
        %v679 = vld [vmem:[%s1 + $0x58] sm:$0xff]
        %v680 = vld [vmem:[%s1 + $0x60] sm:$0xff]
        %v681 = vld [vmem:[%s1 + $0x68] sm:$0xff]
        %v682 = vld [vmem:[%s1 + $0x70] sm:$0xff]
        %v683 = vld [vmem:[%s1 + $0x78] sm:$0xff]
        %v716 = vunpack.c.l.b16 %v496
        %v717 = vunpack.c.l.b16 %v497
        %v718 = vunpack.c.l.b16 %v498
        %v719 = vunpack.c.l.b16 %v499
        %v720 = vunpack.c.l.b16 %v500
        %v721 = vunpack.c.l.b16 %v501
        %v722 = vunpack.c.l.b16 %v502
        %v723 = vunpack.c.l.b16 %v503
        %v724 = vunpack.c.l.b16 %v504
        %v725 = vunpack.c.l.b16 %v505
        %v726 = vunpack.c.l.b16 %v506
        %v727 = vunpack.c.l.b16 %v507
        %v728 = vunpack.c.l.b16 %v508
        %v729 = vunpack.c.l.b16 %v509
        %v730 = vunpack.c.l.b16 %v510
        %v731 = vunpack.c.l.b16 %v511
        %v732 = vunpack.c.l.b16 %v512
        %v733 = vunpack.c.l.b16 %v513
        %v734 = vunpack.c.l.b16 %v514
        %v735 = vunpack.c.l.b16 %v515
        %v736 = vunpack.c.l.b16 %v516
        %v737 = vunpack.c.l.b16 %v517
        %v738 = vunpack.c.l.b16 %v518
        %v739 = vunpack.c.l.b16 %v519
        %v740 = vunpack.c.l.b16 %v520
        %v741 = vunpack.c.l.b16 %v521
        %v742 = vunpack.c.l.b16 %v522
        %v743 = vunpack.c.l.b16 %v523
        %v744 = vunpack.c.l.b16 %v524
        %v745 = vunpack.c.l.b16 %v525
        %v746 = vunpack.c.l.b16 %v526
        %v747 = vunpack.c.l.b16 %v527
        %v748 = vpack.c.b16 %v717, %v716
        %v749 = vpack.c.b16 %v719, %v718
        %v750 = vpack.c.b16 %v721, %v720
        %v751 = vpack.c.b16 %v723, %v722
        %v752 = vpack.c.b16 %v725, %v724
        %v753 = vpack.c.b16 %v727, %v726
        %v754 = vpack.c.b16 %v729, %v728
        %v755 = vpack.c.b16 %v731, %v730
        %v756 = vpack.c.b16 %v733, %v732
        %v757 = vpack.c.b16 %v735, %v734
        %v758 = vpack.c.b16 %v737, %v736
        %v759 = vpack.c.b16 %v739, %v738
        %v760 = vpack.c.b16 %v741, %v740
        %v761 = vpack.c.b16 %v743, %v742
        %v762 = vpack.c.b16 %v745, %v744
        %v763 = vpack.c.b16 %v747, %v746
        %v796 = vunpack.c.l.b16 %v668
        %v797 = vunpack.c.h.b16 %v668
        %v798 = vunpack.c.l.b16 %v669
        %v799 = vunpack.c.h.b16 %v669
        %v800 = vunpack.c.l.b16 %v670
        %v801 = vunpack.c.h.b16 %v670
        %v802 = vunpack.c.l.b16 %v671
        %v803 = vunpack.c.h.b16 %v671
        %v804 = vunpack.c.l.b16 %v672
        %v805 = vunpack.c.h.b16 %v672
        %v806 = vunpack.c.l.b16 %v673
        %v807 = vunpack.c.h.b16 %v673
        %v808 = vunpack.c.l.b16 %v674
        %v809 = vunpack.c.h.b16 %v674
        %v810 = vunpack.c.l.b16 %v675
        %v811 = vunpack.c.h.b16 %v675
        %v812 = vunpack.c.l.b16 %v676
        %v813 = vunpack.c.h.b16 %v676
        %v814 = vunpack.c.l.b16 %v677
        %v815 = vunpack.c.h.b16 %v677
        %v816 = vunpack.c.l.b16 %v678
        %v817 = vunpack.c.h.b16 %v678
        %v818 = vunpack.c.l.b16 %v679
        %v819 = vunpack.c.h.b16 %v679
        %v820 = vunpack.c.l.b16 %v680
        %v821 = vunpack.c.h.b16 %v680
        %v822 = vunpack.c.l.b16 %v681
        %v823 = vunpack.c.h.b16 %v681
        %v824 = vunpack.c.l.b16 %v682
        %v825 = vunpack.c.h.b16 %v682
        %v826 = vunpack.c.l.b16 %v683
        %v827 = vunpack.c.h.b16 %v683
        %v828 = vpack.c.b16 %v798, %v796
        %v829 = vpack.c.b16 %v799, %v797
        %v830 = vpack.c.b16 %v802, %v800
        %v831 = vpack.c.b16 %v803, %v801
        %v832 = vpack.c.b16 %v806, %v804
        %v833 = vpack.c.b16 %v807, %v805
        %v834 = vpack.c.b16 %v810, %v808
        %v835 = vpack.c.b16 %v811, %v809
        %v836 = vpack.c.b16 %v814, %v812
        %v837 = vpack.c.b16 %v815, %v813
        %v838 = vpack.c.b16 %v818, %v816
        %v839 = vpack.c.b16 %v819, %v817
        %v840 = vpack.c.b16 %v822, %v820
        %v841 = vpack.c.b16 %v823, %v821
        %v842 = vpack.c.b16 %v826, %v824
        %v843 = vpack.c.b16 %v827, %v825
        %860 = vmatprep.subr.bf16.mxu0 %v829
        %861 = vmatpush1.bf16.msra.mxu0 %v828
        %862 = vmatprep.subr.bf16.mxu0 %v831
        %863 = vmatpush1.bf16.msra.mxu0 %v830
        %864 = vmatprep.subr.bf16.mxu0 %v833
        %865 = vmatpush1.bf16.msra.mxu0 %v832
        %866 = vmatprep.subr.bf16.mxu0 %v835
        %867 = vmatpush1.bf16.msra.mxu0 %v834
        %868 = vmatprep.subr.bf16.mxu0 %v837
        %869 = vmatpush1.bf16.msra.mxu0 %v836
        %870 = vmatprep.subr.bf16.mxu0 %v839
        %871 = vmatpush1.bf16.msra.mxu0 %v838
        %872 = vmatprep.subr.bf16.mxu0 %v841
        %873 = vmatpush1.bf16.msra.mxu0 %v840
        %874 = vmatprep.subr.bf16.mxu0 %v843
        %875 = vmatpush1.bf16.msra.mxu0 %v842
        %876 = vmatprep.subr.bf16.mxu0 0
        %877 = vmatpush1.bf16.msra.mxu0 0
        %878 = vmatprep.subr.bf16.mxu0 0
        %879 = vmatpush1.bf16.msra.mxu0 0
        %880 = vmatprep.subr.bf16.mxu0 0
        %881 = vmatpush1.bf16.msra.mxu0 0
        %882 = vmatprep.subr.bf16.mxu0 0
        %883 = vmatpush1.bf16.msra.mxu0 0
        %884 = vmatprep.subr.bf16.mxu0 0
        %885 = vmatpush1.bf16.msra.mxu0 0
        %886 = vmatprep.subr.bf16.mxu0 0
        %887 = vmatpush1.bf16.msra.mxu0 0
        %888 = vmatprep.subr.bf16.mxu0 0
        %889 = vmatpush1.bf16.msra.mxu0 0
        %890 = vmatprep.subr.bf16.mxu0 0
        %891 = vmatpush1.bf16.msra.mxu0 0
        %892 = vmatprep.mubr.bf16.mxu0 0
        %893 = vmatmul.mubr.bf16.gmra.mrb[0].mxu0 %v748
        %v894 = vpop.f32.mrb[0].mxu0
        %v895 = vadd.f32 0.0, %v894
        %v896 = vpop.f32.mrb[0].mxu0
        %v897 = vadd.f32 0.0, %v896
        %v898 = vpop.f32.mrb[0].mxu0
        %v899 = vadd.f32 0.0, %v898
        %v900 = vpop.f32.mrb[0].mxu0
        %v901 = vadd.f32 0.0, %v900
        %902 = vmatprep.mubr.bf16.mxu0 0
        %903 = vmatmul.mubr.bf16.gmra.mrb[0].mxu0 %v749
        %v904 = vpop.f32.mrb[0].mxu0
        %v905 = vadd.f32 0.0, %v904
        %v906 = vpop.f32.mrb[0].mxu0
        %v907 = vadd.f32 0.0, %v906
        %v908 = vpop.f32.mrb[0].mxu0
        %v909 = vadd.f32 0.0, %v908
        %v910 = vpop.f32.mrb[0].mxu0
        %v911 = vadd.f32 0.0, %v910
        %912 = vmatprep.mubr.bf16.mxu0 0
        %913 = vmatmul.mubr.bf16.gmra.mrb[0].mxu0 %v750
        %v914 = vpop.f32.mrb[0].mxu0
        %v915 = vadd.f32 0.0, %v914
        %v916 = vpop.f32.mrb[0].mxu0
        %v917 = vadd.f32 0.0, %v916
        %v918 = vpop.f32.mrb[0].mxu0
        %v919 = vadd.f32 0.0, %v918
        %v920 = vpop.f32.mrb[0].mxu0
        %v921 = vadd.f32 0.0, %v920
        %922 = vmatprep.mubr.bf16.mxu0 0
        %923 = vmatmul.mubr.bf16.gmra.mrb[0].mxu0 %v751
        %v924 = vpop.f32.mrb[0].mxu0
        %v925 = vadd.f32 0.0, %v924
        %v926 = vpop.f32.mrb[0].mxu0
        %v927 = vadd.f32 0.0, %v926
        %v928 = vpop.f32.mrb[0].mxu0
        %v929 = vadd.f32 0.0, %v928
        %v930 = vpop.f32.mrb[0].mxu0
        %v931 = vadd.f32 0.0, %v930
        %932 = vmatprep.mubr.bf16.mxu0 0
        %933 = vmatmul.mubr.bf16.gmra.mrb[0].mxu0 %v752
        %v934 = vpop.f32.mrb[0].mxu0
        %v935 = vadd.f32 0.0, %v934
        %v936 = vpop.f32.mrb[0].mxu0
        %v937 = vadd.f32 0.0, %v936
        %v938 = vpop.f32.mrb[0].mxu0
        %v939 = vadd.f32 0.0, %v938
        %v940 = vpop.f32.mrb[0].mxu0
        %v941 = vadd.f32 0.0, %v940
        %942 = vmatprep.mubr.bf16.mxu0 0
        %943 = vmatmul.mubr.bf16.gmra.mrb[0].mxu0 %v753
        %v944 = vpop.f32.mrb[0].mxu0
        %v945 = vadd.f32 0.0, %v944
        %v946 = vpop.f32.mrb[0].mxu0
        %v947 = vadd.f32 0.0, %v946
        %v948 = vpop.f32.mrb[0].mxu0
        %v949 = vadd.f32 0.0, %v948
        %v950 = vpop.f32.mrb[0].mxu0
        %v951 = vadd.f32 0.0, %v950
        %952 = vmatprep.mubr.bf16.mxu0 0
        %953 = vmatmul.mubr.bf16.gmra.mrb[0].mxu0 %v754
        %v954 = vpop.f32.mrb[0].mxu0
        %v955 = vadd.f32 0.0, %v954
        %v956 = vpop.f32.mrb[0].mxu0
        %v957 = vadd.f32 0.0, %v956
        %v958 = vpop.f32.mrb[0].mxu0
        %v959 = vadd.f32 0.0, %v958
        %v960 = vpop.f32.mrb[0].mxu0
        %v961 = vadd.f32 0.0, %v960
        %962 = vmatprep.mubr.bf16.mxu0 0
        %963 = vmatmul.mubr.bf16.gmra.mrb[0].mxu0 %v755
        %v964 = vpop.f32.mrb[0].mxu0
        %v965 = vadd.f32 0.0, %v964
        %v966 = vpop.f32.mrb[0].mxu0
        %v967 = vadd.f32 0.0, %v966
        %v968 = vpop.f32.mrb[0].mxu0
        %v969 = vadd.f32 0.0, %v968
        %v970 = vpop.f32.mrb[0].mxu0
        %v971 = vadd.f32 0.0, %v970
        %972 = vmatprep.mubr.bf16.mxu0 0
        %973 = vmatmul.mubr.bf16.gmra.mrb[0].mxu0 %v756
        %v974 = vpop.f32.mrb[0].mxu0
        %v975 = vadd.f32 0.0, %v974
        %v976 = vpop.f32.mrb[0].mxu0
        %v977 = vadd.f32 0.0, %v976
        %v978 = vpop.f32.mrb[0].mxu0
        %v979 = vadd.f32 0.0, %v978
        %v980 = vpop.f32.mrb[0].mxu0
        %v981 = vadd.f32 0.0, %v980
        %982 = vmatprep.mubr.bf16.mxu0 0
        %983 = vmatmul.mubr.bf16.gmra.mrb[0].mxu0 %v757
        %v984 = vpop.f32.mrb[0].mxu0
        %v985 = vadd.f32 0.0, %v984
        %v986 = vpop.f32.mrb[0].mxu0
        %v987 = vadd.f32 0.0, %v986
        %v988 = vpop.f32.mrb[0].mxu0
        %v989 = vadd.f32 0.0, %v988
        %v990 = vpop.f32.mrb[0].mxu0
        %v991 = vadd.f32 0.0, %v990
        %992 = vmatprep.mubr.bf16.mxu0 0
        %993 = vmatmul.mubr.bf16.gmra.mrb[0].mxu0 %v758
        %v994 = vpop.f32.mrb[0].mxu0
        %v995 = vadd.f32 0.0, %v994
        %v996 = vpop.f32.mrb[0].mxu0
        %v997 = vadd.f32 0.0, %v996
        %v998 = vpop.f32.mrb[0].mxu0
        %v999 = vadd.f32 0.0, %v998
        %v1000 = vpop.f32.mrb[0].mxu0
        %v1001 = vadd.f32 0.0, %v1000
        %1002 = vmatprep.mubr.bf16.mxu0 0
        %1003 = vmatmul.mubr.bf16.gmra.mrb[0].mxu0 %v759
        %v1004 = vpop.f32.mrb[0].mxu0
        %v1005 = vadd.f32 0.0, %v1004
        %v1006 = vpop.f32.mrb[0].mxu0
        %v1007 = vadd.f32 0.0, %v1006
        %v1008 = vpop.f32.mrb[0].mxu0
        %v1009 = vadd.f32 0.0, %v1008
        %v1010 = vpop.f32.mrb[0].mxu0
        %v1011 = vadd.f32 0.0, %v1010
        %1012 = vmatprep.mubr.bf16.mxu0 0
        %1013 = vmatmul.mubr.bf16.gmra.mrb[0].mxu0 %v760
        %v1014 = vpop.f32.mrb[0].mxu0
        %v1015 = vadd.f32 0.0, %v1014
        %v1016 = vpop.f32.mrb[0].mxu0
        %v1017 = vadd.f32 0.0, %v1016
        %v1018 = vpop.f32.mrb[0].mxu0
        %v1019 = vadd.f32 0.0, %v1018
        %v1020 = vpop.f32.mrb[0].mxu0
        %v1021 = vadd.f32 0.0, %v1020
        %1022 = vmatprep.mubr.bf16.mxu0 0
        %1023 = vmatmul.mubr.bf16.gmra.mrb[0].mxu0 %v761
        %v1024 = vpop.f32.mrb[0].mxu0
        %v1025 = vadd.f32 0.0, %v1024
        %v1026 = vpop.f32.mrb[0].mxu0
        %v1027 = vadd.f32 0.0, %v1026
        %v1028 = vpop.f32.mrb[0].mxu0
        %v1029 = vadd.f32 0.0, %v1028
        %v1030 = vpop.f32.mrb[0].mxu0
        %v1031 = vadd.f32 0.0, %v1030
        %1032 = vmatprep.mubr.bf16.mxu0 0
        %1033 = vmatmul.mubr.bf16.gmra.mrb[0].mxu0 %v762
        %v1034 = vpop.f32.mrb[0].mxu0
        %v1035 = vadd.f32 0.0, %v1034
        %v1036 = vpop.f32.mrb[0].mxu0
        %v1037 = vadd.f32 0.0, %v1036
        %v1038 = vpop.f32.mrb[0].mxu0
        %v1039 = vadd.f32 0.0, %v1038
        %v1040 = vpop.f32.mrb[0].mxu0
        %v1041 = vadd.f32 0.0, %v1040
        %1042 = vmatprep.mubr.bf16.mxu0 0
        %1043 = vmatmul.mubr.bf16.gmra.mrb[0].mxu0 %v763
        %v1044 = vpop.f32.mrb[0].mxu0
        %v1045 = vadd.f32 0.0, %v1044
        %v1046 = vpop.f32.mrb[0].mxu0
        %v1047 = vadd.f32 0.0, %v1046
        %v1048 = vpop.f32.mrb[0].mxu0
        %v1049 = vadd.f32 0.0, %v1048
        %v1050 = vpop.f32.mrb[0].mxu0
        %v1051 = vadd.f32 0.0, %v1050
        %1052 = vdwg.mxu0
        %v1053 = vadd.f32 %v604, %v895
        %v1054 = vadd.f32 %v605, %v897
        %v1055 = vadd.f32 %v606, %v899
        %v1056 = vadd.f32 %v607, %v901
        %v1057 = vadd.f32 %v608, %v905
        %v1058 = vadd.f32 %v609, %v907
        %v1059 = vadd.f32 %v610, %v909
        %v1060 = vadd.f32 %v611, %v911
        %v1061 = vadd.f32 %v612, %v915
        %v1062 = vadd.f32 %v613, %v917
        %v1063 = vadd.f32 %v614, %v919
        %v1064 = vadd.f32 %v615, %v921
        %v1065 = vadd.f32 %v616, %v925
        %v1066 = vadd.f32 %v617, %v927
        %v1067 = vadd.f32 %v618, %v929
        %v1068 = vadd.f32 %v619, %v931
        %v1069 = vadd.f32 %v620, %v935
        %v1070 = vadd.f32 %v621, %v937
        %v1071 = vadd.f32 %v622, %v939
        %v1072 = vadd.f32 %v623, %v941
        %v1073 = vadd.f32 %v624, %v945
        %v1074 = vadd.f32 %v625, %v947
        %v1075 = vadd.f32 %v626, %v949
        %v1076 = vadd.f32 %v627, %v951
        %v1077 = vadd.f32 %v628, %v955
        %v1078 = vadd.f32 %v629, %v957
        %v1079 = vadd.f32 %v630, %v959
        %v1080 = vadd.f32 %v631, %v961
        %v1081 = vadd.f32 %v632, %v965
        %v1082 = vadd.f32 %v633, %v967
        %v1083 = vadd.f32 %v634, %v969
        %v1084 = vadd.f32 %v635, %v971
        %v1085 = vadd.f32 %v636, %v975
        %v1086 = vadd.f32 %v637, %v977
        %v1087 = vadd.f32 %v638, %v979
        %v1088 = vadd.f32 %v639, %v981
        %v1089 = vadd.f32 %v640, %v985
        %v1090 = vadd.f32 %v641, %v987
        %v1091 = vadd.f32 %v642, %v989
        %v1092 = vadd.f32 %v643, %v991
        %v1093 = vadd.f32 %v644, %v995
        %v1094 = vadd.f32 %v645, %v997
        %v1095 = vadd.f32 %v646, %v999
        %v1096 = vadd.f32 %v647, %v1001
        %v1097 = vadd.f32 %v648, %v1005
        %v1098 = vadd.f32 %v649, %v1007
        %v1099 = vadd.f32 %v650, %v1009
        %v1100 = vadd.f32 %v651, %v1011
        %v1101 = vadd.f32 %v652, %v1015
        %v1102 = vadd.f32 %v653, %v1017
        %v1103 = vadd.f32 %v654, %v1019
        %v1104 = vadd.f32 %v655, %v1021
        %v1105 = vadd.f32 %v656, %v1025
        %v1106 = vadd.f32 %v657, %v1027
        %v1107 = vadd.f32 %v658, %v1029
        %v1108 = vadd.f32 %v659, %v1031
        %v1109 = vadd.f32 %v660, %v1035
        %v1110 = vadd.f32 %v661, %v1037
        %v1111 = vadd.f32 %v662, %v1039
        %v1112 = vadd.f32 %v663, %v1041
        %v1113 = vadd.f32 %v664, %v1045
        %v1114 = vadd.f32 %v665, %v1047
        %v1115 = vadd.f32 %v666, %v1049
        %v1116 = vadd.f32 %v667, %v1051
        %1117 = vst [vmem:[#allocation2] sm:$0xff] %v1053
        %1118 = vst [vmem:[#allocation2 + $0x8] sm:$0xff] %v1054
        %1119 = vst [vmem:[#allocation2 + $0x10] sm:$0xff] %v1055
        %1120 = vst [vmem:[#allocation2 + $0x18] sm:$0xff] %v1056
        %1121 = vst [vmem:[#allocation2 + $0x20] sm:$0xff] %v1057
        %1122 = vst [vmem:[#allocation2 + $0x28] sm:$0xff] %v1058
        %1123 = vst [vmem:[#allocation2 + $0x30] sm:$0xff] %v1059
        %1124 = vst [vmem:[#allocation2 + $0x38] sm:$0xff] %v1060
        %1125 = vst [vmem:[#allocation2 + $0x40] sm:$0xff] %v1061
        %1126 = vst [vmem:[#allocation2 + $0x48] sm:$0xff] %v1062
        %1127 = vst [vmem:[#allocation2 + $0x50] sm:$0xff] %v1063
        %1128 = vst [vmem:[#allocation2 + $0x58] sm:$0xff] %v1064
        %1129 = vst [vmem:[#allocation2 + $0x60] sm:$0xff] %v1065
        %1130 = vst [vmem:[#allocation2 + $0x68] sm:$0xff] %v1066
        %1131 = vst [vmem:[#allocation2 + $0x70] sm:$0xff] %v1067
        %1132 = vst [vmem:[#allocation2 + $0x78] sm:$0xff] %v1068
        %1133 = vst [vmem:[#allocation2 + $0x80] sm:$0xff] %v1069
        %1134 = vst [vmem:[#allocation2 + $0x88] sm:$0xff] %v1070
        %1135 = vst [vmem:[#allocation2 + $0x90] sm:$0xff] %v1071
        %1136 = vst [vmem:[#allocation2 + $0x98] sm:$0xff] %v1072
        %1137 = vst [vmem:[#allocation2 + $0xa0] sm:$0xff] %v1073
        %1138 = vst [vmem:[#allocation2 + $0xa8] sm:$0xff] %v1074
        %1139 = vst [vmem:[#allocation2 + $0xb0] sm:$0xff] %v1075
        %1140 = vst [vmem:[#allocation2 + $0xb8] sm:$0xff] %v1076
        %1141 = vst [vmem:[#allocation2 + $0xc0] sm:$0xff] %v1077
        %1142 = vst [vmem:[#allocation2 + $0xc8] sm:$0xff] %v1078
        %1143 = vst [vmem:[#allocation2 + $0xd0] sm:$0xff] %v1079
        %1144 = vst [vmem:[#allocation2 + $0xd8] sm:$0xff] %v1080
        %1145 = vst [vmem:[#allocation2 + $0xe0] sm:$0xff] %v1081
        %1146 = vst [vmem:[#allocation2 + $0xe8] sm:$0xff] %v1082
        %1147 = vst [vmem:[#allocation2 + $0xf0] sm:$0xff] %v1083
        %1148 = vst [vmem:[#allocation2 + $0xf8] sm:$0xff] %v1084
        %1149 = vst [vmem:[#allocation2 + $0x100] sm:$0xff] %v1085
        %1150 = vst [vmem:[#allocation2 + $0x108] sm:$0xff] %v1086
        %1151 = vst [vmem:[#allocation2 + $0x110] sm:$0xff] %v1087
        %1152 = vst [vmem:[#allocation2 + $0x118] sm:$0xff] %v1088
        %1153 = vst [vmem:[#allocation2 + $0x120] sm:$0xff] %v1089
        %1154 = vst [vmem:[#allocation2 + $0x128] sm:$0xff] %v1090
        %1155 = vst [vmem:[#allocation2 + $0x130] sm:$0xff] %v1091
        %1156 = vst [vmem:[#allocation2 + $0x138] sm:$0xff] %v1092
        %1157 = vst [vmem:[#allocation2 + $0x140] sm:$0xff] %v1093
        %1158 = vst [vmem:[#allocation2 + $0x148] sm:$0xff] %v1094
        %1159 = vst [vmem:[#allocation2 + $0x150] sm:$0xff] %v1095
        %1160 = vst [vmem:[#allocation2 + $0x158] sm:$0xff] %v1096
        %1161 = vst [vmem:[#allocation2 + $0x160] sm:$0xff] %v1097
        %1162 = vst [vmem:[#allocation2 + $0x168] sm:$0xff] %v1098
        %1163 = vst [vmem:[#allocation2 + $0x170] sm:$0xff] %v1099
        %1164 = vst [vmem:[#allocation2 + $0x178] sm:$0xff] %v1100
        %1165 = vst [vmem:[#allocation2 + $0x180] sm:$0xff] %v1101
        %1166 = vst [vmem:[#allocation2 + $0x188] sm:$0xff] %v1102
        %1167 = vst [vmem:[#allocation2 + $0x190] sm:$0xff] %v1103
        %1168 = vst [vmem:[#allocation2 + $0x198] sm:$0xff] %v1104
        %1169 = vst [vmem:[#allocation2 + $0x1a0] sm:$0xff] %v1105
        %1170 = vst [vmem:[#allocation2 + $0x1a8] sm:$0xff] %v1106
        %1171 = vst [vmem:[#allocation2 + $0x1b0] sm:$0xff] %v1107
        %1172 = vst [vmem:[#allocation2 + $0x1b8] sm:$0xff] %v1108
        %1173 = vst [vmem:[#allocation2 + $0x1c0] sm:$0xff] %v1109
        %1174 = vst [vmem:[#allocation2 + $0x1c8] sm:$0xff] %v1110
        %1175 = vst [vmem:[#allocation2 + $0x1d0] sm:$0xff] %v1111
        %1176 = vst [vmem:[#allocation2 + $0x1d8] sm:$0xff] %v1112
        %1177 = vst [vmem:[#allocation2 + $0x1e0] sm:$0xff] %v1113
        %1178 = vst [vmem:[#allocation2 + $0x1e8] sm:$0xff] %v1114
        %1179 = vst [vmem:[#allocation2 + $0x1f0] sm:$0xf] %v1115
        %1180 = vst [vmem:[#allocation2 + $0x1f8] sm:$0xf] %v1116
        %v1181 = vld [vmem:[#allocation2] sm:$0xff]
        %v1182 = vld [vmem:[#allocation2 + $0x8] sm:$0xff]
        %v1183 = vld [vmem:[#allocation2 + $0x10] sm:$0xff]
        %v1184 = vld [vmem:[#allocation2 + $0x18] sm:$0xff]
        %v1185 = vld [vmem:[#allocation2 + $0x20] sm:$0xff]
        %v1186 = vld [vmem:[#allocation2 + $0x28] sm:$0xff]
        %v1187 = vld [vmem:[#allocation2 + $0x30] sm:$0xff]
        %v1188 = vld [vmem:[#allocation2 + $0x38] sm:$0xff]
        %v1189 = vld [vmem:[#allocation2 + $0x40] sm:$0xff]
        %v1190 = vld [vmem:[#allocation2 + $0x48] sm:$0xff]
        %v1191 = vld [vmem:[#allocation2 + $0x50] sm:$0xff]
        %v1192 = vld [vmem:[#allocation2 + $0x58] sm:$0xff]
        %v1193 = vld [vmem:[#allocation2 + $0x60] sm:$0xff]
        %v1194 = vld [vmem:[#allocation2 + $0x68] sm:$0xff]
        %v1195 = vld [vmem:[#allocation2 + $0x70] sm:$0xff]
        %v1196 = vld [vmem:[#allocation2 + $0x78] sm:$0xff]
        %v1197 = vld [vmem:[#allocation2 + $0x80] sm:$0xff]
        %v1198 = vld [vmem:[#allocation2 + $0x88] sm:$0xff]
        %v1199 = vld [vmem:[#allocation2 + $0x90] sm:$0xff]
        %v1200 = vld [vmem:[#allocation2 + $0x98] sm:$0xff]
        %v1201 = vld [vmem:[#allocation2 + $0xa0] sm:$0xff]
        %v1202 = vld [vmem:[#allocation2 + $0xa8] sm:$0xff]
        %v1203 = vld [vmem:[#allocation2 + $0xb0] sm:$0xff]
        %v1204 = vld [vmem:[#allocation2 + $0xb8] sm:$0xff]
        %v1205 = vld [vmem:[#allocation2 + $0xc0] sm:$0xff]
        %v1206 = vld [vmem:[#allocation2 + $0xc8] sm:$0xff]
        %v1207 = vld [vmem:[#allocation2 + $0xd0] sm:$0xff]
        %v1208 = vld [vmem:[#allocation2 + $0xd8] sm:$0xff]
        %v1209 = vld [vmem:[#allocation2 + $0xe0] sm:$0xff]
        %v1210 = vld [vmem:[#allocation2 + $0xe8] sm:$0xff]
        %v1211 = vld [vmem:[#allocation2 + $0xf0] sm:$0xff]
        %v1212 = vld [vmem:[#allocation2 + $0xf8] sm:$0xff]
        %v1213 = vld [vmem:[#allocation2 + $0x100] sm:$0xff]
        %v1214 = vld [vmem:[#allocation2 + $0x108] sm:$0xff]
        %v1215 = vld [vmem:[#allocation2 + $0x110] sm:$0xff]
        %v1216 = vld [vmem:[#allocation2 + $0x118] sm:$0xff]
        %v1217 = vld [vmem:[#allocation2 + $0x120] sm:$0xff]
        %v1218 = vld [vmem:[#allocation2 + $0x128] sm:$0xff]
        %v1219 = vld [vmem:[#allocation2 + $0x130] sm:$0xff]
        %v1220 = vld [vmem:[#allocation2 + $0x138] sm:$0xff]
        %v1221 = vld [vmem:[#allocation2 + $0x140] sm:$0xff]
        %v1222 = vld [vmem:[#allocation2 + $0x148] sm:$0xff]
        %v1223 = vld [vmem:[#allocation2 + $0x150] sm:$0xff]
        %v1224 = vld [vmem:[#allocation2 + $0x158] sm:$0xff]
        %v1225 = vld [vmem:[#allocation2 + $0x160] sm:$0xff]
        %v1226 = vld [vmem:[#allocation2 + $0x168] sm:$0xff]
        %v1227 = vld [vmem:[#allocation2 + $0x170] sm:$0xff]
        %v1228 = vld [vmem:[#allocation2 + $0x178] sm:$0xff]
        %v1229 = vld [vmem:[#allocation2 + $0x180] sm:$0xff]
        %v1230 = vld [vmem:[#allocation2 + $0x188] sm:$0xff]
        %v1231 = vld [vmem:[#allocation2 + $0x190] sm:$0xff]
        %v1232 = vld [vmem:[#allocation2 + $0x198] sm:$0xff]
        %v1233 = vld [vmem:[#allocation2 + $0x1a0] sm:$0xff]
        %v1234 = vld [vmem:[#allocation2 + $0x1a8] sm:$0xff]
        %v1235 = vld [vmem:[#allocation2 + $0x1b0] sm:$0xff]
        %v1236 = vld [vmem:[#allocation2 + $0x1b8] sm:$0xff]
        %v1237 = vld [vmem:[#allocation2 + $0x1c0] sm:$0xff]
        %v1238 = vld [vmem:[#allocation2 + $0x1c8] sm:$0xff]
        %v1239 = vld [vmem:[#allocation2 + $0x1d0] sm:$0xff]
        %v1240 = vld [vmem:[#allocation2 + $0x1d8] sm:$0xff]
        %v1241 = vld [vmem:[#allocation2 + $0x1e0] sm:$0xff]
        %v1242 = vld [vmem:[#allocation2 + $0x1e8] sm:$0xff]
        %v1243 = vld [vmem:[#allocation2 + $0x1f0] sm:$0xf]
        %v1244 = vld [vmem:[#allocation2 + $0x1f8] sm:$0xf]
        %s1245 = scalar_lea.vmem %s1, 128
        %v1246 = vld [vmem:[%s1245] sm:$0xff]
        %v1247 = vld [vmem:[%s1245 + $0x8] sm:$0xff]
        %v1248 = vld [vmem:[%s1245 + $0x10] sm:$0xff]
        %v1249 = vld [vmem:[%s1245 + $0x18] sm:$0xff]
        %v1250 = vld [vmem:[%s1245 + $0x20] sm:$0xff]
        %v1251 = vld [vmem:[%s1245 + $0x28] sm:$0xff]
        %v1252 = vld [vmem:[%s1245 + $0x30] sm:$0xff]
        %v1253 = vld [vmem:[%s1245 + $0x38] sm:$0xff]
        %v1254 = vld [vmem:[%s1245 + $0x40] sm:$0xff]
        %v1255 = vld [vmem:[%s1245 + $0x48] sm:$0xff]
        %v1256 = vld [vmem:[%s1245 + $0x50] sm:$0xff]
        %v1257 = vld [vmem:[%s1245 + $0x58] sm:$0xff]
        %v1258 = vld [vmem:[%s1245 + $0x60] sm:$0xff]
        %v1259 = vld [vmem:[%s1245 + $0x68] sm:$0xff]
        %v1260 = vld [vmem:[%s1245 + $0x70] sm:$0xff]
        %v1261 = vld [vmem:[%s1245 + $0x78] sm:$0xff]
        %vm1262 = vsmask.f32 7424
        %v1264 = vshrl.u32 %v748, 16
        %v1266 = vshll.u32 %v748, 16
        %v1268 = vrot.slane %v1266, 1
        %v1269 = vor.u32 %v1264, %v1268
        %v1271 = vshll.u32 %v749, 16
        %v1273 = vrot.slane %v1271, 1
        %v1274 = vsel %vm1262, %v1269, %v1273
        %v1275 = vshrl.u32 %v749, 16
        %v1277 = vor.u32 %v1275, %v1273
        %v1279 = vshll.u32 %v750, 16
        %v1281 = vrot.slane %v1279, 1
        %v1282 = vsel %vm1262, %v1277, %v1281
        %v1283 = vshrl.u32 %v750, 16
        %v1285 = vor.u32 %v1283, %v1281
        %v1287 = vshll.u32 %v751, 16
        %v1289 = vrot.slane %v1287, 1
        %v1290 = vsel %vm1262, %v1285, %v1289
        %v1291 = vshrl.u32 %v751, 16
        %v1293 = vor.u32 %v1291, %v1289
        %v1295 = vshll.u32 %v752, 16
        %v1297 = vrot.slane %v1295, 1
        %v1298 = vsel %vm1262, %v1293, %v1297
        %v1299 = vshrl.u32 %v752, 16
        %v1301 = vor.u32 %v1299, %v1297
        %v1303 = vshll.u32 %v753, 16
        %v1305 = vrot.slane %v1303, 1
        %v1306 = vsel %vm1262, %v1301, %v1305
        %v1307 = vshrl.u32 %v753, 16
        %v1309 = vor.u32 %v1307, %v1305
        %v1311 = vshll.u32 %v754, 16
        %v1313 = vrot.slane %v1311, 1
        %v1314 = vsel %vm1262, %v1309, %v1313
        %v1315 = vshrl.u32 %v754, 16
        %v1317 = vor.u32 %v1315, %v1313
        %v1319 = vshll.u32 %v755, 16
        %v1321 = vrot.slane %v1319, 1
        %v1322 = vsel %vm1262, %v1317, %v1321
        %v1323 = vshrl.u32 %v755, 16
        %v1325 = vor.u32 %v1323, %v1321
        %v1327 = vshll.u32 %v756, 16
        %v1329 = vrot.slane %v1327, 1
        %v1330 = vsel %vm1262, %v1325, %v1329
        %v1331 = vshrl.u32 %v756, 16
        %v1333 = vor.u32 %v1331, %v1329
        %v1335 = vshll.u32 %v757, 16
        %v1337 = vrot.slane %v1335, 1
        %v1338 = vsel %vm1262, %v1333, %v1337
        %v1339 = vshrl.u32 %v757, 16
        %v1341 = vor.u32 %v1339, %v1337
        %v1343 = vshll.u32 %v758, 16
        %v1345 = vrot.slane %v1343, 1
        %v1346 = vsel %vm1262, %v1341, %v1345
        %v1347 = vshrl.u32 %v758, 16
        %v1349 = vor.u32 %v1347, %v1345
        %v1351 = vshll.u32 %v759, 16
        %v1353 = vrot.slane %v1351, 1
        %v1354 = vsel %vm1262, %v1349, %v1353
        %v1355 = vshrl.u32 %v759, 16
        %v1357 = vor.u32 %v1355, %v1353
        %v1359 = vshll.u32 %v760, 16
        %v1361 = vrot.slane %v1359, 1
        %v1362 = vsel %vm1262, %v1357, %v1361
        %v1363 = vshrl.u32 %v760, 16
        %v1365 = vor.u32 %v1363, %v1361
        %v1367 = vshll.u32 %v761, 16
        %v1369 = vrot.slane %v1367, 1
        %v1370 = vsel %vm1262, %v1365, %v1369
        %v1371 = vshrl.u32 %v761, 16
        %v1373 = vor.u32 %v1371, %v1369
        %v1375 = vshll.u32 %v762, 16
        %v1377 = vrot.slane %v1375, 1
        %v1378 = vsel %vm1262, %v1373, %v1377
        %v1379 = vshrl.u32 %v762, 16
        %v1381 = vor.u32 %v1379, %v1377
        %v1383 = vshll.u32 %v763, 16
        %v1385 = vrot.slane %v1383, 1
        %v1386 = vsel %vm1262, %v1381, %v1385
        %v1387 = vshrl.u32 %v763, 16
        %v1389 = vor.u32 %v1387, %v1385
        %v1422 = vunpack.c.l.b16 %v1246
        %v1423 = vunpack.c.h.b16 %v1246
        %v1424 = vunpack.c.l.b16 %v1247
        %v1425 = vunpack.c.h.b16 %v1247
        %v1426 = vunpack.c.l.b16 %v1248
        %v1427 = vunpack.c.h.b16 %v1248
        %v1428 = vunpack.c.l.b16 %v1249
        %v1429 = vunpack.c.h.b16 %v1249
        %v1430 = vunpack.c.l.b16 %v1250
        %v1431 = vunpack.c.h.b16 %v1250
        %v1432 = vunpack.c.l.b16 %v1251
        %v1433 = vunpack.c.h.b16 %v1251
        %v1434 = vunpack.c.l.b16 %v1252
        %v1435 = vunpack.c.h.b16 %v1252
        %v1436 = vunpack.c.l.b16 %v1253
        %v1437 = vunpack.c.h.b16 %v1253
        %v1438 = vunpack.c.l.b16 %v1254
        %v1439 = vunpack.c.h.b16 %v1254
        %v1440 = vunpack.c.l.b16 %v1255
        %v1441 = vunpack.c.h.b16 %v1255
        %v1442 = vunpack.c.l.b16 %v1256
        %v1443 = vunpack.c.h.b16 %v1256
        %v1444 = vunpack.c.l.b16 %v1257
        %v1445 = vunpack.c.h.b16 %v1257
        %v1446 = vunpack.c.l.b16 %v1258
        %v1447 = vunpack.c.h.b16 %v1258
        %v1448 = vunpack.c.l.b16 %v1259
        %v1449 = vunpack.c.h.b16 %v1259
        %v1450 = vunpack.c.l.b16 %v1260
        %v1451 = vunpack.c.h.b16 %v1260
        %v1452 = vunpack.c.l.b16 %v1261
        %v1453 = vunpack.c.h.b16 %v1261
        %v1454 = vpack.c.b16 %v1424, %v1422
        %v1455 = vpack.c.b16 %v1425, %v1423
        %v1456 = vpack.c.b16 %v1428, %v1426
        %v1457 = vpack.c.b16 %v1429, %v1427
        %v1458 = vpack.c.b16 %v1432, %v1430
        %v1459 = vpack.c.b16 %v1433, %v1431
        %v1460 = vpack.c.b16 %v1436, %v1434
        %v1461 = vpack.c.b16 %v1437, %v1435
        %v1462 = vpack.c.b16 %v1440, %v1438
        %v1463 = vpack.c.b16 %v1441, %v1439
        %v1464 = vpack.c.b16 %v1444, %v1442
        %v1465 = vpack.c.b16 %v1445, %v1443
        %v1466 = vpack.c.b16 %v1448, %v1446
        %v1467 = vpack.c.b16 %v1449, %v1447
        %v1468 = vpack.c.b16 %v1452, %v1450
        %v1469 = vpack.c.b16 %v1453, %v1451
        %1486 = vmatprep.subr.bf16.mxu0 %v1455
        %1487 = vmatpush1.bf16.msra.mxu0 %v1454
        %1488 = vmatprep.subr.bf16.mxu0 %v1457
        %1489 = vmatpush1.bf16.msra.mxu0 %v1456
        %1490 = vmatprep.subr.bf16.mxu0 %v1459
        %1491 = vmatpush1.bf16.msra.mxu0 %v1458
        %1492 = vmatprep.subr.bf16.mxu0 %v1461
        %1493 = vmatpush1.bf16.msra.mxu0 %v1460
        %1494 = vmatprep.subr.bf16.mxu0 %v1463
        %1495 = vmatpush1.bf16.msra.mxu0 %v1462
        %1496 = vmatprep.subr.bf16.mxu0 %v1465
        %1497 = vmatpush1.bf16.msra.mxu0 %v1464
        %1498 = vmatprep.subr.bf16.mxu0 %v1467
        %1499 = vmatpush1.bf16.msra.mxu0 %v1466
        %1500 = vmatprep.subr.bf16.mxu0 %v1469
        %1501 = vmatpush1.bf16.msra.mxu0 %v1468
        %1502 = vmatprep.subr.bf16.mxu0 0
        %1503 = vmatpush1.bf16.msra.mxu0 0
        %1504 = vmatprep.subr.bf16.mxu0 0
        %1505 = vmatpush1.bf16.msra.mxu0 0
        %1506 = vmatprep.subr.bf16.mxu0 0
        %1507 = vmatpush1.bf16.msra.mxu0 0
        %1508 = vmatprep.subr.bf16.mxu0 0
        %1509 = vmatpush1.bf16.msra.mxu0 0
        %1510 = vmatprep.subr.bf16.mxu0 0
        %1511 = vmatpush1.bf16.msra.mxu0 0
        %1512 = vmatprep.subr.bf16.mxu0 0
        %1513 = vmatpush1.bf16.msra.mxu0 0
        %1514 = vmatprep.subr.bf16.mxu0 0
        %1515 = vmatpush1.bf16.msra.mxu0 0
        %1516 = vmatprep.subr.bf16.mxu0 0
        %1517 = vmatpush1.bf16.msra.mxu0 0
        %1518 = vmatprep.mubr.bf16.mxu0 0
        %1519 = vmatmul.mubr.bf16.gmra.mrb[0].mxu0 %v1274
        %v1520 = vpop.f32.mrb[0].mxu0
        %v1521 = vadd.f32 0.0, %v1520
        %v1522 = vpop.f32.mrb[0].mxu0
        %v1523 = vadd.f32 0.0, %v1522
        %v1524 = vpop.f32.mrb[0].mxu0
        %v1525 = vadd.f32 0.0, %v1524
        %v1526 = vpop.f32.mrb[0].mxu0
        %v1527 = vadd.f32 0.0, %v1526
        %1528 = vmatprep.mubr.bf16.mxu0 0
        %1529 = vmatmul.mubr.bf16.gmra.mrb[0].mxu0 %v1282
        %v1530 = vpop.f32.mrb[0].mxu0
        %v1531 = vadd.f32 0.0, %v1530
        %v1532 = vpop.f32.mrb[0].mxu0
        %v1533 = vadd.f32 0.0, %v1532
        %v1534 = vpop.f32.mrb[0].mxu0
        %v1535 = vadd.f32 0.0, %v1534
        %v1536 = vpop.f32.mrb[0].mxu0
        %v1537 = vadd.f32 0.0, %v1536
        %1538 = vmatprep.mubr.bf16.mxu0 0
        %1539 = vmatmul.mubr.bf16.gmra.mrb[0].mxu0 %v1290
        %v1540 = vpop.f32.mrb[0].mxu0
        %v1541 = vadd.f32 0.0, %v1540
        %v1542 = vpop.f32.mrb[0].mxu0
        %v1543 = vadd.f32 0.0, %v1542
        %v1544 = vpop.f32.mrb[0].mxu0
        %v1545 = vadd.f32 0.0, %v1544
        %v1546 = vpop.f32.mrb[0].mxu0
        %v1547 = vadd.f32 0.0, %v1546
        %1548 = vmatprep.mubr.bf16.mxu0 0
        %1549 = vmatmul.mubr.bf16.gmra.mrb[0].mxu0 %v1298
        %v1550 = vpop.f32.mrb[0].mxu0
        %v1551 = vadd.f32 0.0, %v1550
        %v1552 = vpop.f32.mrb[0].mxu0
        %v1553 = vadd.f32 0.0, %v1552
        %v1554 = vpop.f32.mrb[0].mxu0
        %v1555 = vadd.f32 0.0, %v1554
        %v1556 = vpop.f32.mrb[0].mxu0
        %v1557 = vadd.f32 0.0, %v1556
        %1558 = vmatprep.mubr.bf16.mxu0 0
        %1559 = vmatmul.mubr.bf16.gmra.mrb[0].mxu0 %v1306
        %v1560 = vpop.f32.mrb[0].mxu0
        %v1561 = vadd.f32 0.0, %v1560
        %v1562 = vpop.f32.mrb[0].mxu0
        %v1563 = vadd.f32 0.0, %v1562
        %v1564 = vpop.f32.mrb[0].mxu0
        %v1565 = vadd.f32 0.0, %v1564
        %v1566 = vpop.f32.mrb[0].mxu0
        %v1567 = vadd.f32 0.0, %v1566
        %1568 = vmatprep.mubr.bf16.mxu0 0
        %1569 = vmatmul.mubr.bf16.gmra.mrb[0].mxu0 %v1314
        %v1570 = vpop.f32.mrb[0].mxu0
        %v1571 = vadd.f32 0.0, %v1570
        %v1572 = vpop.f32.mrb[0].mxu0
        %v1573 = vadd.f32 0.0, %v1572
        %v1574 = vpop.f32.mrb[0].mxu0
        %v1575 = vadd.f32 0.0, %v1574
        %v1576 = vpop.f32.mrb[0].mxu0
        %v1577 = vadd.f32 0.0, %v1576
        %1578 = vmatprep.mubr.bf16.mxu0 0
        %1579 = vmatmul.mubr.bf16.gmra.mrb[0].mxu0 %v1322
        %v1580 = vpop.f32.mrb[0].mxu0
        %v1581 = vadd.f32 0.0, %v1580
        %v1582 = vpop.f32.mrb[0].mxu0
        %v1583 = vadd.f32 0.0, %v1582
        %v1584 = vpop.f32.mrb[0].mxu0
        %v1585 = vadd.f32 0.0, %v1584
        %v1586 = vpop.f32.mrb[0].mxu0
        %v1587 = vadd.f32 0.0, %v1586
        %1588 = vmatprep.mubr.bf16.mxu0 0
        %1589 = vmatmul.mubr.bf16.gmra.mrb[0].mxu0 %v1330
        %v1590 = vpop.f32.mrb[0].mxu0
        %v1591 = vadd.f32 0.0, %v1590
        %v1592 = vpop.f32.mrb[0].mxu0
        %v1593 = vadd.f32 0.0, %v1592
        %v1594 = vpop.f32.mrb[0].mxu0
        %v1595 = vadd.f32 0.0, %v1594
        %v1596 = vpop.f32.mrb[0].mxu0
        %v1597 = vadd.f32 0.0, %v1596
        %1598 = vmatprep.mubr.bf16.mxu0 0
        %1599 = vmatmul.mubr.bf16.gmra.mrb[0].mxu0 %v1338
        %v1600 = vpop.f32.mrb[0].mxu0
        %v1601 = vadd.f32 0.0, %v1600
        %v1602 = vpop.f32.mrb[0].mxu0
        %v1603 = vadd.f32 0.0, %v1602
        %v1604 = vpop.f32.mrb[0].mxu0
        %v1605 = vadd.f32 0.0, %v1604
        %v1606 = vpop.f32.mrb[0].mxu0
        %v1607 = vadd.f32 0.0, %v1606
        %1608 = vmatprep.mubr.bf16.mxu0 0
        %1609 = vmatmul.mubr.bf16.gmra.mrb[0].mxu0 %v1346
        %v1610 = vpop.f32.mrb[0].mxu0
        %v1611 = vadd.f32 0.0, %v1610
        %v1612 = vpop.f32.mrb[0].mxu0
        %v1613 = vadd.f32 0.0, %v1612
        %v1614 = vpop.f32.mrb[0].mxu0
        %v1615 = vadd.f32 0.0, %v1614
        %v1616 = vpop.f32.mrb[0].mxu0
        %v1617 = vadd.f32 0.0, %v1616
        %1618 = vmatprep.mubr.bf16.mxu0 0
        %1619 = vmatmul.mubr.bf16.gmra.mrb[0].mxu0 %v1354
        %v1620 = vpop.f32.mrb[0].mxu0
        %v1621 = vadd.f32 0.0, %v1620
        %v1622 = vpop.f32.mrb[0].mxu0
        %v1623 = vadd.f32 0.0, %v1622
        %v1624 = vpop.f32.mrb[0].mxu0
        %v1625 = vadd.f32 0.0, %v1624
        %v1626 = vpop.f32.mrb[0].mxu0
        %v1627 = vadd.f32 0.0, %v1626
        %1628 = vmatprep.mubr.bf16.mxu0 0
        %1629 = vmatmul.mubr.bf16.gmra.mrb[0].mxu0 %v1362
        %v1630 = vpop.f32.mrb[0].mxu0
        %v1631 = vadd.f32 0.0, %v1630
        %v1632 = vpop.f32.mrb[0].mxu0
        %v1633 = vadd.f32 0.0, %v1632
        %v1634 = vpop.f32.mrb[0].mxu0
        %v1635 = vadd.f32 0.0, %v1634
        %v1636 = vpop.f32.mrb[0].mxu0
        %v1637 = vadd.f32 0.0, %v1636
        %1638 = vmatprep.mubr.bf16.mxu0 0
        %1639 = vmatmul.mubr.bf16.gmra.mrb[0].mxu0 %v1370
        %v1640 = vpop.f32.mrb[0].mxu0
        %v1641 = vadd.f32 0.0, %v1640
        %v1642 = vpop.f32.mrb[0].mxu0
        %v1643 = vadd.f32 0.0, %v1642
        %v1644 = vpop.f32.mrb[0].mxu0
        %v1645 = vadd.f32 0.0, %v1644
        %v1646 = vpop.f32.mrb[0].mxu0
        %v1647 = vadd.f32 0.0, %v1646
        %1648 = vmatprep.mubr.bf16.mxu0 0
        %1649 = vmatmul.mubr.bf16.gmra.mrb[0].mxu0 %v1378
        %v1650 = vpop.f32.mrb[0].mxu0
        %v1651 = vadd.f32 0.0, %v1650
        %v1652 = vpop.f32.mrb[0].mxu0
        %v1653 = vadd.f32 0.0, %v1652
        %v1654 = vpop.f32.mrb[0].mxu0
        %v1655 = vadd.f32 0.0, %v1654
        %v1656 = vpop.f32.mrb[0].mxu0
        %v1657 = vadd.f32 0.0, %v1656
        %1658 = vmatprep.mubr.bf16.mxu0 0
        %1659 = vmatmul.mubr.bf16.gmra.mrb[0].mxu0 %v1386
        %v1660 = vpop.f32.mrb[0].mxu0
        %v1661 = vadd.f32 0.0, %v1660
        %v1662 = vpop.f32.mrb[0].mxu0
        %v1663 = vadd.f32 0.0, %v1662
        %v1664 = vpop.f32.mrb[0].mxu0
        %v1665 = vadd.f32 0.0, %v1664
        %v1666 = vpop.f32.mrb[0].mxu0
        %v1667 = vadd.f32 0.0, %v1666
        %1668 = vmatprep.mubr.bf16.mxu0 0
        %1669 = vmatmul.mubr.bf16.gmra.mrb[0].mxu0 %v1389
        %v1670 = vpop.f32.mrb[0].mxu0
        %v1671 = vadd.f32 0.0, %v1670
        %v1672 = vpop.f32.mrb[0].mxu0
        %v1673 = vadd.f32 0.0, %v1672
        %v1674 = vpop.f32.mrb[0].mxu0
        %v1675 = vadd.f32 0.0, %v1674
        %v1676 = vpop.f32.mrb[0].mxu0
        %v1677 = vadd.f32 0.0, %v1676
        %1678 = vdwg.mxu0
        %v1679 = vadd.f32 %v1181, %v1521
        %v1680 = vadd.f32 %v1182, %v1523
        %v1681 = vadd.f32 %v1183, %v1525
        %v1682 = vadd.f32 %v1184, %v1527
        %v1683 = vadd.f32 %v1185, %v1531
        %v1684 = vadd.f32 %v1186, %v1533
        %v1685 = vadd.f32 %v1187, %v1535
        %v1686 = vadd.f32 %v1188, %v1537
        %v1687 = vadd.f32 %v1189, %v1541
        %v1688 = vadd.f32 %v1190, %v1543
        %v1689 = vadd.f32 %v1191, %v1545
        %v1690 = vadd.f32 %v1192, %v1547
        %v1691 = vadd.f32 %v1193, %v1551
        %v1692 = vadd.f32 %v1194, %v1553
        %v1693 = vadd.f32 %v1195, %v1555
        %v1694 = vadd.f32 %v1196, %v1557
        %v1695 = vadd.f32 %v1197, %v1561
        %v1696 = vadd.f32 %v1198, %v1563
        %v1697 = vadd.f32 %v1199, %v1565
        %v1698 = vadd.f32 %v1200, %v1567
        %v1699 = vadd.f32 %v1201, %v1571
        %v1700 = vadd.f32 %v1202, %v1573
        %v1701 = vadd.f32 %v1203, %v1575
        %v1702 = vadd.f32 %v1204, %v1577
        %v1703 = vadd.f32 %v1205, %v1581
        %v1704 = vadd.f32 %v1206, %v1583
        %v1705 = vadd.f32 %v1207, %v1585
        %v1706 = vadd.f32 %v1208, %v1587
        %v1707 = vadd.f32 %v1209, %v1591
        %v1708 = vadd.f32 %v1210, %v1593
        %v1709 = vadd.f32 %v1211, %v1595
        %v1710 = vadd.f32 %v1212, %v1597
        %v1711 = vadd.f32 %v1213, %v1601
        %v1712 = vadd.f32 %v1214, %v1603
        %v1713 = vadd.f32 %v1215, %v1605
        %v1714 = vadd.f32 %v1216, %v1607
        %v1715 = vadd.f32 %v1217, %v1611
        %v1716 = vadd.f32 %v1218, %v1613
        %v1717 = vadd.f32 %v1219, %v1615
        %v1718 = vadd.f32 %v1220, %v1617
        %v1719 = vadd.f32 %v1221, %v1621
        %v1720 = vadd.f32 %v1222, %v1623
        %v1721 = vadd.f32 %v1223, %v1625
        %v1722 = vadd.f32 %v1224, %v1627
        %v1723 = vadd.f32 %v1225, %v1631
        %v1724 = vadd.f32 %v1226, %v1633
        %v1725 = vadd.f32 %v1227, %v1635
        %v1726 = vadd.f32 %v1228, %v1637
        %v1727 = vadd.f32 %v1229, %v1641
        %v1728 = vadd.f32 %v1230, %v1643
        %v1729 = vadd.f32 %v1231, %v1645
        %v1730 = vadd.f32 %v1232, %v1647
        %v1731 = vadd.f32 %v1233, %v1651
        %v1732 = vadd.f32 %v1234, %v1653
        %v1733 = vadd.f32 %v1235, %v1655
        %v1734 = vadd.f32 %v1236, %v1657
        %v1735 = vadd.f32 %v1237, %v1661
        %v1736 = vadd.f32 %v1238, %v1663
        %v1737 = vadd.f32 %v1239, %v1665
        %v1738 = vadd.f32 %v1240, %v1667
        %v1739 = vadd.f32 %v1241, %v1671
        %v1740 = vadd.f32 %v1242, %v1673
        %v1741 = vadd.f32 %v1243, %v1675
        %v1742 = vadd.f32 %v1244, %v1677
        %1743 = vst [vmem:[#allocation2] sm:$0xff] %v1679
        %1744 = vst [vmem:[#allocation2 + $0x8] sm:$0xff] %v1680
        %1745 = vst [vmem:[#allocation2 + $0x10] sm:$0xff] %v1681
        %1746 = vst [vmem:[#allocation2 + $0x18] sm:$0xff] %v1682
        %1747 = vst [vmem:[#allocation2 + $0x20] sm:$0xff] %v1683
        %1748 = vst [vmem:[#allocation2 + $0x28] sm:$0xff] %v1684
        %1749 = vst [vmem:[#allocation2 + $0x30] sm:$0xff] %v1685
        %1750 = vst [vmem:[#allocation2 + $0x38] sm:$0xff] %v1686
        %1751 = vst [vmem:[#allocation2 + $0x40] sm:$0xff] %v1687
        %1752 = vst [vmem:[#allocation2 + $0x48] sm:$0xff] %v1688
        %1753 = vst [vmem:[#allocation2 + $0x50] sm:$0xff] %v1689
        %1754 = vst [vmem:[#allocation2 + $0x58] sm:$0xff] %v1690
        %1755 = vst [vmem:[#allocation2 + $0x60] sm:$0xff] %v1691
        %1756 = vst [vmem:[#allocation2 + $0x68] sm:$0xff] %v1692
        %1757 = vst [vmem:[#allocation2 + $0x70] sm:$0xff] %v1693
        %1758 = vst [vmem:[#allocation2 + $0x78] sm:$0xff] %v1694
        %1759 = vst [vmem:[#allocation2 + $0x80] sm:$0xff] %v1695
        %1760 = vst [vmem:[#allocation2 + $0x88] sm:$0xff] %v1696
        %1761 = vst [vmem:[#allocation2 + $0x90] sm:$0xff] %v1697
        %1762 = vst [vmem:[#allocation2 + $0x98] sm:$0xff] %v1698
        %1763 = vst [vmem:[#allocation2 + $0xa0] sm:$0xff] %v1699
        %1764 = vst [vmem:[#allocation2 + $0xa8] sm:$0xff] %v1700
        %1765 = vst [vmem:[#allocation2 + $0xb0] sm:$0xff] %v1701
        %1766 = vst [vmem:[#allocation2 + $0xb8] sm:$0xff] %v1702
        %1767 = vst [vmem:[#allocation2 + $0xc0] sm:$0xff] %v1703
        %1768 = vst [vmem:[#allocation2 + $0xc8] sm:$0xff] %v1704
        %1769 = vst [vmem:[#allocation2 + $0xd0] sm:$0xff] %v1705
        %1770 = vst [vmem:[#allocation2 + $0xd8] sm:$0xff] %v1706
        %1771 = vst [vmem:[#allocation2 + $0xe0] sm:$0xff] %v1707
        %1772 = vst [vmem:[#allocation2 + $0xe8] sm:$0xff] %v1708
        %1773 = vst [vmem:[#allocation2 + $0xf0] sm:$0xff] %v1709
        %1774 = vst [vmem:[#allocation2 + $0xf8] sm:$0xff] %v1710
        %1775 = vst [vmem:[#allocation2 + $0x100] sm:$0xff] %v1711
        %1776 = vst [vmem:[#allocation2 + $0x108] sm:$0xff] %v1712
        %1777 = vst [vmem:[#allocation2 + $0x110] sm:$0xff] %v1713
        %1778 = vst [vmem:[#allocation2 + $0x118] sm:$0xff] %v1714
        %1779 = vst [vmem:[#allocation2 + $0x120] sm:$0xff] %v1715
        %1780 = vst [vmem:[#allocation2 + $0x128] sm:$0xff] %v1716
        %1781 = vst [vmem:[#allocation2 + $0x130] sm:$0xff] %v1717
        %1782 = vst [vmem:[#allocation2 + $0x138] sm:$0xff] %v1718
        %1783 = vst [vmem:[#allocation2 + $0x140] sm:$0xff] %v1719
        %1784 = vst [vmem:[#allocation2 + $0x148] sm:$0xff] %v1720
        %1785 = vst [vmem:[#allocation2 + $0x150] sm:$0xff] %v1721
        %1786 = vst [vmem:[#allocation2 + $0x158] sm:$0xff] %v1722
        %1787 = vst [vmem:[#allocation2 + $0x160] sm:$0xff] %v1723
        %1788 = vst [vmem:[#allocation2 + $0x168] sm:$0xff] %v1724
        %1789 = vst [vmem:[#allocation2 + $0x170] sm:$0xff] %v1725
        %1790 = vst [vmem:[#allocation2 + $0x178] sm:$0xff] %v1726
        %1791 = vst [vmem:[#allocation2 + $0x180] sm:$0xff] %v1727
        %1792 = vst [vmem:[#allocation2 + $0x188] sm:$0xff] %v1728
        %1793 = vst [vmem:[#allocation2 + $0x190] sm:$0xff] %v1729
        %1794 = vst [vmem:[#allocation2 + $0x198] sm:$0xff] %v1730
        %1795 = vst [vmem:[#allocation2 + $0x1a0] sm:$0xff] %v1731
        %1796 = vst [vmem:[#allocation2 + $0x1a8] sm:$0xff] %v1732
        %1797 = vst [vmem:[#allocation2 + $0x1b0] sm:$0xff] %v1733
        %1798 = vst [vmem:[#allocation2 + $0x1b8] sm:$0xff] %v1734
        %1799 = vst [vmem:[#allocation2 + $0x1c0] sm:$0xff] %v1735
        %1800 = vst [vmem:[#allocation2 + $0x1c8] sm:$0xff] %v1736
        %1801 = vst [vmem:[#allocation2 + $0x1d0] sm:$0xff] %v1737
        %1802 = vst [vmem:[#allocation2 + $0x1d8] sm:$0xff] %v1738
        %1803 = vst [vmem:[#allocation2 + $0x1e0] sm:$0xff] %v1739
        %1804 = vst [vmem:[#allocation2 + $0x1e8] sm:$0xff] %v1740
        %1805 = vst [vmem:[#allocation2 + $0x1f0] sm:$0xf] %v1741
        %1806 = vst [vmem:[#allocation2 + $0x1f8] sm:$0xf] %v1742
        %v1807 = vld [vmem:[#allocation2] sm:$0xff]
        %v1808 = vld [vmem:[#allocation2 + $0x8] sm:$0xff]
        %v1809 = vld [vmem:[#allocation2 + $0x10] sm:$0xff]
        %v1810 = vld [vmem:[#allocation2 + $0x18] sm:$0xff]
        %v1811 = vld [vmem:[#allocation2 + $0x20] sm:$0xff]
        %v1812 = vld [vmem:[#allocation2 + $0x28] sm:$0xff]
        %v1813 = vld [vmem:[#allocation2 + $0x30] sm:$0xff]
        %v1814 = vld [vmem:[#allocation2 + $0x38] sm:$0xff]
        %v1815 = vld [vmem:[#allocation2 + $0x40] sm:$0xff]
        %v1816 = vld [vmem:[#allocation2 + $0x48] sm:$0xff]
        %v1817 = vld [vmem:[#allocation2 + $0x50] sm:$0xff]
        %v1818 = vld [vmem:[#allocation2 + $0x58] sm:$0xff]
        %v1819 = vld [vmem:[#allocation2 + $0x60] sm:$0xff]
        %v1820 = vld [vmem:[#allocation2 + $0x68] sm:$0xff]
        %v1821 = vld [vmem:[#allocation2 + $0x70] sm:$0xff]
        %v1822 = vld [vmem:[#allocation2 + $0x78] sm:$0xff]
        %v1823 = vld [vmem:[#allocation2 + $0x80] sm:$0xff]
        %v1824 = vld [vmem:[#allocation2 + $0x88] sm:$0xff]
        %v1825 = vld [vmem:[#allocation2 + $0x90] sm:$0xff]
        %v1826 = vld [vmem:[#allocation2 + $0x98] sm:$0xff]
        %v1827 = vld [vmem:[#allocation2 + $0xa0] sm:$0xff]
        %v1828 = vld [vmem:[#allocation2 + $0xa8] sm:$0xff]
        %v1829 = vld [vmem:[#allocation2 + $0xb0] sm:$0xff]
        %v1830 = vld [vmem:[#allocation2 + $0xb8] sm:$0xff]
        %v1831 = vld [vmem:[#allocation2 + $0xc0] sm:$0xff]
        %v1832 = vld [vmem:[#allocation2 + $0xc8] sm:$0xff]
        %v1833 = vld [vmem:[#allocation2 + $0xd0] sm:$0xff]
        %v1834 = vld [vmem:[#allocation2 + $0xd8] sm:$0xff]
        %v1835 = vld [vmem:[#allocation2 + $0xe0] sm:$0xff]
        %v1836 = vld [vmem:[#allocation2 + $0xe8] sm:$0xff]
        %v1837 = vld [vmem:[#allocation2 + $0xf0] sm:$0xff]
        %v1838 = vld [vmem:[#allocation2 + $0xf8] sm:$0xff]
        %v1839 = vld [vmem:[#allocation2 + $0x100] sm:$0xff]
        %v1840 = vld [vmem:[#allocation2 + $0x108] sm:$0xff]
        %v1841 = vld [vmem:[#allocation2 + $0x110] sm:$0xff]
        %v1842 = vld [vmem:[#allocation2 + $0x118] sm:$0xff]
        %v1843 = vld [vmem:[#allocation2 + $0x120] sm:$0xff]
        %v1844 = vld [vmem:[#allocation2 + $0x128] sm:$0xff]
        %v1845 = vld [vmem:[#allocation2 + $0x130] sm:$0xff]
        %v1846 = vld [vmem:[#allocation2 + $0x138] sm:$0xff]
        %v1847 = vld [vmem:[#allocation2 + $0x140] sm:$0xff]
        %v1848 = vld [vmem:[#allocation2 + $0x148] sm:$0xff]
        %v1849 = vld [vmem:[#allocation2 + $0x150] sm:$0xff]
        %v1850 = vld [vmem:[#allocation2 + $0x158] sm:$0xff]
        %v1851 = vld [vmem:[#allocation2 + $0x160] sm:$0xff]
        %v1852 = vld [vmem:[#allocation2 + $0x168] sm:$0xff]
        %v1853 = vld [vmem:[#allocation2 + $0x170] sm:$0xff]
        %v1854 = vld [vmem:[#allocation2 + $0x178] sm:$0xff]
        %v1855 = vld [vmem:[#allocation2 + $0x180] sm:$0xff]
        %v1856 = vld [vmem:[#allocation2 + $0x188] sm:$0xff]
        %v1857 = vld [vmem:[#allocation2 + $0x190] sm:$0xff]
        %v1858 = vld [vmem:[#allocation2 + $0x198] sm:$0xff]
        %v1859 = vld [vmem:[#allocation2 + $0x1a0] sm:$0xff]
        %v1860 = vld [vmem:[#allocation2 + $0x1a8] sm:$0xff]
        %v1861 = vld [vmem:[#allocation2 + $0x1b0] sm:$0xff]
        %v1862 = vld [vmem:[#allocation2 + $0x1b8] sm:$0xff]
        %v1863 = vld [vmem:[#allocation2 + $0x1c0] sm:$0xff]
        %v1864 = vld [vmem:[#allocation2 + $0x1c8] sm:$0xff]
        %v1865 = vld [vmem:[#allocation2 + $0x1d0] sm:$0xff]
        %v1866 = vld [vmem:[#allocation2 + $0x1d8] sm:$0xff]
        %v1867 = vld [vmem:[#allocation2 + $0x1e0] sm:$0xff]
        %v1868 = vld [vmem:[#allocation2 + $0x1e8] sm:$0xff]
        %v1869 = vld [vmem:[#allocation2 + $0x1f0] sm:$0xf]
        %v1870 = vld [vmem:[#allocation2 + $0x1f8] sm:$0xf]
        %s1871 = scalar_lea.vmem %s1, 256
        %v1872 = vld [vmem:[%s1871] sm:$0xff]
        %v1873 = vld [vmem:[%s1871 + $0x8] sm:$0xff]
        %v1874 = vld [vmem:[%s1871 + $0x10] sm:$0xff]
        %v1875 = vld [vmem:[%s1871 + $0x18] sm:$0xff]
        %v1876 = vld [vmem:[%s1871 + $0x20] sm:$0xff]
        %v1877 = vld [vmem:[%s1871 + $0x28] sm:$0xff]
        %v1878 = vld [vmem:[%s1871 + $0x30] sm:$0xff]
        %v1879 = vld [vmem:[%s1871 + $0x38] sm:$0xff]
        %v1880 = vld [vmem:[%s1871 + $0x40] sm:$0xff]
        %v1881 = vld [vmem:[%s1871 + $0x48] sm:$0xff]
        %v1882 = vld [vmem:[%s1871 + $0x50] sm:$0xff]
        %v1883 = vld [vmem:[%s1871 + $0x58] sm:$0xff]
        %v1884 = vld [vmem:[%s1871 + $0x60] sm:$0xff]
        %v1885 = vld [vmem:[%s1871 + $0x68] sm:$0xff]
        %v1886 = vld [vmem:[%s1871 + $0x70] sm:$0xff]
        %v1887 = vld [vmem:[%s1871 + $0x78] sm:$0xff]
        %vm1888 = vcmask 1046528
        %v1889 = vrot.slane %v748, 1
        %v1890 = vrot.slane %v749, 1
        %v1891 = vsel %vm1888, %v1889, %v1890
        %v1892 = vrot.slane %v750, 1
        %v1893 = vsel %vm1888, %v1890, %v1892
        %v1894 = vrot.slane %v751, 1
        %v1895 = vsel %vm1888, %v1892, %v1894
        %v1896 = vrot.slane %v752, 1
        %v1897 = vsel %vm1888, %v1894, %v1896
        %v1898 = vrot.slane %v753, 1
        %v1899 = vsel %vm1888, %v1896, %v1898
        %v1900 = vrot.slane %v754, 1
        %v1901 = vsel %vm1888, %v1898, %v1900
        %v1902 = vrot.slane %v755, 1
        %v1903 = vsel %vm1888, %v1900, %v1902
        %v1904 = vrot.slane %v756, 1
        %v1905 = vsel %vm1888, %v1902, %v1904
        %v1906 = vrot.slane %v757, 1
        %v1907 = vsel %vm1888, %v1904, %v1906
        %v1908 = vrot.slane %v758, 1
        %v1909 = vsel %vm1888, %v1906, %v1908
        %v1910 = vrot.slane %v759, 1
        %v1911 = vsel %vm1888, %v1908, %v1910
        %v1912 = vrot.slane %v760, 1
        %v1913 = vsel %vm1888, %v1910, %v1912
        %v1914 = vrot.slane %v761, 1
        %v1915 = vsel %vm1888, %v1912, %v1914
        %v1916 = vrot.slane %v762, 1
        %v1917 = vsel %vm1888, %v1914, %v1916
        %v1918 = vrot.slane %v763, 1
        %v1919 = vsel %vm1888, %v1916, %v1918
        %v1952 = vunpack.c.l.b16 %v1872
        %v1953 = vunpack.c.h.b16 %v1872
        %v1954 = vunpack.c.l.b16 %v1873
        %v1955 = vunpack.c.h.b16 %v1873
        %v1956 = vunpack.c.l.b16 %v1874
        %v1957 = vunpack.c.h.b16 %v1874
        %v1958 = vunpack.c.l.b16 %v1875
        %v1959 = vunpack.c.h.b16 %v1875
        %v1960 = vunpack.c.l.b16 %v1876
        %v1961 = vunpack.c.h.b16 %v1876
        %v1962 = vunpack.c.l.b16 %v1877
        %v1963 = vunpack.c.h.b16 %v1877
        %v1964 = vunpack.c.l.b16 %v1878
        %v1965 = vunpack.c.h.b16 %v1878
        %v1966 = vunpack.c.l.b16 %v1879
        %v1967 = vunpack.c.h.b16 %v1879
        %v1968 = vunpack.c.l.b16 %v1880
        %v1969 = vunpack.c.h.b16 %v1880
        %v1970 = vunpack.c.l.b16 %v1881
        %v1971 = vunpack.c.h.b16 %v1881
        %v1972 = vunpack.c.l.b16 %v1882
        %v1973 = vunpack.c.h.b16 %v1882
        %v1974 = vunpack.c.l.b16 %v1883
        %v1975 = vunpack.c.h.b16 %v1883
        %v1976 = vunpack.c.l.b16 %v1884
        %v1977 = vunpack.c.h.b16 %v1884
        %v1978 = vunpack.c.l.b16 %v1885
        %v1979 = vunpack.c.h.b16 %v1885
        %v1980 = vunpack.c.l.b16 %v1886
        %v1981 = vunpack.c.h.b16 %v1886
        %v1982 = vunpack.c.l.b16 %v1887
        %v1983 = vunpack.c.h.b16 %v1887
        %v1984 = vpack.c.b16 %v1954, %v1952
        %v1985 = vpack.c.b16 %v1955, %v1953
        %v1986 = vpack.c.b16 %v1958, %v1956
        %v1987 = vpack.c.b16 %v1959, %v1957
        %v1988 = vpack.c.b16 %v1962, %v1960
        %v1989 = vpack.c.b16 %v1963, %v1961
        %v1990 = vpack.c.b16 %v1966, %v1964
        %v1991 = vpack.c.b16 %v1967, %v1965
        %v1992 = vpack.c.b16 %v1970, %v1968
        %v1993 = vpack.c.b16 %v1971, %v1969
        %v1994 = vpack.c.b16 %v1974, %v1972
        %v1995 = vpack.c.b16 %v1975, %v1973
        %v1996 = vpack.c.b16 %v1978, %v1976
        %v1997 = vpack.c.b16 %v1979, %v1977
        %v1998 = vpack.c.b16 %v1982, %v1980
        %v1999 = vpack.c.b16 %v1983, %v1981
        %2016 = vmatprep.subr.bf16.mxu0 %v1985
        %2017 = vmatpush1.bf16.msra.mxu0 %v1984
        %2018 = vmatprep.subr.bf16.mxu0 %v1987
        %2019 = vmatpush1.bf16.msra.mxu0 %v1986
        %2020 = vmatprep.subr.bf16.mxu0 %v1989
        %2021 = vmatpush1.bf16.msra.mxu0 %v1988
        %2022 = vmatprep.subr.bf16.mxu0 %v1991
        %2023 = vmatpush1.bf16.msra.mxu0 %v1990
        %2024 = vmatprep.subr.bf16.mxu0 %v1993
        %2025 = vmatpush1.bf16.msra.mxu0 %v1992
        %2026 = vmatprep.subr.bf16.mxu0 %v1995
        %2027 = vmatpush1.bf16.msra.mxu0 %v1994
        %2028 = vmatprep.subr.bf16.mxu0 %v1997
        %2029 = vmatpush1.bf16.msra.mxu0 %v1996
        %2030 = vmatprep.subr.bf16.mxu0 %v1999
        %2031 = vmatpush1.bf16.msra.mxu0 %v1998
        %2032 = vmatprep.subr.bf16.mxu0 0
        %2033 = vmatpush1.bf16.msra.mxu0 0
        %2034 = vmatprep.subr.bf16.mxu0 0
        %2035 = vmatpush1.bf16.msra.mxu0 0
        %2036 = vmatprep.subr.bf16.mxu0 0
        %2037 = vmatpush1.bf16.msra.mxu0 0
        %2038 = vmatprep.subr.bf16.mxu0 0
        %2039 = vmatpush1.bf16.msra.mxu0 0
        %2040 = vmatprep.subr.bf16.mxu0 0
        %2041 = vmatpush1.bf16.msra.mxu0 0
        %2042 = vmatprep.subr.bf16.mxu0 0
        %2043 = vmatpush1.bf16.msra.mxu0 0
        %2044 = vmatprep.subr.bf16.mxu0 0
        %2045 = vmatpush1.bf16.msra.mxu0 0
        %2046 = vmatprep.subr.bf16.mxu0 0
        %2047 = vmatpush1.bf16.msra.mxu0 0
        %2048 = vmatprep.mubr.bf16.mxu0 0
        %2049 = vmatmul.mubr.bf16.gmra.mrb[0].mxu0 %v1891
        %v2050 = vpop.f32.mrb[0].mxu0
        %v2051 = vadd.f32 0.0, %v2050
        %v2052 = vpop.f32.mrb[0].mxu0
        %v2053 = vadd.f32 0.0, %v2052
        %v2054 = vpop.f32.mrb[0].mxu0
        %v2055 = vadd.f32 0.0, %v2054
        %v2056 = vpop.f32.mrb[0].mxu0
        %v2057 = vadd.f32 0.0, %v2056
        %2058 = vmatprep.mubr.bf16.mxu0 0
        %2059 = vmatmul.mubr.bf16.gmra.mrb[0].mxu0 %v1893
        %v2060 = vpop.f32.mrb[0].mxu0
        %v2061 = vadd.f32 0.0, %v2060
        %v2062 = vpop.f32.mrb[0].mxu0
        %v2063 = vadd.f32 0.0, %v2062
        %v2064 = vpop.f32.mrb[0].mxu0
        %v2065 = vadd.f32 0.0, %v2064
        %v2066 = vpop.f32.mrb[0].mxu0
        %v2067 = vadd.f32 0.0, %v2066
        %2068 = vmatprep.mubr.bf16.mxu0 0
        %2069 = vmatmul.mubr.bf16.gmra.mrb[0].mxu0 %v1895
        %v2070 = vpop.f32.mrb[0].mxu0
        %v2071 = vadd.f32 0.0, %v2070
        %v2072 = vpop.f32.mrb[0].mxu0
        %v2073 = vadd.f32 0.0, %v2072
        %v2074 = vpop.f32.mrb[0].mxu0
        %v2075 = vadd.f32 0.0, %v2074
        %v2076 = vpop.f32.mrb[0].mxu0
        %v2077 = vadd.f32 0.0, %v2076
        %2078 = vmatprep.mubr.bf16.mxu0 0
        %2079 = vmatmul.mubr.bf16.gmra.mrb[0].mxu0 %v1897
        %v2080 = vpop.f32.mrb[0].mxu0
        %v2081 = vadd.f32 0.0, %v2080
        %v2082 = vpop.f32.mrb[0].mxu0
        %v2083 = vadd.f32 0.0, %v2082
        %v2084 = vpop.f32.mrb[0].mxu0
        %v2085 = vadd.f32 0.0, %v2084
        %v2086 = vpop.f32.mrb[0].mxu0
        %v2087 = vadd.f32 0.0, %v2086
        %2088 = vmatprep.mubr.bf16.mxu0 0
        %2089 = vmatmul.mubr.bf16.gmra.mrb[0].mxu0 %v1899
        %v2090 = vpop.f32.mrb[0].mxu0
        %v2091 = vadd.f32 0.0, %v2090
        %v2092 = vpop.f32.mrb[0].mxu0
        %v2093 = vadd.f32 0.0, %v2092
        %v2094 = vpop.f32.mrb[0].mxu0
        %v2095 = vadd.f32 0.0, %v2094
        %v2096 = vpop.f32.mrb[0].mxu0
        %v2097 = vadd.f32 0.0, %v2096
        %2098 = vmatprep.mubr.bf16.mxu0 0
        %2099 = vmatmul.mubr.bf16.gmra.mrb[0].mxu0 %v1901
        %v2100 = vpop.f32.mrb[0].mxu0
        %v2101 = vadd.f32 0.0, %v2100
        %v2102 = vpop.f32.mrb[0].mxu0
        %v2103 = vadd.f32 0.0, %v2102
        %v2104 = vpop.f32.mrb[0].mxu0
        %v2105 = vadd.f32 0.0, %v2104
        %v2106 = vpop.f32.mrb[0].mxu0
        %v2107 = vadd.f32 0.0, %v2106
        %2108 = vmatprep.mubr.bf16.mxu0 0
        %2109 = vmatmul.mubr.bf16.gmra.mrb[0].mxu0 %v1903
        %v2110 = vpop.f32.mrb[0].mxu0
        %v2111 = vadd.f32 0.0, %v2110
        %v2112 = vpop.f32.mrb[0].mxu0
        %v2113 = vadd.f32 0.0, %v2112
        %v2114 = vpop.f32.mrb[0].mxu0
        %v2115 = vadd.f32 0.0, %v2114
        %v2116 = vpop.f32.mrb[0].mxu0
        %v2117 = vadd.f32 0.0, %v2116
        %2118 = vmatprep.mubr.bf16.mxu0 0
        %2119 = vmatmul.mubr.bf16.gmra.mrb[0].mxu0 %v1905
        %v2120 = vpop.f32.mrb[0].mxu0
        %v2121 = vadd.f32 0.0, %v2120
        %v2122 = vpop.f32.mrb[0].mxu0
        %v2123 = vadd.f32 0.0, %v2122
        %v2124 = vpop.f32.mrb[0].mxu0
        %v2125 = vadd.f32 0.0, %v2124
        %v2126 = vpop.f32.mrb[0].mxu0
        %v2127 = vadd.f32 0.0, %v2126
        %2128 = vmatprep.mubr.bf16.mxu0 0
        %2129 = vmatmul.mubr.bf16.gmra.mrb[0].mxu0 %v1907
        %v2130 = vpop.f32.mrb[0].mxu0
        %v2131 = vadd.f32 0.0, %v2130
        %v2132 = vpop.f32.mrb[0].mxu0
        %v2133 = vadd.f32 0.0, %v2132
        %v2134 = vpop.f32.mrb[0].mxu0
        %v2135 = vadd.f32 0.0, %v2134
        %v2136 = vpop.f32.mrb[0].mxu0
        %v2137 = vadd.f32 0.0, %v2136
        %2138 = vmatprep.mubr.bf16.mxu0 0
        %2139 = vmatmul.mubr.bf16.gmra.mrb[0].mxu0 %v1909
        %v2140 = vpop.f32.mrb[0].mxu0
        %v2141 = vadd.f32 0.0, %v2140
        %v2142 = vpop.f32.mrb[0].mxu0
        %v2143 = vadd.f32 0.0, %v2142
        %v2144 = vpop.f32.mrb[0].mxu0
        %v2145 = vadd.f32 0.0, %v2144
        %v2146 = vpop.f32.mrb[0].mxu0
        %v2147 = vadd.f32 0.0, %v2146
        %2148 = vmatprep.mubr.bf16.mxu0 0
        %2149 = vmatmul.mubr.bf16.gmra.mrb[0].mxu0 %v1911
        %v2150 = vpop.f32.mrb[0].mxu0
        %v2151 = vadd.f32 0.0, %v2150
        %v2152 = vpop.f32.mrb[0].mxu0
        %v2153 = vadd.f32 0.0, %v2152
        %v2154 = vpop.f32.mrb[0].mxu0
        %v2155 = vadd.f32 0.0, %v2154
        %v2156 = vpop.f32.mrb[0].mxu0
        %v2157 = vadd.f32 0.0, %v2156
        %2158 = vmatprep.mubr.bf16.mxu0 0
        %2159 = vmatmul.mubr.bf16.gmra.mrb[0].mxu0 %v1913
        %v2160 = vpop.f32.mrb[0].mxu0
        %v2161 = vadd.f32 0.0, %v2160
        %v2162 = vpop.f32.mrb[0].mxu0
        %v2163 = vadd.f32 0.0, %v2162
        %v2164 = vpop.f32.mrb[0].mxu0
        %v2165 = vadd.f32 0.0, %v2164
        %v2166 = vpop.f32.mrb[0].mxu0
        %v2167 = vadd.f32 0.0, %v2166
        %2168 = vmatprep.mubr.bf16.mxu0 0
        %2169 = vmatmul.mubr.bf16.gmra.mrb[0].mxu0 %v1915
        %v2170 = vpop.f32.mrb[0].mxu0
        %v2171 = vadd.f32 0.0, %v2170
        %v2172 = vpop.f32.mrb[0].mxu0
        %v2173 = vadd.f32 0.0, %v2172
        %v2174 = vpop.f32.mrb[0].mxu0
        %v2175 = vadd.f32 0.0, %v2174
        %v2176 = vpop.f32.mrb[0].mxu0
        %v2177 = vadd.f32 0.0, %v2176
        %2178 = vmatprep.mubr.bf16.mxu0 0
        %2179 = vmatmul.mubr.bf16.gmra.mrb[0].mxu0 %v1917
        %v2180 = vpop.f32.mrb[0].mxu0
        %v2181 = vadd.f32 0.0, %v2180
        %v2182 = vpop.f32.mrb[0].mxu0
        %v2183 = vadd.f32 0.0, %v2182
        %v2184 = vpop.f32.mrb[0].mxu0
        %v2185 = vadd.f32 0.0, %v2184
        %v2186 = vpop.f32.mrb[0].mxu0
        %v2187 = vadd.f32 0.0, %v2186
        %2188 = vmatprep.mubr.bf16.mxu0 0
        %2189 = vmatmul.mubr.bf16.gmra.mrb[0].mxu0 %v1919
        %v2190 = vpop.f32.mrb[0].mxu0
        %v2191 = vadd.f32 0.0, %v2190
        %v2192 = vpop.f32.mrb[0].mxu0
        %v2193 = vadd.f32 0.0, %v2192
        %v2194 = vpop.f32.mrb[0].mxu0
        %v2195 = vadd.f32 0.0, %v2194
        %v2196 = vpop.f32.mrb[0].mxu0
        %v2197 = vadd.f32 0.0, %v2196
        %2198 = vmatprep.mubr.bf16.mxu0 0
        %2199 = vmatmul.mubr.bf16.gmra.mrb[0].mxu0 %v1918
        %v2200 = vpop.f32.mrb[0].mxu0
        %v2201 = vadd.f32 0.0, %v2200
        %v2202 = vpop.f32.mrb[0].mxu0
        %v2203 = vadd.f32 0.0, %v2202
        %v2204 = vpop.f32.mrb[0].mxu0
        %v2205 = vadd.f32 0.0, %v2204
        %v2206 = vpop.f32.mrb[0].mxu0
        %v2207 = vadd.f32 0.0, %v2206
        %2208 = vdwg.mxu0
        %v2209 = vadd.f32 %v1807, %v2051
        %v2210 = vadd.f32 %v1808, %v2053
        %v2211 = vadd.f32 %v1809, %v2055
        %v2212 = vadd.f32 %v1810, %v2057
        %v2213 = vadd.f32 %v1811, %v2061
        %v2214 = vadd.f32 %v1812, %v2063
        %v2215 = vadd.f32 %v1813, %v2065
        %v2216 = vadd.f32 %v1814, %v2067
        %v2217 = vadd.f32 %v1815, %v2071
        %v2218 = vadd.f32 %v1816, %v2073
        %v2219 = vadd.f32 %v1817, %v2075
        %v2220 = vadd.f32 %v1818, %v2077
        %v2221 = vadd.f32 %v1819, %v2081
        %v2222 = vadd.f32 %v1820, %v2083
        %v2223 = vadd.f32 %v1821, %v2085
        %v2224 = vadd.f32 %v1822, %v2087
        %v2225 = vadd.f32 %v1823, %v2091
        %v2226 = vadd.f32 %v1824, %v2093
        %v2227 = vadd.f32 %v1825, %v2095
        %v2228 = vadd.f32 %v1826, %v2097
        %v2229 = vadd.f32 %v1827, %v2101
        %v2230 = vadd.f32 %v1828, %v2103
        %v2231 = vadd.f32 %v1829, %v2105
        %v2232 = vadd.f32 %v1830, %v2107
        %v2233 = vadd.f32 %v1831, %v2111
        %v2234 = vadd.f32 %v1832, %v2113
        %v2235 = vadd.f32 %v1833, %v2115
        %v2236 = vadd.f32 %v1834, %v2117
        %v2237 = vadd.f32 %v1835, %v2121
        %v2238 = vadd.f32 %v1836, %v2123
        %v2239 = vadd.f32 %v1837, %v2125
        %v2240 = vadd.f32 %v1838, %v2127
        %v2241 = vadd.f32 %v1839, %v2131
        %v2242 = vadd.f32 %v1840, %v2133
        %v2243 = vadd.f32 %v1841, %v2135
        %v2244 = vadd.f32 %v1842, %v2137
        %v2245 = vadd.f32 %v1843, %v2141
        %v2246 = vadd.f32 %v1844, %v2143
        %v2247 = vadd.f32 %v1845, %v2145
        %v2248 = vadd.f32 %v1846, %v2147
        %v2249 = vadd.f32 %v1847, %v2151
        %v2250 = vadd.f32 %v1848, %v2153
        %v2251 = vadd.f32 %v1849, %v2155
        %v2252 = vadd.f32 %v1850, %v2157
        %v2253 = vadd.f32 %v1851, %v2161
        %v2254 = vadd.f32 %v1852, %v2163
        %v2255 = vadd.f32 %v1853, %v2165
        %v2256 = vadd.f32 %v1854, %v2167
        %v2257 = vadd.f32 %v1855, %v2171
        %v2258 = vadd.f32 %v1856, %v2173
        %v2259 = vadd.f32 %v1857, %v2175
        %v2260 = vadd.f32 %v1858, %v2177
        %v2261 = vadd.f32 %v1859, %v2181
        %v2262 = vadd.f32 %v1860, %v2183
        %v2263 = vadd.f32 %v1861, %v2185
        %v2264 = vadd.f32 %v1862, %v2187
        %v2265 = vadd.f32 %v1863, %v2191
        %v2266 = vadd.f32 %v1864, %v2193
        %v2267 = vadd.f32 %v1865, %v2195
        %v2268 = vadd.f32 %v1866, %v2197
        %v2269 = vadd.f32 %v1867, %v2201
        %v2270 = vadd.f32 %v1868, %v2203
        %v2271 = vadd.f32 %v1869, %v2205
        %v2272 = vadd.f32 %v1870, %v2207
        %2273 = vst [vmem:[#allocation2] sm:$0xff] %v2209
        %2274 = vst [vmem:[#allocation2 + $0x8] sm:$0xff] %v2210
        %2275 = vst [vmem:[#allocation2 + $0x10] sm:$0xff] %v2211
        %2276 = vst [vmem:[#allocation2 + $0x18] sm:$0xff] %v2212
        %2277 = vst [vmem:[#allocation2 + $0x20] sm:$0xff] %v2213
        %2278 = vst [vmem:[#allocation2 + $0x28] sm:$0xff] %v2214
        %2279 = vst [vmem:[#allocation2 + $0x30] sm:$0xff] %v2215
        %2280 = vst [vmem:[#allocation2 + $0x38] sm:$0xff] %v2216
        %2281 = vst [vmem:[#allocation2 + $0x40] sm:$0xff] %v2217
        %2282 = vst [vmem:[#allocation2 + $0x48] sm:$0xff] %v2218
        %2283 = vst [vmem:[#allocation2 + $0x50] sm:$0xff] %v2219
        %2284 = vst [vmem:[#allocation2 + $0x58] sm:$0xff] %v2220
        %2285 = vst [vmem:[#allocation2 + $0x60] sm:$0xff] %v2221
        %2286 = vst [vmem:[#allocation2 + $0x68] sm:$0xff] %v2222
        %2287 = vst [vmem:[#allocation2 + $0x70] sm:$0xff] %v2223
        %2288 = vst [vmem:[#allocation2 + $0x78] sm:$0xff] %v2224
        %2289 = vst [vmem:[#allocation2 + $0x80] sm:$0xff] %v2225
        %2290 = vst [vmem:[#allocation2 + $0x88] sm:$0xff] %v2226
        %2291 = vst [vmem:[#allocation2 + $0x90] sm:$0xff] %v2227
        %2292 = vst [vmem:[#allocation2 + $0x98] sm:$0xff] %v2228
        %2293 = vst [vmem:[#allocation2 + $0xa0] sm:$0xff] %v2229
        %2294 = vst [vmem:[#allocation2 + $0xa8] sm:$0xff] %v2230
        %2295 = vst [vmem:[#allocation2 + $0xb0] sm:$0xff] %v2231
        %2296 = vst [vmem:[#allocation2 + $0xb8] sm:$0xff] %v2232
        %2297 = vst [vmem:[#allocation2 + $0xc0] sm:$0xff] %v2233
        %2298 = vst [vmem:[#allocation2 + $0xc8] sm:$0xff] %v2234
        %2299 = vst [vmem:[#allocation2 + $0xd0] sm:$0xff] %v2235
        %2300 = vst [vmem:[#allocation2 + $0xd8] sm:$0xff] %v2236
        %2301 = vst [vmem:[#allocation2 + $0xe0] sm:$0xff] %v2237
        %2302 = vst [vmem:[#allocation2 + $0xe8] sm:$0xff] %v2238
        %2303 = vst [vmem:[#allocation2 + $0xf0] sm:$0xff] %v2239
        %2304 = vst [vmem:[#allocation2 + $0xf8] sm:$0xff] %v2240
        %2305 = vst [vmem:[#allocation2 + $0x100] sm:$0xff] %v2241
        %2306 = vst [vmem:[#allocation2 + $0x108] sm:$0xff] %v2242
        %2307 = vst [vmem:[#allocation2 + $0x110] sm:$0xff] %v2243
        %2308 = vst [vmem:[#allocation2 + $0x118] sm:$0xff] %v2244
        %2309 = vst [vmem:[#allocation2 + $0x120] sm:$0xff] %v2245
        %2310 = vst [vmem:[#allocation2 + $0x128] sm:$0xff] %v2246
        %2311 = vst [vmem:[#allocation2 + $0x130] sm:$0xff] %v2247
        %2312 = vst [vmem:[#allocation2 + $0x138] sm:$0xff] %v2248
        %2313 = vst [vmem:[#allocation2 + $0x140] sm:$0xff] %v2249
        %2314 = vst [vmem:[#allocation2 + $0x148] sm:$0xff] %v2250
        %2315 = vst [vmem:[#allocation2 + $0x150] sm:$0xff] %v2251
        %2316 = vst [vmem:[#allocation2 + $0x158] sm:$0xff] %v2252
        %2317 = vst [vmem:[#allocation2 + $0x160] sm:$0xff] %v2253
        %2318 = vst [vmem:[#allocation2 + $0x168] sm:$0xff] %v2254
        %2319 = vst [vmem:[#allocation2 + $0x170] sm:$0xff] %v2255
        %2320 = vst [vmem:[#allocation2 + $0x178] sm:$0xff] %v2256
        %2321 = vst [vmem:[#allocation2 + $0x180] sm:$0xff] %v2257
        %2322 = vst [vmem:[#allocation2 + $0x188] sm:$0xff] %v2258
        %2323 = vst [vmem:[#allocation2 + $0x190] sm:$0xff] %v2259
        %2324 = vst [vmem:[#allocation2 + $0x198] sm:$0xff] %v2260
        %2325 = vst [vmem:[#allocation2 + $0x1a0] sm:$0xff] %v2261
        %2326 = vst [vmem:[#allocation2 + $0x1a8] sm:$0xff] %v2262
        %2327 = vst [vmem:[#allocation2 + $0x1b0] sm:$0xff] %v2263
        %2328 = vst [vmem:[#allocation2 + $0x1b8] sm:$0xff] %v2264
        %2329 = vst [vmem:[#allocation2 + $0x1c0] sm:$0xff] %v2265
        %2330 = vst [vmem:[#allocation2 + $0x1c8] sm:$0xff] %v2266
        %2331 = vst [vmem:[#allocation2 + $0x1d0] sm:$0xff] %v2267
        %2332 = vst [vmem:[#allocation2 + $0x1d8] sm:$0xff] %v2268
        %2333 = vst [vmem:[#allocation2 + $0x1e0] sm:$0xff] %v2269
        %2334 = vst [vmem:[#allocation2 + $0x1e8] sm:$0xff] %v2270
        %2335 = vst [vmem:[#allocation2 + $0x1f0] sm:$0xf] %v2271
        %2336 = vst [vmem:[#allocation2 + $0x1f8] sm:$0xf] %v2272
        %v2337 = vld [vmem:[#allocation2] sm:$0xff]
        %v2338 = vld [vmem:[#allocation2 + $0x8] sm:$0xff]
        %v2339 = vld [vmem:[#allocation2 + $0x10] sm:$0xff]
        %v2340 = vld [vmem:[#allocation2 + $0x18] sm:$0xff]
        %v2341 = vld [vmem:[#allocation2 + $0x20] sm:$0xff]
        %v2342 = vld [vmem:[#allocation2 + $0x28] sm:$0xff]
        %v2343 = vld [vmem:[#allocation2 + $0x30] sm:$0xff]
        %v2344 = vld [vmem:[#allocation2 + $0x38] sm:$0xff]
        %v2345 = vld [vmem:[#allocation2 + $0x40] sm:$0xff]
        %v2346 = vld [vmem:[#allocation2 + $0x48] sm:$0xff]
        %v2347 = vld [vmem:[#allocation2 + $0x50] sm:$0xff]
        %v2348 = vld [vmem:[#allocation2 + $0x58] sm:$0xff]
        %v2349 = vld [vmem:[#allocation2 + $0x60] sm:$0xff]
        %v2350 = vld [vmem:[#allocation2 + $0x68] sm:$0xff]
        %v2351 = vld [vmem:[#allocation2 + $0x70] sm:$0xff]
        %v2352 = vld [vmem:[#allocation2 + $0x78] sm:$0xff]
        %v2353 = vld [vmem:[#allocation2 + $0x80] sm:$0xff]
        %v2354 = vld [vmem:[#allocation2 + $0x88] sm:$0xff]
        %v2355 = vld [vmem:[#allocation2 + $0x90] sm:$0xff]
        %v2356 = vld [vmem:[#allocation2 + $0x98] sm:$0xff]
        %v2357 = vld [vmem:[#allocation2 + $0xa0] sm:$0xff]
        %v2358 = vld [vmem:[#allocation2 + $0xa8] sm:$0xff]
        %v2359 = vld [vmem:[#allocation2 + $0xb0] sm:$0xff]
        %v2360 = vld [vmem:[#allocation2 + $0xb8] sm:$0xff]
        %v2361 = vld [vmem:[#allocation2 + $0xc0] sm:$0xff]
        %v2362 = vld [vmem:[#allocation2 + $0xc8] sm:$0xff]
        %v2363 = vld [vmem:[#allocation2 + $0xd0] sm:$0xff]
        %v2364 = vld [vmem:[#allocation2 + $0xd8] sm:$0xff]
        %v2365 = vld [vmem:[#allocation2 + $0xe0] sm:$0xff]
        %v2366 = vld [vmem:[#allocation2 + $0xe8] sm:$0xff]
        %v2367 = vld [vmem:[#allocation2 + $0xf0] sm:$0xff]
        %v2368 = vld [vmem:[#allocation2 + $0xf8] sm:$0xff]
        %v2369 = vld [vmem:[#allocation2 + $0x100] sm:$0xff]
        %v2370 = vld [vmem:[#allocation2 + $0x108] sm:$0xff]
        %v2371 = vld [vmem:[#allocation2 + $0x110] sm:$0xff]
        %v2372 = vld [vmem:[#allocation2 + $0x118] sm:$0xff]
        %v2373 = vld [vmem:[#allocation2 + $0x120] sm:$0xff]
        %v2374 = vld [vmem:[#allocation2 + $0x128] sm:$0xff]
        %v2375 = vld [vmem:[#allocation2 + $0x130] sm:$0xff]
        %v2376 = vld [vmem:[#allocation2 + $0x138] sm:$0xff]
        %v2377 = vld [vmem:[#allocation2 + $0x140] sm:$0xff]
        %v2378 = vld [vmem:[#allocation2 + $0x148] sm:$0xff]
        %v2379 = vld [vmem:[#allocation2 + $0x150] sm:$0xff]
        %v2380 = vld [vmem:[#allocation2 + $0x158] sm:$0xff]
        %v2381 = vld [vmem:[#allocation2 + $0x160] sm:$0xff]
        %v2382 = vld [vmem:[#allocation2 + $0x168] sm:$0xff]
        %v2383 = vld [vmem:[#allocation2 + $0x170] sm:$0xff]
        %v2384 = vld [vmem:[#allocation2 + $0x178] sm:$0xff]
        %v2385 = vld [vmem:[#allocation2 + $0x180] sm:$0xff]
        %v2386 = vld [vmem:[#allocation2 + $0x188] sm:$0xff]
        %v2387 = vld [vmem:[#allocation2 + $0x190] sm:$0xff]
        %v2388 = vld [vmem:[#allocation2 + $0x198] sm:$0xff]
        %v2389 = vld [vmem:[#allocation2 + $0x1a0] sm:$0xff]
        %v2390 = vld [vmem:[#allocation2 + $0x1a8] sm:$0xff]
        %v2391 = vld [vmem:[#allocation2 + $0x1b0] sm:$0xff]
        %v2392 = vld [vmem:[#allocation2 + $0x1b8] sm:$0xff]
        %v2393 = vld [vmem:[#allocation2 + $0x1c0] sm:$0xff]
        %v2394 = vld [vmem:[#allocation2 + $0x1c8] sm:$0xff]
        %v2395 = vld [vmem:[#allocation2 + $0x1d0] sm:$0xff]
        %v2396 = vld [vmem:[#allocation2 + $0x1d8] sm:$0xff]
        %v2397 = vld [vmem:[#allocation2 + $0x1e0] sm:$0xff]
        %v2398 = vld [vmem:[#allocation2 + $0x1e8] sm:$0xff]
        %v2399 = vld [vmem:[#allocation2 + $0x1f0] sm:$0xf]
        %v2400 = vld [vmem:[#allocation2 + $0x1f8] sm:$0xf]
        %s2401 = scalar_lea.vmem %s1, 384
        %v2402 = vld [vmem:[%s2401] sm:$0xff]
        %v2403 = vld [vmem:[%s2401 + $0x8] sm:$0xff]
        %v2404 = vld [vmem:[%s2401 + $0x10] sm:$0xff]
        %v2405 = vld [vmem:[%s2401 + $0x18] sm:$0xff]
        %v2406 = vld [vmem:[%s2401 + $0x20] sm:$0xff]
        %v2407 = vld [vmem:[%s2401 + $0x28] sm:$0xff]
        %v2408 = vld [vmem:[%s2401 + $0x30] sm:$0xff]
        %v2409 = vld [vmem:[%s2401 + $0x38] sm:$0xff]
        %v2410 = vld [vmem:[%s2401 + $0x40] sm:$0xff]
        %v2411 = vld [vmem:[%s2401 + $0x48] sm:$0xff]
        %v2412 = vld [vmem:[%s2401 + $0x50] sm:$0xff]
        %v2413 = vld [vmem:[%s2401 + $0x58] sm:$0xff]
        %v2414 = vld [vmem:[%s2401 + $0x60] sm:$0xff]
        %v2415 = vld [vmem:[%s2401 + $0x68] sm:$0xff]
        %v2416 = vld [vmem:[%s2401 + $0x70] sm:$0xff]
        %v2417 = vld [vmem:[%s2401 + $0x78] sm:$0xff]
        %vm2418 = vsmask.f32 6400
        %v2419 = vrot.slane %v1264, 1
        %v2420 = vrot.slane %v1266, 2
        %v2421 = vor.u32 %v2419, %v2420
        %v2422 = vrot.slane %v1275, 1
        %v2423 = vrot.slane %v1271, 2
        %v2424 = vor.u32 %v2422, %v2423
        %v2425 = vsel %vm2418, %v2421, %v2424
        %v2426 = vrot.slane %v1283, 1
        %v2427 = vrot.slane %v1279, 2
        %v2428 = vor.u32 %v2426, %v2427
        %v2429 = vsel %vm2418, %v2424, %v2428
        %v2430 = vrot.slane %v1291, 1
        %v2431 = vrot.slane %v1287, 2
        %v2432 = vor.u32 %v2430, %v2431
        %v2433 = vsel %vm2418, %v2428, %v2432
        %v2434 = vrot.slane %v1299, 1
        %v2435 = vrot.slane %v1295, 2
        %v2436 = vor.u32 %v2434, %v2435
        %v2437 = vsel %vm2418, %v2432, %v2436
        %v2438 = vrot.slane %v1307, 1
        %v2439 = vrot.slane %v1303, 2
        %v2440 = vor.u32 %v2438, %v2439
        %v2441 = vsel %vm2418, %v2436, %v2440
        %v2442 = vrot.slane %v1315, 1
        %v2443 = vrot.slane %v1311, 2
        %v2444 = vor.u32 %v2442, %v2443
        %v2445 = vsel %vm2418, %v2440, %v2444
        %v2446 = vrot.slane %v1323, 1
        %v2447 = vrot.slane %v1319, 2
        %v2448 = vor.u32 %v2446, %v2447
        %v2449 = vsel %vm2418, %v2444, %v2448
        %v2450 = vrot.slane %v1331, 1
        %v2451 = vrot.slane %v1327, 2
        %v2452 = vor.u32 %v2450, %v2451
        %v2453 = vsel %vm2418, %v2448, %v2452
        %v2454 = vrot.slane %v1339, 1
        %v2455 = vrot.slane %v1335, 2
        %v2456 = vor.u32 %v2454, %v2455
        %v2457 = vsel %vm2418, %v2452, %v2456
        %v2458 = vrot.slane %v1347, 1
        %v2459 = vrot.slane %v1343, 2
        %v2460 = vor.u32 %v2458, %v2459
        %v2461 = vsel %vm2418, %v2456, %v2460
        %v2462 = vrot.slane %v1355, 1
        %v2463 = vrot.slane %v1351, 2
        %v2464 = vor.u32 %v2462, %v2463
        %v2465 = vsel %vm2418, %v2460, %v2464
        %v2466 = vrot.slane %v1363, 1
        %v2467 = vrot.slane %v1359, 2
        %v2468 = vor.u32 %v2466, %v2467
        %v2469 = vsel %vm2418, %v2464, %v2468
        %v2470 = vrot.slane %v1371, 1
        %v2471 = vrot.slane %v1367, 2
        %v2472 = vor.u32 %v2470, %v2471
        %v2473 = vsel %vm2418, %v2468, %v2472
        %v2474 = vrot.slane %v1379, 1
        %v2475 = vrot.slane %v1375, 2
        %v2476 = vor.u32 %v2474, %v2475
        %v2477 = vsel %vm2418, %v2472, %v2476
        %v2478 = vrot.slane %v1387, 1
        %v2479 = vrot.slane %v1383, 2
        %v2480 = vor.u32 %v2478, %v2479
        %v2481 = vsel %vm2418, %v2476, %v2480
        %v2514 = vunpack.c.l.b16 %v2402
        %v2515 = vunpack.c.h.b16 %v2402
        %v2516 = vunpack.c.l.b16 %v2403
        %v2517 = vunpack.c.h.b16 %v2403
        %v2518 = vunpack.c.l.b16 %v2404
        %v2519 = vunpack.c.h.b16 %v2404
        %v2520 = vunpack.c.l.b16 %v2405
        %v2521 = vunpack.c.h.b16 %v2405
        %v2522 = vunpack.c.l.b16 %v2406
        %v2523 = vunpack.c.h.b16 %v2406
        %v2524 = vunpack.c.l.b16 %v2407
        %v2525 = vunpack.c.h.b16 %v2407
        %v2526 = vunpack.c.l.b16 %v2408
        %v2527 = vunpack.c.h.b16 %v2408
        %v2528 = vunpack.c.l.b16 %v2409
        %v2529 = vunpack.c.h.b16 %v2409
        %v2530 = vunpack.c.l.b16 %v2410
        %v2531 = vunpack.c.h.b16 %v2410
        %v2532 = vunpack.c.l.b16 %v2411
        %v2533 = vunpack.c.h.b16 %v2411
        %v2534 = vunpack.c.l.b16 %v2412
        %v2535 = vunpack.c.h.b16 %v2412
        %v2536 = vunpack.c.l.b16 %v2413
        %v2537 = vunpack.c.h.b16 %v2413
        %v2538 = vunpack.c.l.b16 %v2414
        %v2539 = vunpack.c.h.b16 %v2414
        %v2540 = vunpack.c.l.b16 %v2415
        %v2541 = vunpack.c.h.b16 %v2415
        %v2542 = vunpack.c.l.b16 %v2416
        %v2543 = vunpack.c.h.b16 %v2416
        %v2544 = vunpack.c.l.b16 %v2417
        %v2545 = vunpack.c.h.b16 %v2417
        %v2546 = vpack.c.b16 %v2516, %v2514
        %v2547 = vpack.c.b16 %v2517, %v2515
        %v2548 = vpack.c.b16 %v2520, %v2518
        %v2549 = vpack.c.b16 %v2521, %v2519
        %v2550 = vpack.c.b16 %v2524, %v2522
        %v2551 = vpack.c.b16 %v2525, %v2523
        %v2552 = vpack.c.b16 %v2528, %v2526
        %v2553 = vpack.c.b16 %v2529, %v2527
        %v2554 = vpack.c.b16 %v2532, %v2530
        %v2555 = vpack.c.b16 %v2533, %v2531
        %v2556 = vpack.c.b16 %v2536, %v2534
        %v2557 = vpack.c.b16 %v2537, %v2535
        %v2558 = vpack.c.b16 %v2540, %v2538
        %v2559 = vpack.c.b16 %v2541, %v2539
        %v2560 = vpack.c.b16 %v2544, %v2542
        %v2561 = vpack.c.b16 %v2545, %v2543
        %2578 = vmatprep.subr.bf16.mxu0 %v2547
        %2579 = vmatpush1.bf16.msra.mxu0 %v2546
        %2580 = vmatprep.subr.bf16.mxu0 %v2549
        %2581 = vmatpush1.bf16.msra.mxu0 %v2548
        %2582 = vmatprep.subr.bf16.mxu0 %v2551
        %2583 = vmatpush1.bf16.msra.mxu0 %v2550
        %2584 = vmatprep.subr.bf16.mxu0 %v2553
        %2585 = vmatpush1.bf16.msra.mxu0 %v2552
        %2586 = vmatprep.subr.bf16.mxu0 %v2555
        %2587 = vmatpush1.bf16.msra.mxu0 %v2554
        %2588 = vmatprep.subr.bf16.mxu0 %v2557
        %2589 = vmatpush1.bf16.msra.mxu0 %v2556
        %2590 = vmatprep.subr.bf16.mxu0 %v2559
        %2591 = vmatpush1.bf16.msra.mxu0 %v2558
        %2592 = vmatprep.subr.bf16.mxu0 %v2561
        %2593 = vmatpush1.bf16.msra.mxu0 %v2560
        %2594 = vmatprep.subr.bf16.mxu0 0
        %2595 = vmatpush1.bf16.msra.mxu0 0
        %2596 = vmatprep.subr.bf16.mxu0 0
        %2597 = vmatpush1.bf16.msra.mxu0 0
        %2598 = vmatprep.subr.bf16.mxu0 0
        %2599 = vmatpush1.bf16.msra.mxu0 0
        %2600 = vmatprep.subr.bf16.mxu0 0
        %2601 = vmatpush1.bf16.msra.mxu0 0
        %2602 = vmatprep.subr.bf16.mxu0 0
        %2603 = vmatpush1.bf16.msra.mxu0 0
        %2604 = vmatprep.subr.bf16.mxu0 0
        %2605 = vmatpush1.bf16.msra.mxu0 0
        %2606 = vmatprep.subr.bf16.mxu0 0
        %2607 = vmatpush1.bf16.msra.mxu0 0
        %2608 = vmatprep.subr.bf16.mxu0 0
        %2609 = vmatpush1.bf16.msra.mxu0 0
        %2610 = vmatprep.mubr.bf16.mxu0 0
        %2611 = vmatmul.mubr.bf16.gmra.mrb[0].mxu0 %v2425
        %v2612 = vpop.f32.mrb[0].mxu0
        %v2613 = vadd.f32 0.0, %v2612
        %v2614 = vpop.f32.mrb[0].mxu0
        %v2615 = vadd.f32 0.0, %v2614
        %v2616 = vpop.f32.mrb[0].mxu0
        %v2617 = vadd.f32 0.0, %v2616
        %v2618 = vpop.f32.mrb[0].mxu0
        %v2619 = vadd.f32 0.0, %v2618
        %2620 = vmatprep.mubr.bf16.mxu0 0
        %2621 = vmatmul.mubr.bf16.gmra.mrb[0].mxu0 %v2429
        %v2622 = vpop.f32.mrb[0].mxu0
        %v2623 = vadd.f32 0.0, %v2622
        %v2624 = vpop.f32.mrb[0].mxu0
        %v2625 = vadd.f32 0.0, %v2624
        %v2626 = vpop.f32.mrb[0].mxu0
        %v2627 = vadd.f32 0.0, %v2626
        %v2628 = vpop.f32.mrb[0].mxu0
        %v2629 = vadd.f32 0.0, %v2628
        %2630 = vmatprep.mubr.bf16.mxu0 0
        %2631 = vmatmul.mubr.bf16.gmra.mrb[0].mxu0 %v2433
        %v2632 = vpop.f32.mrb[0].mxu0
        %v2633 = vadd.f32 0.0, %v2632
        %v2634 = vpop.f32.mrb[0].mxu0
        %v2635 = vadd.f32 0.0, %v2634
        %v2636 = vpop.f32.mrb[0].mxu0
        %v2637 = vadd.f32 0.0, %v2636
        %v2638 = vpop.f32.mrb[0].mxu0
        %v2639 = vadd.f32 0.0, %v2638
        %2640 = vmatprep.mubr.bf16.mxu0 0
        %2641 = vmatmul.mubr.bf16.gmra.mrb[0].mxu0 %v2437
        %v2642 = vpop.f32.mrb[0].mxu0
        %v2643 = vadd.f32 0.0, %v2642
        %v2644 = vpop.f32.mrb[0].mxu0
        %v2645 = vadd.f32 0.0, %v2644
        %v2646 = vpop.f32.mrb[0].mxu0
        %v2647 = vadd.f32 0.0, %v2646
        %v2648 = vpop.f32.mrb[0].mxu0
        %v2649 = vadd.f32 0.0, %v2648
        %2650 = vmatprep.mubr.bf16.mxu0 0
        %2651 = vmatmul.mubr.bf16.gmra.mrb[0].mxu0 %v2441
        %v2652 = vpop.f32.mrb[0].mxu0
        %v2653 = vadd.f32 0.0, %v2652
        %v2654 = vpop.f32.mrb[0].mxu0
        %v2655 = vadd.f32 0.0, %v2654
        %v2656 = vpop.f32.mrb[0].mxu0
        %v2657 = vadd.f32 0.0, %v2656
        %v2658 = vpop.f32.mrb[0].mxu0
        %v2659 = vadd.f32 0.0, %v2658
        %2660 = vmatprep.mubr.bf16.mxu0 0
        %2661 = vmatmul.mubr.bf16.gmra.mrb[0].mxu0 %v2445
        %v2662 = vpop.f32.mrb[0].mxu0
        %v2663 = vadd.f32 0.0, %v2662
        %v2664 = vpop.f32.mrb[0].mxu0
        %v2665 = vadd.f32 0.0, %v2664
        %v2666 = vpop.f32.mrb[0].mxu0
        %v2667 = vadd.f32 0.0, %v2666
        %v2668 = vpop.f32.mrb[0].mxu0
        %v2669 = vadd.f32 0.0, %v2668
        %2670 = vmatprep.mubr.bf16.mxu0 0
        %2671 = vmatmul.mubr.bf16.gmra.mrb[0].mxu0 %v2449
        %v2672 = vpop.f32.mrb[0].mxu0
        %v2673 = vadd.f32 0.0, %v2672
        %v2674 = vpop.f32.mrb[0].mxu0
        %v2675 = vadd.f32 0.0, %v2674
        %v2676 = vpop.f32.mrb[0].mxu0
        %v2677 = vadd.f32 0.0, %v2676
        %v2678 = vpop.f32.mrb[0].mxu0
        %v2679 = vadd.f32 0.0, %v2678
        %2680 = vmatprep.mubr.bf16.mxu0 0
        %2681 = vmatmul.mubr.bf16.gmra.mrb[0].mxu0 %v2453
        %v2682 = vpop.f32.mrb[0].mxu0
        %v2683 = vadd.f32 0.0, %v2682
        %v2684 = vpop.f32.mrb[0].mxu0
        %v2685 = vadd.f32 0.0, %v2684
        %v2686 = vpop.f32.mrb[0].mxu0
        %v2687 = vadd.f32 0.0, %v2686
        %v2688 = vpop.f32.mrb[0].mxu0
        %v2689 = vadd.f32 0.0, %v2688
        %2690 = vmatprep.mubr.bf16.mxu0 0
        %2691 = vmatmul.mubr.bf16.gmra.mrb[0].mxu0 %v2457
        %v2692 = vpop.f32.mrb[0].mxu0
        %v2693 = vadd.f32 0.0, %v2692
        %v2694 = vpop.f32.mrb[0].mxu0
        %v2695 = vadd.f32 0.0, %v2694
        %v2696 = vpop.f32.mrb[0].mxu0
        %v2697 = vadd.f32 0.0, %v2696
        %v2698 = vpop.f32.mrb[0].mxu0
        %v2699 = vadd.f32 0.0, %v2698
        %2700 = vmatprep.mubr.bf16.mxu0 0
        %2701 = vmatmul.mubr.bf16.gmra.mrb[0].mxu0 %v2461
        %v2702 = vpop.f32.mrb[0].mxu0
        %v2703 = vadd.f32 0.0, %v2702
        %v2704 = vpop.f32.mrb[0].mxu0
        %v2705 = vadd.f32 0.0, %v2704
        %v2706 = vpop.f32.mrb[0].mxu0
        %v2707 = vadd.f32 0.0, %v2706
        %v2708 = vpop.f32.mrb[0].mxu0
        %v2709 = vadd.f32 0.0, %v2708
        %2710 = vmatprep.mubr.bf16.mxu0 0
        %2711 = vmatmul.mubr.bf16.gmra.mrb[0].mxu0 %v2465
        %v2712 = vpop.f32.mrb[0].mxu0
        %v2713 = vadd.f32 0.0, %v2712
        %v2714 = vpop.f32.mrb[0].mxu0
        %v2715 = vadd.f32 0.0, %v2714
        %v2716 = vpop.f32.mrb[0].mxu0
        %v2717 = vadd.f32 0.0, %v2716
        %v2718 = vpop.f32.mrb[0].mxu0
        %v2719 = vadd.f32 0.0, %v2718
        %2720 = vmatprep.mubr.bf16.mxu0 0
        %2721 = vmatmul.mubr.bf16.gmra.mrb[0].mxu0 %v2469
        %v2722 = vpop.f32.mrb[0].mxu0
        %v2723 = vadd.f32 0.0, %v2722
        %v2724 = vpop.f32.mrb[0].mxu0
        %v2725 = vadd.f32 0.0, %v2724
        %v2726 = vpop.f32.mrb[0].mxu0
        %v2727 = vadd.f32 0.0, %v2726
        %v2728 = vpop.f32.mrb[0].mxu0
        %v2729 = vadd.f32 0.0, %v2728
        %2730 = vmatprep.mubr.bf16.mxu0 0
        %2731 = vmatmul.mubr.bf16.gmra.mrb[0].mxu0 %v2473
        %v2732 = vpop.f32.mrb[0].mxu0
        %v2733 = vadd.f32 0.0, %v2732
        %v2734 = vpop.f32.mrb[0].mxu0
        %v2735 = vadd.f32 0.0, %v2734
        %v2736 = vpop.f32.mrb[0].mxu0
        %v2737 = vadd.f32 0.0, %v2736
        %v2738 = vpop.f32.mrb[0].mxu0
        %v2739 = vadd.f32 0.0, %v2738
        %2740 = vmatprep.mubr.bf16.mxu0 0
        %2741 = vmatmul.mubr.bf16.gmra.mrb[0].mxu0 %v2477
        %v2742 = vpop.f32.mrb[0].mxu0
        %v2743 = vadd.f32 0.0, %v2742
        %v2744 = vpop.f32.mrb[0].mxu0
        %v2745 = vadd.f32 0.0, %v2744
        %v2746 = vpop.f32.mrb[0].mxu0
        %v2747 = vadd.f32 0.0, %v2746
        %v2748 = vpop.f32.mrb[0].mxu0
        %v2749 = vadd.f32 0.0, %v2748
        %2750 = vmatprep.mubr.bf16.mxu0 0
        %2751 = vmatmul.mubr.bf16.gmra.mrb[0].mxu0 %v2481
        %v2752 = vpop.f32.mrb[0].mxu0
        %v2753 = vadd.f32 0.0, %v2752
        %v2754 = vpop.f32.mrb[0].mxu0
        %v2755 = vadd.f32 0.0, %v2754
        %v2756 = vpop.f32.mrb[0].mxu0
        %v2757 = vadd.f32 0.0, %v2756
        %v2758 = vpop.f32.mrb[0].mxu0
        %v2759 = vadd.f32 0.0, %v2758
        %2760 = vmatprep.mubr.bf16.mxu0 0
        %2761 = vmatmul.mubr.bf16.gmra.mrb[0].mxu0 %v2480
        %v2762 = vpop.f32.mrb[0].mxu0
        %v2763 = vadd.f32 0.0, %v2762
        %v2764 = vpop.f32.mrb[0].mxu0
        %v2765 = vadd.f32 0.0, %v2764
        %v2766 = vpop.f32.mrb[0].mxu0
        %v2767 = vadd.f32 0.0, %v2766
        %v2768 = vpop.f32.mrb[0].mxu0
        %v2769 = vadd.f32 0.0, %v2768
        %2770 = vdwg.mxu0
        %v2771 = vadd.f32 %v2337, %v2613
        %v2772 = vadd.f32 %v2338, %v2615
        %v2773 = vadd.f32 %v2339, %v2617
        %v2774 = vadd.f32 %v2340, %v2619
        %v2775 = vadd.f32 %v2341, %v2623
        %v2776 = vadd.f32 %v2342, %v2625
        %v2777 = vadd.f32 %v2343, %v2627
        %v2778 = vadd.f32 %v2344, %v2629
        %v2779 = vadd.f32 %v2345, %v2633
        %v2780 = vadd.f32 %v2346, %v2635
        %v2781 = vadd.f32 %v2347, %v2637
        %v2782 = vadd.f32 %v2348, %v2639
        %v2783 = vadd.f32 %v2349, %v2643
        %v2784 = vadd.f32 %v2350, %v2645
        %v2785 = vadd.f32 %v2351, %v2647
        %v2786 = vadd.f32 %v2352, %v2649
        %v2787 = vadd.f32 %v2353, %v2653
        %v2788 = vadd.f32 %v2354, %v2655
        %v2789 = vadd.f32 %v2355, %v2657
        %v2790 = vadd.f32 %v2356, %v2659
        %v2791 = vadd.f32 %v2357, %v2663
        %v2792 = vadd.f32 %v2358, %v2665
        %v2793 = vadd.f32 %v2359, %v2667
        %v2794 = vadd.f32 %v2360, %v2669
        %v2795 = vadd.f32 %v2361, %v2673
        %v2796 = vadd.f32 %v2362, %v2675
        %v2797 = vadd.f32 %v2363, %v2677
        %v2798 = vadd.f32 %v2364, %v2679
        %v2799 = vadd.f32 %v2365, %v2683
        %v2800 = vadd.f32 %v2366, %v2685
        %v2801 = vadd.f32 %v2367, %v2687
        %v2802 = vadd.f32 %v2368, %v2689
        %v2803 = vadd.f32 %v2369, %v2693
        %v2804 = vadd.f32 %v2370, %v2695
        %v2805 = vadd.f32 %v2371, %v2697
        %v2806 = vadd.f32 %v2372, %v2699
        %v2807 = vadd.f32 %v2373, %v2703
        %v2808 = vadd.f32 %v2374, %v2705
        %v2809 = vadd.f32 %v2375, %v2707
        %v2810 = vadd.f32 %v2376, %v2709
        %v2811 = vadd.f32 %v2377, %v2713
        %v2812 = vadd.f32 %v2378, %v2715
        %v2813 = vadd.f32 %v2379, %v2717
        %v2814 = vadd.f32 %v2380, %v2719
        %v2815 = vadd.f32 %v2381, %v2723
        %v2816 = vadd.f32 %v2382, %v2725
        %v2817 = vadd.f32 %v2383, %v2727
        %v2818 = vadd.f32 %v2384, %v2729
        %v2819 = vadd.f32 %v2385, %v2733
        %v2820 = vadd.f32 %v2386, %v2735
        %v2821 = vadd.f32 %v2387, %v2737
        %v2822 = vadd.f32 %v2388, %v2739
        %v2823 = vadd.f32 %v2389, %v2743
        %v2824 = vadd.f32 %v2390, %v2745
        %v2825 = vadd.f32 %v2391, %v2747
        %v2826 = vadd.f32 %v2392, %v2749
        %v2827 = vadd.f32 %v2393, %v2753
        %v2828 = vadd.f32 %v2394, %v2755
        %v2829 = vadd.f32 %v2395, %v2757
        %v2830 = vadd.f32 %v2396, %v2759
        %v2831 = vadd.f32 %v2397, %v2763
        %v2832 = vadd.f32 %v2398, %v2765
        %v2833 = vadd.f32 %v2399, %v2767
        %v2834 = vadd.f32 %v2400, %v2769
        %2835 = vst [vmem:[#allocation2] sm:$0xff] %v2771
        %2836 = vst [vmem:[#allocation2 + $0x8] sm:$0xff] %v2772
        %2837 = vst [vmem:[#allocation2 + $0x10] sm:$0xff] %v2773
        %2838 = vst [vmem:[#allocation2 + $0x18] sm:$0xff] %v2774
        %2839 = vst [vmem:[#allocation2 + $0x20] sm:$0xff] %v2775
        %2840 = vst [vmem:[#allocation2 + $0x28] sm:$0xff] %v2776
        %2841 = vst [vmem:[#allocation2 + $0x30] sm:$0xff] %v2777
        %2842 = vst [vmem:[#allocation2 + $0x38] sm:$0xff] %v2778
        %2843 = vst [vmem:[#allocation2 + $0x40] sm:$0xff] %v2779
        %2844 = vst [vmem:[#allocation2 + $0x48] sm:$0xff] %v2780
        %2845 = vst [vmem:[#allocation2 + $0x50] sm:$0xff] %v2781
        %2846 = vst [vmem:[#allocation2 + $0x58] sm:$0xff] %v2782
        %2847 = vst [vmem:[#allocation2 + $0x60] sm:$0xff] %v2783
        %2848 = vst [vmem:[#allocation2 + $0x68] sm:$0xff] %v2784
        %2849 = vst [vmem:[#allocation2 + $0x70] sm:$0xff] %v2785
        %2850 = vst [vmem:[#allocation2 + $0x78] sm:$0xff] %v2786
        %2851 = vst [vmem:[#allocation2 + $0x80] sm:$0xff] %v2787
        %2852 = vst [vmem:[#allocation2 + $0x88] sm:$0xff] %v2788
        %2853 = vst [vmem:[#allocation2 + $0x90] sm:$0xff] %v2789
        %2854 = vst [vmem:[#allocation2 + $0x98] sm:$0xff] %v2790
        %2855 = vst [vmem:[#allocation2 + $0xa0] sm:$0xff] %v2791
        %2856 = vst [vmem:[#allocation2 + $0xa8] sm:$0xff] %v2792
        %2857 = vst [vmem:[#allocation2 + $0xb0] sm:$0xff] %v2793
        %2858 = vst [vmem:[#allocation2 + $0xb8] sm:$0xff] %v2794
        %2859 = vst [vmem:[#allocation2 + $0xc0] sm:$0xff] %v2795
        %2860 = vst [vmem:[#allocation2 + $0xc8] sm:$0xff] %v2796
        %2861 = vst [vmem:[#allocation2 + $0xd0] sm:$0xff] %v2797
        %2862 = vst [vmem:[#allocation2 + $0xd8] sm:$0xff] %v2798
        %2863 = vst [vmem:[#allocation2 + $0xe0] sm:$0xff] %v2799
        %2864 = vst [vmem:[#allocation2 + $0xe8] sm:$0xff] %v2800
        %2865 = vst [vmem:[#allocation2 + $0xf0] sm:$0xff] %v2801
        %2866 = vst [vmem:[#allocation2 + $0xf8] sm:$0xff] %v2802
        %2867 = vst [vmem:[#allocation2 + $0x100] sm:$0xff] %v2803
        %2868 = vst [vmem:[#allocation2 + $0x108] sm:$0xff] %v2804
        %2869 = vst [vmem:[#allocation2 + $0x110] sm:$0xff] %v2805
        %2870 = vst [vmem:[#allocation2 + $0x118] sm:$0xff] %v2806
        %2871 = vst [vmem:[#allocation2 + $0x120] sm:$0xff] %v2807
        %2872 = vst [vmem:[#allocation2 + $0x128] sm:$0xff] %v2808
        %2873 = vst [vmem:[#allocation2 + $0x130] sm:$0xff] %v2809
        %2874 = vst [vmem:[#allocation2 + $0x138] sm:$0xff] %v2810
        %2875 = vst [vmem:[#allocation2 + $0x140] sm:$0xff] %v2811
        %2876 = vst [vmem:[#allocation2 + $0x148] sm:$0xff] %v2812
        %2877 = vst [vmem:[#allocation2 + $0x150] sm:$0xff] %v2813
        %2878 = vst [vmem:[#allocation2 + $0x158] sm:$0xff] %v2814
        %2879 = vst [vmem:[#allocation2 + $0x160] sm:$0xff] %v2815
        %2880 = vst [vmem:[#allocation2 + $0x168] sm:$0xff] %v2816
        %2881 = vst [vmem:[#allocation2 + $0x170] sm:$0xff] %v2817
        %2882 = vst [vmem:[#allocation2 + $0x178] sm:$0xff] %v2818
        %2883 = vst [vmem:[#allocation2 + $0x180] sm:$0xff] %v2819
        %2884 = vst [vmem:[#allocation2 + $0x188] sm:$0xff] %v2820
        %2885 = vst [vmem:[#allocation2 + $0x190] sm:$0xff] %v2821
        %2886 = vst [vmem:[#allocation2 + $0x198] sm:$0xff] %v2822
        %2887 = vst [vmem:[#allocation2 + $0x1a0] sm:$0xff] %v2823
        %2888 = vst [vmem:[#allocation2 + $0x1a8] sm:$0xff] %v2824
        %2889 = vst [vmem:[#allocation2 + $0x1b0] sm:$0xff] %v2825
        %2890 = vst [vmem:[#allocation2 + $0x1b8] sm:$0xff] %v2826
        %2891 = vst [vmem:[#allocation2 + $0x1c0] sm:$0xff] %v2827
        %2892 = vst [vmem:[#allocation2 + $0x1c8] sm:$0xff] %v2828
        %2893 = vst [vmem:[#allocation2 + $0x1d0] sm:$0xff] %v2829
        %2894 = vst [vmem:[#allocation2 + $0x1d8] sm:$0xff] %v2830
        %2895 = vst [vmem:[#allocation2 + $0x1e0] sm:$0xff] %v2831
        %2896 = vst [vmem:[#allocation2 + $0x1e8] sm:$0xff] %v2832
        %2897 = vst [vmem:[#allocation2 + $0x1f0] sm:$0xf] %v2833
        %2898 = vst [vmem:[#allocation2 + $0x1f8] sm:$0xf] %v2834
        %v2899 = vld [vmem:[#allocation2] sm:$0xff]
        %v2900 = vld [vmem:[#allocation2 + $0x8] sm:$0xff]
        %v2901 = vld [vmem:[#allocation2 + $0x10] sm:$0xff]
        %v2902 = vld [vmem:[#allocation2 + $0x18] sm:$0xff]
        %v2903 = vld [vmem:[#allocation2 + $0x20] sm:$0xff]
        %v2904 = vld [vmem:[#allocation2 + $0x28] sm:$0xff]
        %v2905 = vld [vmem:[#allocation2 + $0x30] sm:$0xff]
        %v2906 = vld [vmem:[#allocation2 + $0x38] sm:$0xff]
        %v2907 = vld [vmem:[#allocation2 + $0x40] sm:$0xff]
        %v2908 = vld [vmem:[#allocation2 + $0x48] sm:$0xff]
        %v2909 = vld [vmem:[#allocation2 + $0x50] sm:$0xff]
        %v2910 = vld [vmem:[#allocation2 + $0x58] sm:$0xff]
        %v2911 = vld [vmem:[#allocation2 + $0x60] sm:$0xff]
        %v2912 = vld [vmem:[#allocation2 + $0x68] sm:$0xff]
        %v2913 = vld [vmem:[#allocation2 + $0x70] sm:$0xff]
        %v2914 = vld [vmem:[#allocation2 + $0x78] sm:$0xff]
        %v2915 = vld [vmem:[#allocation2 + $0x80] sm:$0xff]
        %v2916 = vld [vmem:[#allocation2 + $0x88] sm:$0xff]
        %v2917 = vld [vmem:[#allocation2 + $0x90] sm:$0xff]
        %v2918 = vld [vmem:[#allocation2 + $0x98] sm:$0xff]
        %v2919 = vld [vmem:[#allocation2 + $0xa0] sm:$0xff]
        %v2920 = vld [vmem:[#allocation2 + $0xa8] sm:$0xff]
        %v2921 = vld [vmem:[#allocation2 + $0xb0] sm:$0xff]
        %v2922 = vld [vmem:[#allocation2 + $0xb8] sm:$0xff]
        %v2923 = vld [vmem:[#allocation2 + $0xc0] sm:$0xff]
        %v2924 = vld [vmem:[#allocation2 + $0xc8] sm:$0xff]
        %v2925 = vld [vmem:[#allocation2 + $0xd0] sm:$0xff]
        %v2926 = vld [vmem:[#allocation2 + $0xd8] sm:$0xff]
        %v2927 = vld [vmem:[#allocation2 + $0xe0] sm:$0xff]
        %v2928 = vld [vmem:[#allocation2 + $0xe8] sm:$0xff]
        %v2929 = vld [vmem:[#allocation2 + $0xf0] sm:$0xff]
        %v2930 = vld [vmem:[#allocation2 + $0xf8] sm:$0xff]
        %v2931 = vld [vmem:[#allocation2 + $0x100] sm:$0xff]
        %v2932 = vld [vmem:[#allocation2 + $0x108] sm:$0xff]
        %v2933 = vld [vmem:[#allocation2 + $0x110] sm:$0xff]
        %v2934 = vld [vmem:[#allocation2 + $0x118] sm:$0xff]
        %v2935 = vld [vmem:[#allocation2 + $0x120] sm:$0xff]
        %v2936 = vld [vmem:[#allocation2 + $0x128] sm:$0xff]
        %v2937 = vld [vmem:[#allocation2 + $0x130] sm:$0xff]
        %v2938 = vld [vmem:[#allocation2 + $0x138] sm:$0xff]
        %v2939 = vld [vmem:[#allocation2 + $0x140] sm:$0xff]
        %v2940 = vld [vmem:[#allocation2 + $0x148] sm:$0xff]
        %v2941 = vld [vmem:[#allocation2 + $0x150] sm:$0xff]
        %v2942 = vld [vmem:[#allocation2 + $0x158] sm:$0xff]
        %v2943 = vld [vmem:[#allocation2 + $0x160] sm:$0xff]
        %v2944 = vld [vmem:[#allocation2 + $0x168] sm:$0xff]
        %v2945 = vld [vmem:[#allocation2 + $0x170] sm:$0xff]
        %v2946 = vld [vmem:[#allocation2 + $0x178] sm:$0xff]
        %v2947 = vld [vmem:[#allocation2 + $0x180] sm:$0xff]
        %v2948 = vld [vmem:[#allocation2 + $0x188] sm:$0xff]
        %v2949 = vld [vmem:[#allocation2 + $0x190] sm:$0xff]
        %v2950 = vld [vmem:[#allocation2 + $0x198] sm:$0xff]
        %v2951 = vld [vmem:[#allocation2 + $0x1a0] sm:$0xff]
        %v2952 = vld [vmem:[#allocation2 + $0x1a8] sm:$0xff]
        %v2953 = vld [vmem:[#allocation2 + $0x1b0] sm:$0xff]
        %v2954 = vld [vmem:[#allocation2 + $0x1b8] sm:$0xff]
        %v2955 = vld [vmem:[#allocation2 + $0x1c0] sm:$0xff]
        %v2956 = vld [vmem:[#allocation2 + $0x1c8] sm:$0xff]
        %v2957 = vld [vmem:[#allocation2 + $0x1d0] sm:$0xff]
        %v2958 = vld [vmem:[#allocation2 + $0x1d8] sm:$0xff]
        %v2959 = vld [vmem:[#allocation2 + $0x1e0] sm:$0xff]
        %v2960 = vld [vmem:[#allocation2 + $0x1e8] sm:$0xff]
        %v2961 = vld [vmem:[#allocation2 + $0x1f0] sm:$0xf]
        %v2962 = vld [vmem:[#allocation2 + $0x1f8] sm:$0xf]
        %s2963 = scalar_lea.vmem %s1, 512
        %v2964 = vld [vmem:[%s2963] sm:$0xff]
        %v2965 = vld [vmem:[%s2963 + $0x8] sm:$0xff]
        %v2966 = vld [vmem:[%s2963 + $0x10] sm:$0xff]
        %v2967 = vld [vmem:[%s2963 + $0x18] sm:$0xff]
        %v2968 = vld [vmem:[%s2963 + $0x20] sm:$0xff]
        %v2969 = vld [vmem:[%s2963 + $0x28] sm:$0xff]
        %v2970 = vld [vmem:[%s2963 + $0x30] sm:$0xff]
        %v2971 = vld [vmem:[%s2963 + $0x38] sm:$0xff]
        %v2972 = vld [vmem:[%s2963 + $0x40] sm:$0xff]
        %v2973 = vld [vmem:[%s2963 + $0x48] sm:$0xff]
        %v2974 = vld [vmem:[%s2963 + $0x50] sm:$0xff]
        %v2975 = vld [vmem:[%s2963 + $0x58] sm:$0xff]
        %v2976 = vld [vmem:[%s2963 + $0x60] sm:$0xff]
        %v2977 = vld [vmem:[%s2963 + $0x68] sm:$0xff]
        %v2978 = vld [vmem:[%s2963 + $0x70] sm:$0xff]
        %v2979 = vld [vmem:[%s2963 + $0x78] sm:$0xff]
        %vm2980 = vcmask 1045504
        %v2981 = vrot.slane %v748, 2
        %v2982 = vrot.slane %v749, 2
        %v2983 = vsel %vm2980, %v2981, %v2982
        %v2984 = vrot.slane %v750, 2
        %v2985 = vsel %vm2980, %v2982, %v2984
        %v2986 = vrot.slane %v751, 2
        %v2987 = vsel %vm2980, %v2984, %v2986
        %v2988 = vrot.slane %v752, 2
        %v2989 = vsel %vm2980, %v2986, %v2988
        %v2990 = vrot.slane %v753, 2
        %v2991 = vsel %vm2980, %v2988, %v2990
        %v2992 = vrot.slane %v754, 2
        %v2993 = vsel %vm2980, %v2990, %v2992
        %v2994 = vrot.slane %v755, 2
        %v2995 = vsel %vm2980, %v2992, %v2994
        %v2996 = vrot.slane %v756, 2
        %v2997 = vsel %vm2980, %v2994, %v2996
        %v2998 = vrot.slane %v757, 2
        %v2999 = vsel %vm2980, %v2996, %v2998
        %v3000 = vrot.slane %v758, 2
        %v3001 = vsel %vm2980, %v2998, %v3000
        %v3002 = vrot.slane %v759, 2
        %v3003 = vsel %vm2980, %v3000, %v3002
        %v3004 = vrot.slane %v760, 2
        %v3005 = vsel %vm2980, %v3002, %v3004
        %v3006 = vrot.slane %v761, 2
        %v3007 = vsel %vm2980, %v3004, %v3006
        %v3008 = vrot.slane %v762, 2
        %v3009 = vsel %vm2980, %v3006, %v3008
        %v3010 = vrot.slane %v763, 2
        %v3011 = vsel %vm2980, %v3008, %v3010
        %v3044 = vunpack.c.l.b16 %v2964
        %v3045 = vunpack.c.h.b16 %v2964
        %v3046 = vunpack.c.l.b16 %v2965
        %v3047 = vunpack.c.h.b16 %v2965
        %v3048 = vunpack.c.l.b16 %v2966
        %v3049 = vunpack.c.h.b16 %v2966
        %v3050 = vunpack.c.l.b16 %v2967
        %v3051 = vunpack.c.h.b16 %v2967
        %v3052 = vunpack.c.l.b16 %v2968
        %v3053 = vunpack.c.h.b16 %v2968
        %v3054 = vunpack.c.l.b16 %v2969
        %v3055 = vunpack.c.h.b16 %v2969
        %v3056 = vunpack.c.l.b16 %v2970
        %v3057 = vunpack.c.h.b16 %v2970
        %v3058 = vunpack.c.l.b16 %v2971
        %v3059 = vunpack.c.h.b16 %v2971
        %v3060 = vunpack.c.l.b16 %v2972
        %v3061 = vunpack.c.h.b16 %v2972
        %v3062 = vunpack.c.l.b16 %v2973
        %v3063 = vunpack.c.h.b16 %v2973
        %v3064 = vunpack.c.l.b16 %v2974
        %v3065 = vunpack.c.h.b16 %v2974
        %v3066 = vunpack.c.l.b16 %v2975
        %v3067 = vunpack.c.h.b16 %v2975
        %v3068 = vunpack.c.l.b16 %v2976
        %v3069 = vunpack.c.h.b16 %v2976
        %v3070 = vunpack.c.l.b16 %v2977
        %v3071 = vunpack.c.h.b16 %v2977
        %v3072 = vunpack.c.l.b16 %v2978
        %v3073 = vunpack.c.h.b16 %v2978
        %v3074 = vunpack.c.l.b16 %v2979
        %v3075 = vunpack.c.h.b16 %v2979
        %v3076 = vpack.c.b16 %v3046, %v3044
        %v3077 = vpack.c.b16 %v3047, %v3045
        %v3078 = vpack.c.b16 %v3050, %v3048
        %v3079 = vpack.c.b16 %v3051, %v3049
        %v3080 = vpack.c.b16 %v3054, %v3052
        %v3081 = vpack.c.b16 %v3055, %v3053
        %v3082 = vpack.c.b16 %v3058, %v3056
        %v3083 = vpack.c.b16 %v3059, %v3057
        %v3084 = vpack.c.b16 %v3062, %v3060
        %v3085 = vpack.c.b16 %v3063, %v3061
        %v3086 = vpack.c.b16 %v3066, %v3064
        %v3087 = vpack.c.b16 %v3067, %v3065
        %v3088 = vpack.c.b16 %v3070, %v3068
        %v3089 = vpack.c.b16 %v3071, %v3069
        %v3090 = vpack.c.b16 %v3074, %v3072
        %v3091 = vpack.c.b16 %v3075, %v3073
        %3108 = vmatprep.subr.bf16.mxu0 %v3077
        %3109 = vmatpush1.bf16.msra.mxu0 %v3076
        %3110 = vmatprep.subr.bf16.mxu0 %v3079
        %3111 = vmatpush1.bf16.msra.mxu0 %v3078
        %3112 = vmatprep.subr.bf16.mxu0 %v3081
        %3113 = vmatpush1.bf16.msra.mxu0 %v3080
        %3114 = vmatprep.subr.bf16.mxu0 %v3083
        %3115 = vmatpush1.bf16.msra.mxu0 %v3082
        %3116 = vmatprep.subr.bf16.mxu0 %v3085
        %3117 = vmatpush1.bf16.msra.mxu0 %v3084
        %3118 = vmatprep.subr.bf16.mxu0 %v3087
        %3119 = vmatpush1.bf16.msra.mxu0 %v3086
        %3120 = vmatprep.subr.bf16.mxu0 %v3089
        %3121 = vmatpush1.bf16.msra.mxu0 %v3088
        %3122 = vmatprep.subr.bf16.mxu0 %v3091
        %3123 = vmatpush1.bf16.msra.mxu0 %v3090
        %3124 = vmatprep.subr.bf16.mxu0 0
        %3125 = vmatpush1.bf16.msra.mxu0 0
        %3126 = vmatprep.subr.bf16.mxu0 0
        %3127 = vmatpush1.bf16.msra.mxu0 0
        %3128 = vmatprep.subr.bf16.mxu0 0
        %3129 = vmatpush1.bf16.msra.mxu0 0
        %3130 = vmatprep.subr.bf16.mxu0 0
        %3131 = vmatpush1.bf16.msra.mxu0 0
        %3132 = vmatprep.subr.bf16.mxu0 0
        %3133 = vmatpush1.bf16.msra.mxu0 0
        %3134 = vmatprep.subr.bf16.mxu0 0
        %3135 = vmatpush1.bf16.msra.mxu0 0
        %3136 = vmatprep.subr.bf16.mxu0 0
        %3137 = vmatpush1.bf16.msra.mxu0 0
        %3138 = vmatprep.subr.bf16.mxu0 0
        %3139 = vmatpush1.bf16.msra.mxu0 0
        %3140 = vmatprep.mubr.bf16.mxu0 0
        %3141 = vmatmul.mubr.bf16.gmra.mrb[0].mxu0 %v2983
        %v3142 = vpop.f32.mrb[0].mxu0
        %v3143 = vadd.f32 0.0, %v3142
        %v3144 = vpop.f32.mrb[0].mxu0
        %v3145 = vadd.f32 0.0, %v3144
        %v3146 = vpop.f32.mrb[0].mxu0
        %v3147 = vadd.f32 0.0, %v3146
        %v3148 = vpop.f32.mrb[0].mxu0
        %v3149 = vadd.f32 0.0, %v3148
        %3150 = vmatprep.mubr.bf16.mxu0 0
        %3151 = vmatmul.mubr.bf16.gmra.mrb[0].mxu0 %v2985
        %v3152 = vpop.f32.mrb[0].mxu0
        %v3153 = vadd.f32 0.0, %v3152
        %v3154 = vpop.f32.mrb[0].mxu0
        %v3155 = vadd.f32 0.0, %v3154
        %v3156 = vpop.f32.mrb[0].mxu0
        %v3157 = vadd.f32 0.0, %v3156
        %v3158 = vpop.f32.mrb[0].mxu0
        %v3159 = vadd.f32 0.0, %v3158
        %3160 = vmatprep.mubr.bf16.mxu0 0
        %3161 = vmatmul.mubr.bf16.gmra.mrb[0].mxu0 %v2987
        %v3162 = vpop.f32.mrb[0].mxu0
        %v3163 = vadd.f32 0.0, %v3162
        %v3164 = vpop.f32.mrb[0].mxu0
        %v3165 = vadd.f32 0.0, %v3164
        %v3166 = vpop.f32.mrb[0].mxu0
        %v3167 = vadd.f32 0.0, %v3166
        %v3168 = vpop.f32.mrb[0].mxu0
        %v3169 = vadd.f32 0.0, %v3168
        %3170 = vmatprep.mubr.bf16.mxu0 0
        %3171 = vmatmul.mubr.bf16.gmra.mrb[0].mxu0 %v2989
        %v3172 = vpop.f32.mrb[0].mxu0
        %v3173 = vadd.f32 0.0, %v3172
        %v3174 = vpop.f32.mrb[0].mxu0
        %v3175 = vadd.f32 0.0, %v3174
        %v3176 = vpop.f32.mrb[0].mxu0
        %v3177 = vadd.f32 0.0, %v3176
        %v3178 = vpop.f32.mrb[0].mxu0
        %v3179 = vadd.f32 0.0, %v3178
        %3180 = vmatprep.mubr.bf16.mxu0 0
        %3181 = vmatmul.mubr.bf16.gmra.mrb[0].mxu0 %v2991
        %v3182 = vpop.f32.mrb[0].mxu0
        %v3183 = vadd.f32 0.0, %v3182
        %v3184 = vpop.f32.mrb[0].mxu0
        %v3185 = vadd.f32 0.0, %v3184
        %v3186 = vpop.f32.mrb[0].mxu0
        %v3187 = vadd.f32 0.0, %v3186
        %v3188 = vpop.f32.mrb[0].mxu0
        %v3189 = vadd.f32 0.0, %v3188
        %3190 = vmatprep.mubr.bf16.mxu0 0
        %3191 = vmatmul.mubr.bf16.gmra.mrb[0].mxu0 %v2993
        %v3192 = vpop.f32.mrb[0].mxu0
        %v3193 = vadd.f32 0.0, %v3192
        %v3194 = vpop.f32.mrb[0].mxu0
        %v3195 = vadd.f32 0.0, %v3194
        %v3196 = vpop.f32.mrb[0].mxu0
        %v3197 = vadd.f32 0.0, %v3196
        %v3198 = vpop.f32.mrb[0].mxu0
        %v3199 = vadd.f32 0.0, %v3198
        %3200 = vmatprep.mubr.bf16.mxu0 0
        %3201 = vmatmul.mubr.bf16.gmra.mrb[0].mxu0 %v2995
        %v3202 = vpop.f32.mrb[0].mxu0
        %v3203 = vadd.f32 0.0, %v3202
        %v3204 = vpop.f32.mrb[0].mxu0
        %v3205 = vadd.f32 0.0, %v3204
        %v3206 = vpop.f32.mrb[0].mxu0
        %v3207 = vadd.f32 0.0, %v3206
        %v3208 = vpop.f32.mrb[0].mxu0
        %v3209 = vadd.f32 0.0, %v3208
        %3210 = vmatprep.mubr.bf16.mxu0 0
        %3211 = vmatmul.mubr.bf16.gmra.mrb[0].mxu0 %v2997
        %v3212 = vpop.f32.mrb[0].mxu0
        %v3213 = vadd.f32 0.0, %v3212
        %v3214 = vpop.f32.mrb[0].mxu0
        %v3215 = vadd.f32 0.0, %v3214
        %v3216 = vpop.f32.mrb[0].mxu0
        %v3217 = vadd.f32 0.0, %v3216
        %v3218 = vpop.f32.mrb[0].mxu0
        %v3219 = vadd.f32 0.0, %v3218
        %3220 = vmatprep.mubr.bf16.mxu0 0
        %3221 = vmatmul.mubr.bf16.gmra.mrb[0].mxu0 %v2999
        %v3222 = vpop.f32.mrb[0].mxu0
        %v3223 = vadd.f32 0.0, %v3222
        %v3224 = vpop.f32.mrb[0].mxu0
        %v3225 = vadd.f32 0.0, %v3224
        %v3226 = vpop.f32.mrb[0].mxu0
        %v3227 = vadd.f32 0.0, %v3226
        %v3228 = vpop.f32.mrb[0].mxu0
        %v3229 = vadd.f32 0.0, %v3228
        %3230 = vmatprep.mubr.bf16.mxu0 0
        %3231 = vmatmul.mubr.bf16.gmra.mrb[0].mxu0 %v3001
        %v3232 = vpop.f32.mrb[0].mxu0
        %v3233 = vadd.f32 0.0, %v3232
        %v3234 = vpop.f32.mrb[0].mxu0
        %v3235 = vadd.f32 0.0, %v3234
        %v3236 = vpop.f32.mrb[0].mxu0
        %v3237 = vadd.f32 0.0, %v3236
        %v3238 = vpop.f32.mrb[0].mxu0
        %v3239 = vadd.f32 0.0, %v3238
        %3240 = vmatprep.mubr.bf16.mxu0 0
        %3241 = vmatmul.mubr.bf16.gmra.mrb[0].mxu0 %v3003
        %v3242 = vpop.f32.mrb[0].mxu0
        %v3243 = vadd.f32 0.0, %v3242
        %v3244 = vpop.f32.mrb[0].mxu0
        %v3245 = vadd.f32 0.0, %v3244
        %v3246 = vpop.f32.mrb[0].mxu0
        %v3247 = vadd.f32 0.0, %v3246
        %v3248 = vpop.f32.mrb[0].mxu0
        %v3249 = vadd.f32 0.0, %v3248
        %3250 = vmatprep.mubr.bf16.mxu0 0
        %3251 = vmatmul.mubr.bf16.gmra.mrb[0].mxu0 %v3005
        %v3252 = vpop.f32.mrb[0].mxu0
        %v3253 = vadd.f32 0.0, %v3252
        %v3254 = vpop.f32.mrb[0].mxu0
        %v3255 = vadd.f32 0.0, %v3254
        %v3256 = vpop.f32.mrb[0].mxu0
        %v3257 = vadd.f32 0.0, %v3256
        %v3258 = vpop.f32.mrb[0].mxu0
        %v3259 = vadd.f32 0.0, %v3258
        %3260 = vmatprep.mubr.bf16.mxu0 0
        %3261 = vmatmul.mubr.bf16.gmra.mrb[0].mxu0 %v3007
        %v3262 = vpop.f32.mrb[0].mxu0
        %v3263 = vadd.f32 0.0, %v3262
        %v3264 = vpop.f32.mrb[0].mxu0
        %v3265 = vadd.f32 0.0, %v3264
        %v3266 = vpop.f32.mrb[0].mxu0
        %v3267 = vadd.f32 0.0, %v3266
        %v3268 = vpop.f32.mrb[0].mxu0
        %v3269 = vadd.f32 0.0, %v3268
        %3270 = vmatprep.mubr.bf16.mxu0 0
        %3271 = vmatmul.mubr.bf16.gmra.mrb[0].mxu0 %v3009
        %v3272 = vpop.f32.mrb[0].mxu0
        %v3273 = vadd.f32 0.0, %v3272
        %v3274 = vpop.f32.mrb[0].mxu0
        %v3275 = vadd.f32 0.0, %v3274
        %v3276 = vpop.f32.mrb[0].mxu0
        %v3277 = vadd.f32 0.0, %v3276
        %v3278 = vpop.f32.mrb[0].mxu0
        %v3279 = vadd.f32 0.0, %v3278
        %3280 = vmatprep.mubr.bf16.mxu0 0
        %3281 = vmatmul.mubr.bf16.gmra.mrb[0].mxu0 %v3011
        %v3282 = vpop.f32.mrb[0].mxu0
        %v3283 = vadd.f32 0.0, %v3282
        %v3284 = vpop.f32.mrb[0].mxu0
        %v3285 = vadd.f32 0.0, %v3284
        %v3286 = vpop.f32.mrb[0].mxu0
        %v3287 = vadd.f32 0.0, %v3286
        %v3288 = vpop.f32.mrb[0].mxu0
        %v3289 = vadd.f32 0.0, %v3288
        %3290 = vmatprep.mubr.bf16.mxu0 0
        %3291 = vmatmul.mubr.bf16.gmra.mrb[0].mxu0 %v3010
        %v3292 = vpop.f32.mrb[0].mxu0
        %v3293 = vadd.f32 0.0, %v3292
        %v3294 = vpop.f32.mrb[0].mxu0
        %v3295 = vadd.f32 0.0, %v3294
        %v3296 = vpop.f32.mrb[0].mxu0
        %v3297 = vadd.f32 0.0, %v3296
        %v3298 = vpop.f32.mrb[0].mxu0
        %v3299 = vadd.f32 0.0, %v3298
        %3300 = vdwg.mxu0
        %v3301 = vadd.f32 %v2899, %v3143
        %v3302 = vadd.f32 %v2900, %v3145
        %v3303 = vadd.f32 %v2901, %v3147
        %v3304 = vadd.f32 %v2902, %v3149
        %v3305 = vadd.f32 %v2903, %v3153
        %v3306 = vadd.f32 %v2904, %v3155
        %v3307 = vadd.f32 %v2905, %v3157
        %v3308 = vadd.f32 %v2906, %v3159
        %v3309 = vadd.f32 %v2907, %v3163
        %v3310 = vadd.f32 %v2908, %v3165
        %v3311 = vadd.f32 %v2909, %v3167
        %v3312 = vadd.f32 %v2910, %v3169
        %v3313 = vadd.f32 %v2911, %v3173
        %v3314 = vadd.f32 %v2912, %v3175
        %v3315 = vadd.f32 %v2913, %v3177
        %v3316 = vadd.f32 %v2914, %v3179
        %v3317 = vadd.f32 %v2915, %v3183
        %v3318 = vadd.f32 %v2916, %v3185
        %v3319 = vadd.f32 %v2917, %v3187
        %v3320 = vadd.f32 %v2918, %v3189
        %v3321 = vadd.f32 %v2919, %v3193
        %v3322 = vadd.f32 %v2920, %v3195
        %v3323 = vadd.f32 %v2921, %v3197
        %v3324 = vadd.f32 %v2922, %v3199
        %v3325 = vadd.f32 %v2923, %v3203
        %v3326 = vadd.f32 %v2924, %v3205
        %v3327 = vadd.f32 %v2925, %v3207
        %v3328 = vadd.f32 %v2926, %v3209
        %v3329 = vadd.f32 %v2927, %v3213
        %v3330 = vadd.f32 %v2928, %v3215
        %v3331 = vadd.f32 %v2929, %v3217
        %v3332 = vadd.f32 %v2930, %v3219
        %v3333 = vadd.f32 %v2931, %v3223
        %v3334 = vadd.f32 %v2932, %v3225
        %v3335 = vadd.f32 %v2933, %v3227
        %v3336 = vadd.f32 %v2934, %v3229
        %v3337 = vadd.f32 %v2935, %v3233
        %v3338 = vadd.f32 %v2936, %v3235
        %v3339 = vadd.f32 %v2937, %v3237
        %v3340 = vadd.f32 %v2938, %v3239
        %v3341 = vadd.f32 %v2939, %v3243
        %v3342 = vadd.f32 %v2940, %v3245
        %v3343 = vadd.f32 %v2941, %v3247
        %v3344 = vadd.f32 %v2942, %v3249
        %v3345 = vadd.f32 %v2943, %v3253
        %v3346 = vadd.f32 %v2944, %v3255
        %v3347 = vadd.f32 %v2945, %v3257
        %v3348 = vadd.f32 %v2946, %v3259
        %v3349 = vadd.f32 %v2947, %v3263
        %v3350 = vadd.f32 %v2948, %v3265
        %v3351 = vadd.f32 %v2949, %v3267
        %v3352 = vadd.f32 %v2950, %v3269
        %v3353 = vadd.f32 %v2951, %v3273
        %v3354 = vadd.f32 %v2952, %v3275
        %v3355 = vadd.f32 %v2953, %v3277
        %v3356 = vadd.f32 %v2954, %v3279
        %v3357 = vadd.f32 %v2955, %v3283
        %v3358 = vadd.f32 %v2956, %v3285
        %v3359 = vadd.f32 %v2957, %v3287
        %v3360 = vadd.f32 %v2958, %v3289
        %v3361 = vadd.f32 %v2959, %v3293
        %v3362 = vadd.f32 %v2960, %v3295
        %v3363 = vadd.f32 %v2961, %v3297
        %v3364 = vadd.f32 %v2962, %v3299
        %3365 = vst [vmem:[#allocation2] sm:$0xff] %v3301
        %3366 = vst [vmem:[#allocation2 + $0x8] sm:$0xff] %v3302
        %3367 = vst [vmem:[#allocation2 + $0x10] sm:$0xff] %v3303
        %3368 = vst [vmem:[#allocation2 + $0x18] sm:$0xff] %v3304
        %3369 = vst [vmem:[#allocation2 + $0x20] sm:$0xff] %v3305
        %3370 = vst [vmem:[#allocation2 + $0x28] sm:$0xff] %v3306
        %3371 = vst [vmem:[#allocation2 + $0x30] sm:$0xff] %v3307
        %3372 = vst [vmem:[#allocation2 + $0x38] sm:$0xff] %v3308
        %3373 = vst [vmem:[#allocation2 + $0x40] sm:$0xff] %v3309
        %3374 = vst [vmem:[#allocation2 + $0x48] sm:$0xff] %v3310
        %3375 = vst [vmem:[#allocation2 + $0x50] sm:$0xff] %v3311
        %3376 = vst [vmem:[#allocation2 + $0x58] sm:$0xff] %v3312
        %3377 = vst [vmem:[#allocation2 + $0x60] sm:$0xff] %v3313
        %3378 = vst [vmem:[#allocation2 + $0x68] sm:$0xff] %v3314
        %3379 = vst [vmem:[#allocation2 + $0x70] sm:$0xff] %v3315
        %3380 = vst [vmem:[#allocation2 + $0x78] sm:$0xff] %v3316
        %3381 = vst [vmem:[#allocation2 + $0x80] sm:$0xff] %v3317
        %3382 = vst [vmem:[#allocation2 + $0x88] sm:$0xff] %v3318
        %3383 = vst [vmem:[#allocation2 + $0x90] sm:$0xff] %v3319
        %3384 = vst [vmem:[#allocation2 + $0x98] sm:$0xff] %v3320
        %3385 = vst [vmem:[#allocation2 + $0xa0] sm:$0xff] %v3321
        %3386 = vst [vmem:[#allocation2 + $0xa8] sm:$0xff] %v3322
        %3387 = vst [vmem:[#allocation2 + $0xb0] sm:$0xff] %v3323
        %3388 = vst [vmem:[#allocation2 + $0xb8] sm:$0xff] %v3324
        %3389 = vst [vmem:[#allocation2 + $0xc0] sm:$0xff] %v3325
        %3390 = vst [vmem:[#allocation2 + $0xc8] sm:$0xff] %v3326
        %3391 = vst [vmem:[#allocation2 + $0xd0] sm:$0xff] %v3327
        %3392 = vst [vmem:[#allocation2 + $0xd8] sm:$0xff] %v3328
        %3393 = vst [vmem:[#allocation2 + $0xe0] sm:$0xff] %v3329
        %3394 = vst [vmem:[#allocation2 + $0xe8] sm:$0xff] %v3330
        %3395 = vst [vmem:[#allocation2 + $0xf0] sm:$0xff] %v3331
        %3396 = vst [vmem:[#allocation2 + $0xf8] sm:$0xff] %v3332
        %3397 = vst [vmem:[#allocation2 + $0x100] sm:$0xff] %v3333
        %3398 = vst [vmem:[#allocation2 + $0x108] sm:$0xff] %v3334
        %3399 = vst [vmem:[#allocation2 + $0x110] sm:$0xff] %v3335
        %3400 = vst [vmem:[#allocation2 + $0x118] sm:$0xff] %v3336
        %3401 = vst [vmem:[#allocation2 + $0x120] sm:$0xff] %v3337
        %3402 = vst [vmem:[#allocation2 + $0x128] sm:$0xff] %v3338
        %3403 = vst [vmem:[#allocation2 + $0x130] sm:$0xff] %v3339
        %3404 = vst [vmem:[#allocation2 + $0x138] sm:$0xff] %v3340
        %3405 = vst [vmem:[#allocation2 + $0x140] sm:$0xff] %v3341
        %3406 = vst [vmem:[#allocation2 + $0x148] sm:$0xff] %v3342
        %3407 = vst [vmem:[#allocation2 + $0x150] sm:$0xff] %v3343
        %3408 = vst [vmem:[#allocation2 + $0x158] sm:$0xff] %v3344
        %3409 = vst [vmem:[#allocation2 + $0x160] sm:$0xff] %v3345
        %3410 = vst [vmem:[#allocation2 + $0x168] sm:$0xff] %v3346
        %3411 = vst [vmem:[#allocation2 + $0x170] sm:$0xff] %v3347
        %3412 = vst [vmem:[#allocation2 + $0x178] sm:$0xff] %v3348
        %3413 = vst [vmem:[#allocation2 + $0x180] sm:$0xff] %v3349
        %3414 = vst [vmem:[#allocation2 + $0x188] sm:$0xff] %v3350
        %3415 = vst [vmem:[#allocation2 + $0x190] sm:$0xff] %v3351
        %3416 = vst [vmem:[#allocation2 + $0x198] sm:$0xff] %v3352
        %3417 = vst [vmem:[#allocation2 + $0x1a0] sm:$0xff] %v3353
        %3418 = vst [vmem:[#allocation2 + $0x1a8] sm:$0xff] %v3354
        %3419 = vst [vmem:[#allocation2 + $0x1b0] sm:$0xff] %v3355
        %3420 = vst [vmem:[#allocation2 + $0x1b8] sm:$0xff] %v3356
        %3421 = vst [vmem:[#allocation2 + $0x1c0] sm:$0xff] %v3357
        %3422 = vst [vmem:[#allocation2 + $0x1c8] sm:$0xff] %v3358
        %3423 = vst [vmem:[#allocation2 + $0x1d0] sm:$0xff] %v3359
        %3424 = vst [vmem:[#allocation2 + $0x1d8] sm:$0xff] %v3360
        %3425 = vst [vmem:[#allocation2 + $0x1e0] sm:$0xff] %v3361
        %3426 = vst [vmem:[#allocation2 + $0x1e8] sm:$0xff] %v3362
        %3427 = vst [vmem:[#allocation2 + $0x1f0] sm:$0xf] %v3363
        %3428 = vst [vmem:[#allocation2 + $0x1f8] sm:$0xf] %v3364
        %v3429 = vld [vmem:[#allocation2] sm:$0xff]
        %v3430 = vld [vmem:[#allocation2 + $0x10] sm:$0xff]
        %v3431 = vld [vmem:[#allocation2 + $0x20] sm:$0xff]
        %v3432 = vld [vmem:[#allocation2 + $0x30] sm:$0xff]
        %v3433 = vld [vmem:[#allocation2 + $0x40] sm:$0xff]
        %v3434 = vld [vmem:[#allocation2 + $0x50] sm:$0xff]
        %v3435 = vld [vmem:[#allocation2 + $0x60] sm:$0xff]
        %v3436 = vld [vmem:[#allocation2 + $0x70] sm:$0xff]
        %v3437 = vld [vmem:[#allocation2 + $0x80] sm:$0xff]
        %v3438 = vld [vmem:[#allocation2 + $0x90] sm:$0xff]
        %v3439 = vld [vmem:[#allocation2 + $0xa0] sm:$0xff]
        %v3440 = vld [vmem:[#allocation2 + $0xb0] sm:$0xff]
        %v3441 = vld [vmem:[#allocation2 + $0xc0] sm:$0xff]
        %v3442 = vld [vmem:[#allocation2 + $0xd0] sm:$0xff]
        %v3443 = vld [vmem:[#allocation2 + $0xe0] sm:$0xff]
        %v3444 = vld [vmem:[#allocation2 + $0xf0] sm:$0xff]
        %v3445 = vld [vmem:[#allocation2 + $0x100] sm:$0xff]
        %v3446 = vld [vmem:[#allocation2 + $0x110] sm:$0xff]
        %v3447 = vld [vmem:[#allocation2 + $0x120] sm:$0xff]
        %v3448 = vld [vmem:[#allocation2 + $0x130] sm:$0xff]
        %v3449 = vld [vmem:[#allocation2 + $0x140] sm:$0xff]
        %v3450 = vld [vmem:[#allocation2 + $0x150] sm:$0xff]
        %v3451 = vld [vmem:[#allocation2 + $0x160] sm:$0xff]
        %v3452 = vld [vmem:[#allocation2 + $0x170] sm:$0xff]
        %v3453 = vld [vmem:[#allocation2 + $0x180] sm:$0xff]
        %v3454 = vld [vmem:[#allocation2 + $0x190] sm:$0xff]
        %v3455 = vld [vmem:[#allocation2 + $0x1a0] sm:$0xff]
        %v3456 = vld [vmem:[#allocation2 + $0x1b0] sm:$0xff]
        %v3457 = vld [vmem:[#allocation2 + $0x1c0] sm:$0xff]
        %v3458 = vld [vmem:[#allocation2 + $0x1d0] sm:$0xff]
        %v3459 = vld [vmem:[#allocation2 + $0x1e0] sm:$0xff]
        %v3460 = vld [vmem:[#allocation2 + $0x1f0] sm:$0xf]
        %v3461 = vld [vmem:[#allocation2 + $0x8] sm:$0xff]
        %v3462 = vld [vmem:[#allocation2 + $0x18] sm:$0xff]
        %v3463 = vld [vmem:[#allocation2 + $0x28] sm:$0xff]
        %v3464 = vld [vmem:[#allocation2 + $0x38] sm:$0xff]
        %v3465 = vld [vmem:[#allocation2 + $0x48] sm:$0xff]
        %v3466 = vld [vmem:[#allocation2 + $0x58] sm:$0xff]
        %v3467 = vld [vmem:[#allocation2 + $0x68] sm:$0xff]
        %v3468 = vld [vmem:[#allocation2 + $0x78] sm:$0xff]
        %v3469 = vld [vmem:[#allocation2 + $0x88] sm:$0xff]
        %v3470 = vld [vmem:[#allocation2 + $0x98] sm:$0xff]
        %v3471 = vld [vmem:[#allocation2 + $0xa8] sm:$0xff]
        %v3472 = vld [vmem:[#allocation2 + $0xb8] sm:$0xff]
        %v3473 = vld [vmem:[#allocation2 + $0xc8] sm:$0xff]
        %v3474 = vld [vmem:[#allocation2 + $0xd8] sm:$0xff]
        %v3475 = vld [vmem:[#allocation2 + $0xe8] sm:$0xff]
        %v3476 = vld [vmem:[#allocation2 + $0xf8] sm:$0xff]
        %v3477 = vld [vmem:[#allocation2 + $0x108] sm:$0xff]
        %v3478 = vld [vmem:[#allocation2 + $0x118] sm:$0xff]
        %v3479 = vld [vmem:[#allocation2 + $0x128] sm:$0xff]
        %v3480 = vld [vmem:[#allocation2 + $0x138] sm:$0xff]
        %v3481 = vld [vmem:[#allocation2 + $0x148] sm:$0xff]
        %v3482 = vld [vmem:[#allocation2 + $0x158] sm:$0xff]
        %v3483 = vld [vmem:[#allocation2 + $0x168] sm:$0xff]
        %v3484 = vld [vmem:[#allocation2 + $0x178] sm:$0xff]
        %v3485 = vld [vmem:[#allocation2 + $0x188] sm:$0xff]
        %v3486 = vld [vmem:[#allocation2 + $0x198] sm:$0xff]
        %v3487 = vld [vmem:[#allocation2 + $0x1a8] sm:$0xff]
        %v3488 = vld [vmem:[#allocation2 + $0x1b8] sm:$0xff]
        %v3489 = vld [vmem:[#allocation2 + $0x1c8] sm:$0xff]
        %v3490 = vld [vmem:[#allocation2 + $0x1d8] sm:$0xff]
        %v3491 = vld [vmem:[#allocation2 + $0x1e8] sm:$0xff]
        %v3492 = vld [vmem:[#allocation2 + $0x1f8] sm:$0xf]
        %v3493 = vmax.f32 %v3429, %v3461
        %v3494 = vmax.f32 %v3430, %v3462
        %v3495 = vmax.f32 %v3431, %v3463
        %v3496 = vmax.f32 %v3432, %v3464
        %v3497 = vmax.f32 %v3433, %v3465
        %v3498 = vmax.f32 %v3434, %v3466
        %v3499 = vmax.f32 %v3435, %v3467
        %v3500 = vmax.f32 %v3436, %v3468
        %v3501 = vmax.f32 %v3437, %v3469
        %v3502 = vmax.f32 %v3438, %v3470
        %v3503 = vmax.f32 %v3439, %v3471
        %v3504 = vmax.f32 %v3440, %v3472
        %v3505 = vmax.f32 %v3441, %v3473
        %v3506 = vmax.f32 %v3442, %v3474
        %v3507 = vmax.f32 %v3443, %v3475
        %v3508 = vmax.f32 %v3444, %v3476
        %v3509 = vmax.f32 %v3445, %v3477
        %v3510 = vmax.f32 %v3446, %v3478
        %v3511 = vmax.f32 %v3447, %v3479
        %v3512 = vmax.f32 %v3448, %v3480
        %v3513 = vmax.f32 %v3449, %v3481
        %v3514 = vmax.f32 %v3450, %v3482
        %v3515 = vmax.f32 %v3451, %v3483
        %v3516 = vmax.f32 %v3452, %v3484
        %v3517 = vmax.f32 %v3453, %v3485
        %v3518 = vmax.f32 %v3454, %v3486
        %v3519 = vmax.f32 %v3455, %v3487
        %v3520 = vmax.f32 %v3456, %v3488
        %v3521 = vmax.f32 %v3457, %v3489
        %v3522 = vmax.f32 %v3458, %v3490
        %v3523 = vmax.f32 %v3459, %v3491
        %v3524 = vmax.f32 %v3460, %v3492
        %v3525 = vpack.c.bf16 %v3494, %v3493
        %v3526 = vpack.c.bf16 %v3496, %v3495
        %v3527 = vpack.c.bf16 %v3498, %v3497
        %v3528 = vpack.c.bf16 %v3500, %v3499
        %v3529 = vpack.c.bf16 %v3502, %v3501
        %v3530 = vpack.c.bf16 %v3504, %v3503
        %v3531 = vpack.c.bf16 %v3506, %v3505
        %v3532 = vpack.c.bf16 %v3508, %v3507
        %v3533 = vpack.c.bf16 %v3510, %v3509
        %v3534 = vpack.c.bf16 %v3512, %v3511
        %v3535 = vpack.c.bf16 %v3514, %v3513
        %v3536 = vpack.c.bf16 %v3516, %v3515
        %v3537 = vpack.c.bf16 %v3518, %v3517
        %v3538 = vpack.c.bf16 %v3520, %v3519
        %v3539 = vpack.c.bf16 %v3522, %v3521
        %v3540 = vpack.c.bf16 %v3524, %v3523
        %v3541 = vld [vmem:[%s3] sm:$0xff]
        %v3542 = vld [vmem:[%s3 + $0x8] sm:$0xff]
        %v3543 = vld [vmem:[%s3 + $0x10] sm:$0xff]
        %v3544 = vld [vmem:[%s3 + $0x18] sm:$0xff]
        %v3545 = vld [vmem:[%s3 + $0x20] sm:$0xff]
        %v3546 = vld [vmem:[%s3 + $0x28] sm:$0xff]
        %v3547 = vld [vmem:[%s3 + $0x30] sm:$0xff]
        %v3548 = vld [vmem:[%s3 + $0x38] sm:$0xff]
        %v3549 = vld [vmem:[%s3 + $0x40] sm:$0xff]
        %v3550 = vld [vmem:[%s3 + $0x48] sm:$0xff]
        %v3551 = vld [vmem:[%s3 + $0x50] sm:$0xff]
        %v3552 = vld [vmem:[%s3 + $0x58] sm:$0xff]
        %v3553 = vld [vmem:[%s3 + $0x60] sm:$0xff]
        %v3554 = vld [vmem:[%s3 + $0x68] sm:$0xff]
        %v3569 = vunpack.c.l.b16 %v3541
        %v3570 = vunpack.c.h.b16 %v3541
        %v3571 = vunpack.c.l.b16 %v3542
        %v3572 = vunpack.c.h.b16 %v3542
        %v3573 = vunpack.c.l.b16 %v3543
        %v3574 = vunpack.c.h.b16 %v3543
        %v3575 = vunpack.c.l.b16 %v3544
        %v3576 = vunpack.c.h.b16 %v3544
        %v3577 = vunpack.c.l.b16 %v3545
        %v3578 = vunpack.c.h.b16 %v3545
        %v3579 = vunpack.c.l.b16 %v3546
        %v3580 = vunpack.c.h.b16 %v3546
        %v3581 = vunpack.c.l.b16 %v3547
        %v3582 = vunpack.c.h.b16 %v3547
        %v3583 = vunpack.c.l.b16 %v3548
        %v3584 = vunpack.c.h.b16 %v3548
        %v3585 = vunpack.c.l.b16 %v3549
        %v3586 = vunpack.c.h.b16 %v3549
        %v3587 = vunpack.c.l.b16 %v3550
        %v3588 = vunpack.c.h.b16 %v3550
        %v3589 = vunpack.c.l.b16 %v3551
        %v3590 = vunpack.c.h.b16 %v3551
        %v3591 = vunpack.c.l.b16 %v3552
        %v3592 = vunpack.c.h.b16 %v3552
        %v3593 = vunpack.c.l.b16 %v3553
        %v3594 = vunpack.c.h.b16 %v3553
        %v3595 = vunpack.c.l.b16 %v3554
        %v3596 = vunpack.c.h.b16 %v3554
        %v3597 = vpack.c.b16 %v3571, %v3569
        %v3598 = vpack.c.b16 %v3572, %v3570
        %v3599 = vpack.c.b16 %v3575, %v3573
        %v3600 = vpack.c.b16 %v3576, %v3574
        %v3601 = vpack.c.b16 %v3579, %v3577
        %v3602 = vpack.c.b16 %v3580, %v3578
        %v3603 = vpack.c.b16 %v3583, %v3581
        %v3604 = vpack.c.b16 %v3584, %v3582
        %v3605 = vpack.c.b16 %v3587, %v3585
        %v3606 = vpack.c.b16 %v3588, %v3586
        %v3607 = vpack.c.b16 %v3591, %v3589
        %v3608 = vpack.c.b16 %v3592, %v3590
        %v3609 = vpack.c.b16 %v3595, %v3593
        %v3610 = vpack.c.b16 %v3596, %v3594
        %vm3618 = vcmask 1014784
        %v3620 = vsel %vm3618, %v3598, 0
        %v3623 = vsel %vm3618, %v3600, 0
        %v3626 = vsel %vm3618, %v3602, 0
        %v3629 = vsel %vm3618, %v3604, 0
        %v3632 = vsel %vm3618, %v3606, 0
        %v3635 = vsel %vm3618, %v3608, 0
        %v3638 = vsel %vm3618, %v3610, 0
        %vm3640 = vcmask 1045504
        %v3642 = vsel %vm3640, %v3540, 0
        %3644 = vmatprep.subr.bf16.mxu0 0
        %3645 = vmatpush1.bf16.msra.mxu0 %v3525
        %3646 = vmatprep.subr.bf16.mxu0 0
        %3647 = vmatpush1.bf16.msra.mxu0 %v3526
        %3648 = vmatprep.subr.bf16.mxu0 0
        %3649 = vmatpush1.bf16.msra.mxu0 %v3527
        %3650 = vmatprep.subr.bf16.mxu0 0
        %3651 = vmatpush1.bf16.msra.mxu0 %v3528
        %3652 = vmatprep.subr.bf16.mxu0 0
        %3653 = vmatpush1.bf16.msra.mxu0 %v3529
        %3654 = vmatprep.subr.bf16.mxu0 0
        %3655 = vmatpush1.bf16.msra.mxu0 %v3530
        %3656 = vmatprep.subr.bf16.mxu0 0
        %3657 = vmatpush1.bf16.msra.mxu0 %v3531
        %3658 = vmatprep.subr.bf16.mxu0 0
        %3659 = vmatpush1.bf16.msra.mxu0 %v3532
        %3660 = vmatprep.subr.bf16.mxu0 0
        %3661 = vmatpush1.bf16.msra.mxu0 %v3533
        %3662 = vmatprep.subr.bf16.mxu0 0
        %3663 = vmatpush1.bf16.msra.mxu0 %v3534
        %3664 = vmatprep.subr.bf16.mxu0 0
        %3665 = vmatpush1.bf16.msra.mxu0 %v3535
        %3666 = vmatprep.subr.bf16.mxu0 0
        %3667 = vmatpush1.bf16.msra.mxu0 %v3536
        %3668 = vmatprep.subr.bf16.mxu0 0
        %3669 = vmatpush1.bf16.msra.mxu0 %v3537
        %3670 = vmatprep.subr.bf16.mxu0 0
        %3671 = vmatpush1.bf16.msra.mxu0 %v3538
        %3672 = vmatprep.subr.bf16.mxu0 0
        %3673 = vmatpush1.bf16.msra.mxu0 %v3539
        %3674 = vmatprep.subr.bf16.mxu0 0
        %3675 = vmatpush1.bf16.msra.mxu0 %v3642
        %3676 = vmatprep.mubr.bf16.mxu0 %v3620
        %3677 = vmatmul.mubr.bf16.gmra.mrb[0].mxu0 %v3597
        %v3678 = vpop.f32.mrb[0].mxu0
        %v3679 = vadd.f32 0.0, %v3678
        %v3680 = vpop.f32.mrb[0].mxu0
        %v3681 = vpop.f32.mrb[0].mxu0
        %v3682 = vadd.f32 0.0, %v3681
        %v3683 = vpop.f32.mrb[0].mxu0
        %3684 = vmatprep.mubr.bf16.mxu0 %v3623
        %3685 = vmatmul.mubr.bf16.gmra.mrb[0].mxu0 %v3599
        %v3686 = vpop.f32.mrb[0].mxu0
        %v3687 = vadd.f32 0.0, %v3686
        %v3688 = vpop.f32.mrb[0].mxu0
        %v3689 = vpop.f32.mrb[0].mxu0
        %v3690 = vadd.f32 0.0, %v3689
        %v3691 = vpop.f32.mrb[0].mxu0
        %3692 = vmatprep.mubr.bf16.mxu0 %v3626
        %3693 = vmatmul.mubr.bf16.gmra.mrb[0].mxu0 %v3601
        %v3694 = vpop.f32.mrb[0].mxu0
        %v3695 = vadd.f32 0.0, %v3694
        %v3696 = vpop.f32.mrb[0].mxu0
        %v3697 = vpop.f32.mrb[0].mxu0
        %v3698 = vadd.f32 0.0, %v3697
        %v3699 = vpop.f32.mrb[0].mxu0
        %3700 = vmatprep.mubr.bf16.mxu0 %v3629
        %3701 = vmatmul.mubr.bf16.gmra.mrb[0].mxu0 %v3603
        %v3702 = vpop.f32.mrb[0].mxu0
        %v3703 = vadd.f32 0.0, %v3702
        %v3704 = vpop.f32.mrb[0].mxu0
        %v3705 = vpop.f32.mrb[0].mxu0
        %v3706 = vadd.f32 0.0, %v3705
        %v3707 = vpop.f32.mrb[0].mxu0
        %3708 = vmatprep.mubr.bf16.mxu0 %v3632
        %3709 = vmatmul.mubr.bf16.gmra.mrb[0].mxu0 %v3605
        %v3710 = vpop.f32.mrb[0].mxu0
        %v3711 = vadd.f32 0.0, %v3710
        %v3712 = vpop.f32.mrb[0].mxu0
        %v3713 = vpop.f32.mrb[0].mxu0
        %v3714 = vadd.f32 0.0, %v3713
        %v3715 = vpop.f32.mrb[0].mxu0
        %3716 = vmatprep.mubr.bf16.mxu0 %v3635
        %3717 = vmatmul.mubr.bf16.gmra.mrb[0].mxu0 %v3607
        %v3718 = vpop.f32.mrb[0].mxu0
        %v3719 = vadd.f32 0.0, %v3718
        %v3720 = vpop.f32.mrb[0].mxu0
        %v3721 = vpop.f32.mrb[0].mxu0
        %v3722 = vadd.f32 0.0, %v3721
        %v3723 = vpop.f32.mrb[0].mxu0
        %3724 = vmatprep.mubr.bf16.mxu0 %v3638
        %3725 = vmatmul.mubr.bf16.gmra.mrb[0].mxu0 %v3609
        %v3726 = vpop.f32.mrb[0].mxu0
        %v3727 = vadd.f32 0.0, %v3726
        %v3728 = vpop.f32.mrb[0].mxu0
        %v3729 = vpop.f32.mrb[0].mxu0
        %v3730 = vadd.f32 0.0, %v3729
        %v3731 = vpop.f32.mrb[0].mxu0
        %3732 = vdwg.mxu0
        %s3733 = scalar_lea.vmem %s3, 112
        %v3734 = vld [vmem:[%s3733] sm:$0xff]
        %v3735 = vld [vmem:[%s3733 + $0x8] sm:$0xff]
        %v3736 = vld [vmem:[%s3733 + $0x10] sm:$0xff]
        %v3737 = vld [vmem:[%s3733 + $0x18] sm:$0xff]
        %v3738 = vld [vmem:[%s3733 + $0x20] sm:$0xff]
        %v3739 = vld [vmem:[%s3733 + $0x28] sm:$0xff]
        %v3740 = vld [vmem:[%s3733 + $0x30] sm:$0xff]
        %v3741 = vld [vmem:[%s3733 + $0x38] sm:$0xff]
        %v3742 = vld [vmem:[%s3733 + $0x40] sm:$0xff]
        %v3743 = vld [vmem:[%s3733 + $0x48] sm:$0xff]
        %v3744 = vld [vmem:[%s3733 + $0x50] sm:$0xff]
        %v3745 = vld [vmem:[%s3733 + $0x58] sm:$0xff]
        %v3746 = vld [vmem:[%s3733 + $0x60] sm:$0xff]
        %v3747 = vld [vmem:[%s3733 + $0x68] sm:$0xff]
        %v3762 = vunpack.c.l.b16 %v3734
        %v3763 = vunpack.c.h.b16 %v3734
        %v3764 = vunpack.c.l.b16 %v3735
        %v3765 = vunpack.c.h.b16 %v3735
        %v3766 = vunpack.c.l.b16 %v3736
        %v3767 = vunpack.c.h.b16 %v3736
        %v3768 = vunpack.c.l.b16 %v3737
        %v3769 = vunpack.c.h.b16 %v3737
        %v3770 = vunpack.c.l.b16 %v3738
        %v3771 = vunpack.c.h.b16 %v3738
        %v3772 = vunpack.c.l.b16 %v3739
        %v3773 = vunpack.c.h.b16 %v3739
        %v3774 = vunpack.c.l.b16 %v3740
        %v3775 = vunpack.c.h.b16 %v3740
        %v3776 = vunpack.c.l.b16 %v3741
        %v3777 = vunpack.c.h.b16 %v3741
        %v3778 = vunpack.c.l.b16 %v3742
        %v3779 = vunpack.c.h.b16 %v3742
        %v3780 = vunpack.c.l.b16 %v3743
        %v3781 = vunpack.c.h.b16 %v3743
        %v3782 = vunpack.c.l.b16 %v3744
        %v3783 = vunpack.c.h.b16 %v3744
        %v3784 = vunpack.c.l.b16 %v3745
        %v3785 = vunpack.c.h.b16 %v3745
        %v3786 = vunpack.c.l.b16 %v3746
        %v3787 = vunpack.c.h.b16 %v3746
        %v3788 = vunpack.c.l.b16 %v3747
        %v3789 = vunpack.c.h.b16 %v3747
        %v3790 = vpack.c.b16 %v3764, %v3762
        %v3791 = vpack.c.b16 %v3765, %v3763
        %v3792 = vpack.c.b16 %v3768, %v3766
        %v3793 = vpack.c.b16 %v3769, %v3767
        %v3794 = vpack.c.b16 %v3772, %v3770
        %v3795 = vpack.c.b16 %v3773, %v3771
        %v3796 = vpack.c.b16 %v3776, %v3774
        %v3797 = vpack.c.b16 %v3777, %v3775
        %v3798 = vpack.c.b16 %v3780, %v3778
        %v3799 = vpack.c.b16 %v3781, %v3779
        %v3800 = vpack.c.b16 %v3784, %v3782
        %v3801 = vpack.c.b16 %v3785, %v3783
        %v3802 = vpack.c.b16 %v3788, %v3786
        %v3803 = vpack.c.b16 %v3789, %v3787
        %v3812 = vsel %vm3618, %v3791, 0
        %v3815 = vsel %vm3618, %v3793, 0
        %v3818 = vsel %vm3618, %v3795, 0
        %v3821 = vsel %vm3618, %v3797, 0
        %v3824 = vsel %vm3618, %v3799, 0
        %v3827 = vsel %vm3618, %v3801, 0
        %v3830 = vsel %vm3618, %v3803, 0
        %3832 = vmatprep.subr.bf16.mxu0 0
        %3833 = vmatpush1.bf16.msra.mxu0 %v3525
        %3834 = vmatprep.subr.bf16.mxu0 0
        %3835 = vmatpush1.bf16.msra.mxu0 %v3526
        %3836 = vmatprep.subr.bf16.mxu0 0
        %3837 = vmatpush1.bf16.msra.mxu0 %v3527
        %3838 = vmatprep.subr.bf16.mxu0 0
        %3839 = vmatpush1.bf16.msra.mxu0 %v3528
        %3840 = vmatprep.subr.bf16.mxu0 0
        %3841 = vmatpush1.bf16.msra.mxu0 %v3529
        %3842 = vmatprep.subr.bf16.mxu0 0
        %3843 = vmatpush1.bf16.msra.mxu0 %v3530
        %3844 = vmatprep.subr.bf16.mxu0 0
        %3845 = vmatpush1.bf16.msra.mxu0 %v3531
        %3846 = vmatprep.subr.bf16.mxu0 0
        %3847 = vmatpush1.bf16.msra.mxu0 %v3532
        %3848 = vmatprep.subr.bf16.mxu0 0
        %3849 = vmatpush1.bf16.msra.mxu0 %v3533
        %3850 = vmatprep.subr.bf16.mxu0 0
        %3851 = vmatpush1.bf16.msra.mxu0 %v3534
        %3852 = vmatprep.subr.bf16.mxu0 0
        %3853 = vmatpush1.bf16.msra.mxu0 %v3535
        %3854 = vmatprep.subr.bf16.mxu0 0
        %3855 = vmatpush1.bf16.msra.mxu0 %v3536
        %3856 = vmatprep.subr.bf16.mxu0 0
        %3857 = vmatpush1.bf16.msra.mxu0 %v3537
        %3858 = vmatprep.subr.bf16.mxu0 0
        %3859 = vmatpush1.bf16.msra.mxu0 %v3538
        %3860 = vmatprep.subr.bf16.mxu0 0
        %3861 = vmatpush1.bf16.msra.mxu0 %v3539
        %3862 = vmatprep.subr.bf16.mxu0 0
        %3863 = vmatpush1.bf16.msra.mxu0 %v3642
        %3864 = vmatprep.mubr.bf16.mxu0 %v3812
        %3865 = vmatmul.mubr.bf16.gmra.mrb[0].mxu0 %v3790
        %v3866 = vpop.f32.mrb[0].mxu0
        %v3867 = vadd.f32 0.0, %v3866
        %v3868 = vpop.f32.mrb[0].mxu0
        %v3869 = vpop.f32.mrb[0].mxu0
        %v3870 = vadd.f32 0.0, %v3869
        %v3871 = vpop.f32.mrb[0].mxu0
        %3872 = vmatprep.mubr.bf16.mxu0 %v3815
        %3873 = vmatmul.mubr.bf16.gmra.mrb[0].mxu0 %v3792
        %v3874 = vpop.f32.mrb[0].mxu0
        %v3875 = vadd.f32 0.0, %v3874
        %v3876 = vpop.f32.mrb[0].mxu0
        %v3877 = vpop.f32.mrb[0].mxu0
        %v3878 = vadd.f32 0.0, %v3877
        %v3879 = vpop.f32.mrb[0].mxu0
        %3880 = vmatprep.mubr.bf16.mxu0 %v3818
        %3881 = vmatmul.mubr.bf16.gmra.mrb[0].mxu0 %v3794
        %v3882 = vpop.f32.mrb[0].mxu0
        %v3883 = vadd.f32 0.0, %v3882
        %v3884 = vpop.f32.mrb[0].mxu0
        %v3885 = vpop.f32.mrb[0].mxu0
        %v3886 = vadd.f32 0.0, %v3885
        %v3887 = vpop.f32.mrb[0].mxu0
        %3888 = vmatprep.mubr.bf16.mxu0 %v3821
        %3889 = vmatmul.mubr.bf16.gmra.mrb[0].mxu0 %v3796
        %v3890 = vpop.f32.mrb[0].mxu0
        %v3891 = vadd.f32 0.0, %v3890
        %v3892 = vpop.f32.mrb[0].mxu0
        %v3893 = vpop.f32.mrb[0].mxu0
        %v3894 = vadd.f32 0.0, %v3893
        %v3895 = vpop.f32.mrb[0].mxu0
        %3896 = vmatprep.mubr.bf16.mxu0 %v3824
        %3897 = vmatmul.mubr.bf16.gmra.mrb[0].mxu0 %v3798
        %v3898 = vpop.f32.mrb[0].mxu0
        %v3899 = vadd.f32 0.0, %v3898
        %v3900 = vpop.f32.mrb[0].mxu0
        %v3901 = vpop.f32.mrb[0].mxu0
        %v3902 = vadd.f32 0.0, %v3901
        %v3903 = vpop.f32.mrb[0].mxu0
        %3904 = vmatprep.mubr.bf16.mxu0 %v3827
        %3905 = vmatmul.mubr.bf16.gmra.mrb[0].mxu0 %v3800
        %v3906 = vpop.f32.mrb[0].mxu0
        %v3907 = vadd.f32 0.0, %v3906
        %v3908 = vpop.f32.mrb[0].mxu0
        %v3909 = vpop.f32.mrb[0].mxu0
        %v3910 = vadd.f32 0.0, %v3909
        %v3911 = vpop.f32.mrb[0].mxu0
        %3912 = vmatprep.mubr.bf16.mxu0 %v3830
        %3913 = vmatmul.mubr.bf16.gmra.mrb[0].mxu0 %v3802
        %v3914 = vpop.f32.mrb[0].mxu0
        %v3915 = vadd.f32 0.0, %v3914
        %v3916 = vpop.f32.mrb[0].mxu0
        %v3917 = vpop.f32.mrb[0].mxu0
        %v3918 = vadd.f32 0.0, %v3917
        %v3919 = vpop.f32.mrb[0].mxu0
        %3920 = vdwg.mxu0
        %v3921 = vmax.f32 %v3679, %v3867
        %v3922 = vmax.f32 %v3682, %v3870
        %v3923 = vmax.f32 %v3687, %v3875
        %v3924 = vmax.f32 %v3690, %v3878
        %v3925 = vmax.f32 %v3695, %v3883
        %v3926 = vmax.f32 %v3698, %v3886
        %v3927 = vmax.f32 %v3703, %v3891
        %v3928 = vmax.f32 %v3706, %v3894
        %v3929 = vmax.f32 %v3711, %v3899
        %v3930 = vmax.f32 %v3714, %v3902
        %v3931 = vmax.f32 %v3719, %v3907
        %v3932 = vmax.f32 %v3722, %v3910
        %v3933 = vmax.f32 %v3727, %v3915
        %v3934 = vmax.f32 %v3730, %v3918
        %v3935 = vpack.c.bf16 %v3922, %v3921
        %v3936 = vpack.c.bf16 %v3924, %v3923
        %v3937 = vpack.c.bf16 %v3926, %v3925
        %v3938 = vpack.c.bf16 %v3928, %v3927
        %v3939 = vpack.c.bf16 %v3930, %v3929
        %v3940 = vpack.c.bf16 %v3932, %v3931
        %v3941 = vpack.c.bf16 %v3934, %v3933
        %v3942 = vld [vmem:[%s5] sm:$0x3]
        %v3944 = vlaneseq
        %v3945 = vshrl.u32 %v3944, 7
        %v3946 = vsub.s32 0, %v3945
        %v3947 = vrot.slane %v3942, %v3946
        %v3948 = vlaneseq
        %v3949 = vshrl.u32 %v3948, 7
        %v3950 = vsub.s32 1, %v3949
        %v3951 = vrot.slane %v3942, %v3950
        %3954 = vst [vmem:[#allocation3] sm:$0xff] %v3947
        %3955 = vst [vmem:[#allocation3 + $0x8] sm:$0xff] %v3951
        %3956 = vst [vmem:[#allocation3 + $0x10] sm:$0xff] %v3947
        %3957 = vst [vmem:[#allocation3 + $0x18] sm:$0xff] %v3951
        %3958 = vst [vmem:[#allocation3 + $0x20] sm:$0xff] %v3947
        %3959 = vst [vmem:[#allocation3 + $0x28] sm:$0xff] %v3951
        %3960 = vst [vmem:[#allocation3 + $0x30] sm:$0xff] %v3947
        %3961 = vst [vmem:[#allocation3 + $0x38] sm:$0xff] %v3951
        %3962 = vst [vmem:[#allocation3 + $0x40] sm:$0xff] %v3947
        %3963 = vst [vmem:[#allocation3 + $0x48] sm:$0xff] %v3951
        %3964 = vst [vmem:[#allocation3 + $0x50] sm:$0xff] %v3947
        %3965 = vst [vmem:[#allocation3 + $0x58] sm:$0xff] %v3951
        %3966 = vst [vmem:[#allocation3 + $0x60] sm:$0xff] %v3947
        %3967 = vst [vmem:[#allocation3 + $0x68] sm:$0xff] %v3951
        %3968 = vst [vmem:[#allocation3 + $0x70] sm:$0xff] %v3947
        %3969 = vst [vmem:[#allocation3 + $0x78] sm:$0xff] %v3951
        %3970 = vst [vmem:[#allocation3 + $0x80] sm:$0xff] %v3947
        %3971 = vst [vmem:[#allocation3 + $0x88] sm:$0xff] %v3951
        %3972 = vst [vmem:[#allocation3 + $0x90] sm:$0xff] %v3947
        %3973 = vst [vmem:[#allocation3 + $0x98] sm:$0xff] %v3951
        %3974 = vst [vmem:[#allocation3 + $0xa0] sm:$0xff] %v3947
        %3975 = vst [vmem:[#allocation3 + $0xa8] sm:$0xff] %v3951
        %3976 = vst [vmem:[#allocation3 + $0xb0] sm:$0xff] %v3947
        %3977 = vst [vmem:[#allocation3 + $0xb8] sm:$0xff] %v3951
        %3978 = vst [vmem:[#allocation3 + $0xc0] sm:$0xff] %v3947
        %3979 = vst [vmem:[#allocation3 + $0xc8] sm:$0xff] %v3951
        %3980 = vst [vmem:[#allocation3 + $0xd0] sm:$0xf] %v3947
        %3981 = vst [vmem:[#allocation3 + $0xd8] sm:$0xf] %v3951
        %v3982 = vld [vmem:[#allocation3] sm:$0xff]
        %v3983 = vld [vmem:[#allocation3 + $0x8] sm:$0xff]
        %v3984 = vld [vmem:[#allocation3 + $0x10] sm:$0xff]
        %v3985 = vld [vmem:[#allocation3 + $0x18] sm:$0xff]
        %v3986 = vld [vmem:[#allocation3 + $0x20] sm:$0xff]
        %v3987 = vld [vmem:[#allocation3 + $0x28] sm:$0xff]
        %v3988 = vld [vmem:[#allocation3 + $0x30] sm:$0xff]
        %v3989 = vld [vmem:[#allocation3 + $0x38] sm:$0xff]
        %v3990 = vld [vmem:[#allocation3 + $0x40] sm:$0xff]
        %v3991 = vld [vmem:[#allocation3 + $0x48] sm:$0xff]
        %v3992 = vld [vmem:[#allocation3 + $0x50] sm:$0xff]
        %v3993 = vld [vmem:[#allocation3 + $0x58] sm:$0xff]
        %v3994 = vld [vmem:[#allocation3 + $0x60] sm:$0xff]
        %v3995 = vld [vmem:[#allocation3 + $0x68] sm:$0xff]
        %v3996 = vld [vmem:[#allocation3 + $0x70] sm:$0xff]
        %v3997 = vld [vmem:[#allocation3 + $0x78] sm:$0xff]
        %v3998 = vld [vmem:[#allocation3 + $0x80] sm:$0xff]
        %v3999 = vld [vmem:[#allocation3 + $0x88] sm:$0xff]
        %v4000 = vld [vmem:[#allocation3 + $0x90] sm:$0xff]
        %v4001 = vld [vmem:[#allocation3 + $0x98] sm:$0xff]
        %v4002 = vld [vmem:[#allocation3 + $0xa0] sm:$0xff]
        %v4003 = vld [vmem:[#allocation3 + $0xa8] sm:$0xff]
        %v4004 = vld [vmem:[#allocation3 + $0xb0] sm:$0xff]
        %v4005 = vld [vmem:[#allocation3 + $0xb8] sm:$0xff]
        %v4006 = vld [vmem:[#allocation3 + $0xc0] sm:$0xff]
        %v4007 = vld [vmem:[#allocation3 + $0xc8] sm:$0xff]
        %v4008 = vld [vmem:[#allocation3 + $0xd0] sm:$0xf]
        %v4009 = vld [vmem:[#allocation3 + $0xd8] sm:$0xf]
        %v4010 = vld [vmem:[%s4] sm:$0xff]
        %v4011 = vld [vmem:[%s4 + $0x8] sm:$0xff]
        %v4012 = vld [vmem:[%s4 + $0x10] sm:$0xff]
        %v4013 = vld [vmem:[%s4 + $0x18] sm:$0xff]
        %v4014 = vld [vmem:[%s4 + $0x20] sm:$0xff]
        %v4015 = vld [vmem:[%s4 + $0x28] sm:$0xff]
        %v4016 = vld [vmem:[%s4 + $0x30] sm:$0xff]
        %v4017 = vld [vmem:[%s4 + $0x38] sm:$0xff]
        %v4018 = vld [vmem:[%s4 + $0x40] sm:$0xff]
        %v4019 = vld [vmem:[%s4 + $0x48] sm:$0xff]
        %v4020 = vld [vmem:[%s4 + $0x50] sm:$0xff]
        %v4021 = vld [vmem:[%s4 + $0x58] sm:$0xff]
        %v4022 = vld [vmem:[%s4 + $0x60] sm:$0xff]
        %v4023 = vld [vmem:[%s4 + $0x68] sm:$0xff]
        %v4024 = vld [vmem:[%s4 + $0x70] sm:$0xff]
        %v4025 = vld [vmem:[%s4 + $0x78] sm:$0xff]
        %v4042 = vunpack.c.l.b16 %v4010
        %v4043 = vunpack.c.h.b16 %v4010
        %v4044 = vunpack.c.l.b16 %v4011
        %v4045 = vunpack.c.h.b16 %v4011
        %v4046 = vunpack.c.l.b16 %v4012
        %v4047 = vunpack.c.h.b16 %v4012
        %v4048 = vunpack.c.l.b16 %v4013
        %v4049 = vunpack.c.h.b16 %v4013
        %v4050 = vunpack.c.l.b16 %v4014
        %v4051 = vunpack.c.h.b16 %v4014
        %v4052 = vunpack.c.l.b16 %v4015
        %v4053 = vunpack.c.h.b16 %v4015
        %v4054 = vunpack.c.l.b16 %v4016
        %v4055 = vunpack.c.h.b16 %v4016
        %v4056 = vunpack.c.l.b16 %v4017
        %v4057 = vunpack.c.h.b16 %v4017
        %v4058 = vunpack.c.l.b16 %v4018
        %v4059 = vunpack.c.h.b16 %v4018
        %v4060 = vunpack.c.l.b16 %v4019
        %v4061 = vunpack.c.h.b16 %v4019
        %v4062 = vunpack.c.l.b16 %v4020
        %v4063 = vunpack.c.h.b16 %v4020
        %v4064 = vunpack.c.l.b16 %v4021
        %v4065 = vunpack.c.h.b16 %v4021
        %v4066 = vunpack.c.l.b16 %v4022
        %v4067 = vunpack.c.h.b16 %v4022
        %v4068 = vunpack.c.l.b16 %v4023
        %v4069 = vunpack.c.h.b16 %v4023
        %v4070 = vunpack.c.l.b16 %v4024
        %v4071 = vunpack.c.h.b16 %v4024
        %v4072 = vunpack.c.l.b16 %v4025
        %v4073 = vunpack.c.h.b16 %v4025
        %v4074 = vpack.c.b16 %v4044, %v4042
        %v4075 = vpack.c.b16 %v4045, %v4043
        %v4076 = vpack.c.b16 %v4048, %v4046
        %v4077 = vpack.c.b16 %v4049, %v4047
        %v4078 = vpack.c.b16 %v4052, %v4050
        %v4079 = vpack.c.b16 %v4053, %v4051
        %v4080 = vpack.c.b16 %v4056, %v4054
        %v4081 = vpack.c.b16 %v4057, %v4055
        %v4082 = vpack.c.b16 %v4060, %v4058
        %v4083 = vpack.c.b16 %v4061, %v4059
        %v4084 = vpack.c.b16 %v4064, %v4062
        %v4085 = vpack.c.b16 %v4065, %v4063
        %v4086 = vpack.c.b16 %v4068, %v4066
        %v4087 = vpack.c.b16 %v4069, %v4067
        %v4088 = vpack.c.b16 %v4072, %v4070
        %v4089 = vpack.c.b16 %v4073, %v4071
        %4106 = vmatprep.subr.bf16.mxu0 %v4075
        %4107 = vmatpush1.bf16.msra.mxu0 %v4074
        %4108 = vmatprep.subr.bf16.mxu0 %v4077
        %4109 = vmatpush1.bf16.msra.mxu0 %v4076
        %4110 = vmatprep.subr.bf16.mxu0 %v4079
        %4111 = vmatpush1.bf16.msra.mxu0 %v4078
        %4112 = vmatprep.subr.bf16.mxu0 %v4081
        %4113 = vmatpush1.bf16.msra.mxu0 %v4080
        %4114 = vmatprep.subr.bf16.mxu0 %v4083
        %4115 = vmatpush1.bf16.msra.mxu0 %v4082
        %4116 = vmatprep.subr.bf16.mxu0 %v4085
        %4117 = vmatpush1.bf16.msra.mxu0 %v4084
        %4118 = vmatprep.subr.bf16.mxu0 %v4087
        %4119 = vmatpush1.bf16.msra.mxu0 %v4086
        %4120 = vmatprep.subr.bf16.mxu0 %v4089
        %4121 = vmatpush1.bf16.msra.mxu0 %v4088
        %4122 = vmatprep.subr.bf16.mxu0 0
        %4123 = vmatpush1.bf16.msra.mxu0 0
        %4124 = vmatprep.subr.bf16.mxu0 0
        %4125 = vmatpush1.bf16.msra.mxu0 0
        %4126 = vmatprep.subr.bf16.mxu0 0
        %4127 = vmatpush1.bf16.msra.mxu0 0
        %4128 = vmatprep.subr.bf16.mxu0 0
        %4129 = vmatpush1.bf16.msra.mxu0 0
        %4130 = vmatprep.subr.bf16.mxu0 0
        %4131 = vmatpush1.bf16.msra.mxu0 0
        %4132 = vmatprep.subr.bf16.mxu0 0
        %4133 = vmatpush1.bf16.msra.mxu0 0
        %4134 = vmatprep.subr.bf16.mxu0 0
        %4135 = vmatpush1.bf16.msra.mxu0 0
        %4136 = vmatprep.subr.bf16.mxu0 0
        %4137 = vmatpush1.bf16.msra.mxu0 0
        %4138 = vmatprep.mubr.bf16.mxu0 0
        %4139 = vmatmul.mubr.bf16.gmra.mrb[0].mxu0 %v3935
        %v4140 = vpop.f32.mrb[0].mxu0
        %v4141 = vadd.f32 0.0, %v4140
        %v4142 = vpop.f32.mrb[0].mxu0
        %v4143 = vadd.f32 0.0, %v4142
        %v4144 = vpop.f32.mrb[0].mxu0
        %v4145 = vadd.f32 0.0, %v4144
        %v4146 = vpop.f32.mrb[0].mxu0
        %v4147 = vadd.f32 0.0, %v4146
        %4148 = vmatprep.mubr.bf16.mxu0 0
        %4149 = vmatmul.mubr.bf16.gmra.mrb[0].mxu0 %v3936
        %v4150 = vpop.f32.mrb[0].mxu0
        %v4151 = vadd.f32 0.0, %v4150
        %v4152 = vpop.f32.mrb[0].mxu0
        %v4153 = vadd.f32 0.0, %v4152
        %v4154 = vpop.f32.mrb[0].mxu0
        %v4155 = vadd.f32 0.0, %v4154
        %v4156 = vpop.f32.mrb[0].mxu0
        %v4157 = vadd.f32 0.0, %v4156
        %4158 = vmatprep.mubr.bf16.mxu0 0
        %4159 = vmatmul.mubr.bf16.gmra.mrb[0].mxu0 %v3937
        %v4160 = vpop.f32.mrb[0].mxu0
        %v4161 = vadd.f32 0.0, %v4160
        %v4162 = vpop.f32.mrb[0].mxu0
        %v4163 = vadd.f32 0.0, %v4162
        %v4164 = vpop.f32.mrb[0].mxu0
        %v4165 = vadd.f32 0.0, %v4164
        %v4166 = vpop.f32.mrb[0].mxu0
        %v4167 = vadd.f32 0.0, %v4166
        %4168 = vmatprep.mubr.bf16.mxu0 0
        %4169 = vmatmul.mubr.bf16.gmra.mrb[0].mxu0 %v3938
        %v4170 = vpop.f32.mrb[0].mxu0
        %v4171 = vadd.f32 0.0, %v4170
        %v4172 = vpop.f32.mrb[0].mxu0
        %v4173 = vadd.f32 0.0, %v4172
        %v4174 = vpop.f32.mrb[0].mxu0
        %v4175 = vadd.f32 0.0, %v4174
        %v4176 = vpop.f32.mrb[0].mxu0
        %v4177 = vadd.f32 0.0, %v4176
        %4178 = vmatprep.mubr.bf16.mxu0 0
        %4179 = vmatmul.mubr.bf16.gmra.mrb[0].mxu0 %v3939
        %v4180 = vpop.f32.mrb[0].mxu0
        %v4181 = vadd.f32 0.0, %v4180
        %v4182 = vpop.f32.mrb[0].mxu0
        %v4183 = vadd.f32 0.0, %v4182
        %v4184 = vpop.f32.mrb[0].mxu0
        %v4185 = vadd.f32 0.0, %v4184
        %v4186 = vpop.f32.mrb[0].mxu0
        %v4187 = vadd.f32 0.0, %v4186
        %4188 = vmatprep.mubr.bf16.mxu0 0
        %4189 = vmatmul.mubr.bf16.gmra.mrb[0].mxu0 %v3940
        %v4190 = vpop.f32.mrb[0].mxu0
        %v4191 = vadd.f32 0.0, %v4190
        %v4192 = vpop.f32.mrb[0].mxu0
        %v4193 = vadd.f32 0.0, %v4192
        %v4194 = vpop.f32.mrb[0].mxu0
        %v4195 = vadd.f32 0.0, %v4194
        %v4196 = vpop.f32.mrb[0].mxu0
        %v4197 = vadd.f32 0.0, %v4196
        %4198 = vmatprep.mubr.bf16.mxu0 0
        %4199 = vmatmul.mubr.bf16.gmra.mrb[0].mxu0 %v3941
        %v4200 = vpop.f32.mrb[0].mxu0
        %v4201 = vadd.f32 0.0, %v4200
        %v4202 = vpop.f32.mrb[0].mxu0
        %v4203 = vadd.f32 0.0, %v4202
        %v4204 = vpop.f32.mrb[0].mxu0
        %v4205 = vadd.f32 0.0, %v4204
        %v4206 = vpop.f32.mrb[0].mxu0
        %v4207 = vadd.f32 0.0, %v4206
        %4208 = vdwg.mxu0
        %v4209 = vadd.f32 %v3982, %v4141
        %v4210 = vadd.f32 %v3983, %v4143
        %v4211 = vadd.f32 %v3984, %v4145
        %v4212 = vadd.f32 %v3985, %v4147
        %v4213 = vadd.f32 %v3986, %v4151
        %v4214 = vadd.f32 %v3987, %v4153
        %v4215 = vadd.f32 %v3988, %v4155
        %v4216 = vadd.f32 %v3989, %v4157
        %v4217 = vadd.f32 %v3990, %v4161
        %v4218 = vadd.f32 %v3991, %v4163
        %v4219 = vadd.f32 %v3992, %v4165
        %v4220 = vadd.f32 %v3993, %v4167
        %v4221 = vadd.f32 %v3994, %v4171
        %v4222 = vadd.f32 %v3995, %v4173
        %v4223 = vadd.f32 %v3996, %v4175
        %v4224 = vadd.f32 %v3997, %v4177
        %v4225 = vadd.f32 %v3998, %v4181
        %v4226 = vadd.f32 %v3999, %v4183
        %v4227 = vadd.f32 %v4000, %v4185
        %v4228 = vadd.f32 %v4001, %v4187
        %v4229 = vadd.f32 %v4002, %v4191
        %v4230 = vadd.f32 %v4003, %v4193
        %v4231 = vadd.f32 %v4004, %v4195
        %v4232 = vadd.f32 %v4005, %v4197
        %v4233 = vadd.f32 %v4006, %v4201
        %v4234 = vadd.f32 %v4007, %v4203
        %v4235 = vadd.f32 %v4008, %v4205
        %v4236 = vadd.f32 %v4009, %v4207
        %4237 = vst [vmem:[#allocation3] sm:$0xff] %v4209
        %4238 = vst [vmem:[#allocation3 + $0x8] sm:$0xff] %v4210
        %4239 = vst [vmem:[#allocation3 + $0x10] sm:$0xff] %v4211
        %4240 = vst [vmem:[#allocation3 + $0x18] sm:$0xff] %v4212
        %4241 = vst [vmem:[#allocation3 + $0x20] sm:$0xff] %v4213
        %4242 = vst [vmem:[#allocation3 + $0x28] sm:$0xff] %v4214
        %4243 = vst [vmem:[#allocation3 + $0x30] sm:$0xff] %v4215
        %4244 = vst [vmem:[#allocation3 + $0x38] sm:$0xff] %v4216
        %4245 = vst [vmem:[#allocation3 + $0x40] sm:$0xff] %v4217
        %4246 = vst [vmem:[#allocation3 + $0x48] sm:$0xff] %v4218
        %4247 = vst [vmem:[#allocation3 + $0x50] sm:$0xff] %v4219
        %4248 = vst [vmem:[#allocation3 + $0x58] sm:$0xff] %v4220
        %4249 = vst [vmem:[#allocation3 + $0x60] sm:$0xff] %v4221
        %4250 = vst [vmem:[#allocation3 + $0x68] sm:$0xff] %v4222
        %4251 = vst [vmem:[#allocation3 + $0x70] sm:$0xff] %v4223
        %4252 = vst [vmem:[#allocation3 + $0x78] sm:$0xff] %v4224
        %4253 = vst [vmem:[#allocation3 + $0x80] sm:$0xff] %v4225
        %4254 = vst [vmem:[#allocation3 + $0x88] sm:$0xff] %v4226
        %4255 = vst [vmem:[#allocation3 + $0x90] sm:$0xff] %v4227
        %4256 = vst [vmem:[#allocation3 + $0x98] sm:$0xff] %v4228
        %4257 = vst [vmem:[#allocation3 + $0xa0] sm:$0xff] %v4229
        %4258 = vst [vmem:[#allocation3 + $0xa8] sm:$0xff] %v4230
        %4259 = vst [vmem:[#allocation3 + $0xb0] sm:$0xff] %v4231
        %4260 = vst [vmem:[#allocation3 + $0xb8] sm:$0xff] %v4232
        %4261 = vst [vmem:[#allocation3 + $0xc0] sm:$0xff] %v4233
        %4262 = vst [vmem:[#allocation3 + $0xc8] sm:$0xff] %v4234
        %4263 = vst [vmem:[#allocation3 + $0xd0] sm:$0xf] %v4235
        %4264 = vst [vmem:[#allocation3 + $0xd8] sm:$0xf] %v4236
        %v4265 = vld [vmem:[#allocation3] sm:$0xff]
        %v4266 = vld [vmem:[#allocation3 + $0x8] sm:$0xff]
        %v4267 = vld [vmem:[#allocation3 + $0x10] sm:$0xff]
        %v4268 = vld [vmem:[#allocation3 + $0x18] sm:$0xff]
        %v4269 = vld [vmem:[#allocation3 + $0x20] sm:$0xff]
        %v4270 = vld [vmem:[#allocation3 + $0x28] sm:$0xff]
        %v4271 = vld [vmem:[#allocation3 + $0x30] sm:$0xff]
        %v4272 = vld [vmem:[#allocation3 + $0x38] sm:$0xff]
        %v4273 = vld [vmem:[#allocation3 + $0x40] sm:$0xff]
        %v4274 = vld [vmem:[#allocation3 + $0x48] sm:$0xff]
        %v4275 = vld [vmem:[#allocation3 + $0x50] sm:$0xff]
        %v4276 = vld [vmem:[#allocation3 + $0x58] sm:$0xff]
        %v4277 = vld [vmem:[#allocation3 + $0x60] sm:$0xff]
        %v4278 = vld [vmem:[#allocation3 + $0x68] sm:$0xff]
        %v4279 = vld [vmem:[#allocation3 + $0x70] sm:$0xff]
        %v4280 = vld [vmem:[#allocation3 + $0x78] sm:$0xff]
        %v4281 = vld [vmem:[#allocation3 + $0x80] sm:$0xff]
        %v4282 = vld [vmem:[#allocation3 + $0x88] sm:$0xff]
        %v4283 = vld [vmem:[#allocation3 + $0x90] sm:$0xff]
        %v4284 = vld [vmem:[#allocation3 + $0x98] sm:$0xff]
        %v4285 = vld [vmem:[#allocation3 + $0xa0] sm:$0xff]
        %v4286 = vld [vmem:[#allocation3 + $0xa8] sm:$0xff]
        %v4287 = vld [vmem:[#allocation3 + $0xb0] sm:$0xff]
        %v4288 = vld [vmem:[#allocation3 + $0xb8] sm:$0xff]
        %v4289 = vld [vmem:[#allocation3 + $0xc0] sm:$0xff]
        %v4290 = vld [vmem:[#allocation3 + $0xc8] sm:$0xff]
        %v4291 = vld [vmem:[#allocation3 + $0xd0] sm:$0xf]
        %v4292 = vld [vmem:[#allocation3 + $0xd8] sm:$0xf]
        %s4293 = scalar_lea.vmem %s4, 128
        %v4294 = vld [vmem:[%s4293] sm:$0xff]
        %v4295 = vld [vmem:[%s4293 + $0x8] sm:$0xff]
        %v4296 = vld [vmem:[%s4293 + $0x10] sm:$0xff]
        %v4297 = vld [vmem:[%s4293 + $0x18] sm:$0xff]
        %v4298 = vld [vmem:[%s4293 + $0x20] sm:$0xff]
        %v4299 = vld [vmem:[%s4293 + $0x28] sm:$0xff]
        %v4300 = vld [vmem:[%s4293 + $0x30] sm:$0xff]
        %v4301 = vld [vmem:[%s4293 + $0x38] sm:$0xff]
        %v4302 = vld [vmem:[%s4293 + $0x40] sm:$0xff]
        %v4303 = vld [vmem:[%s4293 + $0x48] sm:$0xff]
        %v4304 = vld [vmem:[%s4293 + $0x50] sm:$0xff]
        %v4305 = vld [vmem:[%s4293 + $0x58] sm:$0xff]
        %v4306 = vld [vmem:[%s4293 + $0x60] sm:$0xff]
        %v4307 = vld [vmem:[%s4293 + $0x68] sm:$0xff]
        %v4308 = vld [vmem:[%s4293 + $0x70] sm:$0xff]
        %v4309 = vld [vmem:[%s4293 + $0x78] sm:$0xff]
        %v4311 = vshrl.u32 %v3935, 16
        %v4313 = vshll.u32 %v3935, 16
        %v4315 = vrot.slane %v4313, 1
        %v4316 = vor.u32 %v4311, %v4315
        %v4318 = vshll.u32 %v3936, 16
        %v4320 = vrot.slane %v4318, 1
        %v4321 = vsel %vm1262, %v4316, %v4320
        %v4322 = vshrl.u32 %v3936, 16
        %v4324 = vor.u32 %v4322, %v4320
        %v4326 = vshll.u32 %v3937, 16
        %v4328 = vrot.slane %v4326, 1
        %v4329 = vsel %vm1262, %v4324, %v4328
        %v4330 = vshrl.u32 %v3937, 16
        %v4332 = vor.u32 %v4330, %v4328
        %v4334 = vshll.u32 %v3938, 16
        %v4336 = vrot.slane %v4334, 1
        %v4337 = vsel %vm1262, %v4332, %v4336
        %v4338 = vshrl.u32 %v3938, 16
        %v4340 = vor.u32 %v4338, %v4336
        %v4342 = vshll.u32 %v3939, 16
        %v4344 = vrot.slane %v4342, 1
        %v4345 = vsel %vm1262, %v4340, %v4344
        %v4346 = vshrl.u32 %v3939, 16
        %v4348 = vor.u32 %v4346, %v4344
        %v4350 = vshll.u32 %v3940, 16
        %v4352 = vrot.slane %v4350, 1
        %v4353 = vsel %vm1262, %v4348, %v4352
        %v4354 = vshrl.u32 %v3940, 16
        %v4356 = vor.u32 %v4354, %v4352
        %v4358 = vshll.u32 %v3941, 16
        %v4360 = vrot.slane %v4358, 1
        %v4361 = vsel %vm1262, %v4356, %v4360
        %v4362 = vshrl.u32 %v3941, 16
        %v4364 = vor.u32 %v4362, %v4360
        %v4388 = vunpack.c.l.b16 %v4294
        %v4389 = vunpack.c.h.b16 %v4294
        %v4390 = vunpack.c.l.b16 %v4295
        %v4391 = vunpack.c.h.b16 %v4295
        %v4392 = vunpack.c.l.b16 %v4296
        %v4393 = vunpack.c.h.b16 %v4296
        %v4394 = vunpack.c.l.b16 %v4297
        %v4395 = vunpack.c.h.b16 %v4297
        %v4396 = vunpack.c.l.b16 %v4298
        %v4397 = vunpack.c.h.b16 %v4298
        %v4398 = vunpack.c.l.b16 %v4299
        %v4399 = vunpack.c.h.b16 %v4299
        %v4400 = vunpack.c.l.b16 %v4300
        %v4401 = vunpack.c.h.b16 %v4300
        %v4402 = vunpack.c.l.b16 %v4301
        %v4403 = vunpack.c.h.b16 %v4301
        %v4404 = vunpack.c.l.b16 %v4302
        %v4405 = vunpack.c.h.b16 %v4302
        %v4406 = vunpack.c.l.b16 %v4303
        %v4407 = vunpack.c.h.b16 %v4303
        %v4408 = vunpack.c.l.b16 %v4304
        %v4409 = vunpack.c.h.b16 %v4304
        %v4410 = vunpack.c.l.b16 %v4305
        %v4411 = vunpack.c.h.b16 %v4305
        %v4412 = vunpack.c.l.b16 %v4306
        %v4413 = vunpack.c.h.b16 %v4306
        %v4414 = vunpack.c.l.b16 %v4307
        %v4415 = vunpack.c.h.b16 %v4307
        %v4416 = vunpack.c.l.b16 %v4308
        %v4417 = vunpack.c.h.b16 %v4308
        %v4418 = vunpack.c.l.b16 %v4309
        %v4419 = vunpack.c.h.b16 %v4309
        %v4420 = vpack.c.b16 %v4390, %v4388
        %v4421 = vpack.c.b16 %v4391, %v4389
        %v4422 = vpack.c.b16 %v4394, %v4392
        %v4423 = vpack.c.b16 %v4395, %v4393
        %v4424 = vpack.c.b16 %v4398, %v4396
        %v4425 = vpack.c.b16 %v4399, %v4397
        %v4426 = vpack.c.b16 %v4402, %v4400
        %v4427 = vpack.c.b16 %v4403, %v4401
        %v4428 = vpack.c.b16 %v4406, %v4404
        %v4429 = vpack.c.b16 %v4407, %v4405
        %v4430 = vpack.c.b16 %v4410, %v4408
        %v4431 = vpack.c.b16 %v4411, %v4409
        %v4432 = vpack.c.b16 %v4414, %v4412
        %v4433 = vpack.c.b16 %v4415, %v4413
        %v4434 = vpack.c.b16 %v4418, %v4416
        %v4435 = vpack.c.b16 %v4419, %v4417
        %4452 = vmatprep.subr.bf16.mxu0 %v4421
        %4453 = vmatpush1.bf16.msra.mxu0 %v4420
        %4454 = vmatprep.subr.bf16.mxu0 %v4423
        %4455 = vmatpush1.bf16.msra.mxu0 %v4422
        %4456 = vmatprep.subr.bf16.mxu0 %v4425
        %4457 = vmatpush1.bf16.msra.mxu0 %v4424
        %4458 = vmatprep.subr.bf16.mxu0 %v4427
        %4459 = vmatpush1.bf16.msra.mxu0 %v4426
        %4460 = vmatprep.subr.bf16.mxu0 %v4429
        %4461 = vmatpush1.bf16.msra.mxu0 %v4428
        %4462 = vmatprep.subr.bf16.mxu0 %v4431
        %4463 = vmatpush1.bf16.msra.mxu0 %v4430
        %4464 = vmatprep.subr.bf16.mxu0 %v4433
        %4465 = vmatpush1.bf16.msra.mxu0 %v4432
        %4466 = vmatprep.subr.bf16.mxu0 %v4435
        %4467 = vmatpush1.bf16.msra.mxu0 %v4434
        %4468 = vmatprep.subr.bf16.mxu0 0
        %4469 = vmatpush1.bf16.msra.mxu0 0
        %4470 = vmatprep.subr.bf16.mxu0 0
        %4471 = vmatpush1.bf16.msra.mxu0 0
        %4472 = vmatprep.subr.bf16.mxu0 0
        %4473 = vmatpush1.bf16.msra.mxu0 0
        %4474 = vmatprep.subr.bf16.mxu0 0
        %4475 = vmatpush1.bf16.msra.mxu0 0
        %4476 = vmatprep.subr.bf16.mxu0 0
        %4477 = vmatpush1.bf16.msra.mxu0 0
        %4478 = vmatprep.subr.bf16.mxu0 0
        %4479 = vmatpush1.bf16.msra.mxu0 0
        %4480 = vmatprep.subr.bf16.mxu0 0
        %4481 = vmatpush1.bf16.msra.mxu0 0
        %4482 = vmatprep.subr.bf16.mxu0 0
        %4483 = vmatpush1.bf16.msra.mxu0 0
        %4484 = vmatprep.mubr.bf16.mxu0 0
        %4485 = vmatmul.mubr.bf16.gmra.mrb[0].mxu0 %v4321
        %v4486 = vpop.f32.mrb[0].mxu0
        %v4487 = vadd.f32 0.0, %v4486
        %v4488 = vpop.f32.mrb[0].mxu0
        %v4489 = vadd.f32 0.0, %v4488
        %v4490 = vpop.f32.mrb[0].mxu0
        %v4491 = vadd.f32 0.0, %v4490
        %v4492 = vpop.f32.mrb[0].mxu0
        %v4493 = vadd.f32 0.0, %v4492
        %4494 = vmatprep.mubr.bf16.mxu0 0
        %4495 = vmatmul.mubr.bf16.gmra.mrb[0].mxu0 %v4329
        %v4496 = vpop.f32.mrb[0].mxu0
        %v4497 = vadd.f32 0.0, %v4496
        %v4498 = vpop.f32.mrb[0].mxu0
        %v4499 = vadd.f32 0.0, %v4498
        %v4500 = vpop.f32.mrb[0].mxu0
        %v4501 = vadd.f32 0.0, %v4500
        %v4502 = vpop.f32.mrb[0].mxu0
        %v4503 = vadd.f32 0.0, %v4502
        %4504 = vmatprep.mubr.bf16.mxu0 0
        %4505 = vmatmul.mubr.bf16.gmra.mrb[0].mxu0 %v4337
        %v4506 = vpop.f32.mrb[0].mxu0
        %v4507 = vadd.f32 0.0, %v4506
        %v4508 = vpop.f32.mrb[0].mxu0
        %v4509 = vadd.f32 0.0, %v4508
        %v4510 = vpop.f32.mrb[0].mxu0
        %v4511 = vadd.f32 0.0, %v4510
        %v4512 = vpop.f32.mrb[0].mxu0
        %v4513 = vadd.f32 0.0, %v4512
        %4514 = vmatprep.mubr.bf16.mxu0 0
        %4515 = vmatmul.mubr.bf16.gmra.mrb[0].mxu0 %v4345
        %v4516 = vpop.f32.mrb[0].mxu0
        %v4517 = vadd.f32 0.0, %v4516
        %v4518 = vpop.f32.mrb[0].mxu0
        %v4519 = vadd.f32 0.0, %v4518
        %v4520 = vpop.f32.mrb[0].mxu0
        %v4521 = vadd.f32 0.0, %v4520
        %v4522 = vpop.f32.mrb[0].mxu0
        %v4523 = vadd.f32 0.0, %v4522
        %4524 = vmatprep.mubr.bf16.mxu0 0
        %4525 = vmatmul.mubr.bf16.gmra.mrb[0].mxu0 %v4353
        %v4526 = vpop.f32.mrb[0].mxu0
        %v4527 = vadd.f32 0.0, %v4526
        %v4528 = vpop.f32.mrb[0].mxu0
        %v4529 = vadd.f32 0.0, %v4528
        %v4530 = vpop.f32.mrb[0].mxu0
        %v4531 = vadd.f32 0.0, %v4530
        %v4532 = vpop.f32.mrb[0].mxu0
        %v4533 = vadd.f32 0.0, %v4532
        %4534 = vmatprep.mubr.bf16.mxu0 0
        %4535 = vmatmul.mubr.bf16.gmra.mrb[0].mxu0 %v4361
        %v4536 = vpop.f32.mrb[0].mxu0
        %v4537 = vadd.f32 0.0, %v4536
        %v4538 = vpop.f32.mrb[0].mxu0
        %v4539 = vadd.f32 0.0, %v4538
        %v4540 = vpop.f32.mrb[0].mxu0
        %v4541 = vadd.f32 0.0, %v4540
        %v4542 = vpop.f32.mrb[0].mxu0
        %v4543 = vadd.f32 0.0, %v4542
        %4544 = vmatprep.mubr.bf16.mxu0 0
        %4545 = vmatmul.mubr.bf16.gmra.mrb[0].mxu0 %v4364
        %v4546 = vpop.f32.mrb[0].mxu0
        %v4547 = vadd.f32 0.0, %v4546
        %v4548 = vpop.f32.mrb[0].mxu0
        %v4549 = vadd.f32 0.0, %v4548
        %v4550 = vpop.f32.mrb[0].mxu0
        %v4551 = vadd.f32 0.0, %v4550
        %v4552 = vpop.f32.mrb[0].mxu0
        %v4553 = vadd.f32 0.0, %v4552
        %4554 = vdwg.mxu0
        %v4555 = vadd.f32 %v4265, %v4487
        %v4556 = vadd.f32 %v4266, %v4489
        %v4557 = vadd.f32 %v4267, %v4491
        %v4558 = vadd.f32 %v4268, %v4493
        %v4559 = vadd.f32 %v4269, %v4497
        %v4560 = vadd.f32 %v4270, %v4499
        %v4561 = vadd.f32 %v4271, %v4501
        %v4562 = vadd.f32 %v4272, %v4503
        %v4563 = vadd.f32 %v4273, %v4507
        %v4564 = vadd.f32 %v4274, %v4509
        %v4565 = vadd.f32 %v4275, %v4511
        %v4566 = vadd.f32 %v4276, %v4513
        %v4567 = vadd.f32 %v4277, %v4517
        %v4568 = vadd.f32 %v4278, %v4519
        %v4569 = vadd.f32 %v4279, %v4521
        %v4570 = vadd.f32 %v4280, %v4523
        %v4571 = vadd.f32 %v4281, %v4527
        %v4572 = vadd.f32 %v4282, %v4529
        %v4573 = vadd.f32 %v4283, %v4531
        %v4574 = vadd.f32 %v4284, %v4533
        %v4575 = vadd.f32 %v4285, %v4537
        %v4576 = vadd.f32 %v4286, %v4539
        %v4577 = vadd.f32 %v4287, %v4541
        %v4578 = vadd.f32 %v4288, %v4543
        %v4579 = vadd.f32 %v4289, %v4547
        %v4580 = vadd.f32 %v4290, %v4549
        %v4581 = vadd.f32 %v4291, %v4551
        %v4582 = vadd.f32 %v4292, %v4553
        %4583 = vst [vmem:[#allocation3] sm:$0xff] %v4555
        %4584 = vst [vmem:[#allocation3 + $0x8] sm:$0xff] %v4556
        %4585 = vst [vmem:[#allocation3 + $0x10] sm:$0xff] %v4557
        %4586 = vst [vmem:[#allocation3 + $0x18] sm:$0xff] %v4558
        %4587 = vst [vmem:[#allocation3 + $0x20] sm:$0xff] %v4559
        %4588 = vst [vmem:[#allocation3 + $0x28] sm:$0xff] %v4560
        %4589 = vst [vmem:[#allocation3 + $0x30] sm:$0xff] %v4561
        %4590 = vst [vmem:[#allocation3 + $0x38] sm:$0xff] %v4562
        %4591 = vst [vmem:[#allocation3 + $0x40] sm:$0xff] %v4563
        %4592 = vst [vmem:[#allocation3 + $0x48] sm:$0xff] %v4564
        %4593 = vst [vmem:[#allocation3 + $0x50] sm:$0xff] %v4565
        %4594 = vst [vmem:[#allocation3 + $0x58] sm:$0xff] %v4566
        %4595 = vst [vmem:[#allocation3 + $0x60] sm:$0xff] %v4567
        %4596 = vst [vmem:[#allocation3 + $0x68] sm:$0xff] %v4568
        %4597 = vst [vmem:[#allocation3 + $0x70] sm:$0xff] %v4569
        %4598 = vst [vmem:[#allocation3 + $0x78] sm:$0xff] %v4570
        %4599 = vst [vmem:[#allocation3 + $0x80] sm:$0xff] %v4571
        %4600 = vst [vmem:[#allocation3 + $0x88] sm:$0xff] %v4572
        %4601 = vst [vmem:[#allocation3 + $0x90] sm:$0xff] %v4573
        %4602 = vst [vmem:[#allocation3 + $0x98] sm:$0xff] %v4574
        %4603 = vst [vmem:[#allocation3 + $0xa0] sm:$0xff] %v4575
        %4604 = vst [vmem:[#allocation3 + $0xa8] sm:$0xff] %v4576
        %4605 = vst [vmem:[#allocation3 + $0xb0] sm:$0xff] %v4577
        %4606 = vst [vmem:[#allocation3 + $0xb8] sm:$0xff] %v4578
        %4607 = vst [vmem:[#allocation3 + $0xc0] sm:$0xff] %v4579
        %4608 = vst [vmem:[#allocation3 + $0xc8] sm:$0xff] %v4580
        %4609 = vst [vmem:[#allocation3 + $0xd0] sm:$0xf] %v4581
        %4610 = vst [vmem:[#allocation3 + $0xd8] sm:$0xf] %v4582
        %v4611 = vld [vmem:[#allocation3] sm:$0xff]
        %v4612 = vld [vmem:[#allocation3 + $0x8] sm:$0xff]
        %v4613 = vld [vmem:[#allocation3 + $0x10] sm:$0xff]
        %v4614 = vld [vmem:[#allocation3 + $0x18] sm:$0xff]
        %v4615 = vld [vmem:[#allocation3 + $0x20] sm:$0xff]
        %v4616 = vld [vmem:[#allocation3 + $0x28] sm:$0xff]
        %v4617 = vld [vmem:[#allocation3 + $0x30] sm:$0xff]
        %v4618 = vld [vmem:[#allocation3 + $0x38] sm:$0xff]
        %v4619 = vld [vmem:[#allocation3 + $0x40] sm:$0xff]
        %v4620 = vld [vmem:[#allocation3 + $0x48] sm:$0xff]
        %v4621 = vld [vmem:[#allocation3 + $0x50] sm:$0xff]
        %v4622 = vld [vmem:[#allocation3 + $0x58] sm:$0xff]
        %v4623 = vld [vmem:[#allocation3 + $0x60] sm:$0xff]
        %v4624 = vld [vmem:[#allocation3 + $0x68] sm:$0xff]
        %v4625 = vld [vmem:[#allocation3 + $0x70] sm:$0xff]
        %v4626 = vld [vmem:[#allocation3 + $0x78] sm:$0xff]
        %v4627 = vld [vmem:[#allocation3 + $0x80] sm:$0xff]
        %v4628 = vld [vmem:[#allocation3 + $0x88] sm:$0xff]
        %v4629 = vld [vmem:[#allocation3 + $0x90] sm:$0xff]
        %v4630 = vld [vmem:[#allocation3 + $0x98] sm:$0xff]
        %v4631 = vld [vmem:[#allocation3 + $0xa0] sm:$0xff]
        %v4632 = vld [vmem:[#allocation3 + $0xa8] sm:$0xff]
        %v4633 = vld [vmem:[#allocation3 + $0xb0] sm:$0xff]
        %v4634 = vld [vmem:[#allocation3 + $0xb8] sm:$0xff]
        %v4635 = vld [vmem:[#allocation3 + $0xc0] sm:$0xff]
        %v4636 = vld [vmem:[#allocation3 + $0xc8] sm:$0xff]
        %v4637 = vld [vmem:[#allocation3 + $0xd0] sm:$0xf]
        %v4638 = vld [vmem:[#allocation3 + $0xd8] sm:$0xf]
        %s4639 = scalar_lea.vmem %s4, 256
        %v4640 = vld [vmem:[%s4639] sm:$0xff]
        %v4641 = vld [vmem:[%s4639 + $0x8] sm:$0xff]
        %v4642 = vld [vmem:[%s4639 + $0x10] sm:$0xff]
        %v4643 = vld [vmem:[%s4639 + $0x18] sm:$0xff]
        %v4644 = vld [vmem:[%s4639 + $0x20] sm:$0xff]
        %v4645 = vld [vmem:[%s4639 + $0x28] sm:$0xff]
        %v4646 = vld [vmem:[%s4639 + $0x30] sm:$0xff]
        %v4647 = vld [vmem:[%s4639 + $0x38] sm:$0xff]
        %v4648 = vld [vmem:[%s4639 + $0x40] sm:$0xff]
        %v4649 = vld [vmem:[%s4639 + $0x48] sm:$0xff]
        %v4650 = vld [vmem:[%s4639 + $0x50] sm:$0xff]
        %v4651 = vld [vmem:[%s4639 + $0x58] sm:$0xff]
        %v4652 = vld [vmem:[%s4639 + $0x60] sm:$0xff]
        %v4653 = vld [vmem:[%s4639 + $0x68] sm:$0xff]
        %v4654 = vld [vmem:[%s4639 + $0x70] sm:$0xff]
        %v4655 = vld [vmem:[%s4639 + $0x78] sm:$0xff]
        %v4663 = vrot.slane %v3935, 1
        %v4664 = vrot.slane %v3936, 1
        %v4665 = vsel %vm1888, %v4663, %v4664
        %v4666 = vrot.slane %v3937, 1
        %v4667 = vsel %vm1888, %v4664, %v4666
        %v4668 = vrot.slane %v3938, 1
        %v4669 = vsel %vm1888, %v4666, %v4668
        %v4670 = vrot.slane %v3939, 1
        %v4671 = vsel %vm1888, %v4668, %v4670
        %v4672 = vrot.slane %v3940, 1
        %v4673 = vsel %vm1888, %v4670, %v4672
        %v4674 = vrot.slane %v3941, 1
        %v4675 = vsel %vm1888, %v4672, %v4674
        %v4699 = vunpack.c.l.b16 %v4640
        %v4700 = vunpack.c.h.b16 %v4640
        %v4701 = vunpack.c.l.b16 %v4641
        %v4702 = vunpack.c.h.b16 %v4641
        %v4703 = vunpack.c.l.b16 %v4642
        %v4704 = vunpack.c.h.b16 %v4642
        %v4705 = vunpack.c.l.b16 %v4643
        %v4706 = vunpack.c.h.b16 %v4643
        %v4707 = vunpack.c.l.b16 %v4644
        %v4708 = vunpack.c.h.b16 %v4644
        %v4709 = vunpack.c.l.b16 %v4645
        %v4710 = vunpack.c.h.b16 %v4645
        %v4711 = vunpack.c.l.b16 %v4646
        %v4712 = vunpack.c.h.b16 %v4646
        %v4713 = vunpack.c.l.b16 %v4647
        %v4714 = vunpack.c.h.b16 %v4647
        %v4715 = vunpack.c.l.b16 %v4648
        %v4716 = vunpack.c.h.b16 %v4648
        %v4717 = vunpack.c.l.b16 %v4649
        %v4718 = vunpack.c.h.b16 %v4649
        %v4719 = vunpack.c.l.b16 %v4650
        %v4720 = vunpack.c.h.b16 %v4650
        %v4721 = vunpack.c.l.b16 %v4651
        %v4722 = vunpack.c.h.b16 %v4651
        %v4723 = vunpack.c.l.b16 %v4652
        %v4724 = vunpack.c.h.b16 %v4652
        %v4725 = vunpack.c.l.b16 %v4653
        %v4726 = vunpack.c.h.b16 %v4653
        %v4727 = vunpack.c.l.b16 %v4654
        %v4728 = vunpack.c.h.b16 %v4654
        %v4729 = vunpack.c.l.b16 %v4655
        %v4730 = vunpack.c.h.b16 %v4655
        %v4731 = vpack.c.b16 %v4701, %v4699
        %v4732 = vpack.c.b16 %v4702, %v4700
        %v4733 = vpack.c.b16 %v4705, %v4703
        %v4734 = vpack.c.b16 %v4706, %v4704
        %v4735 = vpack.c.b16 %v4709, %v4707
        %v4736 = vpack.c.b16 %v4710, %v4708
        %v4737 = vpack.c.b16 %v4713, %v4711
        %v4738 = vpack.c.b16 %v4714, %v4712
        %v4739 = vpack.c.b16 %v4717, %v4715
        %v4740 = vpack.c.b16 %v4718, %v4716
        %v4741 = vpack.c.b16 %v4721, %v4719
        %v4742 = vpack.c.b16 %v4722, %v4720
        %v4743 = vpack.c.b16 %v4725, %v4723
        %v4744 = vpack.c.b16 %v4726, %v4724
        %v4745 = vpack.c.b16 %v4729, %v4727
        %v4746 = vpack.c.b16 %v4730, %v4728
        %4763 = vmatprep.subr.bf16.mxu0 %v4732
        %4764 = vmatpush1.bf16.msra.mxu0 %v4731
        %4765 = vmatprep.subr.bf16.mxu0 %v4734
        %4766 = vmatpush1.bf16.msra.mxu0 %v4733
        %4767 = vmatprep.subr.bf16.mxu0 %v4736
        %4768 = vmatpush1.bf16.msra.mxu0 %v4735
        %4769 = vmatprep.subr.bf16.mxu0 %v4738
        %4770 = vmatpush1.bf16.msra.mxu0 %v4737
        %4771 = vmatprep.subr.bf16.mxu0 %v4740
        %4772 = vmatpush1.bf16.msra.mxu0 %v4739
        %4773 = vmatprep.subr.bf16.mxu0 %v4742
        %4774 = vmatpush1.bf16.msra.mxu0 %v4741
        %4775 = vmatprep.subr.bf16.mxu0 %v4744
        %4776 = vmatpush1.bf16.msra.mxu0 %v4743
        %4777 = vmatprep.subr.bf16.mxu0 %v4746
        %4778 = vmatpush1.bf16.msra.mxu0 %v4745
        %4779 = vmatprep.subr.bf16.mxu0 0
        %4780 = vmatpush1.bf16.msra.mxu0 0
        %4781 = vmatprep.subr.bf16.mxu0 0
        %4782 = vmatpush1.bf16.msra.mxu0 0
        %4783 = vmatprep.subr.bf16.mxu0 0
        %4784 = vmatpush1.bf16.msra.mxu0 0
        %4785 = vmatprep.subr.bf16.mxu0 0
        %4786 = vmatpush1.bf16.msra.mxu0 0
        %4787 = vmatprep.subr.bf16.mxu0 0
        %4788 = vmatpush1.bf16.msra.mxu0 0
        %4789 = vmatprep.subr.bf16.mxu0 0
        %4790 = vmatpush1.bf16.msra.mxu0 0
        %4791 = vmatprep.subr.bf16.mxu0 0
        %4792 = vmatpush1.bf16.msra.mxu0 0
        %4793 = vmatprep.subr.bf16.mxu0 0
        %4794 = vmatpush1.bf16.msra.mxu0 0
        %4795 = vmatprep.mubr.bf16.mxu0 0
        %4796 = vmatmul.mubr.bf16.gmra.mrb[0].mxu0 %v4665
        %v4797 = vpop.f32.mrb[0].mxu0
        %v4798 = vadd.f32 0.0, %v4797
        %v4799 = vpop.f32.mrb[0].mxu0
        %v4800 = vadd.f32 0.0, %v4799
        %v4801 = vpop.f32.mrb[0].mxu0
        %v4802 = vadd.f32 0.0, %v4801
        %v4803 = vpop.f32.mrb[0].mxu0
        %v4804 = vadd.f32 0.0, %v4803
        %4805 = vmatprep.mubr.bf16.mxu0 0
        %4806 = vmatmul.mubr.bf16.gmra.mrb[0].mxu0 %v4667
        %v4807 = vpop.f32.mrb[0].mxu0
        %v4808 = vadd.f32 0.0, %v4807
        %v4809 = vpop.f32.mrb[0].mxu0
        %v4810 = vadd.f32 0.0, %v4809
        %v4811 = vpop.f32.mrb[0].mxu0
        %v4812 = vadd.f32 0.0, %v4811
        %v4813 = vpop.f32.mrb[0].mxu0
        %v4814 = vadd.f32 0.0, %v4813
        %4815 = vmatprep.mubr.bf16.mxu0 0
        %4816 = vmatmul.mubr.bf16.gmra.mrb[0].mxu0 %v4669
        %v4817 = vpop.f32.mrb[0].mxu0
        %v4818 = vadd.f32 0.0, %v4817
        %v4819 = vpop.f32.mrb[0].mxu0
        %v4820 = vadd.f32 0.0, %v4819
        %v4821 = vpop.f32.mrb[0].mxu0
        %v4822 = vadd.f32 0.0, %v4821
        %v4823 = vpop.f32.mrb[0].mxu0
        %v4824 = vadd.f32 0.0, %v4823
        %4825 = vmatprep.mubr.bf16.mxu0 0
        %4826 = vmatmul.mubr.bf16.gmra.mrb[0].mxu0 %v4671
        %v4827 = vpop.f32.mrb[0].mxu0
        %v4828 = vadd.f32 0.0, %v4827
        %v4829 = vpop.f32.mrb[0].mxu0
        %v4830 = vadd.f32 0.0, %v4829
        %v4831 = vpop.f32.mrb[0].mxu0
        %v4832 = vadd.f32 0.0, %v4831
        %v4833 = vpop.f32.mrb[0].mxu0
        %v4834 = vadd.f32 0.0, %v4833
        %4835 = vmatprep.mubr.bf16.mxu0 0
        %4836 = vmatmul.mubr.bf16.gmra.mrb[0].mxu0 %v4673
        %v4837 = vpop.f32.mrb[0].mxu0
        %v4838 = vadd.f32 0.0, %v4837
        %v4839 = vpop.f32.mrb[0].mxu0
        %v4840 = vadd.f32 0.0, %v4839
        %v4841 = vpop.f32.mrb[0].mxu0
        %v4842 = vadd.f32 0.0, %v4841
        %v4843 = vpop.f32.mrb[0].mxu0
        %v4844 = vadd.f32 0.0, %v4843
        %4845 = vmatprep.mubr.bf16.mxu0 0
        %4846 = vmatmul.mubr.bf16.gmra.mrb[0].mxu0 %v4675
        %v4847 = vpop.f32.mrb[0].mxu0
        %v4848 = vadd.f32 0.0, %v4847
        %v4849 = vpop.f32.mrb[0].mxu0
        %v4850 = vadd.f32 0.0, %v4849
        %v4851 = vpop.f32.mrb[0].mxu0
        %v4852 = vadd.f32 0.0, %v4851
        %v4853 = vpop.f32.mrb[0].mxu0
        %v4854 = vadd.f32 0.0, %v4853
        %4855 = vmatprep.mubr.bf16.mxu0 0
        %4856 = vmatmul.mubr.bf16.gmra.mrb[0].mxu0 %v4674
        %v4857 = vpop.f32.mrb[0].mxu0
        %v4858 = vadd.f32 0.0, %v4857
        %v4859 = vpop.f32.mrb[0].mxu0
        %v4860 = vadd.f32 0.0, %v4859
        %v4861 = vpop.f32.mrb[0].mxu0
        %v4862 = vadd.f32 0.0, %v4861
        %v4863 = vpop.f32.mrb[0].mxu0
        %v4864 = vadd.f32 0.0, %v4863
        %4865 = vdwg.mxu0
        %v4866 = vadd.f32 %v4611, %v4798
        %v4867 = vadd.f32 %v4612, %v4800
        %v4868 = vadd.f32 %v4613, %v4802
        %v4869 = vadd.f32 %v4614, %v4804
        %v4870 = vadd.f32 %v4615, %v4808
        %v4871 = vadd.f32 %v4616, %v4810
        %v4872 = vadd.f32 %v4617, %v4812
        %v4873 = vadd.f32 %v4618, %v4814
        %v4874 = vadd.f32 %v4619, %v4818
        %v4875 = vadd.f32 %v4620, %v4820
        %v4876 = vadd.f32 %v4621, %v4822
        %v4877 = vadd.f32 %v4622, %v4824
        %v4878 = vadd.f32 %v4623, %v4828
        %v4879 = vadd.f32 %v4624, %v4830
        %v4880 = vadd.f32 %v4625, %v4832
        %v4881 = vadd.f32 %v4626, %v4834
        %v4882 = vadd.f32 %v4627, %v4838
        %v4883 = vadd.f32 %v4628, %v4840
        %v4884 = vadd.f32 %v4629, %v4842
        %v4885 = vadd.f32 %v4630, %v4844
        %v4886 = vadd.f32 %v4631, %v4848
        %v4887 = vadd.f32 %v4632, %v4850
        %v4888 = vadd.f32 %v4633, %v4852
        %v4889 = vadd.f32 %v4634, %v4854
        %v4890 = vadd.f32 %v4635, %v4858
        %v4891 = vadd.f32 %v4636, %v4860
        %v4892 = vadd.f32 %v4637, %v4862
        %v4893 = vadd.f32 %v4638, %v4864
        %4894 = vst [vmem:[#allocation3] sm:$0xff] %v4866
        %4895 = vst [vmem:[#allocation3 + $0x8] sm:$0xff] %v4867
        %4896 = vst [vmem:[#allocation3 + $0x10] sm:$0xff] %v4868
        %4897 = vst [vmem:[#allocation3 + $0x18] sm:$0xff] %v4869
        %4898 = vst [vmem:[#allocation3 + $0x20] sm:$0xff] %v4870
        %4899 = vst [vmem:[#allocation3 + $0x28] sm:$0xff] %v4871
        %4900 = vst [vmem:[#allocation3 + $0x30] sm:$0xff] %v4872
        %4901 = vst [vmem:[#allocation3 + $0x38] sm:$0xff] %v4873
        %4902 = vst [vmem:[#allocation3 + $0x40] sm:$0xff] %v4874
        %4903 = vst [vmem:[#allocation3 + $0x48] sm:$0xff] %v4875
        %4904 = vst [vmem:[#allocation3 + $0x50] sm:$0xff] %v4876
        %4905 = vst [vmem:[#allocation3 + $0x58] sm:$0xff] %v4877
        %4906 = vst [vmem:[#allocation3 + $0x60] sm:$0xff] %v4878
        %4907 = vst [vmem:[#allocation3 + $0x68] sm:$0xff] %v4879
        %4908 = vst [vmem:[#allocation3 + $0x70] sm:$0xff] %v4880
        %4909 = vst [vmem:[#allocation3 + $0x78] sm:$0xff] %v4881
        %4910 = vst [vmem:[#allocation3 + $0x80] sm:$0xff] %v4882
        %4911 = vst [vmem:[#allocation3 + $0x88] sm:$0xff] %v4883
        %4912 = vst [vmem:[#allocation3 + $0x90] sm:$0xff] %v4884
        %4913 = vst [vmem:[#allocation3 + $0x98] sm:$0xff] %v4885
        %4914 = vst [vmem:[#allocation3 + $0xa0] sm:$0xff] %v4886
        %4915 = vst [vmem:[#allocation3 + $0xa8] sm:$0xff] %v4887
        %4916 = vst [vmem:[#allocation3 + $0xb0] sm:$0xff] %v4888
        %4917 = vst [vmem:[#allocation3 + $0xb8] sm:$0xff] %v4889
        %4918 = vst [vmem:[#allocation3 + $0xc0] sm:$0xff] %v4890
        %4919 = vst [vmem:[#allocation3 + $0xc8] sm:$0xff] %v4891
        %4920 = vst [vmem:[#allocation3 + $0xd0] sm:$0xf] %v4892
        %4921 = vst [vmem:[#allocation3 + $0xd8] sm:$0xf] %v4893
        %v4922 = vld [vmem:[#allocation3] sm:$0xff]
        %v4923 = vld [vmem:[#allocation3 + $0x8] sm:$0xff]
        %v4924 = vld [vmem:[#allocation3 + $0x10] sm:$0xff]
        %v4925 = vld [vmem:[#allocation3 + $0x18] sm:$0xff]
        %v4926 = vld [vmem:[#allocation3 + $0x20] sm:$0xff]
        %v4927 = vld [vmem:[#allocation3 + $0x28] sm:$0xff]
        %v4928 = vld [vmem:[#allocation3 + $0x30] sm:$0xff]
        %v4929 = vld [vmem:[#allocation3 + $0x38] sm:$0xff]
        %v4930 = vld [vmem:[#allocation3 + $0x40] sm:$0xff]
        %v4931 = vld [vmem:[#allocation3 + $0x48] sm:$0xff]
        %v4932 = vld [vmem:[#allocation3 + $0x50] sm:$0xff]
        %v4933 = vld [vmem:[#allocation3 + $0x58] sm:$0xff]
        %v4934 = vld [vmem:[#allocation3 + $0x60] sm:$0xff]
        %v4935 = vld [vmem:[#allocation3 + $0x68] sm:$0xff]
        %v4936 = vld [vmem:[#allocation3 + $0x70] sm:$0xff]
        %v4937 = vld [vmem:[#allocation3 + $0x78] sm:$0xff]
        %v4938 = vld [vmem:[#allocation3 + $0x80] sm:$0xff]
        %v4939 = vld [vmem:[#allocation3 + $0x88] sm:$0xff]
        %v4940 = vld [vmem:[#allocation3 + $0x90] sm:$0xff]
        %v4941 = vld [vmem:[#allocation3 + $0x98] sm:$0xff]
        %v4942 = vld [vmem:[#allocation3 + $0xa0] sm:$0xff]
        %v4943 = vld [vmem:[#allocation3 + $0xa8] sm:$0xff]
        %v4944 = vld [vmem:[#allocation3 + $0xb0] sm:$0xff]
        %v4945 = vld [vmem:[#allocation3 + $0xb8] sm:$0xff]
        %v4946 = vld [vmem:[#allocation3 + $0xc0] sm:$0xff]
        %v4947 = vld [vmem:[#allocation3 + $0xc8] sm:$0xff]
        %v4948 = vld [vmem:[#allocation3 + $0xd0] sm:$0xf]
        %v4949 = vld [vmem:[#allocation3 + $0xd8] sm:$0xf]
        %s4950 = scalar_lea.vmem %s4, 384
        %v4951 = vld [vmem:[%s4950] sm:$0xff]
        %v4952 = vld [vmem:[%s4950 + $0x8] sm:$0xff]
        %v4953 = vld [vmem:[%s4950 + $0x10] sm:$0xff]
        %v4954 = vld [vmem:[%s4950 + $0x18] sm:$0xff]
        %v4955 = vld [vmem:[%s4950 + $0x20] sm:$0xff]
        %v4956 = vld [vmem:[%s4950 + $0x28] sm:$0xff]
        %v4957 = vld [vmem:[%s4950 + $0x30] sm:$0xff]
        %v4958 = vld [vmem:[%s4950 + $0x38] sm:$0xff]
        %v4959 = vld [vmem:[%s4950 + $0x40] sm:$0xff]
        %v4960 = vld [vmem:[%s4950 + $0x48] sm:$0xff]
        %v4961 = vld [vmem:[%s4950 + $0x50] sm:$0xff]
        %v4962 = vld [vmem:[%s4950 + $0x58] sm:$0xff]
        %v4963 = vld [vmem:[%s4950 + $0x60] sm:$0xff]
        %v4964 = vld [vmem:[%s4950 + $0x68] sm:$0xff]
        %v4965 = vld [vmem:[%s4950 + $0x70] sm:$0xff]
        %v4966 = vld [vmem:[%s4950 + $0x78] sm:$0xff]
        %v4967 = vrot.slane %v4311, 1
        %v4968 = vrot.slane %v4313, 2
        %v4969 = vor.u32 %v4967, %v4968
        %v4970 = vrot.slane %v4322, 1
        %v4971 = vrot.slane %v4318, 2
        %v4972 = vor.u32 %v4970, %v4971
        %v4973 = vsel %vm2418, %v4969, %v4972
        %v4974 = vrot.slane %v4330, 1
        %v4975 = vrot.slane %v4326, 2
        %v4976 = vor.u32 %v4974, %v4975
        %v4977 = vsel %vm2418, %v4972, %v4976
        %v4978 = vrot.slane %v4338, 1
        %v4979 = vrot.slane %v4334, 2
        %v4980 = vor.u32 %v4978, %v4979
        %v4981 = vsel %vm2418, %v4976, %v4980
        %v4982 = vrot.slane %v4346, 1
        %v4983 = vrot.slane %v4342, 2
        %v4984 = vor.u32 %v4982, %v4983
        %v4985 = vsel %vm2418, %v4980, %v4984
        %v4986 = vrot.slane %v4354, 1
        %v4987 = vrot.slane %v4350, 2
        %v4988 = vor.u32 %v4986, %v4987
        %v4989 = vsel %vm2418, %v4984, %v4988
        %v4990 = vrot.slane %v4362, 1
        %v4991 = vrot.slane %v4358, 2
        %v4992 = vor.u32 %v4990, %v4991
        %v4993 = vsel %vm2418, %v4988, %v4992
        %v5017 = vunpack.c.l.b16 %v4951
        %v5018 = vunpack.c.h.b16 %v4951
        %v5019 = vunpack.c.l.b16 %v4952
        %v5020 = vunpack.c.h.b16 %v4952
        %v5021 = vunpack.c.l.b16 %v4953
        %v5022 = vunpack.c.h.b16 %v4953
        %v5023 = vunpack.c.l.b16 %v4954
        %v5024 = vunpack.c.h.b16 %v4954
        %v5025 = vunpack.c.l.b16 %v4955
        %v5026 = vunpack.c.h.b16 %v4955
        %v5027 = vunpack.c.l.b16 %v4956
        %v5028 = vunpack.c.h.b16 %v4956
        %v5029 = vunpack.c.l.b16 %v4957
        %v5030 = vunpack.c.h.b16 %v4957
        %v5031 = vunpack.c.l.b16 %v4958
        %v5032 = vunpack.c.h.b16 %v4958
        %v5033 = vunpack.c.l.b16 %v4959
        %v5034 = vunpack.c.h.b16 %v4959
        %v5035 = vunpack.c.l.b16 %v4960
        %v5036 = vunpack.c.h.b16 %v4960
        %v5037 = vunpack.c.l.b16 %v4961
        %v5038 = vunpack.c.h.b16 %v4961
        %v5039 = vunpack.c.l.b16 %v4962
        %v5040 = vunpack.c.h.b16 %v4962
        %v5041 = vunpack.c.l.b16 %v4963
        %v5042 = vunpack.c.h.b16 %v4963
        %v5043 = vunpack.c.l.b16 %v4964
        %v5044 = vunpack.c.h.b16 %v4964
        %v5045 = vunpack.c.l.b16 %v4965
        %v5046 = vunpack.c.h.b16 %v4965
        %v5047 = vunpack.c.l.b16 %v4966
        %v5048 = vunpack.c.h.b16 %v4966
        %v5049 = vpack.c.b16 %v5019, %v5017
        %v5050 = vpack.c.b16 %v5020, %v5018
        %v5051 = vpack.c.b16 %v5023, %v5021
        %v5052 = vpack.c.b16 %v5024, %v5022
        %v5053 = vpack.c.b16 %v5027, %v5025
        %v5054 = vpack.c.b16 %v5028, %v5026
        %v5055 = vpack.c.b16 %v5031, %v5029
        %v5056 = vpack.c.b16 %v5032, %v5030
        %v5057 = vpack.c.b16 %v5035, %v5033
        %v5058 = vpack.c.b16 %v5036, %v5034
        %v5059 = vpack.c.b16 %v5039, %v5037
        %v5060 = vpack.c.b16 %v5040, %v5038
        %v5061 = vpack.c.b16 %v5043, %v5041
        %v5062 = vpack.c.b16 %v5044, %v5042
        %v5063 = vpack.c.b16 %v5047, %v5045
        %v5064 = vpack.c.b16 %v5048, %v5046
        %5081 = vmatprep.subr.bf16.mxu0 %v5050
        %5082 = vmatpush1.bf16.msra.mxu0 %v5049
        %5083 = vmatprep.subr.bf16.mxu0 %v5052
        %5084 = vmatpush1.bf16.msra.mxu0 %v5051
        %5085 = vmatprep.subr.bf16.mxu0 %v5054
        %5086 = vmatpush1.bf16.msra.mxu0 %v5053
        %5087 = vmatprep.subr.bf16.mxu0 %v5056
        %5088 = vmatpush1.bf16.msra.mxu0 %v5055
        %5089 = vmatprep.subr.bf16.mxu0 %v5058
        %5090 = vmatpush1.bf16.msra.mxu0 %v5057
        %5091 = vmatprep.subr.bf16.mxu0 %v5060
        %5092 = vmatpush1.bf16.msra.mxu0 %v5059
        %5093 = vmatprep.subr.bf16.mxu0 %v5062
        %5094 = vmatpush1.bf16.msra.mxu0 %v5061
        %5095 = vmatprep.subr.bf16.mxu0 %v5064
        %5096 = vmatpush1.bf16.msra.mxu0 %v5063
        %5097 = vmatprep.subr.bf16.mxu0 0
        %5098 = vmatpush1.bf16.msra.mxu0 0
        %5099 = vmatprep.subr.bf16.mxu0 0
        %5100 = vmatpush1.bf16.msra.mxu0 0
        %5101 = vmatprep.subr.bf16.mxu0 0
        %5102 = vmatpush1.bf16.msra.mxu0 0
        %5103 = vmatprep.subr.bf16.mxu0 0
        %5104 = vmatpush1.bf16.msra.mxu0 0
        %5105 = vmatprep.subr.bf16.mxu0 0
        %5106 = vmatpush1.bf16.msra.mxu0 0
        %5107 = vmatprep.subr.bf16.mxu0 0
        %5108 = vmatpush1.bf16.msra.mxu0 0
        %5109 = vmatprep.subr.bf16.mxu0 0
        %5110 = vmatpush1.bf16.msra.mxu0 0
        %5111 = vmatprep.subr.bf16.mxu0 0
        %5112 = vmatpush1.bf16.msra.mxu0 0
        %5113 = vmatprep.mubr.bf16.mxu0 0
        %5114 = vmatmul.mubr.bf16.gmra.mrb[0].mxu0 %v4973
        %v5115 = vpop.f32.mrb[0].mxu0
        %v5116 = vadd.f32 0.0, %v5115
        %v5117 = vpop.f32.mrb[0].mxu0
        %v5118 = vadd.f32 0.0, %v5117
        %v5119 = vpop.f32.mrb[0].mxu0
        %v5120 = vadd.f32 0.0, %v5119
        %v5121 = vpop.f32.mrb[0].mxu0
        %v5122 = vadd.f32 0.0, %v5121
        %5123 = vmatprep.mubr.bf16.mxu0 0
        %5124 = vmatmul.mubr.bf16.gmra.mrb[0].mxu0 %v4977
        %v5125 = vpop.f32.mrb[0].mxu0
        %v5126 = vadd.f32 0.0, %v5125
        %v5127 = vpop.f32.mrb[0].mxu0
        %v5128 = vadd.f32 0.0, %v5127
        %v5129 = vpop.f32.mrb[0].mxu0
        %v5130 = vadd.f32 0.0, %v5129
        %v5131 = vpop.f32.mrb[0].mxu0
        %v5132 = vadd.f32 0.0, %v5131
        %5133 = vmatprep.mubr.bf16.mxu0 0
        %5134 = vmatmul.mubr.bf16.gmra.mrb[0].mxu0 %v4981
        %v5135 = vpop.f32.mrb[0].mxu0
        %v5136 = vadd.f32 0.0, %v5135
        %v5137 = vpop.f32.mrb[0].mxu0
        %v5138 = vadd.f32 0.0, %v5137
        %v5139 = vpop.f32.mrb[0].mxu0
        %v5140 = vadd.f32 0.0, %v5139
        %v5141 = vpop.f32.mrb[0].mxu0
        %v5142 = vadd.f32 0.0, %v5141
        %5143 = vmatprep.mubr.bf16.mxu0 0
        %5144 = vmatmul.mubr.bf16.gmra.mrb[0].mxu0 %v4985
        %v5145 = vpop.f32.mrb[0].mxu0
        %v5146 = vadd.f32 0.0, %v5145
        %v5147 = vpop.f32.mrb[0].mxu0
        %v5148 = vadd.f32 0.0, %v5147
        %v5149 = vpop.f32.mrb[0].mxu0
        %v5150 = vadd.f32 0.0, %v5149
        %v5151 = vpop.f32.mrb[0].mxu0
        %v5152 = vadd.f32 0.0, %v5151
        %5153 = vmatprep.mubr.bf16.mxu0 0
        %5154 = vmatmul.mubr.bf16.gmra.mrb[0].mxu0 %v4989
        %v5155 = vpop.f32.mrb[0].mxu0
        %v5156 = vadd.f32 0.0, %v5155
        %v5157 = vpop.f32.mrb[0].mxu0
        %v5158 = vadd.f32 0.0, %v5157
        %v5159 = vpop.f32.mrb[0].mxu0
        %v5160 = vadd.f32 0.0, %v5159
        %v5161 = vpop.f32.mrb[0].mxu0
        %v5162 = vadd.f32 0.0, %v5161
        %5163 = vmatprep.mubr.bf16.mxu0 0
        %5164 = vmatmul.mubr.bf16.gmra.mrb[0].mxu0 %v4993
        %v5165 = vpop.f32.mrb[0].mxu0
        %v5166 = vadd.f32 0.0, %v5165
        %v5167 = vpop.f32.mrb[0].mxu0
        %v5168 = vadd.f32 0.0, %v5167
        %v5169 = vpop.f32.mrb[0].mxu0
        %v5170 = vadd.f32 0.0, %v5169
        %v5171 = vpop.f32.mrb[0].mxu0
        %v5172 = vadd.f32 0.0, %v5171
        %5173 = vmatprep.mubr.bf16.mxu0 0
        %5174 = vmatmul.mubr.bf16.gmra.mrb[0].mxu0 %v4992
        %v5175 = vpop.f32.mrb[0].mxu0
        %v5176 = vadd.f32 0.0, %v5175
        %v5177 = vpop.f32.mrb[0].mxu0
        %v5178 = vadd.f32 0.0, %v5177
        %v5179 = vpop.f32.mrb[0].mxu0
        %v5180 = vadd.f32 0.0, %v5179
        %v5181 = vpop.f32.mrb[0].mxu0
        %v5182 = vadd.f32 0.0, %v5181
        %5183 = vdwg.mxu0
        %v5184 = vadd.f32 %v4922, %v5116
        %v5185 = vadd.f32 %v4923, %v5118
        %v5186 = vadd.f32 %v4924, %v5120
        %v5187 = vadd.f32 %v4925, %v5122
        %v5188 = vadd.f32 %v4926, %v5126
        %v5189 = vadd.f32 %v4927, %v5128
        %v5190 = vadd.f32 %v4928, %v5130
        %v5191 = vadd.f32 %v4929, %v5132
        %v5192 = vadd.f32 %v4930, %v5136
        %v5193 = vadd.f32 %v4931, %v5138
        %v5194 = vadd.f32 %v4932, %v5140
        %v5195 = vadd.f32 %v4933, %v5142
        %v5196 = vadd.f32 %v4934, %v5146
        %v5197 = vadd.f32 %v4935, %v5148
        %v5198 = vadd.f32 %v4936, %v5150
        %v5199 = vadd.f32 %v4937, %v5152
        %v5200 = vadd.f32 %v4938, %v5156
        %v5201 = vadd.f32 %v4939, %v5158
        %v5202 = vadd.f32 %v4940, %v5160
        %v5203 = vadd.f32 %v4941, %v5162
        %v5204 = vadd.f32 %v4942, %v5166
        %v5205 = vadd.f32 %v4943, %v5168
        %v5206 = vadd.f32 %v4944, %v5170
        %v5207 = vadd.f32 %v4945, %v5172
        %v5208 = vadd.f32 %v4946, %v5176
        %v5209 = vadd.f32 %v4947, %v5178
        %v5210 = vadd.f32 %v4948, %v5180
        %v5211 = vadd.f32 %v4949, %v5182
        %5212 = vst [vmem:[#allocation3] sm:$0xff] %v5184
        %5213 = vst [vmem:[#allocation3 + $0x8] sm:$0xff] %v5185
        %5214 = vst [vmem:[#allocation3 + $0x10] sm:$0xff] %v5186
        %5215 = vst [vmem:[#allocation3 + $0x18] sm:$0xff] %v5187
        %5216 = vst [vmem:[#allocation3 + $0x20] sm:$0xff] %v5188
        %5217 = vst [vmem:[#allocation3 + $0x28] sm:$0xff] %v5189
        %5218 = vst [vmem:[#allocation3 + $0x30] sm:$0xff] %v5190
        %5219 = vst [vmem:[#allocation3 + $0x38] sm:$0xff] %v5191
        %5220 = vst [vmem:[#allocation3 + $0x40] sm:$0xff] %v5192
        %5221 = vst [vmem:[#allocation3 + $0x48] sm:$0xff] %v5193
        %5222 = vst [vmem:[#allocation3 + $0x50] sm:$0xff] %v5194
        %5223 = vst [vmem:[#allocation3 + $0x58] sm:$0xff] %v5195
        %5224 = vst [vmem:[#allocation3 + $0x60] sm:$0xff] %v5196
        %5225 = vst [vmem:[#allocation3 + $0x68] sm:$0xff] %v5197
        %5226 = vst [vmem:[#allocation3 + $0x70] sm:$0xff] %v5198
        %5227 = vst [vmem:[#allocation3 + $0x78] sm:$0xff] %v5199
        %5228 = vst [vmem:[#allocation3 + $0x80] sm:$0xff] %v5200
        %5229 = vst [vmem:[#allocation3 + $0x88] sm:$0xff] %v5201
        %5230 = vst [vmem:[#allocation3 + $0x90] sm:$0xff] %v5202
        %5231 = vst [vmem:[#allocation3 + $0x98] sm:$0xff] %v5203
        %5232 = vst [vmem:[#allocation3 + $0xa0] sm:$0xff] %v5204
        %5233 = vst [vmem:[#allocation3 + $0xa8] sm:$0xff] %v5205
        %5234 = vst [vmem:[#allocation3 + $0xb0] sm:$0xff] %v5206
        %5235 = vst [vmem:[#allocation3 + $0xb8] sm:$0xff] %v5207
        %5236 = vst [vmem:[#allocation3 + $0xc0] sm:$0xff] %v5208
        %5237 = vst [vmem:[#allocation3 + $0xc8] sm:$0xff] %v5209
        %5238 = vst [vmem:[#allocation3 + $0xd0] sm:$0xf] %v5210
        %5239 = vst [vmem:[#allocation3 + $0xd8] sm:$0xf] %v5211
        %v5240 = vld [vmem:[#allocation3] sm:$0xff]
        %v5241 = vld [vmem:[#allocation3 + $0x8] sm:$0xff]
        %v5242 = vld [vmem:[#allocation3 + $0x10] sm:$0xff]
        %v5243 = vld [vmem:[#allocation3 + $0x18] sm:$0xff]
        %v5244 = vld [vmem:[#allocation3 + $0x20] sm:$0xff]
        %v5245 = vld [vmem:[#allocation3 + $0x28] sm:$0xff]
        %v5246 = vld [vmem:[#allocation3 + $0x30] sm:$0xff]
        %v5247 = vld [vmem:[#allocation3 + $0x38] sm:$0xff]
        %v5248 = vld [vmem:[#allocation3 + $0x40] sm:$0xff]
        %v5249 = vld [vmem:[#allocation3 + $0x48] sm:$0xff]
        %v5250 = vld [vmem:[#allocation3 + $0x50] sm:$0xff]
        %v5251 = vld [vmem:[#allocation3 + $0x58] sm:$0xff]
        %v5252 = vld [vmem:[#allocation3 + $0x60] sm:$0xff]
        %v5253 = vld [vmem:[#allocation3 + $0x68] sm:$0xff]
        %v5254 = vld [vmem:[#allocation3 + $0x70] sm:$0xff]
        %v5255 = vld [vmem:[#allocation3 + $0x78] sm:$0xff]
        %v5256 = vld [vmem:[#allocation3 + $0x80] sm:$0xff]
        %v5257 = vld [vmem:[#allocation3 + $0x88] sm:$0xff]
        %v5258 = vld [vmem:[#allocation3 + $0x90] sm:$0xff]
        %v5259 = vld [vmem:[#allocation3 + $0x98] sm:$0xff]
        %v5260 = vld [vmem:[#allocation3 + $0xa0] sm:$0xff]
        %v5261 = vld [vmem:[#allocation3 + $0xa8] sm:$0xff]
        %v5262 = vld [vmem:[#allocation3 + $0xb0] sm:$0xff]
        %v5263 = vld [vmem:[#allocation3 + $0xb8] sm:$0xff]
        %v5264 = vld [vmem:[#allocation3 + $0xc0] sm:$0xff]
        %v5265 = vld [vmem:[#allocation3 + $0xc8] sm:$0xff]
        %v5266 = vld [vmem:[#allocation3 + $0xd0] sm:$0xf]
        %v5267 = vld [vmem:[#allocation3 + $0xd8] sm:$0xf]
        %s5268 = scalar_lea.vmem %s4, 512
        %v5269 = vld [vmem:[%s5268] sm:$0xff]
        %v5270 = vld [vmem:[%s5268 + $0x8] sm:$0xff]
        %v5271 = vld [vmem:[%s5268 + $0x10] sm:$0xff]
        %v5272 = vld [vmem:[%s5268 + $0x18] sm:$0xff]
        %v5273 = vld [vmem:[%s5268 + $0x20] sm:$0xff]
        %v5274 = vld [vmem:[%s5268 + $0x28] sm:$0xff]
        %v5275 = vld [vmem:[%s5268 + $0x30] sm:$0xff]
        %v5276 = vld [vmem:[%s5268 + $0x38] sm:$0xff]
        %v5277 = vld [vmem:[%s5268 + $0x40] sm:$0xff]
        %v5278 = vld [vmem:[%s5268 + $0x48] sm:$0xff]
        %v5279 = vld [vmem:[%s5268 + $0x50] sm:$0xff]
        %v5280 = vld [vmem:[%s5268 + $0x58] sm:$0xff]
        %v5281 = vld [vmem:[%s5268 + $0x60] sm:$0xff]
        %v5282 = vld [vmem:[%s5268 + $0x68] sm:$0xff]
        %v5283 = vld [vmem:[%s5268 + $0x70] sm:$0xff]
        %v5284 = vld [vmem:[%s5268 + $0x78] sm:$0xff]
        %v5285 = vrot.slane %v3935, 2
        %v5286 = vrot.slane %v3936, 2
        %v5287 = vsel %vm2980, %v5285, %v5286
        %v5288 = vrot.slane %v3937, 2
        %v5289 = vsel %vm2980, %v5286, %v5288
        %v5290 = vrot.slane %v3938, 2
        %v5291 = vsel %vm2980, %v5288, %v5290
        %v5292 = vrot.slane %v3939, 2
        %v5293 = vsel %vm2980, %v5290, %v5292
        %v5294 = vrot.slane %v3940, 2
        %v5295 = vsel %vm2980, %v5292, %v5294
        %v5296 = vrot.slane %v3941, 2
        %v5297 = vsel %vm2980, %v5294, %v5296
        %v5321 = vunpack.c.l.b16 %v5269
        %v5322 = vunpack.c.h.b16 %v5269
        %v5323 = vunpack.c.l.b16 %v5270
        %v5324 = vunpack.c.h.b16 %v5270
        %v5325 = vunpack.c.l.b16 %v5271
        %v5326 = vunpack.c.h.b16 %v5271
        %v5327 = vunpack.c.l.b16 %v5272
        %v5328 = vunpack.c.h.b16 %v5272
        %v5329 = vunpack.c.l.b16 %v5273
        %v5330 = vunpack.c.h.b16 %v5273
        %v5331 = vunpack.c.l.b16 %v5274
        %v5332 = vunpack.c.h.b16 %v5274
        %v5333 = vunpack.c.l.b16 %v5275
        %v5334 = vunpack.c.h.b16 %v5275
        %v5335 = vunpack.c.l.b16 %v5276
        %v5336 = vunpack.c.h.b16 %v5276
        %v5337 = vunpack.c.l.b16 %v5277
        %v5338 = vunpack.c.h.b16 %v5277
        %v5339 = vunpack.c.l.b16 %v5278
        %v5340 = vunpack.c.h.b16 %v5278
        %v5341 = vunpack.c.l.b16 %v5279
        %v5342 = vunpack.c.h.b16 %v5279
        %v5343 = vunpack.c.l.b16 %v5280
        %v5344 = vunpack.c.h.b16 %v5280
        %v5345 = vunpack.c.l.b16 %v5281
        %v5346 = vunpack.c.h.b16 %v5281
        %v5347 = vunpack.c.l.b16 %v5282
        %v5348 = vunpack.c.h.b16 %v5282
        %v5349 = vunpack.c.l.b16 %v5283
        %v5350 = vunpack.c.h.b16 %v5283
        %v5351 = vunpack.c.l.b16 %v5284
        %v5352 = vunpack.c.h.b16 %v5284
        %v5353 = vpack.c.b16 %v5323, %v5321
        %v5354 = vpack.c.b16 %v5324, %v5322
        %v5355 = vpack.c.b16 %v5327, %v5325
        %v5356 = vpack.c.b16 %v5328, %v5326
        %v5357 = vpack.c.b16 %v5331, %v5329
        %v5358 = vpack.c.b16 %v5332, %v5330
        %v5359 = vpack.c.b16 %v5335, %v5333
        %v5360 = vpack.c.b16 %v5336, %v5334
        %v5361 = vpack.c.b16 %v5339, %v5337
        %v5362 = vpack.c.b16 %v5340, %v5338
        %v5363 = vpack.c.b16 %v5343, %v5341
        %v5364 = vpack.c.b16 %v5344, %v5342
        %v5365 = vpack.c.b16 %v5347, %v5345
        %v5366 = vpack.c.b16 %v5348, %v5346
        %v5367 = vpack.c.b16 %v5351, %v5349
        %v5368 = vpack.c.b16 %v5352, %v5350
        %5385 = vmatprep.subr.bf16.mxu0 %v5354
        %5386 = vmatpush1.bf16.msra.mxu0 %v5353
        %5387 = vmatprep.subr.bf16.mxu0 %v5356
        %5388 = vmatpush1.bf16.msra.mxu0 %v5355
        %5389 = vmatprep.subr.bf16.mxu0 %v5358
        %5390 = vmatpush1.bf16.msra.mxu0 %v5357
        %5391 = vmatprep.subr.bf16.mxu0 %v5360
        %5392 = vmatpush1.bf16.msra.mxu0 %v5359
        %5393 = vmatprep.subr.bf16.mxu0 %v5362
        %5394 = vmatpush1.bf16.msra.mxu0 %v5361
        %5395 = vmatprep.subr.bf16.mxu0 %v5364
        %5396 = vmatpush1.bf16.msra.mxu0 %v5363
        %5397 = vmatprep.subr.bf16.mxu0 %v5366
        %5398 = vmatpush1.bf16.msra.mxu0 %v5365
        %5399 = vmatprep.subr.bf16.mxu0 %v5368
        %5400 = vmatpush1.bf16.msra.mxu0 %v5367
        %5401 = vmatprep.subr.bf16.mxu0 0
        %5402 = vmatpush1.bf16.msra.mxu0 0
        %5403 = vmatprep.subr.bf16.mxu0 0
        %5404 = vmatpush1.bf16.msra.mxu0 0
        %5405 = vmatprep.subr.bf16.mxu0 0
        %5406 = vmatpush1.bf16.msra.mxu0 0
        %5407 = vmatprep.subr.bf16.mxu0 0
        %5408 = vmatpush1.bf16.msra.mxu0 0
        %5409 = vmatprep.subr.bf16.mxu0 0
        %5410 = vmatpush1.bf16.msra.mxu0 0
        %5411 = vmatprep.subr.bf16.mxu0 0
        %5412 = vmatpush1.bf16.msra.mxu0 0
        %5413 = vmatprep.subr.bf16.mxu0 0
        %5414 = vmatpush1.bf16.msra.mxu0 0
        %5415 = vmatprep.subr.bf16.mxu0 0
        %5416 = vmatpush1.bf16.msra.mxu0 0
        %5417 = vmatprep.mubr.bf16.mxu0 0
        %5418 = vmatmul.mubr.bf16.gmra.mrb[0].mxu0 %v5287
        %v5419 = vpop.f32.mrb[0].mxu0
        %v5420 = vadd.f32 0.0, %v5419
        %v5421 = vpop.f32.mrb[0].mxu0
        %v5422 = vadd.f32 0.0, %v5421
        %v5423 = vpop.f32.mrb[0].mxu0
        %v5424 = vadd.f32 0.0, %v5423
        %v5425 = vpop.f32.mrb[0].mxu0
        %v5426 = vadd.f32 0.0, %v5425
        %5427 = vmatprep.mubr.bf16.mxu0 0
        %5428 = vmatmul.mubr.bf16.gmra.mrb[0].mxu0 %v5289
        %v5429 = vpop.f32.mrb[0].mxu0
        %v5430 = vadd.f32 0.0, %v5429
        %v5431 = vpop.f32.mrb[0].mxu0
        %v5432 = vadd.f32 0.0, %v5431
        %v5433 = vpop.f32.mrb[0].mxu0
        %v5434 = vadd.f32 0.0, %v5433
        %v5435 = vpop.f32.mrb[0].mxu0
        %v5436 = vadd.f32 0.0, %v5435
        %5437 = vmatprep.mubr.bf16.mxu0 0
        %5438 = vmatmul.mubr.bf16.gmra.mrb[0].mxu0 %v5291
        %v5439 = vpop.f32.mrb[0].mxu0
        %v5440 = vadd.f32 0.0, %v5439
        %v5441 = vpop.f32.mrb[0].mxu0
        %v5442 = vadd.f32 0.0, %v5441
        %v5443 = vpop.f32.mrb[0].mxu0
        %v5444 = vadd.f32 0.0, %v5443
        %v5445 = vpop.f32.mrb[0].mxu0
        %v5446 = vadd.f32 0.0, %v5445
        %5447 = vmatprep.mubr.bf16.mxu0 0
        %5448 = vmatmul.mubr.bf16.gmra.mrb[0].mxu0 %v5293
        %v5449 = vpop.f32.mrb[0].mxu0
        %v5450 = vadd.f32 0.0, %v5449
        %v5451 = vpop.f32.mrb[0].mxu0
        %v5452 = vadd.f32 0.0, %v5451
        %v5453 = vpop.f32.mrb[0].mxu0
        %v5454 = vadd.f32 0.0, %v5453
        %v5455 = vpop.f32.mrb[0].mxu0
        %v5456 = vadd.f32 0.0, %v5455
        %5457 = vmatprep.mubr.bf16.mxu0 0
        %5458 = vmatmul.mubr.bf16.gmra.mrb[0].mxu0 %v5295
        %v5459 = vpop.f32.mrb[0].mxu0
        %v5460 = vadd.f32 0.0, %v5459
        %v5461 = vpop.f32.mrb[0].mxu0
        %v5462 = vadd.f32 0.0, %v5461
        %v5463 = vpop.f32.mrb[0].mxu0
        %v5464 = vadd.f32 0.0, %v5463
        %v5465 = vpop.f32.mrb[0].mxu0
        %v5466 = vadd.f32 0.0, %v5465
        %5467 = vmatprep.mubr.bf16.mxu0 0
        %5468 = vmatmul.mubr.bf16.gmra.mrb[0].mxu0 %v5297
        %v5469 = vpop.f32.mrb[0].mxu0
        %v5470 = vadd.f32 0.0, %v5469
        %v5471 = vpop.f32.mrb[0].mxu0
        %v5472 = vadd.f32 0.0, %v5471
        %v5473 = vpop.f32.mrb[0].mxu0
        %v5474 = vadd.f32 0.0, %v5473
        %v5475 = vpop.f32.mrb[0].mxu0
        %v5476 = vadd.f32 0.0, %v5475
        %5477 = vmatprep.mubr.bf16.mxu0 0
        %5478 = vmatmul.mubr.bf16.gmra.mrb[0].mxu0 %v5296
        %v5479 = vpop.f32.mrb[0].mxu0
        %v5480 = vadd.f32 0.0, %v5479
        %v5481 = vpop.f32.mrb[0].mxu0
        %v5482 = vadd.f32 0.0, %v5481
        %v5483 = vpop.f32.mrb[0].mxu0
        %v5484 = vadd.f32 0.0, %v5483
        %v5485 = vpop.f32.mrb[0].mxu0
        %v5486 = vadd.f32 0.0, %v5485
        %5487 = vdwg.mxu0
        %v5488 = vadd.f32 %v5240, %v5420
        %v5489 = vadd.f32 %v5241, %v5422
        %v5490 = vadd.f32 %v5242, %v5424
        %v5491 = vadd.f32 %v5243, %v5426
        %v5492 = vadd.f32 %v5244, %v5430
        %v5493 = vadd.f32 %v5245, %v5432
        %v5494 = vadd.f32 %v5246, %v5434
        %v5495 = vadd.f32 %v5247, %v5436
        %v5496 = vadd.f32 %v5248, %v5440
        %v5497 = vadd.f32 %v5249, %v5442
        %v5498 = vadd.f32 %v5250, %v5444
        %v5499 = vadd.f32 %v5251, %v5446
        %v5500 = vadd.f32 %v5252, %v5450
        %v5501 = vadd.f32 %v5253, %v5452
        %v5502 = vadd.f32 %v5254, %v5454
        %v5503 = vadd.f32 %v5255, %v5456
        %v5504 = vadd.f32 %v5256, %v5460
        %v5505 = vadd.f32 %v5257, %v5462
        %v5506 = vadd.f32 %v5258, %v5464
        %v5507 = vadd.f32 %v5259, %v5466
        %v5508 = vadd.f32 %v5260, %v5470
        %v5509 = vadd.f32 %v5261, %v5472
        %v5510 = vadd.f32 %v5262, %v5474
        %v5511 = vadd.f32 %v5263, %v5476
        %v5512 = vadd.f32 %v5264, %v5480
        %v5513 = vadd.f32 %v5265, %v5482
        %v5514 = vadd.f32 %v5266, %v5484
        %v5515 = vadd.f32 %v5267, %v5486
        %5516 = vst [vmem:[#allocation3] sm:$0xff] %v5488
        %5517 = vst [vmem:[#allocation3 + $0x8] sm:$0xff] %v5489
        %5518 = vst [vmem:[#allocation3 + $0x10] sm:$0xff] %v5490
        %5519 = vst [vmem:[#allocation3 + $0x18] sm:$0xff] %v5491
        %5520 = vst [vmem:[#allocation3 + $0x20] sm:$0xff] %v5492
        %5521 = vst [vmem:[#allocation3 + $0x28] sm:$0xff] %v5493
        %5522 = vst [vmem:[#allocation3 + $0x30] sm:$0xff] %v5494
        %5523 = vst [vmem:[#allocation3 + $0x38] sm:$0xff] %v5495
        %5524 = vst [vmem:[#allocation3 + $0x40] sm:$0xff] %v5496
        %5525 = vst [vmem:[#allocation3 + $0x48] sm:$0xff] %v5497
        %5526 = vst [vmem:[#allocation3 + $0x50] sm:$0xff] %v5498
        %5527 = vst [vmem:[#allocation3 + $0x58] sm:$0xff] %v5499
        %5528 = vst [vmem:[#allocation3 + $0x60] sm:$0xff] %v5500
        %5529 = vst [vmem:[#allocation3 + $0x68] sm:$0xff] %v5501
        %5530 = vst [vmem:[#allocation3 + $0x70] sm:$0xff] %v5502
        %5531 = vst [vmem:[#allocation3 + $0x78] sm:$0xff] %v5503
        %5532 = vst [vmem:[#allocation3 + $0x80] sm:$0xff] %v5504
        %5533 = vst [vmem:[#allocation3 + $0x88] sm:$0xff] %v5505
        %5534 = vst [vmem:[#allocation3 + $0x90] sm:$0xff] %v5506
        %5535 = vst [vmem:[#allocation3 + $0x98] sm:$0xff] %v5507
        %5536 = vst [vmem:[#allocation3 + $0xa0] sm:$0xff] %v5508
        %5537 = vst [vmem:[#allocation3 + $0xa8] sm:$0xff] %v5509
        %5538 = vst [vmem:[#allocation3 + $0xb0] sm:$0xff] %v5510
        %5539 = vst [vmem:[#allocation3 + $0xb8] sm:$0xff] %v5511
        %5540 = vst [vmem:[#allocation3 + $0xc0] sm:$0xff] %v5512
        %5541 = vst [vmem:[#allocation3 + $0xc8] sm:$0xff] %v5513
        %5542 = vst [vmem:[#allocation3 + $0xd0] sm:$0xf] %v5514
        %5543 = vst [vmem:[#allocation3 + $0xd8] sm:$0xf] %v5515
        %v5544 = vld [vmem:[#allocation3] sm:$0xff]
        %v5545 = vld [vmem:[#allocation3 + $0x10] sm:$0xff]
        %v5546 = vld [vmem:[#allocation3 + $0x20] sm:$0xff]
        %v5547 = vld [vmem:[#allocation3 + $0x30] sm:$0xff]
        %v5548 = vld [vmem:[#allocation3 + $0x40] sm:$0xff]
        %v5549 = vld [vmem:[#allocation3 + $0x50] sm:$0xff]
        %v5550 = vld [vmem:[#allocation3 + $0x60] sm:$0xff]
        %v5551 = vld [vmem:[#allocation3 + $0x70] sm:$0xff]
        %v5552 = vld [vmem:[#allocation3 + $0x80] sm:$0xff]
        %v5553 = vld [vmem:[#allocation3 + $0x90] sm:$0xff]
        %v5554 = vld [vmem:[#allocation3 + $0xa0] sm:$0xff]
        %v5555 = vld [vmem:[#allocation3 + $0xb0] sm:$0xff]
        %v5556 = vld [vmem:[#allocation3 + $0xc0] sm:$0xff]
        %v5557 = vld [vmem:[#allocation3 + $0xd0] sm:$0xf]
        %v5558 = vld [vmem:[#allocation3 + $0x8] sm:$0xff]
        %v5559 = vld [vmem:[#allocation3 + $0x18] sm:$0xff]
        %v5560 = vld [vmem:[#allocation3 + $0x28] sm:$0xff]
        %v5561 = vld [vmem:[#allocation3 + $0x38] sm:$0xff]
        %v5562 = vld [vmem:[#allocation3 + $0x48] sm:$0xff]
        %v5563 = vld [vmem:[#allocation3 + $0x58] sm:$0xff]
        %v5564 = vld [vmem:[#allocation3 + $0x68] sm:$0xff]
        %v5565 = vld [vmem:[#allocation3 + $0x78] sm:$0xff]
        %v5566 = vld [vmem:[#allocation3 + $0x88] sm:$0xff]
        %v5567 = vld [vmem:[#allocation3 + $0x98] sm:$0xff]
        %v5568 = vld [vmem:[#allocation3 + $0xa8] sm:$0xff]
        %v5569 = vld [vmem:[#allocation3 + $0xb8] sm:$0xff]
        %v5570 = vld [vmem:[#allocation3 + $0xc8] sm:$0xff]
        %v5571 = vld [vmem:[#allocation3 + $0xd8] sm:$0xf]
        %v5572 = vmax.f32 %v5544, %v5558
        %v5573 = vmax.f32 %v5545, %v5559
        %v5574 = vmax.f32 %v5546, %v5560
        %v5575 = vmax.f32 %v5547, %v5561
        %v5576 = vmax.f32 %v5548, %v5562
        %v5577 = vmax.f32 %v5549, %v5563
        %v5578 = vmax.f32 %v5550, %v5564
        %v5579 = vmax.f32 %v5551, %v5565
        %v5580 = vmax.f32 %v5552, %v5566
        %v5581 = vmax.f32 %v5553, %v5567
        %v5582 = vmax.f32 %v5554, %v5568
        %v5583 = vmax.f32 %v5555, %v5569
        %v5584 = vmax.f32 %v5556, %v5570
        %v5585 = vmax.f32 %v5557, %v5571
        %v5586 = vpack.c.bf16 %v5573, %v5572
        %v5587 = vpack.c.bf16 %v5575, %v5574
        %v5588 = vpack.c.bf16 %v5577, %v5576
        %v5589 = vpack.c.bf16 %v5579, %v5578
        %v5590 = vpack.c.bf16 %v5581, %v5580
        %v5591 = vpack.c.bf16 %v5583, %v5582
        %v5592 = vpack.c.bf16 %v5585, %v5584
        %v5593 = vld [vmem:[%s6] sm:$0xf]
        %v5594 = vld [vmem:[%s6 + $0x4] sm:$0xf]
        %v5595 = vld [vmem:[%s6 + $0x8] sm:$0xf]
        %v5596 = vld [vmem:[%s6 + $0xc] sm:$0xf]
        %v5597 = vld [vmem:[%s6 + $0x10] sm:$0xf]
        %v5603 = vunpack.c.l.b16 %v5593
        %v5604 = vunpack.c.l.b16 %v5594
        %v5605 = vunpack.c.l.b16 %v5595
        %v5606 = vunpack.c.l.b16 %v5596
        %v5607 = vunpack.c.l.b16 %v5597
        %v5608 = vpack.c.b16 %v5604, %v5603
        %v5609 = vpack.c.b16 %v5606, %v5605
        %v5610 = vpack.c.b16 %v5607, %v5607
        %vm5611 = vcmask 883712
        %v5613 = vsel %vm5611, %v5608, 0
        %v5616 = vsel %vm5611, %v5609, 0
        %v5619 = vsel %vm5611, %v5610, 0
        %v5622 = vsel %vm3640, %v5592, 0
        %5624 = vmatprep.subr.bf16.mxu0 0
        %5625 = vmatpush1.bf16.msra.mxu0 %v5586
        %5626 = vmatprep.subr.bf16.mxu0 0
        %5627 = vmatpush1.bf16.msra.mxu0 %v5587
        %5628 = vmatprep.subr.bf16.mxu0 0
        %5629 = vmatpush1.bf16.msra.mxu0 %v5588
        %5630 = vmatprep.subr.bf16.mxu0 0
        %5631 = vmatpush1.bf16.msra.mxu0 %v5589
        %5632 = vmatprep.subr.bf16.mxu0 0
        %5633 = vmatpush1.bf16.msra.mxu0 %v5590
        %5634 = vmatprep.subr.bf16.mxu0 0
        %5635 = vmatpush1.bf16.msra.mxu0 %v5591
        %5636 = vmatprep.subr.bf16.mxu0 0
        %5637 = vmatpush1.bf16.msra.mxu0 %v5622
        %5638 = vmatprep.subr.bf16.mxu0 0
        %5639 = vmatpush1.bf16.msra.mxu0 0
        %5640 = vmatprep.subr.bf16.mxu0 0
        %5641 = vmatpush1.bf16.msra.mxu0 0
        %5642 = vmatprep.subr.bf16.mxu0 0
        %5643 = vmatpush1.bf16.msra.mxu0 0
        %5644 = vmatprep.subr.bf16.mxu0 0
        %5645 = vmatpush1.bf16.msra.mxu0 0
        %5646 = vmatprep.subr.bf16.mxu0 0
        %5647 = vmatpush1.bf16.msra.mxu0 0
        %5648 = vmatprep.subr.bf16.mxu0 0
        %5649 = vmatpush1.bf16.msra.mxu0 0
        %5650 = vmatprep.subr.bf16.mxu0 0
        %5651 = vmatpush1.bf16.msra.mxu0 0
        %5652 = vmatprep.subr.bf16.mxu0 0
        %5653 = vmatpush1.bf16.msra.mxu0 0
        %5654 = vmatprep.subr.bf16.mxu0 0
        %5655 = vmatpush1.bf16.msra.mxu0 0
        %5656 = vmatprep.mubr.bf16.mxu0 0
        %5657 = vmatmul.mubr.bf16.gmra.mrb[0].mxu0 %v5613
        %v5658 = vpop.f32.mrb[0].mxu0
        %v5659 = vadd.f32 0.0, %v5658
        %v5660 = vpop.f32.mrb[0].mxu0
        %v5661 = vpop.f32.mrb[0].mxu0
        %v5662 = vadd.f32 0.0, %v5661
        %v5663 = vpop.f32.mrb[0].mxu0
        %5664 = vmatprep.mubr.bf16.mxu0 0
        %5665 = vmatmul.mubr.bf16.gmra.mrb[0].mxu0 %v5616
        %v5666 = vpop.f32.mrb[0].mxu0
        %v5667 = vadd.f32 0.0, %v5666
        %v5668 = vpop.f32.mrb[0].mxu0
        %v5669 = vpop.f32.mrb[0].mxu0
        %v5670 = vadd.f32 0.0, %v5669
        %v5671 = vpop.f32.mrb[0].mxu0
        %5672 = vmatprep.mubr.bf16.mxu0 0
        %5673 = vmatmul.mubr.bf16.gmra.mrb[0].mxu0 %v5619
        %v5674 = vpop.f32.mrb[0].mxu0
        %v5675 = vadd.f32 0.0, %v5674
        %v5676 = vpop.f32.mrb[0].mxu0
        %v5677 = vpop.f32.mrb[0].mxu0
        %v5678 = vpop.f32.mrb[0].mxu0
        %5679 = vdwg.mxu0
        %s5680 = scalar_lea.vmem %s6, 20
        %v5681 = vld [vmem:[%s5680] sm:$0xf]
        %v5682 = vld [vmem:[%s5680 + $0x4] sm:$0xf]
        %v5683 = vld [vmem:[%s5680 + $0x8] sm:$0xf]
        %v5684 = vld [vmem:[%s5680 + $0xc] sm:$0xf]
        %v5685 = vld [vmem:[%s5680 + $0x10] sm:$0xf]
        %v5691 = vunpack.c.l.b16 %v5681
        %v5692 = vunpack.c.l.b16 %v5682
        %v5693 = vunpack.c.l.b16 %v5683
        %v5694 = vunpack.c.l.b16 %v5684
        %v5695 = vunpack.c.l.b16 %v5685
        %v5696 = vpack.c.b16 %v5692, %v5691
        %v5697 = vpack.c.b16 %v5694, %v5693
        %v5698 = vpack.c.b16 %v5695, %v5695
        %v5700 = vsel %vm5611, %v5696, 0
        %v5703 = vsel %vm5611, %v5697, 0
        %v5706 = vsel %vm5611, %v5698, 0
        %5708 = vmatprep.subr.bf16.mxu0 0
        %5709 = vmatpush1.bf16.msra.mxu0 %v5586
        %5710 = vmatprep.subr.bf16.mxu0 0
        %5711 = vmatpush1.bf16.msra.mxu0 %v5587
        %5712 = vmatprep.subr.bf16.mxu0 0
        %5713 = vmatpush1.bf16.msra.mxu0 %v5588
        %5714 = vmatprep.subr.bf16.mxu0 0
        %5715 = vmatpush1.bf16.msra.mxu0 %v5589
        %5716 = vmatprep.subr.bf16.mxu0 0
        %5717 = vmatpush1.bf16.msra.mxu0 %v5590
        %5718 = vmatprep.subr.bf16.mxu0 0
        %5719 = vmatpush1.bf16.msra.mxu0 %v5591
        %5720 = vmatprep.subr.bf16.mxu0 0
        %5721 = vmatpush1.bf16.msra.mxu0 %v5622
        %5722 = vmatprep.subr.bf16.mxu0 0
        %5723 = vmatpush1.bf16.msra.mxu0 0
        %5724 = vmatprep.subr.bf16.mxu0 0
        %5725 = vmatpush1.bf16.msra.mxu0 0
        %5726 = vmatprep.subr.bf16.mxu0 0
        %5727 = vmatpush1.bf16.msra.mxu0 0
        %5728 = vmatprep.subr.bf16.mxu0 0
        %5729 = vmatpush1.bf16.msra.mxu0 0
        %5730 = vmatprep.subr.bf16.mxu0 0
        %5731 = vmatpush1.bf16.msra.mxu0 0
        %5732 = vmatprep.subr.bf16.mxu0 0
        %5733 = vmatpush1.bf16.msra.mxu0 0
        %5734 = vmatprep.subr.bf16.mxu0 0
        %5735 = vmatpush1.bf16.msra.mxu0 0
        %5736 = vmatprep.subr.bf16.mxu0 0
        %5737 = vmatpush1.bf16.msra.mxu0 0
        %5738 = vmatprep.subr.bf16.mxu0 0
        %5739 = vmatpush1.bf16.msra.mxu0 0
        %5740 = vmatprep.mubr.bf16.mxu0 0
        %5741 = vmatmul.mubr.bf16.gmra.mrb[0].mxu0 %v5700
        %v5742 = vpop.f32.mrb[0].mxu0
        %v5743 = vadd.f32 0.0, %v5742
        %v5744 = vpop.f32.mrb[0].mxu0
        %v5745 = vpop.f32.mrb[0].mxu0
        %v5746 = vadd.f32 0.0, %v5745
        %v5747 = vpop.f32.mrb[0].mxu0
        %5748 = vmatprep.mubr.bf16.mxu0 0
        %5749 = vmatmul.mubr.bf16.gmra.mrb[0].mxu0 %v5703
        %v5750 = vpop.f32.mrb[0].mxu0
        %v5751 = vadd.f32 0.0, %v5750
        %v5752 = vpop.f32.mrb[0].mxu0
        %v5753 = vpop.f32.mrb[0].mxu0
        %v5754 = vadd.f32 0.0, %v5753
        %v5755 = vpop.f32.mrb[0].mxu0
        %5756 = vmatprep.mubr.bf16.mxu0 0
        %5757 = vmatmul.mubr.bf16.gmra.mrb[0].mxu0 %v5706
        %v5758 = vpop.f32.mrb[0].mxu0
        %v5759 = vadd.f32 0.0, %v5758
        %v5760 = vpop.f32.mrb[0].mxu0
        %v5761 = vpop.f32.mrb[0].mxu0
        %v5762 = vpop.f32.mrb[0].mxu0
        %5763 = vdwg.mxu0
        %v5764 = vmax.f32 %v5659, %v5743
        %v5765 = vmax.f32 %v5662, %v5746
        %v5766 = vmax.f32 %v5667, %v5751
        %v5767 = vmax.f32 %v5670, %v5754
        %v5768 = vmax.f32 %v5675, %v5759
        %v5769 = vpack.c.bf16 %v5765, %v5764
        %v5770 = vpack.c.bf16 %v5767, %v5766
        %v5771 = vpack.c.bf16 %v5768, %v5768
        %v5772 = vld [vmem:[%s8] sm:$0x7]
        %v5774 = vlaneseq
        %v5775 = vshrl.u32 %v5774, 7
        %v5776 = vsub.s32 0, %v5775
        %v5777 = vrot.slane %v5772, %v5776
        %v5778 = vlaneseq
        %v5779 = vshrl.u32 %v5778, 7
        %v5780 = vsub.s32 1, %v5779
        %v5781 = vrot.slane %v5772, %v5780
        %v5782 = vlaneseq
        %v5783 = vshrl.u32 %v5782, 7
        %v5784 = vsub.s32 2, %v5783
        %v5785 = vrot.slane %v5772, %v5784
        %v5789 = vld [vmem:[%s7] sm:$0xff]
        %v5790 = vld [vmem:[%s7 + $0x8] sm:$0xf]
        %v5791 = vld [vmem:[%s7 + $0xc] sm:$0xff]
        %v5792 = vld [vmem:[%s7 + $0x14] sm:$0xf]
        %v5793 = vld [vmem:[%s7 + $0x18] sm:$0xff]
        %v5794 = vld [vmem:[%s7 + $0x20] sm:$0xf]
        %v5795 = vld [vmem:[%s7 + $0x24] sm:$0xff]
        %v5796 = vld [vmem:[%s7 + $0x2c] sm:$0xf]
        %v5797 = vld [vmem:[%s7 + $0x30] sm:$0xff]
        %v5798 = vld [vmem:[%s7 + $0x38] sm:$0xf]
        %v5799 = vld [vmem:[%s7 + $0x3c] sm:$0xff]
        %v5800 = vld [vmem:[%s7 + $0x44] sm:$0xf]
        %v5801 = vld [vmem:[%s7 + $0x48] sm:$0xff]
        %v5802 = vld [vmem:[%s7 + $0x50] sm:$0xf]
        %v5803 = vld [vmem:[%s7 + $0x54] sm:$0xff]
        %v5804 = vld [vmem:[%s7 + $0x5c] sm:$0xf]
        %v5805 = vld [vmem:[%s7 + $0x60] sm:$0xff]
        %v5806 = vld [vmem:[%s7 + $0x68] sm:$0xf]
        %v5807 = vld [vmem:[%s7 + $0x6c] sm:$0xff]
        %v5808 = vld [vmem:[%s7 + $0x74] sm:$0xf]
        %v5809 = vld [vmem:[%s7 + $0x78] sm:$0xff]
        %v5810 = vld [vmem:[%s7 + $0x80] sm:$0xf]
        %v5811 = vld [vmem:[%s7 + $0x84] sm:$0xff]
        %v5812 = vld [vmem:[%s7 + $0x8c] sm:$0xf]
        %v5813 = vld [vmem:[%s7 + $0x90] sm:$0xff]
        %v5814 = vld [vmem:[%s7 + $0x98] sm:$0xf]
        %v5815 = vld [vmem:[%s7 + $0x9c] sm:$0xff]
        %v5816 = vld [vmem:[%s7 + $0xa4] sm:$0xf]
        %v5817 = vld [vmem:[%s7 + $0xa8] sm:$0xff]
        %v5818 = vld [vmem:[%s7 + $0xb0] sm:$0xf]
        %v5819 = vld [vmem:[%s7 + $0xb4] sm:$0xff]
        %v5820 = vld [vmem:[%s7 + $0xbc] sm:$0xf]
        %v5853 = vunpack.c.l.b16 %v5789
        %v5854 = vunpack.c.h.b16 %v5789
        %v5855 = vunpack.c.l.b16 %v5790
        %v5856 = vunpack.c.l.b16 %v5791
        %v5857 = vunpack.c.h.b16 %v5791
        %v5858 = vunpack.c.l.b16 %v5792
        %v5859 = vunpack.c.l.b16 %v5793
        %v5860 = vunpack.c.h.b16 %v5793
        %v5861 = vunpack.c.l.b16 %v5794
        %v5862 = vunpack.c.l.b16 %v5795
        %v5863 = vunpack.c.h.b16 %v5795
        %v5864 = vunpack.c.l.b16 %v5796
        %v5865 = vunpack.c.l.b16 %v5797
        %v5866 = vunpack.c.h.b16 %v5797
        %v5867 = vunpack.c.l.b16 %v5798
        %v5868 = vunpack.c.l.b16 %v5799
        %v5869 = vunpack.c.h.b16 %v5799
        %v5870 = vunpack.c.l.b16 %v5800
        %v5871 = vunpack.c.l.b16 %v5801
        %v5872 = vunpack.c.h.b16 %v5801
        %v5873 = vunpack.c.l.b16 %v5802
        %v5874 = vunpack.c.l.b16 %v5803
        %v5875 = vunpack.c.h.b16 %v5803
        %v5876 = vunpack.c.l.b16 %v5804
        %v5877 = vunpack.c.l.b16 %v5805
        %v5878 = vunpack.c.h.b16 %v5805
        %v5879 = vunpack.c.l.b16 %v5806
        %v5880 = vunpack.c.l.b16 %v5807
        %v5881 = vunpack.c.h.b16 %v5807
        %v5882 = vunpack.c.l.b16 %v5808
        %v5883 = vunpack.c.l.b16 %v5809
        %v5884 = vunpack.c.h.b16 %v5809
        %v5885 = vunpack.c.l.b16 %v5810
        %v5886 = vunpack.c.l.b16 %v5811
        %v5887 = vunpack.c.h.b16 %v5811
        %v5888 = vunpack.c.l.b16 %v5812
        %v5889 = vunpack.c.l.b16 %v5813
        %v5890 = vunpack.c.h.b16 %v5813
        %v5891 = vunpack.c.l.b16 %v5814
        %v5892 = vunpack.c.l.b16 %v5815
        %v5893 = vunpack.c.h.b16 %v5815
        %v5894 = vunpack.c.l.b16 %v5816
        %v5895 = vunpack.c.l.b16 %v5817
        %v5896 = vunpack.c.h.b16 %v5817
        %v5897 = vunpack.c.l.b16 %v5818
        %v5898 = vunpack.c.l.b16 %v5819
        %v5899 = vunpack.c.h.b16 %v5819
        %v5900 = vunpack.c.l.b16 %v5820
        %v5901 = vpack.c.b16 %v5856, %v5853
        %v5902 = vpack.c.b16 %v5857, %v5854
        %v5903 = vpack.c.b16 %v5858, %v5855
        %v5904 = vpack.c.b16 %v5862, %v5859
        %v5905 = vpack.c.b16 %v5863, %v5860
        %v5906 = vpack.c.b16 %v5864, %v5861
        %v5907 = vpack.c.b16 %v5868, %v5865
        %v5908 = vpack.c.b16 %v5869, %v5866
        %v5909 = vpack.c.b16 %v5870, %v5867
        %v5910 = vpack.c.b16 %v5874, %v5871
        %v5911 = vpack.c.b16 %v5875, %v5872
        %v5912 = vpack.c.b16 %v5876, %v5873
        %v5913 = vpack.c.b16 %v5880, %v5877
        %v5914 = vpack.c.b16 %v5881, %v5878
        %v5915 = vpack.c.b16 %v5882, %v5879
        %v5916 = vpack.c.b16 %v5886, %v5883
        %v5917 = vpack.c.b16 %v5887, %v5884
        %v5918 = vpack.c.b16 %v5888, %v5885
        %v5919 = vpack.c.b16 %v5892, %v5889
        %v5920 = vpack.c.b16 %v5893, %v5890
        %v5921 = vpack.c.b16 %v5894, %v5891
        %v5922 = vpack.c.b16 %v5898, %v5895
        %v5923 = vpack.c.b16 %v5899, %v5896
        %v5924 = vpack.c.b16 %v5900, %v5897
        %5949 = vmatprep.subr.bf16.mxu0 %v5902
        %5950 = vmatpush1.bf16.msra.mxu0 %v5901
        %5951 = vmatprep.subr.bf16.mxu0 %v5905
        %5952 = vmatpush1.bf16.msra.mxu0 %v5904
        %5953 = vmatprep.subr.bf16.mxu0 %v5908
        %5954 = vmatpush1.bf16.msra.mxu0 %v5907
        %5955 = vmatprep.subr.bf16.mxu0 %v5911
        %5956 = vmatpush1.bf16.msra.mxu0 %v5910
        %5957 = vmatprep.subr.bf16.mxu0 %v5914
        %5958 = vmatpush1.bf16.msra.mxu0 %v5913
        %5959 = vmatprep.subr.bf16.mxu0 %v5917
        %5960 = vmatpush1.bf16.msra.mxu0 %v5916
        %5961 = vmatprep.subr.bf16.mxu0 %v5920
        %5962 = vmatpush1.bf16.msra.mxu0 %v5919
        %5963 = vmatprep.subr.bf16.mxu0 %v5923
        %5964 = vmatpush1.bf16.msra.mxu0 %v5922
        %5965 = vmatprep.subr.bf16.mxu0 0
        %5966 = vmatpush1.bf16.msra.mxu0 0
        %5967 = vmatprep.subr.bf16.mxu0 0
        %5968 = vmatpush1.bf16.msra.mxu0 0
        %5969 = vmatprep.subr.bf16.mxu0 0
        %5970 = vmatpush1.bf16.msra.mxu0 0
        %5971 = vmatprep.subr.bf16.mxu0 0
        %5972 = vmatpush1.bf16.msra.mxu0 0
        %5973 = vmatprep.subr.bf16.mxu0 0
        %5974 = vmatpush1.bf16.msra.mxu0 0
        %5975 = vmatprep.subr.bf16.mxu0 0
        %5976 = vmatpush1.bf16.msra.mxu0 0
        %5977 = vmatprep.subr.bf16.mxu0 0
        %5978 = vmatpush1.bf16.msra.mxu0 0
        %5979 = vmatprep.subr.bf16.mxu0 0
        %5980 = vmatpush1.bf16.msra.mxu0 0
        %5981 = vmatprep.mubr.bf16.mxu0 0
        %5982 = vmatmul.mubr.bf16.gmra.mrb[0].mxu0 %v5769
        %v5983 = vpop.f32.mrb[0].mxu0
        %v5984 = vadd.f32 0.0, %v5983
        %v5985 = vpop.f32.mrb[0].mxu0
        %v5986 = vadd.f32 0.0, %v5985
        %v5987 = vpop.f32.mrb[0].mxu0
        %v5988 = vpop.f32.mrb[0].mxu0
        %5989 = vdwg.mxu0
        %5990 = vmatprep.subr.bf16.mxu0 0
        %5991 = vmatpush1.bf16.msra.mxu0 %v5903
        %5992 = vmatprep.subr.bf16.mxu0 0
        %5993 = vmatpush1.bf16.msra.mxu0 %v5906
        %5994 = vmatprep.subr.bf16.mxu0 0
        %5995 = vmatpush1.bf16.msra.mxu0 %v5909
        %5996 = vmatprep.subr.bf16.mxu0 0
        %5997 = vmatpush1.bf16.msra.mxu0 %v5912
        %5998 = vmatprep.subr.bf16.mxu0 0
        %5999 = vmatpush1.bf16.msra.mxu0 %v5915
        %6000 = vmatprep.subr.bf16.mxu0 0
        %6001 = vmatpush1.bf16.msra.mxu0 %v5918
        %6002 = vmatprep.subr.bf16.mxu0 0
        %6003 = vmatpush1.bf16.msra.mxu0 %v5921
        %6004 = vmatprep.subr.bf16.mxu0 0
        %6005 = vmatpush1.bf16.msra.mxu0 %v5924
        %6006 = vmatprep.subr.bf16.mxu0 0
        %6007 = vmatpush1.bf16.msra.mxu0 0
        %6008 = vmatprep.subr.bf16.mxu0 0
        %6009 = vmatpush1.bf16.msra.mxu0 0
        %6010 = vmatprep.subr.bf16.mxu0 0
        %6011 = vmatpush1.bf16.msra.mxu0 0
        %6012 = vmatprep.subr.bf16.mxu0 0
        %6013 = vmatpush1.bf16.msra.mxu0 0
        %6014 = vmatprep.subr.bf16.mxu0 0
        %6015 = vmatpush1.bf16.msra.mxu0 0
        %6016 = vmatprep.subr.bf16.mxu0 0
        %6017 = vmatpush1.bf16.msra.mxu0 0
        %6018 = vmatprep.subr.bf16.mxu0 0
        %6019 = vmatpush1.bf16.msra.mxu0 0
        %6020 = vmatprep.subr.bf16.mxu0 0
        %6021 = vmatpush1.bf16.msra.mxu0 0
        %6022 = vmatprep.mubr.bf16.mxu0 0
        %6023 = vmatmul.mubr.bf16.gmra.mrb[0].mxu0 %v5769
        %v6024 = vpop.f32.mrb[0].mxu0
        %v6025 = vadd.f32 0.0, %v6024
        %v6026 = vpop.f32.mrb[0].mxu0
        %v6027 = vpop.f32.mrb[0].mxu0
        %v6028 = vpop.f32.mrb[0].mxu0
        %6029 = vdwg.mxu0
        %v6030 = vadd.f32 %v5777, %v5984
        %v6031 = vadd.f32 %v5781, %v5986
        %v6032 = vadd.f32 %v5785, %v6025
        %s6033 = scalar_lea.vmem %s7, 192
        %v6034 = vld [vmem:[%s6033] sm:$0xff]
        %v6035 = vld [vmem:[%s6033 + $0x8] sm:$0xf]
        %v6036 = vld [vmem:[%s6033 + $0xc] sm:$0xff]
        %v6037 = vld [vmem:[%s6033 + $0x14] sm:$0xf]
        %v6038 = vld [vmem:[%s6033 + $0x18] sm:$0xff]
        %v6039 = vld [vmem:[%s6033 + $0x20] sm:$0xf]
        %v6040 = vld [vmem:[%s6033 + $0x24] sm:$0xff]
        %v6041 = vld [vmem:[%s6033 + $0x2c] sm:$0xf]
        %v6042 = vld [vmem:[%s6033 + $0x30] sm:$0xff]
        %v6043 = vld [vmem:[%s6033 + $0x38] sm:$0xf]
        %v6044 = vld [vmem:[%s6033 + $0x3c] sm:$0xff]
        %v6045 = vld [vmem:[%s6033 + $0x44] sm:$0xf]
        %v6046 = vld [vmem:[%s6033 + $0x48] sm:$0xff]
        %v6047 = vld [vmem:[%s6033 + $0x50] sm:$0xf]
        %v6048 = vld [vmem:[%s6033 + $0x54] sm:$0xff]
        %v6049 = vld [vmem:[%s6033 + $0x5c] sm:$0xf]
        %v6050 = vld [vmem:[%s6033 + $0x60] sm:$0xff]
        %v6051 = vld [vmem:[%s6033 + $0x68] sm:$0xf]
        %v6052 = vld [vmem:[%s6033 + $0x6c] sm:$0xff]
        %v6053 = vld [vmem:[%s6033 + $0x74] sm:$0xf]
        %v6054 = vld [vmem:[%s6033 + $0x78] sm:$0xff]
        %v6055 = vld [vmem:[%s6033 + $0x80] sm:$0xf]
        %v6056 = vld [vmem:[%s6033 + $0x84] sm:$0xff]
        %v6057 = vld [vmem:[%s6033 + $0x8c] sm:$0xf]
        %v6058 = vld [vmem:[%s6033 + $0x90] sm:$0xff]
        %v6059 = vld [vmem:[%s6033 + $0x98] sm:$0xf]
        %v6060 = vld [vmem:[%s6033 + $0x9c] sm:$0xff]
        %v6061 = vld [vmem:[%s6033 + $0xa4] sm:$0xf]
        %v6062 = vld [vmem:[%s6033 + $0xa8] sm:$0xff]
        %v6063 = vld [vmem:[%s6033 + $0xb0] sm:$0xf]
        %v6064 = vld [vmem:[%s6033 + $0xb4] sm:$0xff]
        %v6065 = vld [vmem:[%s6033 + $0xbc] sm:$0xf]
        %v6067 = vrot.slane %v5769, 4
        %v6101 = vunpack.c.l.b16 %v6034
        %v6102 = vunpack.c.h.b16 %v6034
        %v6103 = vunpack.c.l.b16 %v6035
        %v6104 = vunpack.c.l.b16 %v6036
        %v6105 = vunpack.c.h.b16 %v6036
        %v6106 = vunpack.c.l.b16 %v6037
        %v6107 = vunpack.c.l.b16 %v6038
        %v6108 = vunpack.c.h.b16 %v6038
        %v6109 = vunpack.c.l.b16 %v6039
        %v6110 = vunpack.c.l.b16 %v6040
        %v6111 = vunpack.c.h.b16 %v6040
        %v6112 = vunpack.c.l.b16 %v6041
        %v6113 = vunpack.c.l.b16 %v6042
        %v6114 = vunpack.c.h.b16 %v6042
        %v6115 = vunpack.c.l.b16 %v6043
        %v6116 = vunpack.c.l.b16 %v6044
        %v6117 = vunpack.c.h.b16 %v6044
        %v6118 = vunpack.c.l.b16 %v6045
        %v6119 = vunpack.c.l.b16 %v6046
        %v6120 = vunpack.c.h.b16 %v6046
        %v6121 = vunpack.c.l.b16 %v6047
        %v6122 = vunpack.c.l.b16 %v6048
        %v6123 = vunpack.c.h.b16 %v6048
        %v6124 = vunpack.c.l.b16 %v6049
        %v6125 = vunpack.c.l.b16 %v6050
        %v6126 = vunpack.c.h.b16 %v6050
        %v6127 = vunpack.c.l.b16 %v6051
        %v6128 = vunpack.c.l.b16 %v6052
        %v6129 = vunpack.c.h.b16 %v6052
        %v6130 = vunpack.c.l.b16 %v6053
        %v6131 = vunpack.c.l.b16 %v6054
        %v6132 = vunpack.c.h.b16 %v6054
        %v6133 = vunpack.c.l.b16 %v6055
        %v6134 = vunpack.c.l.b16 %v6056
        %v6135 = vunpack.c.h.b16 %v6056
        %v6136 = vunpack.c.l.b16 %v6057
        %v6137 = vunpack.c.l.b16 %v6058
        %v6138 = vunpack.c.h.b16 %v6058
        %v6139 = vunpack.c.l.b16 %v6059
        %v6140 = vunpack.c.l.b16 %v6060
        %v6141 = vunpack.c.h.b16 %v6060
        %v6142 = vunpack.c.l.b16 %v6061
        %v6143 = vunpack.c.l.b16 %v6062
        %v6144 = vunpack.c.h.b16 %v6062
        %v6145 = vunpack.c.l.b16 %v6063
        %v6146 = vunpack.c.l.b16 %v6064
        %v6147 = vunpack.c.h.b16 %v6064
        %v6148 = vunpack.c.l.b16 %v6065
        %v6149 = vpack.c.b16 %v6104, %v6101
        %v6150 = vpack.c.b16 %v6105, %v6102
        %v6151 = vpack.c.b16 %v6106, %v6103
        %v6152 = vpack.c.b16 %v6110, %v6107
        %v6153 = vpack.c.b16 %v6111, %v6108
        %v6154 = vpack.c.b16 %v6112, %v6109
        %v6155 = vpack.c.b16 %v6116, %v6113
        %v6156 = vpack.c.b16 %v6117, %v6114
        %v6157 = vpack.c.b16 %v6118, %v6115
        %v6158 = vpack.c.b16 %v6122, %v6119
        %v6159 = vpack.c.b16 %v6123, %v6120
        %v6160 = vpack.c.b16 %v6124, %v6121
        %v6161 = vpack.c.b16 %v6128, %v6125
        %v6162 = vpack.c.b16 %v6129, %v6126
        %v6163 = vpack.c.b16 %v6130, %v6127
        %v6164 = vpack.c.b16 %v6134, %v6131
        %v6165 = vpack.c.b16 %v6135, %v6132
        %v6166 = vpack.c.b16 %v6136, %v6133
        %v6167 = vpack.c.b16 %v6140, %v6137
        %v6168 = vpack.c.b16 %v6141, %v6138
        %v6169 = vpack.c.b16 %v6142, %v6139
        %v6170 = vpack.c.b16 %v6146, %v6143
        %v6171 = vpack.c.b16 %v6147, %v6144
        %v6172 = vpack.c.b16 %v6148, %v6145
        %6197 = vmatprep.subr.bf16.mxu0 %v6150
        %6198 = vmatpush1.bf16.msra.mxu0 %v6149
        %6199 = vmatprep.subr.bf16.mxu0 %v6153
        %6200 = vmatpush1.bf16.msra.mxu0 %v6152
        %6201 = vmatprep.subr.bf16.mxu0 %v6156
        %6202 = vmatpush1.bf16.msra.mxu0 %v6155
        %6203 = vmatprep.subr.bf16.mxu0 %v6159
        %6204 = vmatpush1.bf16.msra.mxu0 %v6158
        %6205 = vmatprep.subr.bf16.mxu0 %v6162
        %6206 = vmatpush1.bf16.msra.mxu0 %v6161
        %6207 = vmatprep.subr.bf16.mxu0 %v6165
        %6208 = vmatpush1.bf16.msra.mxu0 %v6164
        %6209 = vmatprep.subr.bf16.mxu0 %v6168
        %6210 = vmatpush1.bf16.msra.mxu0 %v6167
        %6211 = vmatprep.subr.bf16.mxu0 %v6171
        %6212 = vmatpush1.bf16.msra.mxu0 %v6170
        %6213 = vmatprep.subr.bf16.mxu0 0
        %6214 = vmatpush1.bf16.msra.mxu0 0
        %6215 = vmatprep.subr.bf16.mxu0 0
        %6216 = vmatpush1.bf16.msra.mxu0 0
        %6217 = vmatprep.subr.bf16.mxu0 0
        %6218 = vmatpush1.bf16.msra.mxu0 0
        %6219 = vmatprep.subr.bf16.mxu0 0
        %6220 = vmatpush1.bf16.msra.mxu0 0
        %6221 = vmatprep.subr.bf16.mxu0 0
        %6222 = vmatpush1.bf16.msra.mxu0 0
        %6223 = vmatprep.subr.bf16.mxu0 0
        %6224 = vmatpush1.bf16.msra.mxu0 0
        %6225 = vmatprep.subr.bf16.mxu0 0
        %6226 = vmatpush1.bf16.msra.mxu0 0
        %6227 = vmatprep.subr.bf16.mxu0 0
        %6228 = vmatpush1.bf16.msra.mxu0 0
        %6229 = vmatprep.mubr.bf16.mxu0 0
        %6230 = vmatmul.mubr.bf16.gmra.mrb[0].mxu0 %v6067
        %v6231 = vpop.f32.mrb[0].mxu0
        %v6232 = vadd.f32 0.0, %v6231
        %v6233 = vpop.f32.mrb[0].mxu0
        %v6234 = vadd.f32 0.0, %v6233
        %v6235 = vpop.f32.mrb[0].mxu0
        %v6236 = vpop.f32.mrb[0].mxu0
        %6237 = vdwg.mxu0
        %6238 = vmatprep.subr.bf16.mxu0 0
        %6239 = vmatpush1.bf16.msra.mxu0 %v6151
        %6240 = vmatprep.subr.bf16.mxu0 0
        %6241 = vmatpush1.bf16.msra.mxu0 %v6154
        %6242 = vmatprep.subr.bf16.mxu0 0
        %6243 = vmatpush1.bf16.msra.mxu0 %v6157
        %6244 = vmatprep.subr.bf16.mxu0 0
        %6245 = vmatpush1.bf16.msra.mxu0 %v6160
        %6246 = vmatprep.subr.bf16.mxu0 0
        %6247 = vmatpush1.bf16.msra.mxu0 %v6163
        %6248 = vmatprep.subr.bf16.mxu0 0
        %6249 = vmatpush1.bf16.msra.mxu0 %v6166
        %6250 = vmatprep.subr.bf16.mxu0 0
        %6251 = vmatpush1.bf16.msra.mxu0 %v6169
        %6252 = vmatprep.subr.bf16.mxu0 0
        %6253 = vmatpush1.bf16.msra.mxu0 %v6172
        %6254 = vmatprep.subr.bf16.mxu0 0
        %6255 = vmatpush1.bf16.msra.mxu0 0
        %6256 = vmatprep.subr.bf16.mxu0 0
        %6257 = vmatpush1.bf16.msra.mxu0 0
        %6258 = vmatprep.subr.bf16.mxu0 0
        %6259 = vmatpush1.bf16.msra.mxu0 0
        %6260 = vmatprep.subr.bf16.mxu0 0
        %6261 = vmatpush1.bf16.msra.mxu0 0
        %6262 = vmatprep.subr.bf16.mxu0 0
        %6263 = vmatpush1.bf16.msra.mxu0 0
        %6264 = vmatprep.subr.bf16.mxu0 0
        %6265 = vmatpush1.bf16.msra.mxu0 0
        %6266 = vmatprep.subr.bf16.mxu0 0
        %6267 = vmatpush1.bf16.msra.mxu0 0
        %6268 = vmatprep.subr.bf16.mxu0 0
        %6269 = vmatpush1.bf16.msra.mxu0 0
        %6270 = vmatprep.mubr.bf16.mxu0 0
        %6271 = vmatmul.mubr.bf16.gmra.mrb[0].mxu0 %v6067
        %v6272 = vpop.f32.mrb[0].mxu0
        %v6273 = vadd.f32 0.0, %v6272
        %v6274 = vpop.f32.mrb[0].mxu0
        %v6275 = vpop.f32.mrb[0].mxu0
        %v6276 = vpop.f32.mrb[0].mxu0
        %6277 = vdwg.mxu0
        %v6278 = vadd.f32 %v6030, %v6232
        %v6279 = vadd.f32 %v6031, %v6234
        %v6280 = vadd.f32 %v6032, %v6273
        %s6281 = scalar_lea.vmem %s7, 384
        %v6282 = vld [vmem:[%s6281] sm:$0xff]
        %v6283 = vld [vmem:[%s6281 + $0x8] sm:$0xf]
        %v6284 = vld [vmem:[%s6281 + $0xc] sm:$0xff]
        %v6285 = vld [vmem:[%s6281 + $0x14] sm:$0xf]
        %v6286 = vld [vmem:[%s6281 + $0x18] sm:$0xff]
        %v6287 = vld [vmem:[%s6281 + $0x20] sm:$0xf]
        %v6288 = vld [vmem:[%s6281 + $0x24] sm:$0xff]
        %v6289 = vld [vmem:[%s6281 + $0x2c] sm:$0xf]
        %v6290 = vld [vmem:[%s6281 + $0x30] sm:$0xff]
        %v6291 = vld [vmem:[%s6281 + $0x38] sm:$0xf]
        %v6292 = vld [vmem:[%s6281 + $0x3c] sm:$0xff]
        %v6293 = vld [vmem:[%s6281 + $0x44] sm:$0xf]
        %v6294 = vld [vmem:[%s6281 + $0x48] sm:$0xff]
        %v6295 = vld [vmem:[%s6281 + $0x50] sm:$0xf]
        %v6296 = vld [vmem:[%s6281 + $0x54] sm:$0xff]
        %v6297 = vld [vmem:[%s6281 + $0x5c] sm:$0xf]
        %v6298 = vld [vmem:[%s6281 + $0x60] sm:$0xff]
        %v6299 = vld [vmem:[%s6281 + $0x68] sm:$0xf]
        %v6300 = vld [vmem:[%s6281 + $0x6c] sm:$0xff]
        %v6301 = vld [vmem:[%s6281 + $0x74] sm:$0xf]
        %v6302 = vld [vmem:[%s6281 + $0x78] sm:$0xff]
        %v6303 = vld [vmem:[%s6281 + $0x80] sm:$0xf]
        %v6304 = vld [vmem:[%s6281 + $0x84] sm:$0xff]
        %v6305 = vld [vmem:[%s6281 + $0x8c] sm:$0xf]
        %v6306 = vld [vmem:[%s6281 + $0x90] sm:$0xff]
        %v6307 = vld [vmem:[%s6281 + $0x98] sm:$0xf]
        %v6308 = vld [vmem:[%s6281 + $0x9c] sm:$0xff]
        %v6309 = vld [vmem:[%s6281 + $0xa4] sm:$0xf]
        %v6310 = vld [vmem:[%s6281 + $0xa8] sm:$0xff]
        %v6311 = vld [vmem:[%s6281 + $0xb0] sm:$0xf]
        %v6312 = vld [vmem:[%s6281 + $0xb4] sm:$0xff]
        %v6313 = vld [vmem:[%s6281 + $0xbc] sm:$0xf]
        %v6346 = vunpack.c.l.b16 %v6282
        %v6347 = vunpack.c.h.b16 %v6282
        %v6348 = vunpack.c.l.b16 %v6283
        %v6349 = vunpack.c.l.b16 %v6284
        %v6350 = vunpack.c.h.b16 %v6284
        %v6351 = vunpack.c.l.b16 %v6285
        %v6352 = vunpack.c.l.b16 %v6286
        %v6353 = vunpack.c.h.b16 %v6286
        %v6354 = vunpack.c.l.b16 %v6287
        %v6355 = vunpack.c.l.b16 %v6288
        %v6356 = vunpack.c.h.b16 %v6288
        %v6357 = vunpack.c.l.b16 %v6289
        %v6358 = vunpack.c.l.b16 %v6290
        %v6359 = vunpack.c.h.b16 %v6290
        %v6360 = vunpack.c.l.b16 %v6291
        %v6361 = vunpack.c.l.b16 %v6292
        %v6362 = vunpack.c.h.b16 %v6292
        %v6363 = vunpack.c.l.b16 %v6293
        %v6364 = vunpack.c.l.b16 %v6294
        %v6365 = vunpack.c.h.b16 %v6294
        %v6366 = vunpack.c.l.b16 %v6295
        %v6367 = vunpack.c.l.b16 %v6296
        %v6368 = vunpack.c.h.b16 %v6296
        %v6369 = vunpack.c.l.b16 %v6297
        %v6370 = vunpack.c.l.b16 %v6298
        %v6371 = vunpack.c.h.b16 %v6298
        %v6372 = vunpack.c.l.b16 %v6299
        %v6373 = vunpack.c.l.b16 %v6300
        %v6374 = vunpack.c.h.b16 %v6300
        %v6375 = vunpack.c.l.b16 %v6301
        %v6376 = vunpack.c.l.b16 %v6302
        %v6377 = vunpack.c.h.b16 %v6302
        %v6378 = vunpack.c.l.b16 %v6303
        %v6379 = vunpack.c.l.b16 %v6304
        %v6380 = vunpack.c.h.b16 %v6304
        %v6381 = vunpack.c.l.b16 %v6305
        %v6382 = vunpack.c.l.b16 %v6306
        %v6383 = vunpack.c.h.b16 %v6306
        %v6384 = vunpack.c.l.b16 %v6307
        %v6385 = vunpack.c.l.b16 %v6308
        %v6386 = vunpack.c.h.b16 %v6308
        %v6387 = vunpack.c.l.b16 %v6309
        %v6388 = vunpack.c.l.b16 %v6310
        %v6389 = vunpack.c.h.b16 %v6310
        %v6390 = vunpack.c.l.b16 %v6311
        %v6391 = vunpack.c.l.b16 %v6312
        %v6392 = vunpack.c.h.b16 %v6312
        %v6393 = vunpack.c.l.b16 %v6313
        %v6394 = vpack.c.b16 %v6349, %v6346
        %v6395 = vpack.c.b16 %v6350, %v6347
        %v6396 = vpack.c.b16 %v6351, %v6348
        %v6397 = vpack.c.b16 %v6355, %v6352
        %v6398 = vpack.c.b16 %v6356, %v6353
        %v6399 = vpack.c.b16 %v6357, %v6354
        %v6400 = vpack.c.b16 %v6361, %v6358
        %v6401 = vpack.c.b16 %v6362, %v6359
        %v6402 = vpack.c.b16 %v6363, %v6360
        %v6403 = vpack.c.b16 %v6367, %v6364
        %v6404 = vpack.c.b16 %v6368, %v6365
        %v6405 = vpack.c.b16 %v6369, %v6366
        %v6406 = vpack.c.b16 %v6373, %v6370
        %v6407 = vpack.c.b16 %v6374, %v6371
        %v6408 = vpack.c.b16 %v6375, %v6372
        %v6409 = vpack.c.b16 %v6379, %v6376
        %v6410 = vpack.c.b16 %v6380, %v6377
        %v6411 = vpack.c.b16 %v6381, %v6378
        %v6412 = vpack.c.b16 %v6385, %v6382
        %v6413 = vpack.c.b16 %v6386, %v6383
        %v6414 = vpack.c.b16 %v6387, %v6384
        %v6415 = vpack.c.b16 %v6391, %v6388
        %v6416 = vpack.c.b16 %v6392, %v6389
        %v6417 = vpack.c.b16 %v6393, %v6390
        %6442 = vmatprep.subr.bf16.mxu0 %v6395
        %6443 = vmatpush1.bf16.msra.mxu0 %v6394
        %6444 = vmatprep.subr.bf16.mxu0 %v6398
        %6445 = vmatpush1.bf16.msra.mxu0 %v6397
        %6446 = vmatprep.subr.bf16.mxu0 %v6401
        %6447 = vmatpush1.bf16.msra.mxu0 %v6400
        %6448 = vmatprep.subr.bf16.mxu0 %v6404
        %6449 = vmatpush1.bf16.msra.mxu0 %v6403
        %6450 = vmatprep.subr.bf16.mxu0 %v6407
        %6451 = vmatpush1.bf16.msra.mxu0 %v6406
        %6452 = vmatprep.subr.bf16.mxu0 %v6410
        %6453 = vmatpush1.bf16.msra.mxu0 %v6409
        %6454 = vmatprep.subr.bf16.mxu0 %v6413
        %6455 = vmatpush1.bf16.msra.mxu0 %v6412
        %6456 = vmatprep.subr.bf16.mxu0 %v6416
        %6457 = vmatpush1.bf16.msra.mxu0 %v6415
        %6458 = vmatprep.subr.bf16.mxu0 0
        %6459 = vmatpush1.bf16.msra.mxu0 0
        %6460 = vmatprep.subr.bf16.mxu0 0
        %6461 = vmatpush1.bf16.msra.mxu0 0
        %6462 = vmatprep.subr.bf16.mxu0 0
        %6463 = vmatpush1.bf16.msra.mxu0 0
        %6464 = vmatprep.subr.bf16.mxu0 0
        %6465 = vmatpush1.bf16.msra.mxu0 0
        %6466 = vmatprep.subr.bf16.mxu0 0
        %6467 = vmatpush1.bf16.msra.mxu0 0
        %6468 = vmatprep.subr.bf16.mxu0 0
        %6469 = vmatpush1.bf16.msra.mxu0 0
        %6470 = vmatprep.subr.bf16.mxu0 0
        %6471 = vmatpush1.bf16.msra.mxu0 0
        %6472 = vmatprep.subr.bf16.mxu0 0
        %6473 = vmatpush1.bf16.msra.mxu0 0
        %6474 = vmatprep.mubr.bf16.mxu0 0
        %6475 = vmatmul.mubr.bf16.gmra.mrb[0].mxu0 %v5770
        %v6476 = vpop.f32.mrb[0].mxu0
        %v6477 = vadd.f32 0.0, %v6476
        %v6478 = vpop.f32.mrb[0].mxu0
        %v6479 = vadd.f32 0.0, %v6478
        %v6480 = vpop.f32.mrb[0].mxu0
        %v6481 = vpop.f32.mrb[0].mxu0
        %6482 = vdwg.mxu0
        %6483 = vmatprep.subr.bf16.mxu0 0
        %6484 = vmatpush1.bf16.msra.mxu0 %v6396
        %6485 = vmatprep.subr.bf16.mxu0 0
        %6486 = vmatpush1.bf16.msra.mxu0 %v6399
        %6487 = vmatprep.subr.bf16.mxu0 0
        %6488 = vmatpush1.bf16.msra.mxu0 %v6402
        %6489 = vmatprep.subr.bf16.mxu0 0
        %6490 = vmatpush1.bf16.msra.mxu0 %v6405
        %6491 = vmatprep.subr.bf16.mxu0 0
        %6492 = vmatpush1.bf16.msra.mxu0 %v6408
        %6493 = vmatprep.subr.bf16.mxu0 0
        %6494 = vmatpush1.bf16.msra.mxu0 %v6411
        %6495 = vmatprep.subr.bf16.mxu0 0
        %6496 = vmatpush1.bf16.msra.mxu0 %v6414
        %6497 = vmatprep.subr.bf16.mxu0 0
        %6498 = vmatpush1.bf16.msra.mxu0 %v6417
        %6499 = vmatprep.subr.bf16.mxu0 0
        %6500 = vmatpush1.bf16.msra.mxu0 0
        %6501 = vmatprep.subr.bf16.mxu0 0
        %6502 = vmatpush1.bf16.msra.mxu0 0
        %6503 = vmatprep.subr.bf16.mxu0 0
        %6504 = vmatpush1.bf16.msra.mxu0 0
        %6505 = vmatprep.subr.bf16.mxu0 0
        %6506 = vmatpush1.bf16.msra.mxu0 0
        %6507 = vmatprep.subr.bf16.mxu0 0
        %6508 = vmatpush1.bf16.msra.mxu0 0
        %6509 = vmatprep.subr.bf16.mxu0 0
        %6510 = vmatpush1.bf16.msra.mxu0 0
        %6511 = vmatprep.subr.bf16.mxu0 0
        %6512 = vmatpush1.bf16.msra.mxu0 0
        %6513 = vmatprep.subr.bf16.mxu0 0
        %6514 = vmatpush1.bf16.msra.mxu0 0
        %6515 = vmatprep.mubr.bf16.mxu0 0
        %6516 = vmatmul.mubr.bf16.gmra.mrb[0].mxu0 %v5770
        %v6517 = vpop.f32.mrb[0].mxu0
        %v6518 = vadd.f32 0.0, %v6517
        %v6519 = vpop.f32.mrb[0].mxu0
        %v6520 = vpop.f32.mrb[0].mxu0
        %v6521 = vpop.f32.mrb[0].mxu0
        %6522 = vdwg.mxu0
        %v6523 = vadd.f32 %v6278, %v6477
        %v6524 = vadd.f32 %v6279, %v6479
        %v6525 = vadd.f32 %v6280, %v6518
        %s6526 = scalar_lea.vmem %s7, 576
        %v6527 = vld [vmem:[%s6526] sm:$0xff]
        %v6528 = vld [vmem:[%s6526 + $0x8] sm:$0xf]
        %v6529 = vld [vmem:[%s6526 + $0xc] sm:$0xff]
        %v6530 = vld [vmem:[%s6526 + $0x14] sm:$0xf]
        %v6531 = vld [vmem:[%s6526 + $0x18] sm:$0xff]
        %v6532 = vld [vmem:[%s6526 + $0x20] sm:$0xf]
        %v6533 = vld [vmem:[%s6526 + $0x24] sm:$0xff]
        %v6534 = vld [vmem:[%s6526 + $0x2c] sm:$0xf]
        %v6535 = vld [vmem:[%s6526 + $0x30] sm:$0xff]
        %v6536 = vld [vmem:[%s6526 + $0x38] sm:$0xf]
        %v6537 = vld [vmem:[%s6526 + $0x3c] sm:$0xff]
        %v6538 = vld [vmem:[%s6526 + $0x44] sm:$0xf]
        %v6539 = vld [vmem:[%s6526 + $0x48] sm:$0xff]
        %v6540 = vld [vmem:[%s6526 + $0x50] sm:$0xf]
        %v6541 = vld [vmem:[%s6526 + $0x54] sm:$0xff]
        %v6542 = vld [vmem:[%s6526 + $0x5c] sm:$0xf]
        %v6543 = vld [vmem:[%s6526 + $0x60] sm:$0xff]
        %v6544 = vld [vmem:[%s6526 + $0x68] sm:$0xf]
        %v6545 = vld [vmem:[%s6526 + $0x6c] sm:$0xff]
        %v6546 = vld [vmem:[%s6526 + $0x74] sm:$0xf]
        %v6547 = vld [vmem:[%s6526 + $0x78] sm:$0xff]
        %v6548 = vld [vmem:[%s6526 + $0x80] sm:$0xf]
        %v6549 = vld [vmem:[%s6526 + $0x84] sm:$0xff]
        %v6550 = vld [vmem:[%s6526 + $0x8c] sm:$0xf]
        %v6551 = vld [vmem:[%s6526 + $0x90] sm:$0xff]
        %v6552 = vld [vmem:[%s6526 + $0x98] sm:$0xf]
        %v6553 = vld [vmem:[%s6526 + $0x9c] sm:$0xff]
        %v6554 = vld [vmem:[%s6526 + $0xa4] sm:$0xf]
        %v6555 = vld [vmem:[%s6526 + $0xa8] sm:$0xff]
        %v6556 = vld [vmem:[%s6526 + $0xb0] sm:$0xf]
        %v6557 = vld [vmem:[%s6526 + $0xb4] sm:$0xff]
        %v6558 = vld [vmem:[%s6526 + $0xbc] sm:$0xf]
        %v6560 = vrot.slane %v5770, 4
        %v6594 = vunpack.c.l.b16 %v6527
        %v6595 = vunpack.c.h.b16 %v6527
        %v6596 = vunpack.c.l.b16 %v6528
        %v6597 = vunpack.c.l.b16 %v6529
        %v6598 = vunpack.c.h.b16 %v6529
        %v6599 = vunpack.c.l.b16 %v6530
        %v6600 = vunpack.c.l.b16 %v6531
        %v6601 = vunpack.c.h.b16 %v6531
        %v6602 = vunpack.c.l.b16 %v6532
        %v6603 = vunpack.c.l.b16 %v6533
        %v6604 = vunpack.c.h.b16 %v6533
        %v6605 = vunpack.c.l.b16 %v6534
        %v6606 = vunpack.c.l.b16 %v6535
        %v6607 = vunpack.c.h.b16 %v6535
        %v6608 = vunpack.c.l.b16 %v6536
        %v6609 = vunpack.c.l.b16 %v6537
        %v6610 = vunpack.c.h.b16 %v6537
        %v6611 = vunpack.c.l.b16 %v6538
        %v6612 = vunpack.c.l.b16 %v6539
        %v6613 = vunpack.c.h.b16 %v6539
        %v6614 = vunpack.c.l.b16 %v6540
        %v6615 = vunpack.c.l.b16 %v6541
        %v6616 = vunpack.c.h.b16 %v6541
        %v6617 = vunpack.c.l.b16 %v6542
        %v6618 = vunpack.c.l.b16 %v6543
        %v6619 = vunpack.c.h.b16 %v6543
        %v6620 = vunpack.c.l.b16 %v6544
        %v6621 = vunpack.c.l.b16 %v6545
        %v6622 = vunpack.c.h.b16 %v6545
        %v6623 = vunpack.c.l.b16 %v6546
        %v6624 = vunpack.c.l.b16 %v6547
        %v6625 = vunpack.c.h.b16 %v6547
        %v6626 = vunpack.c.l.b16 %v6548
        %v6627 = vunpack.c.l.b16 %v6549
        %v6628 = vunpack.c.h.b16 %v6549
        %v6629 = vunpack.c.l.b16 %v6550
        %v6630 = vunpack.c.l.b16 %v6551
        %v6631 = vunpack.c.h.b16 %v6551
        %v6632 = vunpack.c.l.b16 %v6552
        %v6633 = vunpack.c.l.b16 %v6553
        %v6634 = vunpack.c.h.b16 %v6553
        %v6635 = vunpack.c.l.b16 %v6554
        %v6636 = vunpack.c.l.b16 %v6555
        %v6637 = vunpack.c.h.b16 %v6555
        %v6638 = vunpack.c.l.b16 %v6556
        %v6639 = vunpack.c.l.b16 %v6557
        %v6640 = vunpack.c.h.b16 %v6557
        %v6641 = vunpack.c.l.b16 %v6558
        %v6642 = vpack.c.b16 %v6597, %v6594
        %v6643 = vpack.c.b16 %v6598, %v6595
        %v6644 = vpack.c.b16 %v6599, %v6596
        %v6645 = vpack.c.b16 %v6603, %v6600
        %v6646 = vpack.c.b16 %v6604, %v6601
        %v6647 = vpack.c.b16 %v6605, %v6602
        %v6648 = vpack.c.b16 %v6609, %v6606
        %v6649 = vpack.c.b16 %v6610, %v6607
        %v6650 = vpack.c.b16 %v6611, %v6608
        %v6651 = vpack.c.b16 %v6615, %v6612
        %v6652 = vpack.c.b16 %v6616, %v6613
        %v6653 = vpack.c.b16 %v6617, %v6614
        %v6654 = vpack.c.b16 %v6621, %v6618
        %v6655 = vpack.c.b16 %v6622, %v6619
        %v6656 = vpack.c.b16 %v6623, %v6620
        %v6657 = vpack.c.b16 %v6627, %v6624
        %v6658 = vpack.c.b16 %v6628, %v6625
        %v6659 = vpack.c.b16 %v6629, %v6626
        %v6660 = vpack.c.b16 %v6633, %v6630
        %v6661 = vpack.c.b16 %v6634, %v6631
        %v6662 = vpack.c.b16 %v6635, %v6632
        %v6663 = vpack.c.b16 %v6639, %v6636
        %v6664 = vpack.c.b16 %v6640, %v6637
        %v6665 = vpack.c.b16 %v6641, %v6638
        %6690 = vmatprep.subr.bf16.mxu0 %v6643
        %6691 = vmatpush1.bf16.msra.mxu0 %v6642
        %6692 = vmatprep.subr.bf16.mxu0 %v6646
        %6693 = vmatpush1.bf16.msra.mxu0 %v6645
        %6694 = vmatprep.subr.bf16.mxu0 %v6649
        %6695 = vmatpush1.bf16.msra.mxu0 %v6648
        %6696 = vmatprep.subr.bf16.mxu0 %v6652
        %6697 = vmatpush1.bf16.msra.mxu0 %v6651
        %6698 = vmatprep.subr.bf16.mxu0 %v6655
        %6699 = vmatpush1.bf16.msra.mxu0 %v6654
        %6700 = vmatprep.subr.bf16.mxu0 %v6658
        %6701 = vmatpush1.bf16.msra.mxu0 %v6657
        %6702 = vmatprep.subr.bf16.mxu0 %v6661
        %6703 = vmatpush1.bf16.msra.mxu0 %v6660
        %6704 = vmatprep.subr.bf16.mxu0 %v6664
        %6705 = vmatpush1.bf16.msra.mxu0 %v6663
        %6706 = vmatprep.subr.bf16.mxu0 0
        %6707 = vmatpush1.bf16.msra.mxu0 0
        %6708 = vmatprep.subr.bf16.mxu0 0
        %6709 = vmatpush1.bf16.msra.mxu0 0
        %6710 = vmatprep.subr.bf16.mxu0 0
        %6711 = vmatpush1.bf16.msra.mxu0 0
        %6712 = vmatprep.subr.bf16.mxu0 0
        %6713 = vmatpush1.bf16.msra.mxu0 0
        %6714 = vmatprep.subr.bf16.mxu0 0
        %6715 = vmatpush1.bf16.msra.mxu0 0
        %6716 = vmatprep.subr.bf16.mxu0 0
        %6717 = vmatpush1.bf16.msra.mxu0 0
        %6718 = vmatprep.subr.bf16.mxu0 0
        %6719 = vmatpush1.bf16.msra.mxu0 0
        %6720 = vmatprep.subr.bf16.mxu0 0
        %6721 = vmatpush1.bf16.msra.mxu0 0
        %6722 = vmatprep.mubr.bf16.mxu0 0
        %6723 = vmatmul.mubr.bf16.gmra.mrb[0].mxu0 %v6560
        %v6724 = vpop.f32.mrb[0].mxu0
        %v6725 = vadd.f32 0.0, %v6724
        %v6726 = vpop.f32.mrb[0].mxu0
        %v6727 = vadd.f32 0.0, %v6726
        %v6728 = vpop.f32.mrb[0].mxu0
        %v6729 = vpop.f32.mrb[0].mxu0
        %6730 = vdwg.mxu0
        %6731 = vmatprep.subr.bf16.mxu0 0
        %6732 = vmatpush1.bf16.msra.mxu0 %v6644
        %6733 = vmatprep.subr.bf16.mxu0 0
        %6734 = vmatpush1.bf16.msra.mxu0 %v6647
        %6735 = vmatprep.subr.bf16.mxu0 0
        %6736 = vmatpush1.bf16.msra.mxu0 %v6650
        %6737 = vmatprep.subr.bf16.mxu0 0
        %6738 = vmatpush1.bf16.msra.mxu0 %v6653
        %6739 = vmatprep.subr.bf16.mxu0 0
        %6740 = vmatpush1.bf16.msra.mxu0 %v6656
        %6741 = vmatprep.subr.bf16.mxu0 0
        %6742 = vmatpush1.bf16.msra.mxu0 %v6659
        %6743 = vmatprep.subr.bf16.mxu0 0
        %6744 = vmatpush1.bf16.msra.mxu0 %v6662
        %6745 = vmatprep.subr.bf16.mxu0 0
        %6746 = vmatpush1.bf16.msra.mxu0 %v6665
        %6747 = vmatprep.subr.bf16.mxu0 0
        %6748 = vmatpush1.bf16.msra.mxu0 0
        %6749 = vmatprep.subr.bf16.mxu0 0
        %6750 = vmatpush1.bf16.msra.mxu0 0
        %6751 = vmatprep.subr.bf16.mxu0 0
        %6752 = vmatpush1.bf16.msra.mxu0 0
        %6753 = vmatprep.subr.bf16.mxu0 0
        %6754 = vmatpush1.bf16.msra.mxu0 0
        %6755 = vmatprep.subr.bf16.mxu0 0
        %6756 = vmatpush1.bf16.msra.mxu0 0
        %6757 = vmatprep.subr.bf16.mxu0 0
        %6758 = vmatpush1.bf16.msra.mxu0 0
        %6759 = vmatprep.subr.bf16.mxu0 0
        %6760 = vmatpush1.bf16.msra.mxu0 0
        %6761 = vmatprep.subr.bf16.mxu0 0
        %6762 = vmatpush1.bf16.msra.mxu0 0
        %6763 = vmatprep.mubr.bf16.mxu0 0
        %6764 = vmatmul.mubr.bf16.gmra.mrb[0].mxu0 %v6560
        %v6765 = vpop.f32.mrb[0].mxu0
        %v6766 = vadd.f32 0.0, %v6765
        %v6767 = vpop.f32.mrb[0].mxu0
        %v6768 = vpop.f32.mrb[0].mxu0
        %v6769 = vpop.f32.mrb[0].mxu0
        %6770 = vdwg.mxu0
        %v6771 = vadd.f32 %v6523, %v6725
        %v6772 = vadd.f32 %v6524, %v6727
        %v6773 = vadd.f32 %v6525, %v6766
        %s6774 = scalar_lea.vmem %s7, 768
        %v6775 = vld [vmem:[%s6774] sm:$0xff]
        %v6776 = vld [vmem:[%s6774 + $0x8] sm:$0xf]
        %v6777 = vld [vmem:[%s6774 + $0xc] sm:$0xff]
        %v6778 = vld [vmem:[%s6774 + $0x14] sm:$0xf]
        %v6779 = vld [vmem:[%s6774 + $0x18] sm:$0xff]
        %v6780 = vld [vmem:[%s6774 + $0x20] sm:$0xf]
        %v6781 = vld [vmem:[%s6774 + $0x24] sm:$0xff]
        %v6782 = vld [vmem:[%s6774 + $0x2c] sm:$0xf]
        %v6783 = vld [vmem:[%s6774 + $0x30] sm:$0xff]
        %v6784 = vld [vmem:[%s6774 + $0x38] sm:$0xf]
        %v6785 = vld [vmem:[%s6774 + $0x3c] sm:$0xff]
        %v6786 = vld [vmem:[%s6774 + $0x44] sm:$0xf]
        %v6787 = vld [vmem:[%s6774 + $0x48] sm:$0xff]
        %v6788 = vld [vmem:[%s6774 + $0x50] sm:$0xf]
        %v6789 = vld [vmem:[%s6774 + $0x54] sm:$0xff]
        %v6790 = vld [vmem:[%s6774 + $0x5c] sm:$0xf]
        %v6791 = vld [vmem:[%s6774 + $0x60] sm:$0xff]
        %v6792 = vld [vmem:[%s6774 + $0x68] sm:$0xf]
        %v6793 = vld [vmem:[%s6774 + $0x6c] sm:$0xff]
        %v6794 = vld [vmem:[%s6774 + $0x74] sm:$0xf]
        %v6795 = vld [vmem:[%s6774 + $0x78] sm:$0xff]
        %v6796 = vld [vmem:[%s6774 + $0x80] sm:$0xf]
        %v6797 = vld [vmem:[%s6774 + $0x84] sm:$0xff]
        %v6798 = vld [vmem:[%s6774 + $0x8c] sm:$0xf]
        %v6799 = vld [vmem:[%s6774 + $0x90] sm:$0xff]
        %v6800 = vld [vmem:[%s6774 + $0x98] sm:$0xf]
        %v6801 = vld [vmem:[%s6774 + $0x9c] sm:$0xff]
        %v6802 = vld [vmem:[%s6774 + $0xa4] sm:$0xf]
        %v6803 = vld [vmem:[%s6774 + $0xa8] sm:$0xff]
        %v6804 = vld [vmem:[%s6774 + $0xb0] sm:$0xf]
        %v6805 = vld [vmem:[%s6774 + $0xb4] sm:$0xff]
        %v6806 = vld [vmem:[%s6774 + $0xbc] sm:$0xf]
        %v6839 = vunpack.c.l.b16 %v6775
        %v6840 = vunpack.c.h.b16 %v6775
        %v6841 = vunpack.c.l.b16 %v6776
        %v6842 = vunpack.c.l.b16 %v6777
        %v6843 = vunpack.c.h.b16 %v6777
        %v6844 = vunpack.c.l.b16 %v6778
        %v6845 = vunpack.c.l.b16 %v6779
        %v6846 = vunpack.c.h.b16 %v6779
        %v6847 = vunpack.c.l.b16 %v6780
        %v6848 = vunpack.c.l.b16 %v6781
        %v6849 = vunpack.c.h.b16 %v6781
        %v6850 = vunpack.c.l.b16 %v6782
        %v6851 = vunpack.c.l.b16 %v6783
        %v6852 = vunpack.c.h.b16 %v6783
        %v6853 = vunpack.c.l.b16 %v6784
        %v6854 = vunpack.c.l.b16 %v6785
        %v6855 = vunpack.c.h.b16 %v6785
        %v6856 = vunpack.c.l.b16 %v6786
        %v6857 = vunpack.c.l.b16 %v6787
        %v6858 = vunpack.c.h.b16 %v6787
        %v6859 = vunpack.c.l.b16 %v6788
        %v6860 = vunpack.c.l.b16 %v6789
        %v6861 = vunpack.c.h.b16 %v6789
        %v6862 = vunpack.c.l.b16 %v6790
        %v6863 = vunpack.c.l.b16 %v6791
        %v6864 = vunpack.c.h.b16 %v6791
        %v6865 = vunpack.c.l.b16 %v6792
        %v6866 = vunpack.c.l.b16 %v6793
        %v6867 = vunpack.c.h.b16 %v6793
        %v6868 = vunpack.c.l.b16 %v6794
        %v6869 = vunpack.c.l.b16 %v6795
        %v6870 = vunpack.c.h.b16 %v6795
        %v6871 = vunpack.c.l.b16 %v6796
        %v6872 = vunpack.c.l.b16 %v6797
        %v6873 = vunpack.c.h.b16 %v6797
        %v6874 = vunpack.c.l.b16 %v6798
        %v6875 = vunpack.c.l.b16 %v6799
        %v6876 = vunpack.c.h.b16 %v6799
        %v6877 = vunpack.c.l.b16 %v6800
        %v6878 = vunpack.c.l.b16 %v6801
        %v6879 = vunpack.c.h.b16 %v6801
        %v6880 = vunpack.c.l.b16 %v6802
        %v6881 = vunpack.c.l.b16 %v6803
        %v6882 = vunpack.c.h.b16 %v6803
        %v6883 = vunpack.c.l.b16 %v6804
        %v6884 = vunpack.c.l.b16 %v6805
        %v6885 = vunpack.c.h.b16 %v6805
        %v6886 = vunpack.c.l.b16 %v6806
        %v6887 = vpack.c.b16 %v6842, %v6839
        %v6888 = vpack.c.b16 %v6843, %v6840
        %v6889 = vpack.c.b16 %v6844, %v6841
        %v6890 = vpack.c.b16 %v6848, %v6845
        %v6891 = vpack.c.b16 %v6849, %v6846
        %v6892 = vpack.c.b16 %v6850, %v6847
        %v6893 = vpack.c.b16 %v6854, %v6851
        %v6894 = vpack.c.b16 %v6855, %v6852
        %v6895 = vpack.c.b16 %v6856, %v6853
        %v6896 = vpack.c.b16 %v6860, %v6857
        %v6897 = vpack.c.b16 %v6861, %v6858
        %v6898 = vpack.c.b16 %v6862, %v6859
        %v6899 = vpack.c.b16 %v6866, %v6863
        %v6900 = vpack.c.b16 %v6867, %v6864
        %v6901 = vpack.c.b16 %v6868, %v6865
        %v6902 = vpack.c.b16 %v6872, %v6869
        %v6903 = vpack.c.b16 %v6873, %v6870
        %v6904 = vpack.c.b16 %v6874, %v6871
        %v6905 = vpack.c.b16 %v6878, %v6875
        %v6906 = vpack.c.b16 %v6879, %v6876
        %v6907 = vpack.c.b16 %v6880, %v6877
        %v6908 = vpack.c.b16 %v6884, %v6881
        %v6909 = vpack.c.b16 %v6885, %v6882
        %v6910 = vpack.c.b16 %v6886, %v6883
        %6935 = vmatprep.subr.bf16.mxu0 %v6888
        %6936 = vmatpush1.bf16.msra.mxu0 %v6887
        %6937 = vmatprep.subr.bf16.mxu0 %v6891
        %6938 = vmatpush1.bf16.msra.mxu0 %v6890
        %6939 = vmatprep.subr.bf16.mxu0 %v6894
        %6940 = vmatpush1.bf16.msra.mxu0 %v6893
        %6941 = vmatprep.subr.bf16.mxu0 %v6897
        %6942 = vmatpush1.bf16.msra.mxu0 %v6896
        %6943 = vmatprep.subr.bf16.mxu0 %v6900
        %6944 = vmatpush1.bf16.msra.mxu0 %v6899
        %6945 = vmatprep.subr.bf16.mxu0 %v6903
        %6946 = vmatpush1.bf16.msra.mxu0 %v6902
        %6947 = vmatprep.subr.bf16.mxu0 %v6906
        %6948 = vmatpush1.bf16.msra.mxu0 %v6905
        %6949 = vmatprep.subr.bf16.mxu0 %v6909
        %6950 = vmatpush1.bf16.msra.mxu0 %v6908
        %6951 = vmatprep.subr.bf16.mxu0 0
        %6952 = vmatpush1.bf16.msra.mxu0 0
        %6953 = vmatprep.subr.bf16.mxu0 0
        %6954 = vmatpush1.bf16.msra.mxu0 0
        %6955 = vmatprep.subr.bf16.mxu0 0
        %6956 = vmatpush1.bf16.msra.mxu0 0
        %6957 = vmatprep.subr.bf16.mxu0 0
        %6958 = vmatpush1.bf16.msra.mxu0 0
        %6959 = vmatprep.subr.bf16.mxu0 0
        %6960 = vmatpush1.bf16.msra.mxu0 0
        %6961 = vmatprep.subr.bf16.mxu0 0
        %6962 = vmatpush1.bf16.msra.mxu0 0
        %6963 = vmatprep.subr.bf16.mxu0 0
        %6964 = vmatpush1.bf16.msra.mxu0 0
        %6965 = vmatprep.subr.bf16.mxu0 0
        %6966 = vmatpush1.bf16.msra.mxu0 0
        %6967 = vmatprep.mubr.bf16.mxu0 0
        %6968 = vmatmul.mubr.bf16.gmra.mrb[0].mxu0 %v5771
        %v6969 = vpop.f32.mrb[0].mxu0
        %v6970 = vadd.f32 0.0, %v6969
        %v6971 = vpop.f32.mrb[0].mxu0
        %v6972 = vadd.f32 0.0, %v6971
        %v6973 = vpop.f32.mrb[0].mxu0
        %v6974 = vpop.f32.mrb[0].mxu0
        %6975 = vdwg.mxu0
        %6976 = vmatprep.subr.bf16.mxu0 0
        %6977 = vmatpush1.bf16.msra.mxu0 %v6889
        %6978 = vmatprep.subr.bf16.mxu0 0
        %6979 = vmatpush1.bf16.msra.mxu0 %v6892
        %6980 = vmatprep.subr.bf16.mxu0 0
        %6981 = vmatpush1.bf16.msra.mxu0 %v6895
        %6982 = vmatprep.subr.bf16.mxu0 0
        %6983 = vmatpush1.bf16.msra.mxu0 %v6898
        %6984 = vmatprep.subr.bf16.mxu0 0
        %6985 = vmatpush1.bf16.msra.mxu0 %v6901
        %6986 = vmatprep.subr.bf16.mxu0 0
        %6987 = vmatpush1.bf16.msra.mxu0 %v6904
        %6988 = vmatprep.subr.bf16.mxu0 0
        %6989 = vmatpush1.bf16.msra.mxu0 %v6907
        %6990 = vmatprep.subr.bf16.mxu0 0
        %6991 = vmatpush1.bf16.msra.mxu0 %v6910
        %6992 = vmatprep.subr.bf16.mxu0 0
        %6993 = vmatpush1.bf16.msra.mxu0 0
        %6994 = vmatprep.subr.bf16.mxu0 0
        %6995 = vmatpush1.bf16.msra.mxu0 0
        %6996 = vmatprep.subr.bf16.mxu0 0
        %6997 = vmatpush1.bf16.msra.mxu0 0
        %6998 = vmatprep.subr.bf16.mxu0 0
        %6999 = vmatpush1.bf16.msra.mxu0 0
        %7000 = vmatprep.subr.bf16.mxu0 0
        %7001 = vmatpush1.bf16.msra.mxu0 0
        %7002 = vmatprep.subr.bf16.mxu0 0
        %7003 = vmatpush1.bf16.msra.mxu0 0
        %7004 = vmatprep.subr.bf16.mxu0 0
        %7005 = vmatpush1.bf16.msra.mxu0 0
        %7006 = vmatprep.subr.bf16.mxu0 0
        %7007 = vmatpush1.bf16.msra.mxu0 0
        %7008 = vmatprep.mubr.bf16.mxu0 0
        %7009 = vmatmul.mubr.bf16.gmra.mrb[0].mxu0 %v5771
        %v7010 = vpop.f32.mrb[0].mxu0
        %v7011 = vadd.f32 0.0, %v7010
        %v7012 = vpop.f32.mrb[0].mxu0
        %v7013 = vpop.f32.mrb[0].mxu0
        %v7014 = vpop.f32.mrb[0].mxu0
        %7015 = vdwg.mxu0
        %v7016 = vadd.f32 %v6771, %v6970
        %v7017 = vadd.f32 %v6772, %v6972
        %v7018 = vadd.f32 %v6773, %v7011
        %v7019 = vmax.f32 %v7016, 0.0
        %v7020 = vmax.f32 %v7017, 0.0
        %v7021 = vmax.f32 %v7018, 0.0
        %v7022 = vpack.c.bf16 %v7019, %v7019
        %v7023 = vpack.c.bf16 %v7020, %v7020
        %v7024 = vpack.c.bf16 %v7021, %v7021
        %v7025 = vld [vmem:[%s9] sm:$0xf]
        %v7026 = vld [vmem:[%s9 + $0x4] sm:$0xf]
        %v7027 = vld [vmem:[%s9 + $0x8] sm:$0xf]
        %v7028 = vld [vmem:[%s9 + $0xc] sm:$0xf]
        %v7029 = vld [vmem:[%s9 + $0x10] sm:$0xf]
        %v7030 = vld [vmem:[%s9 + $0x14] sm:$0xf]
        %v7031 = vld [vmem:[%s9 + $0x18] sm:$0xf]
        %v7032 = vld [vmem:[%s9 + $0x1c] sm:$0xf]
        %v7033 = vld [vmem:[%s9 + $0x20] sm:$0xf]
        %v7034 = vld [vmem:[%s9 + $0x24] sm:$0xf]
        %v7035 = vld [vmem:[%s9 + $0x28] sm:$0xf]
        %v7036 = vld [vmem:[%s9 + $0x2c] sm:$0xf]
        %v7037 = vld [vmem:[%s9 + $0x30] sm:$0xf]
        %v7038 = vld [vmem:[%s9 + $0x34] sm:$0xf]
        %v7039 = vld [vmem:[%s9 + $0x38] sm:$0xf]
        %v7040 = vld [vmem:[%s9 + $0x3c] sm:$0xf]
        %v7041 = vld [vmem:[%s9 + $0x40] sm:$0xf]
        %v7042 = vld [vmem:[%s9 + $0x44] sm:$0xf]
        %v7043 = vld [vmem:[%s9 + $0x48] sm:$0xf]
        %v7044 = vld [vmem:[%s9 + $0x4c] sm:$0xf]
        %v7045 = vld [vmem:[%s9 + $0x50] sm:$0xf]
        %v7046 = vld [vmem:[%s9 + $0x54] sm:$0xf]
        %v7047 = vld [vmem:[%s9 + $0x58] sm:$0xf]
        %v7048 = vld [vmem:[%s9 + $0x5c] sm:$0xf]
        %v7049 = vld [vmem:[%s9 + $0x60] sm:$0xf]
        %v7050 = vld [vmem:[%s9 + $0x64] sm:$0xf]
        %v7051 = vld [vmem:[%s9 + $0x68] sm:$0xf]
        %v7052 = vld [vmem:[%s9 + $0x6c] sm:$0xf]
        %v7053 = vld [vmem:[%s9 + $0x70] sm:$0xf]
        %v7054 = vld [vmem:[%s9 + $0x74] sm:$0xf]
        %v7055 = vld [vmem:[%s9 + $0x78] sm:$0xf]
        %v7056 = vld [vmem:[%s9 + $0x7c] sm:$0xf]
        %v7057 = vld [vmem:[%s9 + $0x80] sm:$0xf]
        %v7058 = vld [vmem:[%s9 + $0x84] sm:$0xf]
        %v7059 = vld [vmem:[%s9 + $0x88] sm:$0xf]
        %v7060 = vld [vmem:[%s9 + $0x8c] sm:$0xf]
        %v7061 = vld [vmem:[%s9 + $0x90] sm:$0xf]
        %v7062 = vld [vmem:[%s9 + $0x94] sm:$0xf]
        %v7063 = vld [vmem:[%s9 + $0x98] sm:$0xf]
        %v7064 = vld [vmem:[%s9 + $0x9c] sm:$0xf]
        %v7065 = vld [vmem:[%s9 + $0xa0] sm:$0xf]
        %v7066 = vld [vmem:[%s9 + $0xa4] sm:$0xf]
        %v7067 = vld [vmem:[%s9 + $0xa8] sm:$0xf]
        %v7068 = vld [vmem:[%s9 + $0xac] sm:$0xf]
        %v7069 = vld [vmem:[%s9 + $0xb0] sm:$0xf]
        %v7070 = vld [vmem:[%s9 + $0xb4] sm:$0xf]
        %v7071 = vld [vmem:[%s9 + $0xb8] sm:$0xf]
        %v7072 = vld [vmem:[%s9 + $0xbc] sm:$0xf]
        %v7073 = vld [vmem:[%s10] sm:$0x1]
        %v7075 = vlaneseq
        %v7076 = vshrl.u32 %v7075, 7
        %v7077 = vsub.s32 0, %v7076
        %v7078 = vrot.slane %v7073, %v7077
        %v7128 = vunpack.c.l.b16 %v7025
        %v7129 = vunpack.c.l.b16 %v7026
        %v7130 = vunpack.c.l.b16 %v7027
        %v7131 = vunpack.c.l.b16 %v7028
        %v7132 = vunpack.c.l.b16 %v7029
        %v7133 = vunpack.c.l.b16 %v7030
        %v7134 = vunpack.c.l.b16 %v7031
        %v7135 = vunpack.c.l.b16 %v7032
        %v7136 = vunpack.c.l.b16 %v7033
        %v7137 = vunpack.c.l.b16 %v7034
        %v7138 = vunpack.c.l.b16 %v7035
        %v7139 = vunpack.c.l.b16 %v7036
        %v7140 = vunpack.c.l.b16 %v7037
        %v7141 = vunpack.c.l.b16 %v7038
        %v7142 = vunpack.c.l.b16 %v7039
        %v7143 = vunpack.c.l.b16 %v7040
        %v7144 = vunpack.c.l.b16 %v7041
        %v7145 = vunpack.c.l.b16 %v7042
        %v7146 = vunpack.c.l.b16 %v7043
        %v7147 = vunpack.c.l.b16 %v7044
        %v7148 = vunpack.c.l.b16 %v7045
        %v7149 = vunpack.c.l.b16 %v7046
        %v7150 = vunpack.c.l.b16 %v7047
        %v7151 = vunpack.c.l.b16 %v7048
        %v7152 = vunpack.c.l.b16 %v7049
        %v7153 = vunpack.c.l.b16 %v7050
        %v7154 = vunpack.c.l.b16 %v7051
        %v7155 = vunpack.c.l.b16 %v7052
        %v7156 = vunpack.c.l.b16 %v7053
        %v7157 = vunpack.c.l.b16 %v7054
        %v7158 = vunpack.c.l.b16 %v7055
        %v7159 = vunpack.c.l.b16 %v7056
        %v7160 = vunpack.c.l.b16 %v7057
        %v7161 = vunpack.c.l.b16 %v7058
        %v7162 = vunpack.c.l.b16 %v7059
        %v7163 = vunpack.c.l.b16 %v7060
        %v7164 = vunpack.c.l.b16 %v7061
        %v7165 = vunpack.c.l.b16 %v7062
        %v7166 = vunpack.c.l.b16 %v7063
        %v7167 = vunpack.c.l.b16 %v7064
        %v7168 = vunpack.c.l.b16 %v7065
        %v7169 = vunpack.c.l.b16 %v7066
        %v7170 = vunpack.c.l.b16 %v7067
        %v7171 = vunpack.c.l.b16 %v7068
        %v7172 = vunpack.c.l.b16 %v7069
        %v7173 = vunpack.c.l.b16 %v7070
        %v7174 = vunpack.c.l.b16 %v7071
        %v7175 = vunpack.c.l.b16 %v7072
        %v7176 = vpack.c.b16 %v7129, %v7128
        %v7177 = vpack.c.b16 %v7131, %v7130
        %v7178 = vpack.c.b16 %v7133, %v7132
        %v7179 = vpack.c.b16 %v7135, %v7134
        %v7180 = vpack.c.b16 %v7137, %v7136
        %v7181 = vpack.c.b16 %v7139, %v7138
        %v7182 = vpack.c.b16 %v7141, %v7140
        %v7183 = vpack.c.b16 %v7143, %v7142
        %v7184 = vpack.c.b16 %v7145, %v7144
        %v7185 = vpack.c.b16 %v7147, %v7146
        %v7186 = vpack.c.b16 %v7149, %v7148
        %v7187 = vpack.c.b16 %v7151, %v7150
        %v7188 = vpack.c.b16 %v7153, %v7152
        %v7189 = vpack.c.b16 %v7155, %v7154
        %v7190 = vpack.c.b16 %v7157, %v7156
        %v7191 = vpack.c.b16 %v7159, %v7158
        %v7192 = vpack.c.b16 %v7161, %v7160
        %v7193 = vpack.c.b16 %v7163, %v7162
        %v7194 = vpack.c.b16 %v7165, %v7164
        %v7195 = vpack.c.b16 %v7167, %v7166
        %v7196 = vpack.c.b16 %v7169, %v7168
        %v7197 = vpack.c.b16 %v7171, %v7170
        %v7198 = vpack.c.b16 %v7173, %v7172
        %v7199 = vpack.c.b16 %v7175, %v7174
        %7224 = vmatprep.subr.bf16.mxu0 0
        %7225 = vmatpush1.bf16.msra.mxu0 %v7176
        %7226 = vmatprep.subr.bf16.mxu0 0
        %7227 = vmatpush1.bf16.msra.mxu0 %v7177
        %7228 = vmatprep.subr.bf16.mxu0 0
        %7229 = vmatpush1.bf16.msra.mxu0 %v7178
        %7230 = vmatprep.subr.bf16.mxu0 0
        %7231 = vmatpush1.bf16.msra.mxu0 %v7179
        %7232 = vmatprep.subr.bf16.mxu0 0
        %7233 = vmatpush1.bf16.msra.mxu0 %v7180
        %7234 = vmatprep.subr.bf16.mxu0 0
        %7235 = vmatpush1.bf16.msra.mxu0 %v7181
        %7236 = vmatprep.subr.bf16.mxu0 0
        %7237 = vmatpush1.bf16.msra.mxu0 %v7182
        %7238 = vmatprep.subr.bf16.mxu0 0
        %7239 = vmatpush1.bf16.msra.mxu0 %v7183
        %7240 = vmatprep.subr.bf16.mxu0 0
        %7241 = vmatpush1.bf16.msra.mxu0 %v7184
        %7242 = vmatprep.subr.bf16.mxu0 0
        %7243 = vmatpush1.bf16.msra.mxu0 %v7185
        %7244 = vmatprep.subr.bf16.mxu0 0
        %7245 = vmatpush1.bf16.msra.mxu0 %v7186
        %7246 = vmatprep.subr.bf16.mxu0 0
        %7247 = vmatpush1.bf16.msra.mxu0 %v7187
        %7248 = vmatprep.subr.bf16.mxu0 0
        %7249 = vmatpush1.bf16.msra.mxu0 %v7188
        %7250 = vmatprep.subr.bf16.mxu0 0
        %7251 = vmatpush1.bf16.msra.mxu0 %v7189
        %7252 = vmatprep.subr.bf16.mxu0 0
        %7253 = vmatpush1.bf16.msra.mxu0 %v7190
        %7254 = vmatprep.subr.bf16.mxu0 0
        %7255 = vmatpush1.bf16.msra.mxu0 %v7191
        %7256 = vmatprep.mubr.bf16.mxu0 %v7023
        %7257 = vmatmul.mubr.bf16.gmra.mrb[0].mxu0 %v7022
        %v7258 = vpop.f32.mrb[0].mxu0
        %v7259 = vadd.f32 %v7078, %v7258
        %v7260 = vpop.f32.mrb[0].mxu0
        %v7261 = vpop.f32.mrb[0].mxu0
        %v7262 = vpop.f32.mrb[0].mxu0
        %7263 = vdwg.mxu0
        %7264 = vmatprep.subr.bf16.mxu0 0
        %7265 = vmatpush1.bf16.msra.mxu0 %v7192
        %7266 = vmatprep.subr.bf16.mxu0 0
        %7267 = vmatpush1.bf16.msra.mxu0 %v7193
        %7268 = vmatprep.subr.bf16.mxu0 0
        %7269 = vmatpush1.bf16.msra.mxu0 %v7194
        %7270 = vmatprep.subr.bf16.mxu0 0
        %7271 = vmatpush1.bf16.msra.mxu0 %v7195
        %7272 = vmatprep.subr.bf16.mxu0 0
        %7273 = vmatpush1.bf16.msra.mxu0 %v7196
        %7274 = vmatprep.subr.bf16.mxu0 0
        %7275 = vmatpush1.bf16.msra.mxu0 %v7197
        %7276 = vmatprep.subr.bf16.mxu0 0
        %7277 = vmatpush1.bf16.msra.mxu0 %v7198
        %7278 = vmatprep.subr.bf16.mxu0 0
        %7279 = vmatpush1.bf16.msra.mxu0 %v7199
        %7280 = vmatprep.subr.bf16.mxu0 0
        %7281 = vmatpush1.bf16.msra.mxu0 0
        %7282 = vmatprep.subr.bf16.mxu0 0
        %7283 = vmatpush1.bf16.msra.mxu0 0
        %7284 = vmatprep.subr.bf16.mxu0 0
        %7285 = vmatpush1.bf16.msra.mxu0 0
        %7286 = vmatprep.subr.bf16.mxu0 0
        %7287 = vmatpush1.bf16.msra.mxu0 0
        %7288 = vmatprep.subr.bf16.mxu0 0
        %7289 = vmatpush1.bf16.msra.mxu0 0
        %7290 = vmatprep.subr.bf16.mxu0 0
        %7291 = vmatpush1.bf16.msra.mxu0 0
        %7292 = vmatprep.subr.bf16.mxu0 0
        %7293 = vmatpush1.bf16.msra.mxu0 0
        %7294 = vmatprep.subr.bf16.mxu0 0
        %7295 = vmatpush1.bf16.msra.mxu0 0
        %7296 = vmatprep.mubr.bf16.mxu0 0
        %7297 = vmatmul.mubr.bf16.gmra.mrb[0].mxu0 %v7024
        %v7298 = vpop.f32.mrb[0].mxu0
        %v7299 = vadd.f32 %v7259, %v7298
        %v7300 = vpop.f32.mrb[0].mxu0
        %v7301 = vpop.f32.mrb[0].mxu0
        %v7302 = vpop.f32.mrb[0].mxu0
        %7303 = vdwg.mxu0
        %v7304 = vmax.f32 %v7299, 0.0
        %v7305 = vpack.c.bf16 %v7304, %v7304
        %v7306 = vld [vmem:[%s11] sm:$0xf]
        %v7307 = vld [vmem:[%s11 + $0x4] sm:$0xf]
        %v7308 = vld [vmem:[%s11 + $0x8] sm:$0xf]
        %v7309 = vld [vmem:[%s11 + $0xc] sm:$0xf]
        %v7310 = vld [vmem:[%s11 + $0x10] sm:$0xf]
        %v7311 = vld [vmem:[%s11 + $0x14] sm:$0xf]
        %v7312 = vld [vmem:[%s11 + $0x18] sm:$0xf]
        %v7313 = vld [vmem:[%s11 + $0x1c] sm:$0xf]
        %v7314 = vld [vmem:[%s11 + $0x20] sm:$0xf]
        %v7315 = vld [vmem:[%s11 + $0x24] sm:$0xf]
        %v7316 = vld [vmem:[%s11 + $0x28] sm:$0xf]
        %v7317 = vld [vmem:[%s11 + $0x2c] sm:$0xf]
        %v7318 = vld [vmem:[%s11 + $0x30] sm:$0xf]
        %v7319 = vld [vmem:[%s11 + $0x34] sm:$0xf]
        %v7320 = vld [vmem:[%s11 + $0x38] sm:$0xf]
        %v7321 = vld [vmem:[%s11 + $0x3c] sm:$0xf]
        %v7322 = vld [vmem:[%s12] sm:$0x1]
        %v7324 = vlaneseq
        %v7325 = vshrl.u32 %v7324, 7
        %v7326 = vsub.s32 0, %v7325
        %v7327 = vrot.slane %v7322, %v7326
        %v7345 = vunpack.c.l.b16 %v7306
        %v7346 = vunpack.c.l.b16 %v7307
        %v7347 = vunpack.c.l.b16 %v7308
        %v7348 = vunpack.c.l.b16 %v7309
        %v7349 = vunpack.c.l.b16 %v7310
        %v7350 = vunpack.c.l.b16 %v7311
        %v7351 = vunpack.c.l.b16 %v7312
        %v7352 = vunpack.c.l.b16 %v7313
        %v7353 = vunpack.c.l.b16 %v7314
        %v7354 = vunpack.c.l.b16 %v7315
        %v7355 = vunpack.c.l.b16 %v7316
        %v7356 = vunpack.c.l.b16 %v7317
        %v7357 = vunpack.c.l.b16 %v7318
        %v7358 = vunpack.c.l.b16 %v7319
        %v7359 = vunpack.c.l.b16 %v7320
        %v7360 = vunpack.c.l.b16 %v7321
        %v7361 = vpack.c.b16 %v7346, %v7345
        %v7362 = vpack.c.b16 %v7348, %v7347
        %v7363 = vpack.c.b16 %v7350, %v7349
        %v7364 = vpack.c.b16 %v7352, %v7351
        %v7365 = vpack.c.b16 %v7354, %v7353
        %v7366 = vpack.c.b16 %v7356, %v7355
        %v7367 = vpack.c.b16 %v7358, %v7357
        %v7368 = vpack.c.b16 %v7360, %v7359
        %7377 = vmatprep.subr.bf16.mxu0 0
        %7378 = vmatpush1.bf16.msra.mxu0 %v7361
        %7379 = vmatprep.subr.bf16.mxu0 0
        %7380 = vmatpush1.bf16.msra.mxu0 %v7362
        %7381 = vmatprep.subr.bf16.mxu0 0
        %7382 = vmatpush1.bf16.msra.mxu0 %v7363
        %7383 = vmatprep.subr.bf16.mxu0 0
        %7384 = vmatpush1.bf16.msra.mxu0 %v7364
        %7385 = vmatprep.subr.bf16.mxu0 0
        %7386 = vmatpush1.bf16.msra.mxu0 %v7365
        %7387 = vmatprep.subr.bf16.mxu0 0
        %7388 = vmatpush1.bf16.msra.mxu0 %v7366
        %7389 = vmatprep.subr.bf16.mxu0 0
        %7390 = vmatpush1.bf16.msra.mxu0 %v7367
        %7391 = vmatprep.subr.bf16.mxu0 0
        %7392 = vmatpush1.bf16.msra.mxu0 %v7368
        %7393 = vmatprep.subr.bf16.mxu0 0
        %7394 = vmatpush1.bf16.msra.mxu0 0
        %7395 = vmatprep.subr.bf16.mxu0 0
        %7396 = vmatpush1.bf16.msra.mxu0 0
        %7397 = vmatprep.subr.bf16.mxu0 0
        %7398 = vmatpush1.bf16.msra.mxu0 0
        %7399 = vmatprep.subr.bf16.mxu0 0
        %7400 = vmatpush1.bf16.msra.mxu0 0
        %7401 = vmatprep.subr.bf16.mxu0 0
        %7402 = vmatpush1.bf16.msra.mxu0 0
        %7403 = vmatprep.subr.bf16.mxu0 0
        %7404 = vmatpush1.bf16.msra.mxu0 0
        %7405 = vmatprep.subr.bf16.mxu0 0
        %7406 = vmatpush1.bf16.msra.mxu0 0
        %7407 = vmatprep.subr.bf16.mxu0 0
        %7408 = vmatpush1.bf16.msra.mxu0 0
        %7409 = vmatprep.mubr.bf16.mxu0 0
        %7410 = vmatmul.mubr.bf16.gmra.mrb[0].mxu0 %v7305
        %v7411 = vpop.f32.mrb[0].mxu0
        %v7412 = vadd.f32 %v7327, %v7411
        %v7413 = vpop.f32.mrb[0].mxu0
        %v7414 = vpop.f32.mrb[0].mxu0
        %v7415 = vpop.f32.mrb[0].mxu0
        %7416 = vdwg.mxu0
        %v7417 = vmax.f32 %v7412, 0.0
        %v7418 = vpack.c.bf16 %v7417, %v7417
        %v7419 = vld [vmem:[%s13] sm:$0xf]
        %v7420 = vld [vmem:[%s13 + $0x4] sm:$0xf]
        %v7421 = vld [vmem:[%s13 + $0x8] sm:$0xf]
        %v7422 = vld [vmem:[%s13 + $0xc] sm:$0xf]
        %v7423 = vld [vmem:[%s13 + $0x10] sm:$0xf]
        %v7424 = vld [vmem:[%s13 + $0x14] sm:$0xf]
        %v7425 = vld [vmem:[%s13 + $0x18] sm:$0xf]
        %v7426 = vld [vmem:[%s13 + $0x1c] sm:$0xf]
        %v7427 = vld [vmem:[%s13 + $0x20] sm:$0xf]
        %v7428 = vld [vmem:[%s13 + $0x24] sm:$0xf]
        %v7429 = vld [vmem:[%s13 + $0x28] sm:$0xf]
        %v7430 = vld [vmem:[%s13 + $0x2c] sm:$0xf]
        %v7431 = vld [vmem:[%s13 + $0x30] sm:$0xf]
        %v7432 = vld [vmem:[%s13 + $0x34] sm:$0xf]
        %v7433 = vld [vmem:[%s13 + $0x38] sm:$0xf]
        %v7434 = vld [vmem:[%s13 + $0x3c] sm:$0xf]
        %v7435 = vld [vmem:[%s14] sm:$0x1]
        %v7437 = vlaneseq
        %v7438 = vshrl.u32 %v7437, 7
        %v7439 = vsub.s32 0, %v7438
        %v7440 = vrot.slane %v7435, %v7439
        %v7458 = vunpack.c.l.b16 %v7419
        %v7459 = vunpack.c.l.b16 %v7420
        %v7460 = vunpack.c.l.b16 %v7421
        %v7461 = vunpack.c.l.b16 %v7422
        %v7462 = vunpack.c.l.b16 %v7423
        %v7463 = vunpack.c.l.b16 %v7424
        %v7464 = vunpack.c.l.b16 %v7425
        %v7465 = vunpack.c.l.b16 %v7426
        %v7466 = vunpack.c.l.b16 %v7427
        %v7467 = vunpack.c.l.b16 %v7428
        %v7468 = vunpack.c.l.b16 %v7429
        %v7469 = vunpack.c.l.b16 %v7430
        %v7470 = vunpack.c.l.b16 %v7431
        %v7471 = vunpack.c.l.b16 %v7432
        %v7472 = vunpack.c.l.b16 %v7433
        %v7473 = vunpack.c.l.b16 %v7434
        %v7474 = vpack.c.b16 %v7459, %v7458
        %v7475 = vpack.c.b16 %v7461, %v7460
        %v7476 = vpack.c.b16 %v7463, %v7462
        %v7477 = vpack.c.b16 %v7465, %v7464
        %v7478 = vpack.c.b16 %v7467, %v7466
        %v7479 = vpack.c.b16 %v7469, %v7468
        %v7480 = vpack.c.b16 %v7471, %v7470
        %v7481 = vpack.c.b16 %v7473, %v7472
        %7490 = vmatprep.subr.bf16.mxu0 0
        %7491 = vmatpush1.bf16.msra.mxu0 %v7474
        %7492 = vmatprep.subr.bf16.mxu0 0
        %7493 = vmatpush1.bf16.msra.mxu0 %v7475
        %7494 = vmatprep.subr.bf16.mxu0 0
        %7495 = vmatpush1.bf16.msra.mxu0 %v7476
        %7496 = vmatprep.subr.bf16.mxu0 0
        %7497 = vmatpush1.bf16.msra.mxu0 %v7477
        %7498 = vmatprep.subr.bf16.mxu0 0
        %7499 = vmatpush1.bf16.msra.mxu0 %v7478
        %7500 = vmatprep.subr.bf16.mxu0 0
        %7501 = vmatpush1.bf16.msra.mxu0 %v7479
        %7502 = vmatprep.subr.bf16.mxu0 0
        %7503 = vmatpush1.bf16.msra.mxu0 %v7480
        %7504 = vmatprep.subr.bf16.mxu0 0
        %7505 = vmatpush1.bf16.msra.mxu0 %v7481
        %7506 = vmatprep.subr.bf16.mxu0 0
        %7507 = vmatpush1.bf16.msra.mxu0 0
        %7508 = vmatprep.subr.bf16.mxu0 0
        %7509 = vmatpush1.bf16.msra.mxu0 0
        %7510 = vmatprep.subr.bf16.mxu0 0
        %7511 = vmatpush1.bf16.msra.mxu0 0
        %7512 = vmatprep.subr.bf16.mxu0 0
        %7513 = vmatpush1.bf16.msra.mxu0 0
        %7514 = vmatprep.subr.bf16.mxu0 0
        %7515 = vmatpush1.bf16.msra.mxu0 0
        %7516 = vmatprep.subr.bf16.mxu0 0
        %7517 = vmatpush1.bf16.msra.mxu0 0
        %7518 = vmatprep.subr.bf16.mxu0 0
        %7519 = vmatpush1.bf16.msra.mxu0 0
        %7520 = vmatprep.subr.bf16.mxu0 0
        %7521 = vmatpush1.bf16.msra.mxu0 0
        %7522 = vmatprep.mubr.bf16.mxu0 0
        %7523 = vmatmul.mubr.bf16.gmra.mrb[0].mxu0 %v7418
        %v7524 = vpop.f32.mrb[0].mxu0
        %v7525 = vadd.f32 %v7440, %v7524
        %v7526 = vpop.f32.mrb[0].mxu0
        %v7527 = vpop.f32.mrb[0].mxu0
        %v7528 = vpop.f32.mrb[0].mxu0
        %7529 = vdwg.mxu0
        %7530 = vst [vmem:[%s488] sm:$0xff] %v7525
        %s7531 = sand.u32 %s357, 1
        %s7532 = scalar_lea.sflag [#allocation5], %s7531
        %s7533 = sand.u32 %s357, 1
        %s7534 = smul.addr %s7533, 8
        %s7535 = scalar_lea.vmem [#allocation4], %s7534
        // Predicated region
        $region81: #{convnet_forward.1} parent=79 // pred_check
          %p7536 = pneg %p367
        $region82: #{convnet_forward.1} parent=79 // pred_check_branch
          %7538 = sbr.rel (%p7536) target = $region84
        $region83: #{convnet_forward.1} parent=79 // pred_region
          %s7540 = ssub.s32 128, 128
          %7541 = vsyncadd %s7532, %s7540
          %s7542 = smul.addr %s29, 128
          %s7543 = scalar_lea.hbm %s15, %s7542
          %s7545 = sshll.u32 %s7535, 4
          %s7546 = int_to_ptr.vmem [resolvable:$true] %s7545
          %7548 = dma.vmem_to_hbm [thread:$0]  %s7546, 128, %s7543, %s7532
        $region84: #{convnet_forward.1} parent=79 // pred_fallthru
          _
      $region80: #{convnet_forward.1} parent=5 // pred_fallthru
        _
      %p7549 = scmp.le.s32.totalorder 2, %s24
      // Predicated region
      $region85: #{convnet_forward.1} parent=5 // pred_check
        %p7550 = pneg %p7549
      $region86: #{convnet_forward.1} parent=5 // pred_check_branch
        %7552 = sbr.rel (%p7550) target = $region88
      $region87: #{convnet_forward.1} parent=5 // pred_region
        %s7553 = ssub.s32 %s24, 2
        // Predicated region
        $region89: #{convnet_forward.1} parent=87 // pred_check
          %p7554 = pneg %p373
        $region90: #{convnet_forward.1} parent=87 // pred_check_branch
          %7556 = sbr.rel (%p7554) target = $region92
        $region91: #{convnet_forward.1} parent=87 // pred_region
          %s7557 = sand.u32 %s358, 1
          %s7558 = scalar_lea.sflag [#allocation5], %s7557
          %s7559 = sand.u32 %s358, 1
          %s7560 = smul.addr %s7559, 8
          %s7561 = scalar_lea.vmem [#allocation4], %s7560
          %7562 = dma.done %s7558, 128
        $region92: #{convnet_forward.1} parent=87 // pred_fallthru
          _
      $region88: #{convnet_forward.1} parent=5 // pred_fallthru
        _
    $region6: #{convnet_forward.1} parent=1 // loop_footer
      %s28 = sadd.s32 1, %s24
    $region7: #{convnet_forward.1} parent=1 // loop_footer_branch
      %23 = sbr.rel target = $region3
    $region8: #{convnet_forward.1} parent=1 // loop_exit
      _
    %7563 = vsyncpa [#allocation5], 1
    %s7564 = scalar_lea.sflag [#allocation5], 1
    %7565 = vsyncpa %s7564, 1

</llo_original>
